<compile_context>
chip_gen: v7x
topology: tpu7x:2x2x1
jax: 0.10.0
libtpu: 0.0.40
codegen_flags: <defaults>
</compile_context>

<pallas_src>
import functools

import numpy as np
import jax
import jax.numpy as jnp
from jax.experimental import pallas as pl
from jax.experimental.pallas import tpu as pltpu

EPS = 1e-5
GROUPS = 32


# ----------------------------- fused Bottleneck kernel -----------------------------

def _bottleneck_kernel(x_ref, w1_ref, b1_ref, w2_ref, b2_ref, w3_ref, b3_ref,
                       *rest, H, W, d, first):
    """One batch element per grid step.  Everything stays in VMEM.

    x_ref : (1, H*W, Cin)      bf16
    w1    : (Cin, P)           bf16 (BN1 scale folded)     b1: (1, P)  f32
    w2    : (9, P, P)          bf16 per-tap block-diagonal grouped weights
                               (BN2 scale folded)          b2: (1, P)  f32
    w3    : (P, C3)            bf16 (BN3 scale folded)     b3: (1, C3) f32
    ws,bs : shortcut conv (only if first)
    o_ref : (1, H*W, Cm)       bf16  (Cm = Cs + dense_depth)
    pad   : (H*W + 2*W + 2, P) f32 scratch -- flat zero-padded halo buffer
    """
    if first:
        ws_ref, bs_ref, o_ref, pad_ref = rest
    else:
        o_ref, pad_ref = rest

    f32 = jnp.float32
    HW = H * W
    x = x_ref[0]                                                     # (HW, Cin) bf16

    # ---- conv1 (1x1) + folded BN1 + ReLU ----
    h1 = jnp.dot(x, w1_ref[...], preferred_element_type=f32) + b1_ref[...]
    h1 = jnp.maximum(h1, 0.0)                                        # (HW, P) f32
    P = h1.shape[-1]

    # ---- grouped 3x3 conv (pad=1) as 9 shifted matmuls over a VMEM halo buffer ----
    # pad_ref holds [W+1 zeros | h1 (row-major) | W+1 zeros]; the window for tap
    # (dy, dx) is the HW-long slice starting at dy*W+dx.  Row out-of-bounds falls
    # into the zero padding automatically; column wrap-around is masked.
    pad_ref[...] = jnp.zeros_like(pad_ref)
    pad_ref[W + 1:W + 1 + HW, :] = h1

    col = jax.lax.broadcasted_iota(jnp.int32, (HW, 1), 0) % W        # output column j
    acc = jnp.zeros((HW, P), f32) + b2_ref[...]
    for dy in range(3):
        for dx in range(3):
            off = dy * W + dx
            win = pad_ref[off:off + HW, :]                           # (HW, P) f32
            if dx == 0:                                              # reads j-1 -> mask j==0
                win = jnp.where(col != 0, win, 0.0)
            elif dx == 2:                                            # reads j+1 -> mask j==W-1
                win = jnp.where(col != W - 1, win, 0.0)
            acc = acc + jnp.dot(win.astype(jnp.bfloat16), w2_ref[dy * 3 + dx],
                                preferred_element_type=f32)
    h2 = jnp.maximum(acc, 0.0)                                       # (HW, P) f32

    # ---- conv3 (1x1) + folded BN3 (no ReLU yet) ----
    h3 = jnp.dot(h2.astype(jnp.bfloat16), w3_ref[...],
                 preferred_element_type=f32) + b3_ref[...]           # (HW, C3) f32

    # ---- shortcut ----
    if first:
        xs = jnp.dot(x, ws_ref[...], preferred_element_type=f32) + bs_ref[...]
    else:
        xs = x.astype(f32)                                           # identity

    # ---- dual-path merge + ReLU epilogue (single lane-dense store) ----
    merged = jnp.concatenate(
        [xs[:, :d] + h3[:, :d], xs[:, d:], h3[:, d:]], axis=1)
    o_ref[0] = jnp.maximum(merged, 0.0).astype(o_ref.dtype)


def bottleneck_forward(p, x):
    """x: (B, H, W, Cin) NHWC -> (B, H/stride, W/stride, Cm)."""
    B, H, W, Cin = x.shape
    x = x.astype(jnp.bfloat16)
    HW = H * W
    P = p["w1"].shape[1]
    c3 = p["w3"].shape[1]
    d = p["out_planes"]
    dd = p["dense_depth"]
    first = p["first"]
    cs = c3 if first else Cin
    cm = cs + dd

    kernel = functools.partial(_bottleneck_kernel, H=H, W=W, d=d, first=first)

    in_specs = [
        pl.BlockSpec((1, HW, Cin), lambda b: (b, 0, 0)),
        pl.BlockSpec((Cin, P), lambda b: (0, 0)),
        pl.BlockSpec((1, P), lambda b: (0, 0)),
        pl.BlockSpec((9, P, P), lambda b: (0, 0, 0)),
        pl.BlockSpec((1, P), lambda b: (0, 0)),
        pl.BlockSpec((P, c3), lambda b: (0, 0)),
        pl.BlockSpec((1, c3), lambda b: (0, 0)),
    ]
    args = [x.reshape(B, HW, Cin), p["w1"], p["b1"], p["w2"], p["b2"],
            p["w3"], p["b3"]]
    if first:
        in_specs += [pl.BlockSpec((Cin, c3), lambda b: (0, 0)),
                     pl.BlockSpec((1, c3), lambda b: (0, 0))]
        args += [p["ws"], p["bs"]]

    out = pl.pallas_call(
        kernel,
        out_shape=jax.ShapeDtypeStruct((B, HW, cm), jnp.bfloat16),
        grid_spec=pltpu.PrefetchScalarGridSpec(
            num_scalar_prefetch=0,
            grid=(B,),
            in_specs=in_specs,
            out_specs=pl.BlockSpec((1, HW, cm), lambda b: (b, 0, 0)),
            scratch_shapes=[pltpu.VMEM((HW + 2 * W + 2, P), jnp.float32)]),
        compiler_params=pltpu.CompilerParams(
            dimension_semantics=("parallel",)),
    )(*args)

    out = out.reshape(B, H, W, cm)
    s = p["stride"]
    if s > 1:
        # conv-with-stride == dense conv followed by subsampling (conv2 has pad=1,
        # conv1/conv3/shortcut are 1x1, merge/ReLU are pointwise), so the fused
        # kernel computes the dense output and we subsample here.
        # TODO(synk): fold the subsample into the kernel epilogue with strided
        # pl.ds if the tiny post-kernel XLA slice ever matters.
        out = out[:, ::s, ::s, :]
    return out


# ----------------------------- pure-JAX reference (same numerics) -----------------------------

def bottleneck_ref(p, x):
    B, H, W, Cin = x.shape
    f32 = jnp.float32
    xb = x.astype(jnp.bfloat16)
    P = p["w1"].shape[1]

    h1 = jnp.dot(xb.reshape(B * H * W, Cin), p["w1"],
                 preferred_element_type=f32).reshape(B, H, W, P) + p["b1"][0]
    h1 = jnp.maximum(h1, 0.0)
    hp = jnp.pad(h1, ((0, 0), (1, 1), (1, 1), (0, 0)))
    acc = jnp.zeros((B, H, W, P), f32) + p["b2"][0]
    for dy in range(3):
        for dx in range(3):
            win = hp[:, dy:dy + H, dx:dx + W, :].astype(jnp.bfloat16)
            acc = acc + jnp.dot(win.reshape(B * H * W, P), p["w2"][dy * 3 + dx],
                                preferred_element_type=f32).reshape(B, H, W, P)
    h2 = jnp.maximum(acc, 0.0)
    c3 = p["w3"].shape[1]
    h3 = jnp.dot(h2.astype(jnp.bfloat16).reshape(B * H * W, P), p["w3"],
                 preferred_element_type=f32).reshape(B, H, W, c3) + p["b3"][0]
    if p["first"]:
        xs = jnp.dot(xb.reshape(B * H * W, Cin), p["ws"],
                     preferred_element_type=f32).reshape(B, H, W, c3) + p["bs"][0]
    else:
        xs = xb.astype(f32)
    d = p["out_planes"]
    merged = jnp.concatenate(
        [xs[..., :d] + h3[..., :d], xs[..., d:], h3[..., d:]], axis=-1)
    merged = jnp.maximum(merged, 0.0)
    s = p["stride"]
    return merged[:, ::s, ::s, :].astype(jnp.bfloat16)


# ----------------------------- parameter init (BN folded into weights) -----------------------------

def _normal(key, shape, std):
    return std * jax.random.normal(key, shape, jnp.float32)


def init_bn_folded(key, c):
    k1, k2, k3, k4 = jax.random.split(key, 4)
    gamma = 1.0 + 0.1 * jax.random.normal(k1, (c,))
    beta = 0.1 * jax.random.normal(k2, (c,))
    mean = 0.1 * jax.random.normal(k3, (c,))
    var = 0.5 + jax.random.uniform(k4, (c,))
    scale = gamma / jnp.sqrt(var + EPS)
    bias = beta - mean * scale
    return scale.astype(jnp.float32), bias.astype(jnp.float32)


def init_bottleneck(key, last_planes, in_planes, out_planes, dense_depth,
                    stride, first_layer):
    assert in_planes % GROUPS == 0
    ks = jax.random.split(key, 8)
    c3 = out_planes + dense_depth
    cg = in_planes // GROUPS

    s1, b1 = init_bn_folded(ks[1], in_planes)
    w1 = _normal(ks[0], (last_planes, in_planes), (2.0 / last_planes) ** 0.5)
    w1 = w1 * s1[None, :]

    # grouped 3x3 weights stored per tap (k = 3*ky + kx, torch w[:, :, ky, kx])
    # as block-diagonal dense (P, P) matrices -> one MXU matmul per tap.
    wg = _normal(ks[2], (9, GROUPS, cg, cg), (2.0 / (9 * cg)) ** 0.5)
    w2 = jnp.zeros((9, in_planes, in_planes), jnp.float32)
    for g in range(GROUPS):
        sl = slice(g * cg, (g + 1) * cg)
        w2 = w2.at[:, sl, sl].set(wg[:, g])
    s2, b2 = init_bn_folded(ks[3], in_planes)
    w2 = w2 * s2[None, None, :]

    s3, b3 = init_bn_folded(ks[5], c3)
    w3 = _normal(ks[4], (in_planes, c3), (2.0 / in_planes) ** 0.5) * s3[None, :]

    p = dict(
        w1=w1.astype(jnp.bfloat16), b1=b1.reshape(1, -1),
        w2=w2.astype(jnp.bfloat16), b2=b2.reshape(1, -1),
        w3=w3.astype(jnp.bfloat16), b3=b3.reshape(1, -1),
        out_planes=out_planes, dense_depth=dense_depth,
        stride=stride, first=first_layer)
    if first_layer:
        ss, bs = init_bn_folded(ks[7], c3)
        ws = _normal(ks[6], (last_planes, c3), (2.0 / last_planes) ** 0.5) * ss[None, :]
        p["ws"] = ws.astype(jnp.bfloat16)
        p["bs"] = bs.reshape(1, -1)
    return p


# ----------------------------- main -----------------------------

if __name__ == "__main__":
    key = jax.random.PRNGKey(0)
    kp, kx = jax.random.split(key)
    k1, k2, k3 = jax.random.split(kp, 3)

    # Small DPN-style stack exercising: first_layer shortcut, identity shortcut,
    # stride 1 and stride 2.  (last_planes, in_planes, out_planes, dense_depth)
    blocks = [
        init_bottleneck(k1, 64, 96, 256, 16, stride=1, first_layer=True),    # -> 288 ch
        init_bottleneck(k2, 288, 96, 256, 16, stride=1, first_layer=False),  # -> 304 ch
        init_bottleneck(k3, 304, 192, 512, 32, stride=2, first_layer=True),  # -> 576 ch, /2
    ]

    # NHWC input (torch NCHW (2, 64, 8, 8))
    x = jax.random.normal(kx, (2, 8, 8, 64), jnp.float32)

    @jax.jit
    def forward(inp):
        out = inp
        for p in blocks:
            out = bottleneck_forward(p, out)
        return out

    out = jax.block_until_ready(forward(x))
    assert out.shape == (2, 4, 4, 576), out.shape

    # pure-JAX reference with identical precision policy
    ref = x
    for p in blocks:
        ref = bottleneck_ref(p, ref)
    ref = jax.block_until_ready(ref)

    out_f32 = np.asarray(out.astype(jnp.float32))
    ref_f32 = np.asarray(ref.astype(jnp.float32))
    np.testing.assert_allclose(out_f32, ref_f32, rtol=0.1, atol=0.1)
    assert np.all(np.isfinite(out_f32))
    print("KERNEL_OK")
</pallas_src>

<mosaic_0001>
module attributes {stable_mosaic.version = 11 : i64} {
  func.func @_bottleneck_kernel(%arg0: i32, %arg1: memref<1x64x64xbf16, #tpu.memory_space<vmem>>, %arg2: memref<64x96xbf16, #tpu.memory_space<vmem>>, %arg3: memref<1x96xf32, #tpu.memory_space<vmem>>, %arg4: memref<9x96x96xbf16, #tpu.memory_space<vmem>>, %arg5: memref<1x96xf32, #tpu.memory_space<vmem>>, %arg6: memref<96x272xbf16, #tpu.memory_space<vmem>>, %arg7: memref<1x272xf32, #tpu.memory_space<vmem>>, %arg8: memref<64x272xbf16, #tpu.memory_space<vmem>>, %arg9: memref<1x272xf32, #tpu.memory_space<vmem>>, %arg10: memref<1x64x288xbf16, #tpu.memory_space<vmem>>, %arg11: memref<82x96xf32, #tpu.memory_space<vmem>>) attributes {dimension_semantics = [#tpu.dimension_semantics<parallel>], iteration_bounds = array<i64: 2>, scalar_prefetch = 0 : i64, scratch_operands = 1 : i64, tpu.core_type = #tpu.core_type<tc>, window_params = [{transform_indices = @transform_0, window_bounds = array<i64: 1, 64, 64>}, {pipeline_mode = #tpu.pipeline_mode<synchronous>, transform_indices = @transform_1, window_bounds = array<i64: 64, 96>}, {pipeline_mode = #tpu.pipeline_mode<synchronous>, transform_indices = @transform_2, window_bounds = array<i64: 1, 96>}, {pipeline_mode = #tpu.pipeline_mode<synchronous>, transform_indices = @transform_3, window_bounds = array<i64: 9, 96, 96>}, {pipeline_mode = #tpu.pipeline_mode<synchronous>, transform_indices = @transform_4, window_bounds = array<i64: 1, 96>}, {pipeline_mode = #tpu.pipeline_mode<synchronous>, transform_indices = @transform_5, window_bounds = array<i64: 96, 272>}, {pipeline_mode = #tpu.pipeline_mode<synchronous>, transform_indices = @transform_6, window_bounds = array<i64: 1, 272>}, {pipeline_mode = #tpu.pipeline_mode<synchronous>, transform_indices = @transform_7, window_bounds = array<i64: 64, 272>}, {pipeline_mode = #tpu.pipeline_mode<synchronous>, transform_indices = @transform_8, window_bounds = array<i64: 1, 272>}, {transform_indices = @transform_9, window_bounds = array<i64: 1, 64, 288>}]} {
    %c0 = arith.constant 0 : index
    %c0_0 = arith.constant 0 : index
    %c0_1 = arith.constant 0 : index
    %0 = vector.load %arg1[%c0, %c0_0, %c0_1] : memref<1x64x64xbf16, #tpu.memory_space<vmem>>, vector<1x64x64xbf16>
    %1 = vector.shape_cast %0 : vector<1x64x64xbf16> to vector<64x64xbf16>
    %c0_2 = arith.constant 0 : index
    %c0_3 = arith.constant 0 : index
    %2 = vector.load %arg2[%c0_2, %c0_3] : memref<64x96xbf16, #tpu.memory_space<vmem>>, vector<64x96xbf16>
    %cst = arith.constant dense<0.000000e+00> : vector<64x96xf32>
    %3 = tpu.matmul %1, %2, %cst {dimension_numbers = #tpu.dot_dimension_numbers<[1], [0], [0], [1], [0, 0, 1, 1], [], []>} : vector<64x64xbf16>, vector<64x96xbf16>, vector<64x96xf32> -> vector<64x96xf32>
    %c0_4 = arith.constant 0 : index
    %c0_5 = arith.constant 0 : index
    %4 = vector.load %arg3[%c0_4, %c0_5] : memref<1x96xf32, #tpu.memory_space<vmem>>, vector<1x96xf32>
    %5 = vector.broadcast %4 : vector<1x96xf32> to vector<64x96xf32>
    %6 = arith.addf %3, %5 : vector<64x96xf32>
    %cst_6 = arith.constant 0.000000e+00 : f32
    %7 = vector.broadcast %cst_6 : f32 to vector<64x96xf32>
    %8 = arith.maximumf %6, %7 : vector<64x96xf32>
    %cst_7 = arith.constant 0.000000e+00 : f32
    %9 = vector.broadcast %cst_7 : f32 to vector<82x96xf32>
    %c0_8 = arith.constant 0 : index
    %c0_9 = arith.constant 0 : index
    %10 = vector.load %arg11[%c0_8, %c0_9] : memref<82x96xf32, #tpu.memory_space<vmem>>, vector<82x96xf32>
    tpu.vector_store %arg11[%c0_8, %c0_9], %9 {strides = array<i32>} : memref<82x96xf32, #tpu.memory_space<vmem>>, vector<82x96xf32>,
    %c9 = arith.constant 9 : index
    %c0_10 = arith.constant 0 : index
    %11 = vector.load %arg11[%c9, %c0_10] : memref<82x96xf32, #tpu.memory_space<vmem>>, vector<64x96xf32>
    tpu.vector_store %arg11[%c9, %c0_10], %8 {strides = array<i32>} : memref<82x96xf32, #tpu.memory_space<vmem>>, vector<64x96xf32>,
    %12 = tpu.iota {dimensions = array<i32: 0>} : vector<64x1xi32>
    %c8_i32 = arith.constant 8 : i32
    %c0_i32 = arith.constant 0 : i32
    %13 = arith.cmpi eq, %c8_i32, %c0_i32 : i32
    %c1_i32 = arith.constant 1 : i32
    %14 = arith.select %13, %c1_i32, %c8_i32 : i32
    %15 = vector.broadcast %14 : i32 to vector<64x1xi32>
    %16 = arith.remsi %12, %15 : vector<64x1xi32>
    %c0_i32_11 = arith.constant 0 : i32
    %17 = vector.broadcast %c0_i32_11 : i32 to vector<64x1xi32>
    %18 = arith.cmpi ne, %16, %17 : vector<64x1xi32>
    %c0_i32_12 = arith.constant 0 : i32
    %19 = vector.broadcast %c0_i32_12 : i32 to vector<64x1xi32>
    %20 = arith.cmpi slt, %16, %19 : vector<64x1xi32>
    %c0_i32_13 = arith.constant 0 : i32
    %21 = arith.cmpi slt, %14, %c0_i32_13 : i32
    %22 = vector.broadcast %21 : i1 to vector<64x1xi1>
    %23 = vector.broadcast %22 : vector<64x1xi1> to vector<64x1xi1>
    %24 = arith.xori %20, %23 : vector<64x1xi1>
    %25 = arith.andi %24, %18 : vector<64x1xi1>
    %26 = vector.broadcast %14 : i32 to vector<64x1xi32>
    %27 = arith.addi %16, %26 : vector<64x1xi32>
    %28 = arith.select %25, %27, %16 : vector<64x1xi1>, vector<64x1xi32>
    %cst_14 = arith.constant 0.000000e+00 : f32
    %29 = vector.broadcast %cst_14 : f32 to vector<64x96xf32>
    %c0_15 = arith.constant 0 : index
    %c0_16 = arith.constant 0 : index
    %30 = vector.load %arg5[%c0_15, %c0_16] : memref<1x96xf32, #tpu.memory_space<vmem>>, vector<1x96xf32>
    %31 = vector.broadcast %30 : vector<1x96xf32> to vector<64x96xf32>
    %32 = arith.addf %29, %31 : vector<64x96xf32>
    %c0_17 = arith.constant 0 : index
    %c0_18 = arith.constant 0 : index
    %33 = vector.load %arg11[%c0_17, %c0_18] : memref<82x96xf32, #tpu.memory_space<vmem>>, vector<64x96xf32>
    %c0_i32_19 = arith.constant 0 : i32
    %34 = vector.broadcast %c0_i32_19 : i32 to vector<64x1xi32>
    %35 = arith.cmpi ne, %28, %34 : vector<64x1xi32>
    %cst_20 = arith.constant 0.000000e+00 : f32
    %36 = vector.shape_cast %35 : vector<64x1xi1> to vector<64x1xi1>
    %37 = vector.broadcast %36 : vector<64x1xi1> to vector<64x96xi1>
    %38 = vector.broadcast %cst_20 : f32 to vector<64x96xf32>
    %39 = arith.select %37, %33, %38 : vector<64x96xi1>, vector<64x96xf32>
    %40 = arith.truncf %39 : vector<64x96xf32> to vector<64x96xbf16>
    %c0_21 = arith.constant 0 : index
    %c0_22 = arith.constant 0 : index
    %c0_23 = arith.constant 0 : index
    %41 = vector.load %arg4[%c0_21, %c0_22, %c0_23] : memref<9x96x96xbf16, #tpu.memory_space<vmem>>, vector<1x96x96xbf16>
    %42 = vector.shape_cast %41 : vector<1x96x96xbf16> to vector<96x96xbf16>
    %cst_24 = arith.constant dense<0.000000e+00> : vector<64x96xf32>
    %43 = tpu.matmul %40, %42, %cst_24 {dimension_numbers = #tpu.dot_dimension_numbers<[1], [0], [0], [1], [0, 0, 1, 1], [], []>} : vector<64x96xbf16>, vector<96x96xbf16>, vector<64x96xf32> -> vector<64x96xf32>
    %44 = arith.addf %32, %43 : vector<64x96xf32>
    %c1 = arith.constant 1 : index
    %c0_25 = arith.constant 0 : index
    %45 = vector.load %arg11[%c1, %c0_25] : memref<82x96xf32, #tpu.memory_space<vmem>>, vector<64x96xf32>
    %46 = arith.truncf %45 : vector<64x96xf32> to vector<64x96xbf16>
    %c1_26 = arith.constant 1 : index
    %c0_27 = arith.constant 0 : index
    %c0_28 = arith.constant 0 : index
    %47 = vector.load %arg4[%c1_26, %c0_27, %c0_28] : memref<9x96x96xbf16, #tpu.memory_space<vmem>>, vector<1x96x96xbf16>
    %48 = vector.shape_cast %47 : vector<1x96x96xbf16> to vector<96x96xbf16>
    %cst_29 = arith.constant dense<0.000000e+00> : vector<64x96xf32>
    %49 = tpu.matmul %46, %48, %cst_29 {dimension_numbers = #tpu.dot_dimension_numbers<[1], [0], [0], [1], [0, 0, 1, 1], [], []>} : vector<64x96xbf16>, vector<96x96xbf16>, vector<64x96xf32> -> vector<64x96xf32>
    %50 = arith.addf %44, %49 : vector<64x96xf32>
    %c2 = arith.constant 2 : index
    %c0_30 = arith.constant 0 : index
    %51 = vector.load %arg11[%c2, %c0_30] : memref<82x96xf32, #tpu.memory_space<vmem>>, vector<64x96xf32>
    %c7_i32 = arith.constant 7 : i32
    %52 = vector.broadcast %c7_i32 : i32 to vector<64x1xi32>
    %53 = arith.cmpi ne, %28, %52 : vector<64x1xi32>
    %cst_31 = arith.constant 0.000000e+00 : f32
    %54 = vector.shape_cast %53 : vector<64x1xi1> to vector<64x1xi1>
    %55 = vector.broadcast %54 : vector<64x1xi1> to vector<64x96xi1>
    %56 = vector.broadcast %cst_31 : f32 to vector<64x96xf32>
    %57 = arith.select %55, %51, %56 : vector<64x96xi1>, vector<64x96xf32>
    %58 = arith.truncf %57 : vector<64x96xf32> to vector<64x96xbf16>
    %c2_32 = arith.constant 2 : index
    %c0_33 = arith.constant 0 : index
    %c0_34 = arith.constant 0 : index
    %59 = vector.load %arg4[%c2_32, %c0_33, %c0_34] : memref<9x96x96xbf16, #tpu.memory_space<vmem>>, vector<1x96x96xbf16>
    %60 = vector.shape_cast %59 : vector<1x96x96xbf16> to vector<96x96xbf16>
    %cst_35 = arith.constant dense<0.000000e+00> : vector<64x96xf32>
    %61 = tpu.matmul %58, %60, %cst_35 {dimension_numbers = #tpu.dot_dimension_numbers<[1], [0], [0], [1], [0, 0, 1, 1], [], []>} : vector<64x96xbf16>, vector<96x96xbf16>, vector<64x96xf32> -> vector<64x96xf32>
    %62 = arith.addf %50, %61 : vector<64x96xf32>
    %c8 = arith.constant 8 : index
    %c0_36 = arith.constant 0 : index
    %63 = vector.load %arg11[%c8, %c0_36] : memref<82x96xf32, #tpu.memory_space<vmem>>, vector<64x96xf32>
    %c0_i32_37 = arith.constant 0 : i32
    %64 = vector.broadcast %c0_i32_37 : i32 to vector<64x1xi32>
    %65 = arith.cmpi ne, %28, %64 : vector<64x1xi32>
    %cst_38 = arith.constant 0.000000e+00 : f32
    %66 = vector.shape_cast %65 : vector<64x1xi1> to vector<64x1xi1>
    %67 = vector.broadcast %66 : vector<64x1xi1> to vector<64x96xi1>
    %68 = vector.broadcast %cst_38 : f32 to vector<64x96xf32>
    %69 = arith.select %67, %63, %68 : vector<64x96xi1>, vector<64x96xf32>
    %70 = arith.truncf %69 : vector<64x96xf32> to vector<64x96xbf16>
    %c3 = arith.constant 3 : index
    %c0_39 = arith.constant 0 : index
    %c0_40 = arith.constant 0 : index
    %71 = vector.load %arg4[%c3, %c0_39, %c0_40] : memref<9x96x96xbf16, #tpu.memory_space<vmem>>, vector<1x96x96xbf16>
    %72 = vector.shape_cast %71 : vector<1x96x96xbf16> to vector<96x96xbf16>
    %cst_41 = arith.constant dense<0.000000e+00> : vector<64x96xf32>
    %73 = tpu.matmul %70, %72, %cst_41 {dimension_numbers = #tpu.dot_dimension_numbers<[1], [0], [0], [1], [0, 0, 1, 1], [], []>} : vector<64x96xbf16>, vector<96x96xbf16>, vector<64x96xf32> -> vector<64x96xf32>
    %74 = arith.addf %62, %73 : vector<64x96xf32>
    %c9_42 = arith.constant 9 : index
    %c0_43 = arith.constant 0 : index
    %75 = vector.load %arg11[%c9_42, %c0_43] : memref<82x96xf32, #tpu.memory_space<vmem>>, vector<64x96xf32>
    %76 = arith.truncf %75 : vector<64x96xf32> to vector<64x96xbf16>
    %c4 = arith.constant 4 : index
    %c0_44 = arith.constant 0 : index
    %c0_45 = arith.constant 0 : index
    %77 = vector.load %arg4[%c4, %c0_44, %c0_45] : memref<9x96x96xbf16, #tpu.memory_space<vmem>>, vector<1x96x96xbf16>
    %78 = vector.shape_cast %77 : vector<1x96x96xbf16> to vector<96x96xbf16>
    %cst_46 = arith.constant dense<0.000000e+00> : vector<64x96xf32>
    %79 = tpu.matmul %76, %78, %cst_46 {dimension_numbers = #tpu.dot_dimension_numbers<[1], [0], [0], [1], [0, 0, 1, 1], [], []>} : vector<64x96xbf16>, vector<96x96xbf16>, vector<64x96xf32> -> vector<64x96xf32>
    %80 = arith.addf %74, %79 : vector<64x96xf32>
    %c10 = arith.constant 10 : index
    %c0_47 = arith.constant 0 : index
    %81 = vector.load %arg11[%c10, %c0_47] : memref<82x96xf32, #tpu.memory_space<vmem>>, vector<64x96xf32>
    %c7_i32_48 = arith.constant 7 : i32
    %82 = vector.broadcast %c7_i32_48 : i32 to vector<64x1xi32>
    %83 = arith.cmpi ne, %28, %82 : vector<64x1xi32>
    %cst_49 = arith.constant 0.000000e+00 : f32
    %84 = vector.shape_cast %83 : vector<64x1xi1> to vector<64x1xi1>
    %85 = vector.broadcast %84 : vector<64x1xi1> to vector<64x96xi1>
    %86 = vector.broadcast %cst_49 : f32 to vector<64x96xf32>
    %87 = arith.select %85, %81, %86 : vector<64x96xi1>, vector<64x96xf32>
    %88 = arith.truncf %87 : vector<64x96xf32> to vector<64x96xbf16>
    %c5 = arith.constant 5 : index
    %c0_50 = arith.constant 0 : index
    %c0_51 = arith.constant 0 : index
    %89 = vector.load %arg4[%c5, %c0_50, %c0_51] : memref<9x96x96xbf16, #tpu.memory_space<vmem>>, vector<1x96x96xbf16>
    %90 = vector.shape_cast %89 : vector<1x96x96xbf16> to vector<96x96xbf16>
    %cst_52 = arith.constant dense<0.000000e+00> : vector<64x96xf32>
    %91 = tpu.matmul %88, %90, %cst_52 {dimension_numbers = #tpu.dot_dimension_numbers<[1], [0], [0], [1], [0, 0, 1, 1], [], []>} : vector<64x96xbf16>, vector<96x96xbf16>, vector<64x96xf32> -> vector<64x96xf32>
    %92 = arith.addf %80, %91 : vector<64x96xf32>
    %c16 = arith.constant 16 : index
    %c0_53 = arith.constant 0 : index
    %93 = vector.load %arg11[%c16, %c0_53] : memref<82x96xf32, #tpu.memory_space<vmem>>, vector<64x96xf32>
    %c0_i32_54 = arith.constant 0 : i32
    %94 = vector.broadcast %c0_i32_54 : i32 to vector<64x1xi32>
    %95 = arith.cmpi ne, %28, %94 : vector<64x1xi32>
    %cst_55 = arith.constant 0.000000e+00 : f32
    %96 = vector.shape_cast %95 : vector<64x1xi1> to vector<64x1xi1>
    %97 = vector.broadcast %96 : vector<64x1xi1> to vector<64x96xi1>
    %98 = vector.broadcast %cst_55 : f32 to vector<64x96xf32>
    %99 = arith.select %97, %93, %98 : vector<64x96xi1>, vector<64x96xf32>
    %100 = arith.truncf %99 : vector<64x96xf32> to vector<64x96xbf16>
    %c6 = arith.constant 6 : index
    %c0_56 = arith.constant 0 : index
    %c0_57 = arith.constant 0 : index
    %101 = vector.load %arg4[%c6, %c0_56, %c0_57] : memref<9x96x96xbf16, #tpu.memory_space<vmem>>, vector<1x96x96xbf16>
    %102 = vector.shape_cast %101 : vector<1x96x96xbf16> to vector<96x96xbf16>
    %cst_58 = arith.constant dense<0.000000e+00> : vector<64x96xf32>
    %103 = tpu.matmul %100, %102, %cst_58 {dimension_numbers = #tpu.dot_dimension_numbers<[1], [0], [0], [1], [0, 0, 1, 1], [], []>} : vector<64x96xbf16>, vector<96x96xbf16>, vector<64x96xf32> -> vector<64x96xf32>
    %104 = arith.addf %92, %103 : vector<64x96xf32>
    %c17 = arith.constant 17 : index
    %c0_59 = arith.constant 0 : index
    %105 = vector.load %arg11[%c17, %c0_59] : memref<82x96xf32, #tpu.memory_space<vmem>>, vector<64x96xf32>
    %106 = arith.truncf %105 : vector<64x96xf32> to vector<64x96xbf16>
    %c7 = arith.constant 7 : index
    %c0_60 = arith.constant 0 : index
    %c0_61 = arith.constant 0 : index
    %107 = vector.load %arg4[%c7, %c0_60, %c0_61] : memref<9x96x96xbf16, #tpu.memory_space<vmem>>, vector<1x96x96xbf16>
    %108 = vector.shape_cast %107 : vector<1x96x96xbf16> to vector<96x96xbf16>
    %cst_62 = arith.constant dense<0.000000e+00> : vector<64x96xf32>
    %109 = tpu.matmul %106, %108, %cst_62 {dimension_numbers = #tpu.dot_dimension_numbers<[1], [0], [0], [1], [0, 0, 1, 1], [], []>} : vector<64x96xbf16>, vector<96x96xbf16>, vector<64x96xf32> -> vector<64x96xf32>
    %110 = arith.addf %104, %109 : vector<64x96xf32>
    %c18 = arith.constant 18 : index
    %c0_63 = arith.constant 0 : index
    %111 = vector.load %arg11[%c18, %c0_63] : memref<82x96xf32, #tpu.memory_space<vmem>>, vector<64x96xf32>
    %c7_i32_64 = arith.constant 7 : i32
    %112 = vector.broadcast %c7_i32_64 : i32 to vector<64x1xi32>
    %113 = arith.cmpi ne, %28, %112 : vector<64x1xi32>
    %cst_65 = arith.constant 0.000000e+00 : f32
    %114 = vector.shape_cast %113 : vector<64x1xi1> to vector<64x1xi1>
    %115 = vector.broadcast %114 : vector<64x1xi1> to vector<64x96xi1>
    %116 = vector.broadcast %cst_65 : f32 to vector<64x96xf32>
    %117 = arith.select %115, %111, %116 : vector<64x96xi1>, vector<64x96xf32>
    %118 = arith.truncf %117 : vector<64x96xf32> to vector<64x96xbf16>
    %c8_66 = arith.constant 8 : index
    %c0_67 = arith.constant 0 : index
    %c0_68 = arith.constant 0 : index
    %119 = vector.load %arg4[%c8_66, %c0_67, %c0_68] : memref<9x96x96xbf16, #tpu.memory_space<vmem>>, vector<1x96x96xbf16>
    %120 = vector.shape_cast %119 : vector<1x96x96xbf16> to vector<96x96xbf16>
    %cst_69 = arith.constant dense<0.000000e+00> : vector<64x96xf32>
    %121 = tpu.matmul %118, %120, %cst_69 {dimension_numbers = #tpu.dot_dimension_numbers<[1], [0], [0], [1], [0, 0, 1, 1], [], []>} : vector<64x96xbf16>, vector<96x96xbf16>, vector<64x96xf32> -> vector<64x96xf32>
    %122 = arith.addf %110, %121 : vector<64x96xf32>
    %cst_70 = arith.constant 0.000000e+00 : f32
    %123 = vector.broadcast %cst_70 : f32 to vector<64x96xf32>
    %124 = arith.maximumf %122, %123 : vector<64x96xf32>
    %125 = arith.truncf %124 : vector<64x96xf32> to vector<64x96xbf16>
    %c0_71 = arith.constant 0 : index
    %c0_72 = arith.constant 0 : index
    %126 = vector.load %arg6[%c0_71, %c0_72] : memref<96x272xbf16, #tpu.memory_space<vmem>>, vector<96x272xbf16>
    %cst_73 = arith.constant dense<0.000000e+00> : vector<64x272xf32>
    %127 = tpu.matmul %125, %126, %cst_73 {dimension_numbers = #tpu.dot_dimension_numbers<[1], [0], [0], [1], [0, 0, 1, 1], [], []>} : vector<64x96xbf16>, vector<96x272xbf16>, vector<64x272xf32> -> vector<64x272xf32>
    %c0_74 = arith.constant 0 : index
    %c0_75 = arith.constant 0 : index
    %128 = vector.load %arg7[%c0_74, %c0_75] : memref<1x272xf32, #tpu.memory_space<vmem>>, vector<1x272xf32>
    %129 = vector.broadcast %128 : vector<1x272xf32> to vector<64x272xf32>
    %130 = arith.addf %127, %129 : vector<64x272xf32>
    %c0_76 = arith.constant 0 : index
    %c0_77 = arith.constant 0 : index
    %131 = vector.load %arg8[%c0_76, %c0_77] : memref<64x272xbf16, #tpu.memory_space<vmem>>, vector<64x272xbf16>
    %cst_78 = arith.constant dense<0.000000e+00> : vector<64x272xf32>
    %132 = tpu.matmul %1, %131, %cst_78 {dimension_numbers = #tpu.dot_dimension_numbers<[1], [0], [0], [1], [0, 0, 1, 1], [], []>} : vector<64x64xbf16>, vector<64x272xbf16>, vector<64x272xf32> -> vector<64x272xf32>
    %c0_79 = arith.constant 0 : index
    %c0_80 = arith.constant 0 : index
    %133 = vector.load %arg9[%c0_79, %c0_80] : memref<1x272xf32, #tpu.memory_space<vmem>>, vector<1x272xf32>
    %134 = vector.broadcast %133 : vector<1x272xf32> to vector<64x272xf32>
    %135 = arith.addf %132, %134 : vector<64x272xf32>
    %136 = vector.extract_strided_slice %135 {offsets = [0, 0], sizes = [64, 256], strides = [1, 1]} : vector<64x272xf32> to vector<64x256xf32>
    %137 = vector.extract_strided_slice %130 {offsets = [0, 0], sizes = [64, 256], strides = [1, 1]} : vector<64x272xf32> to vector<64x256xf32>
    %138 = arith.addf %136, %137 : vector<64x256xf32>
    %139 = vector.extract_strided_slice %135 {offsets = [0, 256], sizes = [64, 16], strides = [1, 1]} : vector<64x272xf32> to vector<64x16xf32>
    %140 = vector.extract_strided_slice %130 {offsets = [0, 256], sizes = [64, 16], strides = [1, 1]} : vector<64x272xf32> to vector<64x16xf32>
    %141 = tpu.concatenate %138, %139, %140 in 1 : vector<64x256xf32>, vector<64x16xf32>, vector<64x16xf32> -> vector<64x288xf32>
    %cst_81 = arith.constant 0.000000e+00 : f32
    %142 = vector.broadcast %cst_81 : f32 to vector<64x288xf32>
    %143 = arith.maximumf %141, %142 : vector<64x288xf32>
    %144 = arith.truncf %143 : vector<64x288xf32> to vector<64x288xbf16>
    %c0_82 = arith.constant 0 : index
    %c0_83 = arith.constant 0 : index
    %c0_84 = arith.constant 0 : index
    %145 = vector.load %arg10[%c0_82, %c0_83, %c0_84] : memref<1x64x288xbf16, #tpu.memory_space<vmem>>, vector<1x64x288xbf16>
    %146 = vector.shape_cast %145 : vector<1x64x288xbf16> to vector<64x288xbf16>
    %147 = vector.shape_cast %144 : vector<64x288xbf16> to vector<1x64x288xbf16>
    tpu.vector_store %arg10[%c0_82, %c0_83, %c0_84], %147 {strides = array<i32>} : memref<1x64x288xbf16, #tpu.memory_space<vmem>>, vector<1x64x288xbf16>,
    return
  }
  func.func @transform_0(%arg0: i32) -> (i32, i32, i32) {
    %c0_i32 = arith.constant 0 : i32
    %c0_i32_0 = arith.constant 0 : i32
    %c0_i32_1 = arith.constant 0 : i32
    return %arg0, %c0_i32, %c0_i32_0 : i32, i32, i32
  }
  func.func @transform_1(%arg0: i32) -> (i32, i32) {
    %c0_i32 = arith.constant 0 : i32
    %c0_i32_0 = arith.constant 0 : i32
    %c0_i32_1 = arith.constant 0 : i32
    return %c0_i32, %c0_i32_0 : i32, i32
  }
  func.func @transform_2(%arg0: i32) -> (i32, i32) {
    %c0_i32 = arith.constant 0 : i32
    %c0_i32_0 = arith.constant 0 : i32
    %c0_i32_1 = arith.constant 0 : i32
    return %c0_i32, %c0_i32_0 : i32, i32
  }
  func.func @transform_3(%arg0: i32) -> (i32, i32, i32) {
    %c0_i32 = arith.constant 0 : i32
    %c0_i32_0 = arith.constant 0 : i32
    %c0_i32_1 = arith.constant 0 : i32
    %c0_i32_2 = arith.constant 0 : i32
    return %c0_i32, %c0_i32_0, %c0_i32_1 : i32, i32, i32
  }
  func.func @transform_4(%arg0: i32) -> (i32, i32) {
    %c0_i32 = arith.constant 0 : i32
    %c0_i32_0 = arith.constant 0 : i32
    %c0_i32_1 = arith.constant 0 : i32
    return %c0_i32, %c0_i32_0 : i32, i32
  }
  func.func @transform_5(%arg0: i32) -> (i32, i32) {
    %c0_i32 = arith.constant 0 : i32
    %c0_i32_0 = arith.constant 0 : i32
    %c0_i32_1 = arith.constant 0 : i32
    return %c0_i32, %c0_i32_0 : i32, i32
  }
  func.func @transform_6(%arg0: i32) -> (i32, i32) {
    %c0_i32 = arith.constant 0 : i32
    %c0_i32_0 = arith.constant 0 : i32
    %c0_i32_1 = arith.constant 0 : i32
    return %c0_i32, %c0_i32_0 : i32, i32
  }
  func.func @transform_7(%arg0: i32) -> (i32, i32) {
    %c0_i32 = arith.constant 0 : i32
    %c0_i32_0 = arith.constant 0 : i32
    %c0_i32_1 = arith.constant 0 : i32
    return %c0_i32, %c0_i32_0 : i32, i32
  }
  func.func @transform_8(%arg0: i32) -> (i32, i32) {
    %c0_i32 = arith.constant 0 : i32
    %c0_i32_0 = arith.constant 0 : i32
    %c0_i32_1 = arith.constant 0 : i32
    return %c0_i32, %c0_i32_0 : i32, i32
  }
  func.func @transform_9(%arg0: i32) -> (i32, i32, i32) {
    %c0_i32 = arith.constant 0 : i32
    %c0_i32_0 = arith.constant 0 : i32
    %c0_i32_1 = arith.constant 0 : i32
    return %arg0, %c0_i32, %c0_i32_0 : i32, i32, i32
  }
}

module attributes {stable_mosaic.version = 11 : i64} {
  func.func @_bottleneck_kernel(%arg0: i32, %arg1: memref<1x64x288xbf16, #tpu.memory_space<vmem>>, %arg2: memref<288x96xbf16, #tpu.memory_space<vmem>>, %arg3: memref<1x96xf32, #tpu.memory_space<vmem>>, %arg4: memref<9x96x96xbf16, #tpu.memory_space<vmem>>, %arg5: memref<1x96xf32, #tpu.memory_space<vmem>>, %arg6: memref<96x272xbf16, #tpu.memory_space<vmem>>, %arg7: memref<1x272xf32, #tpu.memory_space<vmem>>, %arg8: memref<1x64x304xbf16, #tpu.memory_space<vmem>>, %arg9: memref<82x96xf32, #tpu.memory_space<vmem>>) attributes {dimension_semantics = [#tpu.dimension_semantics<parallel>], iteration_bounds = array<i64: 2>, scalar_prefetch = 0 : i64, scratch_operands = 1 : i64, tpu.core_type = #tpu.core_type<tc>, window_params = [{transform_indices = @transform_0, window_bounds = array<i64: 1, 64, 288>}, {pipeline_mode = #tpu.pipeline_mode<synchronous>, transform_indices = @transform_1, window_bounds = array<i64: 288, 96>}, {pipeline_mode = #tpu.pipeline_mode<synchronous>, transform_indices = @transform_2, window_bounds = array<i64: 1, 96>}, {pipeline_mode = #tpu.pipeline_mode<synchronous>, transform_indices = @transform_3, window_bounds = array<i64: 9, 96, 96>}, {pipeline_mode = #tpu.pipeline_mode<synchronous>, transform_indices = @transform_4, window_bounds = array<i64: 1, 96>}, {pipeline_mode = #tpu.pipeline_mode<synchronous>, transform_indices = @transform_5, window_bounds = array<i64: 96, 272>}, {pipeline_mode = #tpu.pipeline_mode<synchronous>, transform_indices = @transform_6, window_bounds = array<i64: 1, 272>}, {transform_indices = @transform_7, window_bounds = array<i64: 1, 64, 304>}]} {
    %c0 = arith.constant 0 : index
    %c0_0 = arith.constant 0 : index
    %c0_1 = arith.constant 0 : index
    %0 = vector.load %arg1[%c0, %c0_0, %c0_1] : memref<1x64x288xbf16, #tpu.memory_space<vmem>>, vector<1x64x288xbf16>
    %1 = vector.shape_cast %0 : vector<1x64x288xbf16> to vector<64x288xbf16>
    %c0_2 = arith.constant 0 : index
    %c0_3 = arith.constant 0 : index
    %2 = vector.load %arg2[%c0_2, %c0_3] : memref<288x96xbf16, #tpu.memory_space<vmem>>, vector<288x96xbf16>
    %cst = arith.constant dense<0.000000e+00> : vector<64x96xf32>
    %3 = tpu.matmul %1, %2, %cst {dimension_numbers = #tpu.dot_dimension_numbers<[1], [0], [0], [1], [0, 0, 1, 1], [], []>} : vector<64x288xbf16>, vector<288x96xbf16>, vector<64x96xf32> -> vector<64x96xf32>
    %c0_4 = arith.constant 0 : index
    %c0_5 = arith.constant 0 : index
    %4 = vector.load %arg3[%c0_4, %c0_5] : memref<1x96xf32, #tpu.memory_space<vmem>>, vector<1x96xf32>
    %5 = vector.broadcast %4 : vector<1x96xf32> to vector<64x96xf32>
    %6 = arith.addf %3, %5 : vector<64x96xf32>
    %cst_6 = arith.constant 0.000000e+00 : f32
    %7 = vector.broadcast %cst_6 : f32 to vector<64x96xf32>
    %8 = arith.maximumf %6, %7 : vector<64x96xf32>
    %cst_7 = arith.constant 0.000000e+00 : f32
    %9 = vector.broadcast %cst_7 : f32 to vector<82x96xf32>
    %c0_8 = arith.constant 0 : index
    %c0_9 = arith.constant 0 : index
    %10 = vector.load %arg9[%c0_8, %c0_9] : memref<82x96xf32, #tpu.memory_space<vmem>>, vector<82x96xf32>
    tpu.vector_store %arg9[%c0_8, %c0_9], %9 {strides = array<i32>} : memref<82x96xf32, #tpu.memory_space<vmem>>, vector<82x96xf32>,
    %c9 = arith.constant 9 : index
    %c0_10 = arith.constant 0 : index
    %11 = vector.load %arg9[%c9, %c0_10] : memref<82x96xf32, #tpu.memory_space<vmem>>, vector<64x96xf32>
    tpu.vector_store %arg9[%c9, %c0_10], %8 {strides = array<i32>} : memref<82x96xf32, #tpu.memory_space<vmem>>, vector<64x96xf32>,
    %12 = tpu.iota {dimensions = array<i32: 0>} : vector<64x1xi32>
    %c8_i32 = arith.constant 8 : i32
    %c0_i32 = arith.constant 0 : i32
    %13 = arith.cmpi eq, %c8_i32, %c0_i32 : i32
    %c1_i32 = arith.constant 1 : i32
    %14 = arith.select %13, %c1_i32, %c8_i32 : i32
    %15 = vector.broadcast %14 : i32 to vector<64x1xi32>
    %16 = arith.remsi %12, %15 : vector<64x1xi32>
    %c0_i32_11 = arith.constant 0 : i32
    %17 = vector.broadcast %c0_i32_11 : i32 to vector<64x1xi32>
    %18 = arith.cmpi ne, %16, %17 : vector<64x1xi32>
    %c0_i32_12 = arith.constant 0 : i32
    %19 = vector.broadcast %c0_i32_12 : i32 to vector<64x1xi32>
    %20 = arith.cmpi slt, %16, %19 : vector<64x1xi32>
    %c0_i32_13 = arith.constant 0 : i32
    %21 = arith.cmpi slt, %14, %c0_i32_13 : i32
    %22 = vector.broadcast %21 : i1 to vector<64x1xi1>
    %23 = vector.broadcast %22 : vector<64x1xi1> to vector<64x1xi1>
    %24 = arith.xori %20, %23 : vector<64x1xi1>
    %25 = arith.andi %24, %18 : vector<64x1xi1>
    %26 = vector.broadcast %14 : i32 to vector<64x1xi32>
    %27 = arith.addi %16, %26 : vector<64x1xi32>
    %28 = arith.select %25, %27, %16 : vector<64x1xi1>, vector<64x1xi32>
    %cst_14 = arith.constant 0.000000e+00 : f32
    %29 = vector.broadcast %cst_14 : f32 to vector<64x96xf32>
    %c0_15 = arith.constant 0 : index
    %c0_16 = arith.constant 0 : index
    %30 = vector.load %arg5[%c0_15, %c0_16] : memref<1x96xf32, #tpu.memory_space<vmem>>, vector<1x96xf32>
    %31 = vector.broadcast %30 : vector<1x96xf32> to vector<64x96xf32>
    %32 = arith.addf %29, %31 : vector<64x96xf32>
    %c0_17 = arith.constant 0 : index
    %c0_18 = arith.constant 0 : index
    %33 = vector.load %arg9[%c0_17, %c0_18] : memref<82x96xf32, #tpu.memory_space<vmem>>, vector<64x96xf32>
    %c0_i32_19 = arith.constant 0 : i32
    %34 = vector.broadcast %c0_i32_19 : i32 to vector<64x1xi32>
    %35 = arith.cmpi ne, %28, %34 : vector<64x1xi32>
    %cst_20 = arith.constant 0.000000e+00 : f32
    %36 = vector.shape_cast %35 : vector<64x1xi1> to vector<64x1xi1>
    %37 = vector.broadcast %36 : vector<64x1xi1> to vector<64x96xi1>
    %38 = vector.broadcast %cst_20 : f32 to vector<64x96xf32>
    %39 = arith.select %37, %33, %38 : vector<64x96xi1>, vector<64x96xf32>
    %40 = arith.truncf %39 : vector<64x96xf32> to vector<64x96xbf16>
    %c0_21 = arith.constant 0 : index
    %c0_22 = arith.constant 0 : index
    %c0_23 = arith.constant 0 : index
    %41 = vector.load %arg4[%c0_21, %c0_22, %c0_23] : memref<9x96x96xbf16, #tpu.memory_space<vmem>>, vector<1x96x96xbf16>
    %42 = vector.shape_cast %41 : vector<1x96x96xbf16> to vector<96x96xbf16>
    %cst_24 = arith.constant dense<0.000000e+00> : vector<64x96xf32>
    %43 = tpu.matmul %40, %42, %cst_24 {dimension_numbers = #tpu.dot_dimension_numbers<[1], [0], [0], [1], [0, 0, 1, 1], [], []>} : vector<64x96xbf16>, vector<96x96xbf16>, vector<64x96xf32> -> vector<64x96xf32>
    %44 = arith.addf %32, %43 : vector<64x96xf32>
    %c1 = arith.constant 1 : index
    %c0_25 = arith.constant 0 : index
    %45 = vector.load %arg9[%c1, %c0_25] : memref<82x96xf32, #tpu.memory_space<vmem>>, vector<64x96xf32>
    %46 = arith.truncf %45 : vector<64x96xf32> to vector<64x96xbf16>
    %c1_26 = arith.constant 1 : index
    %c0_27 = arith.constant 0 : index
    %c0_28 = arith.constant 0 : index
    %47 = vector.load %arg4[%c1_26, %c0_27, %c0_28] : memref<9x96x96xbf16, #tpu.memory_space<vmem>>, vector<1x96x96xbf16>
    %48 = vector.shape_cast %47 : vector<1x96x96xbf16> to vector<96x96xbf16>
    %cst_29 = arith.constant dense<0.000000e+00> : vector<64x96xf32>
    %49 = tpu.matmul %46, %48, %cst_29 {dimension_numbers = #tpu.dot_dimension_numbers<[1], [0], [0], [1], [0, 0, 1, 1], [], []>} : vector<64x96xbf16>, vector<96x96xbf16>, vector<64x96xf32> -> vector<64x96xf32>
    %50 = arith.addf %44, %49 : vector<64x96xf32>
    %c2 = arith.constant 2 : index
    %c0_30 = arith.constant 0 : index
    %51 = vector.load %arg9[%c2, %c0_30] : memref<82x96xf32, #tpu.memory_space<vmem>>, vector<64x96xf32>
    %c7_i32 = arith.constant 7 : i32
    %52 = vector.broadcast %c7_i32 : i32 to vector<64x1xi32>
    %53 = arith.cmpi ne, %28, %52 : vector<64x1xi32>
    %cst_31 = arith.constant 0.000000e+00 : f32
    %54 = vector.shape_cast %53 : vector<64x1xi1> to vector<64x1xi1>
    %55 = vector.broadcast %54 : vector<64x1xi1> to vector<64x96xi1>
    %56 = vector.broadcast %cst_31 : f32 to vector<64x96xf32>
    %57 = arith.select %55, %51, %56 : vector<64x96xi1>, vector<64x96xf32>
    %58 = arith.truncf %57 : vector<64x96xf32> to vector<64x96xbf16>
    %c2_32 = arith.constant 2 : index
    %c0_33 = arith.constant 0 : index
    %c0_34 = arith.constant 0 : index
    %59 = vector.load %arg4[%c2_32, %c0_33, %c0_34] : memref<9x96x96xbf16, #tpu.memory_space<vmem>>, vector<1x96x96xbf16>
    %60 = vector.shape_cast %59 : vector<1x96x96xbf16> to vector<96x96xbf16>
    %cst_35 = arith.constant dense<0.000000e+00> : vector<64x96xf32>
    %61 = tpu.matmul %58, %60, %cst_35 {dimension_numbers = #tpu.dot_dimension_numbers<[1], [0], [0], [1], [0, 0, 1, 1], [], []>} : vector<64x96xbf16>, vector<96x96xbf16>, vector<64x96xf32> -> vector<64x96xf32>
    %62 = arith.addf %50, %61 : vector<64x96xf32>
    %c8 = arith.constant 8 : index
    %c0_36 = arith.constant 0 : index
    %63 = vector.load %arg9[%c8, %c0_36] : memref<82x96xf32, #tpu.memory_space<vmem>>, vector<64x96xf32>
    %c0_i32_37 = arith.constant 0 : i32
    %64 = vector.broadcast %c0_i32_37 : i32 to vector<64x1xi32>
    %65 = arith.cmpi ne, %28, %64 : vector<64x1xi32>
    %cst_38 = arith.constant 0.000000e+00 : f32
    %66 = vector.shape_cast %65 : vector<64x1xi1> to vector<64x1xi1>
    %67 = vector.broadcast %66 : vector<64x1xi1> to vector<64x96xi1>
    %68 = vector.broadcast %cst_38 : f32 to vector<64x96xf32>
    %69 = arith.select %67, %63, %68 : vector<64x96xi1>, vector<64x96xf32>
    %70 = arith.truncf %69 : vector<64x96xf32> to vector<64x96xbf16>
    %c3 = arith.constant 3 : index
    %c0_39 = arith.constant 0 : index
    %c0_40 = arith.constant 0 : index
    %71 = vector.load %arg4[%c3, %c0_39, %c0_40] : memref<9x96x96xbf16, #tpu.memory_space<vmem>>, vector<1x96x96xbf16>
    %72 = vector.shape_cast %71 : vector<1x96x96xbf16> to vector<96x96xbf16>
    %cst_41 = arith.constant dense<0.000000e+00> : vector<64x96xf32>
    %73 = tpu.matmul %70, %72, %cst_41 {dimension_numbers = #tpu.dot_dimension_numbers<[1], [0], [0], [1], [0, 0, 1, 1], [], []>} : vector<64x96xbf16>, vector<96x96xbf16>, vector<64x96xf32> -> vector<64x96xf32>
    %74 = arith.addf %62, %73 : vector<64x96xf32>
    %c9_42 = arith.constant 9 : index
    %c0_43 = arith.constant 0 : index
    %75 = vector.load %arg9[%c9_42, %c0_43] : memref<82x96xf32, #tpu.memory_space<vmem>>, vector<64x96xf32>
    %76 = arith.truncf %75 : vector<64x96xf32> to vector<64x96xbf16>
    %c4 = arith.constant 4 : index
    %c0_44 = arith.constant 0 : index
    %c0_45 = arith.constant 0 : index
    %77 = vector.load %arg4[%c4, %c0_44, %c0_45] : memref<9x96x96xbf16, #tpu.memory_space<vmem>>, vector<1x96x96xbf16>
    %78 = vector.shape_cast %77 : vector<1x96x96xbf16> to vector<96x96xbf16>
    %cst_46 = arith.constant dense<0.000000e+00> : vector<64x96xf32>
    %79 = tpu.matmul %76, %78, %cst_46 {dimension_numbers = #tpu.dot_dimension_numbers<[1], [0], [0], [1], [0, 0, 1, 1], [], []>} : vector<64x96xbf16>, vector<96x96xbf16>, vector<64x96xf32> -> vector<64x96xf32>
    %80 = arith.addf %74, %79 : vector<64x96xf32>
    %c10 = arith.constant 10 : index
    %c0_47 = arith.constant 0 : index
    %81 = vector.load %arg9[%c10, %c0_47] : memref<82x96xf32, #tpu.memory_space<vmem>>, vector<64x96xf32>
    %c7_i32_48 = arith.constant 7 : i32
    %82 = vector.broadcast %c7_i32_48 : i32 to vector<64x1xi32>
    %83 = arith.cmpi ne, %28, %82 : vector<64x1xi32>
    %cst_49 = arith.constant 0.000000e+00 : f32
    %84 = vector.shape_cast %83 : vector<64x1xi1> to vector<64x1xi1>
    %85 = vector.broadcast %84 : vector<64x1xi1> to vector<64x96xi1>
    %86 = vector.broadcast %cst_49 : f32 to vector<64x96xf32>
    %87 = arith.select %85, %81, %86 : vector<64x96xi1>, vector<64x96xf32>
    %88 = arith.truncf %87 : vector<64x96xf32> to vector<64x96xbf16>
    %c5 = arith.constant 5 : index
    %c0_50 = arith.constant 0 : index
    %c0_51 = arith.constant 0 : index
    %89 = vector.load %arg4[%c5, %c0_50, %c0_51] : memref<9x96x96xbf16, #tpu.memory_space<vmem>>, vector<1x96x96xbf16>
    %90 = vector.shape_cast %89 : vector<1x96x96xbf16> to vector<96x96xbf16>
    %cst_52 = arith.constant dense<0.000000e+00> : vector<64x96xf32>
    %91 = tpu.matmul %88, %90, %cst_52 {dimension_numbers = #tpu.dot_dimension_numbers<[1], [0], [0], [1], [0, 0, 1, 1], [], []>} : vector<64x96xbf16>, vector<96x96xbf16>, vector<64x96xf32> -> vector<64x96xf32>
    %92 = arith.addf %80, %91 : vector<64x96xf32>
    %c16 = arith.constant 16 : index
    %c0_53 = arith.constant 0 : index
    %93 = vector.load %arg9[%c16, %c0_53] : memref<82x96xf32, #tpu.memory_space<vmem>>, vector<64x96xf32>
    %c0_i32_54 = arith.constant 0 : i32
    %94 = vector.broadcast %c0_i32_54 : i32 to vector<64x1xi32>
    %95 = arith.cmpi ne, %28, %94 : vector<64x1xi32>
    %cst_55 = arith.constant 0.000000e+00 : f32
    %96 = vector.shape_cast %95 : vector<64x1xi1> to vector<64x1xi1>
    %97 = vector.broadcast %96 : vector<64x1xi1> to vector<64x96xi1>
    %98 = vector.broadcast %cst_55 : f32 to vector<64x96xf32>
    %99 = arith.select %97, %93, %98 : vector<64x96xi1>, vector<64x96xf32>
    %100 = arith.truncf %99 : vector<64x96xf32> to vector<64x96xbf16>
    %c6 = arith.constant 6 : index
    %c0_56 = arith.constant 0 : index
    %c0_57 = arith.constant 0 : index
    %101 = vector.load %arg4[%c6, %c0_56, %c0_57] : memref<9x96x96xbf16, #tpu.memory_space<vmem>>, vector<1x96x96xbf16>
    %102 = vector.shape_cast %101 : vector<1x96x96xbf16> to vector<96x96xbf16>
    %cst_58 = arith.constant dense<0.000000e+00> : vector<64x96xf32>
    %103 = tpu.matmul %100, %102, %cst_58 {dimension_numbers = #tpu.dot_dimension_numbers<[1], [0], [0], [1], [0, 0, 1, 1], [], []>} : vector<64x96xbf16>, vector<96x96xbf16>, vector<64x96xf32> -> vector<64x96xf32>
    %104 = arith.addf %92, %103 : vector<64x96xf32>
    %c17 = arith.constant 17 : index
    %c0_59 = arith.constant 0 : index
    %105 = vector.load %arg9[%c17, %c0_59] : memref<82x96xf32, #tpu.memory_space<vmem>>, vector<64x96xf32>
    %106 = arith.truncf %105 : vector<64x96xf32> to vector<64x96xbf16>
    %c7 = arith.constant 7 : index
    %c0_60 = arith.constant 0 : index
    %c0_61 = arith.constant 0 : index
    %107 = vector.load %arg4[%c7, %c0_60, %c0_61] : memref<9x96x96xbf16, #tpu.memory_space<vmem>>, vector<1x96x96xbf16>
    %108 = vector.shape_cast %107 : vector<1x96x96xbf16> to vector<96x96xbf16>
    %cst_62 = arith.constant dense<0.000000e+00> : vector<64x96xf32>
    %109 = tpu.matmul %106, %108, %cst_62 {dimension_numbers = #tpu.dot_dimension_numbers<[1], [0], [0], [1], [0, 0, 1, 1], [], []>} : vector<64x96xbf16>, vector<96x96xbf16>, vector<64x96xf32> -> vector<64x96xf32>
    %110 = arith.addf %104, %109 : vector<64x96xf32>
    %c18 = arith.constant 18 : index
    %c0_63 = arith.constant 0 : index
    %111 = vector.load %arg9[%c18, %c0_63] : memref<82x96xf32, #tpu.memory_space<vmem>>, vector<64x96xf32>
    %c7_i32_64 = arith.constant 7 : i32
    %112 = vector.broadcast %c7_i32_64 : i32 to vector<64x1xi32>
    %113 = arith.cmpi ne, %28, %112 : vector<64x1xi32>
    %cst_65 = arith.constant 0.000000e+00 : f32
    %114 = vector.shape_cast %113 : vector<64x1xi1> to vector<64x1xi1>
    %115 = vector.broadcast %114 : vector<64x1xi1> to vector<64x96xi1>
    %116 = vector.broadcast %cst_65 : f32 to vector<64x96xf32>
    %117 = arith.select %115, %111, %116 : vector<64x96xi1>, vector<64x96xf32>
    %118 = arith.truncf %117 : vector<64x96xf32> to vector<64x96xbf16>
    %c8_66 = arith.constant 8 : index
    %c0_67 = arith.constant 0 : index
    %c0_68 = arith.constant 0 : index
    %119 = vector.load %arg4[%c8_66, %c0_67, %c0_68] : memref<9x96x96xbf16, #tpu.memory_space<vmem>>, vector<1x96x96xbf16>
    %120 = vector.shape_cast %119 : vector<1x96x96xbf16> to vector<96x96xbf16>
    %cst_69 = arith.constant dense<0.000000e+00> : vector<64x96xf32>
    %121 = tpu.matmul %118, %120, %cst_69 {dimension_numbers = #tpu.dot_dimension_numbers<[1], [0], [0], [1], [0, 0, 1, 1], [], []>} : vector<64x96xbf16>, vector<96x96xbf16>, vector<64x96xf32> -> vector<64x96xf32>
    %122 = arith.addf %110, %121 : vector<64x96xf32>
    %cst_70 = arith.constant 0.000000e+00 : f32
    %123 = vector.broadcast %cst_70 : f32 to vector<64x96xf32>
    %124 = arith.maximumf %122, %123 : vector<64x96xf32>
    %125 = arith.truncf %124 : vector<64x96xf32> to vector<64x96xbf16>
    %c0_71 = arith.constant 0 : index
    %c0_72 = arith.constant 0 : index
    %126 = vector.load %arg6[%c0_71, %c0_72] : memref<96x272xbf16, #tpu.memory_space<vmem>>, vector<96x272xbf16>
    %cst_73 = arith.constant dense<0.000000e+00> : vector<64x272xf32>
    %127 = tpu.matmul %125, %126, %cst_73 {dimension_numbers = #tpu.dot_dimension_numbers<[1], [0], [0], [1], [0, 0, 1, 1], [], []>} : vector<64x96xbf16>, vector<96x272xbf16>, vector<64x272xf32> -> vector<64x272xf32>
    %c0_74 = arith.constant 0 : index
    %c0_75 = arith.constant 0 : index
    %128 = vector.load %arg7[%c0_74, %c0_75] : memref<1x272xf32, #tpu.memory_space<vmem>>, vector<1x272xf32>
    %129 = vector.broadcast %128 : vector<1x272xf32> to vector<64x272xf32>
    %130 = arith.addf %127, %129 : vector<64x272xf32>
    %131 = arith.extf %1 : vector<64x288xbf16> to vector<64x288xf32>
    %132 = vector.extract_strided_slice %131 {offsets = [0, 0], sizes = [64, 256], strides = [1, 1]} : vector<64x288xf32> to vector<64x256xf32>
    %133 = vector.extract_strided_slice %130 {offsets = [0, 0], sizes = [64, 256], strides = [1, 1]} : vector<64x272xf32> to vector<64x256xf32>
    %134 = arith.addf %132, %133 : vector<64x256xf32>
    %135 = vector.extract_strided_slice %131 {offsets = [0, 256], sizes = [64, 32], strides = [1, 1]} : vector<64x288xf32> to vector<64x32xf32>
    %136 = vector.extract_strided_slice %130 {offsets = [0, 256], sizes = [64, 16], strides = [1, 1]} : vector<64x272xf32> to vector<64x16xf32>
    %137 = tpu.concatenate %134, %135, %136 in 1 : vector<64x256xf32>, vector<64x32xf32>, vector<64x16xf32> -> vector<64x304xf32>
    %cst_76 = arith.constant 0.000000e+00 : f32
    %138 = vector.broadcast %cst_76 : f32 to vector<64x304xf32>
    %139 = arith.maximumf %137, %138 : vector<64x304xf32>
    %140 = arith.truncf %139 : vector<64x304xf32> to vector<64x304xbf16>
    %c0_77 = arith.constant 0 : index
    %c0_78 = arith.constant 0 : index
    %c0_79 = arith.constant 0 : index
    %141 = vector.load %arg8[%c0_77, %c0_78, %c0_79] : memref<1x64x304xbf16, #tpu.memory_space<vmem>>, vector<1x64x304xbf16>
    %142 = vector.shape_cast %141 : vector<1x64x304xbf16> to vector<64x304xbf16>
    %143 = vector.shape_cast %140 : vector<64x304xbf16> to vector<1x64x304xbf16>
    tpu.vector_store %arg8[%c0_77, %c0_78, %c0_79], %143 {strides = array<i32>} : memref<1x64x304xbf16, #tpu.memory_space<vmem>>, vector<1x64x304xbf16>,
    return
  }
  func.func @transform_0(%arg0: i32) -> (i32, i32, i32) {
    %c0_i32 = arith.constant 0 : i32
    %c0_i32_0 = arith.constant 0 : i32
    %c0_i32_1 = arith.constant 0 : i32
    return %arg0, %c0_i32, %c0_i32_0 : i32, i32, i32
  }
  func.func @transform_1(%arg0: i32) -> (i32, i32) {
    %c0_i32 = arith.constant 0 : i32
    %c0_i32_0 = arith.constant 0 : i32
    %c0_i32_1 = arith.constant 0 : i32
    return %c0_i32, %c0_i32_0 : i32, i32
  }
  func.func @transform_2(%arg0: i32) -> (i32, i32) {
    %c0_i32 = arith.constant 0 : i32
    %c0_i32_0 = arith.constant 0 : i32
    %c0_i32_1 = arith.constant 0 : i32
    return %c0_i32, %c0_i32_0 : i32, i32
  }
  func.func @transform_3(%arg0: i32) -> (i32, i32, i32) {
    %c0_i32 = arith.constant 0 : i32
    %c0_i32_0 = arith.constant 0 : i32
    %c0_i32_1 = arith.constant 0 : i32
    %c0_i32_2 = arith.constant 0 : i32
    return %c0_i32, %c0_i32_0, %c0_i32_1 : i32, i32, i32
  }
  func.func @transform_4(%arg0: i32) -> (i32, i32) {
    %c0_i32 = arith.constant 0 : i32
    %c0_i32_0 = arith.constant 0 : i32
    %c0_i32_1 = arith.constant 0 : i32
    return %c0_i32, %c0_i32_0 : i32, i32
  }
  func.func @transform_5(%arg0: i32) -> (i32, i32) {
    %c0_i32 = arith.constant 0 : i32
    %c0_i32_0 = arith.constant 0 : i32
    %c0_i32_1 = arith.constant 0 : i32
    return %c0_i32, %c0_i32_0 : i32, i32
  }
  func.func @transform_6(%arg0: i32) -> (i32, i32) {
    %c0_i32 = arith.constant 0 : i32
    %c0_i32_0 = arith.constant 0 : i32
    %c0_i32_1 = arith.constant 0 : i32
    return %c0_i32, %c0_i32_0 : i32, i32
  }
  func.func @transform_7(%arg0: i32) -> (i32, i32, i32) {
    %c0_i32 = arith.constant 0 : i32
    %c0_i32_0 = arith.constant 0 : i32
    %c0_i32_1 = arith.constant 0 : i32
    return %arg0, %c0_i32, %c0_i32_0 : i32, i32, i32
  }
}

module attributes {stable_mosaic.version = 11 : i64} {
  func.func @_bottleneck_kernel(%arg0: i32, %arg1: memref<1x64x304xbf16, #tpu.memory_space<vmem>>, %arg2: memref<304x192xbf16, #tpu.memory_space<vmem>>, %arg3: memref<1x192xf32, #tpu.memory_space<vmem>>, %arg4: memref<9x192x192xbf16, #tpu.memory_space<vmem>>, %arg5: memref<1x192xf32, #tpu.memory_space<vmem>>, %arg6: memref<192x544xbf16, #tpu.memory_space<vmem>>, %arg7: memref<1x544xf32, #tpu.memory_space<vmem>>, %arg8: memref<304x544xbf16, #tpu.memory_space<vmem>>, %arg9: memref<1x544xf32, #tpu.memory_space<vmem>>, %arg10: memref<1x64x576xbf16, #tpu.memory_space<vmem>>, %arg11: memref<82x192xf32, #tpu.memory_space<vmem>>) attributes {dimension_semantics = [#tpu.dimension_semantics<parallel>], iteration_bounds = array<i64: 2>, scalar_prefetch = 0 : i64, scratch_operands = 1 : i64, tpu.core_type = #tpu.core_type<tc>, window_params = [{transform_indices = @transform_0, window_bounds = array<i64: 1, 64, 304>}, {pipeline_mode = #tpu.pipeline_mode<synchronous>, transform_indices = @transform_1, window_bounds = array<i64: 304, 192>}, {pipeline_mode = #tpu.pipeline_mode<synchronous>, transform_indices = @transform_2, window_bounds = array<i64: 1, 192>}, {pipeline_mode = #tpu.pipeline_mode<synchronous>, transform_indices = @transform_3, window_bounds = array<i64: 9, 192, 192>}, {pipeline_mode = #tpu.pipeline_mode<synchronous>, transform_indices = @transform_4, window_bounds = array<i64: 1, 192>}, {pipeline_mode = #tpu.pipeline_mode<synchronous>, transform_indices = @transform_5, window_bounds = array<i64: 192, 544>}, {pipeline_mode = #tpu.pipeline_mode<synchronous>, transform_indices = @transform_6, window_bounds = array<i64: 1, 544>}, {pipeline_mode = #tpu.pipeline_mode<synchronous>, transform_indices = @transform_7, window_bounds = array<i64: 304, 544>}, {pipeline_mode = #tpu.pipeline_mode<synchronous>, transform_indices = @transform_8, window_bounds = array<i64: 1, 544>}, {transform_indices = @transform_9, window_bounds = array<i64: 1, 64, 576>}]} {
    %c0 = arith.constant 0 : index
    %c0_0 = arith.constant 0 : index
    %c0_1 = arith.constant 0 : index
    %0 = vector.load %arg1[%c0, %c0_0, %c0_1] : memref<1x64x304xbf16, #tpu.memory_space<vmem>>, vector<1x64x304xbf16>
    %1 = vector.shape_cast %0 : vector<1x64x304xbf16> to vector<64x304xbf16>
    %c0_2 = arith.constant 0 : index
    %c0_3 = arith.constant 0 : index
    %2 = vector.load %arg2[%c0_2, %c0_3] : memref<304x192xbf16, #tpu.memory_space<vmem>>, vector<304x192xbf16>
    %cst = arith.constant dense<0.000000e+00> : vector<64x192xf32>
    %3 = tpu.matmul %1, %2, %cst {dimension_numbers = #tpu.dot_dimension_numbers<[1], [0], [0], [1], [0, 0, 1, 1], [], []>} : vector<64x304xbf16>, vector<304x192xbf16>, vector<64x192xf32> -> vector<64x192xf32>
    %c0_4 = arith.constant 0 : index
    %c0_5 = arith.constant 0 : index
    %4 = vector.load %arg3[%c0_4, %c0_5] : memref<1x192xf32, #tpu.memory_space<vmem>>, vector<1x192xf32>
    %5 = vector.broadcast %4 : vector<1x192xf32> to vector<64x192xf32>
    %6 = arith.addf %3, %5 : vector<64x192xf32>
    %cst_6 = arith.constant 0.000000e+00 : f32
    %7 = vector.broadcast %cst_6 : f32 to vector<64x192xf32>
    %8 = arith.maximumf %6, %7 : vector<64x192xf32>
    %cst_7 = arith.constant 0.000000e+00 : f32
    %9 = vector.broadcast %cst_7 : f32 to vector<82x192xf32>
    %c0_8 = arith.constant 0 : index
    %c0_9 = arith.constant 0 : index
    %10 = vector.load %arg11[%c0_8, %c0_9] : memref<82x192xf32, #tpu.memory_space<vmem>>, vector<82x192xf32>
    tpu.vector_store %arg11[%c0_8, %c0_9], %9 {strides = array<i32>} : memref<82x192xf32, #tpu.memory_space<vmem>>, vector<82x192xf32>,
    %c9 = arith.constant 9 : index
    %c0_10 = arith.constant 0 : index
    %11 = vector.load %arg11[%c9, %c0_10] : memref<82x192xf32, #tpu.memory_space<vmem>>, vector<64x192xf32>
    tpu.vector_store %arg11[%c9, %c0_10], %8 {strides = array<i32>} : memref<82x192xf32, #tpu.memory_space<vmem>>, vector<64x192xf32>,
    %12 = tpu.iota {dimensions = array<i32: 0>} : vector<64x1xi32>
    %c8_i32 = arith.constant 8 : i32
    %c0_i32 = arith.constant 0 : i32
    %13 = arith.cmpi eq, %c8_i32, %c0_i32 : i32
    %c1_i32 = arith.constant 1 : i32
    %14 = arith.select %13, %c1_i32, %c8_i32 : i32
    %15 = vector.broadcast %14 : i32 to vector<64x1xi32>
    %16 = arith.remsi %12, %15 : vector<64x1xi32>
    %c0_i32_11 = arith.constant 0 : i32
    %17 = vector.broadcast %c0_i32_11 : i32 to vector<64x1xi32>
    %18 = arith.cmpi ne, %16, %17 : vector<64x1xi32>
    %c0_i32_12 = arith.constant 0 : i32
    %19 = vector.broadcast %c0_i32_12 : i32 to vector<64x1xi32>
    %20 = arith.cmpi slt, %16, %19 : vector<64x1xi32>
    %c0_i32_13 = arith.constant 0 : i32
    %21 = arith.cmpi slt, %14, %c0_i32_13 : i32
    %22 = vector.broadcast %21 : i1 to vector<64x1xi1>
    %23 = vector.broadcast %22 : vector<64x1xi1> to vector<64x1xi1>
    %24 = arith.xori %20, %23 : vector<64x1xi1>
    %25 = arith.andi %24, %18 : vector<64x1xi1>
    %26 = vector.broadcast %14 : i32 to vector<64x1xi32>
    %27 = arith.addi %16, %26 : vector<64x1xi32>
    %28 = arith.select %25, %27, %16 : vector<64x1xi1>, vector<64x1xi32>
    %cst_14 = arith.constant 0.000000e+00 : f32
    %29 = vector.broadcast %cst_14 : f32 to vector<64x192xf32>
    %c0_15 = arith.constant 0 : index
    %c0_16 = arith.constant 0 : index
    %30 = vector.load %arg5[%c0_15, %c0_16] : memref<1x192xf32, #tpu.memory_space<vmem>>, vector<1x192xf32>
    %31 = vector.broadcast %30 : vector<1x192xf32> to vector<64x192xf32>
    %32 = arith.addf %29, %31 : vector<64x192xf32>
    %c0_17 = arith.constant 0 : index
    %c0_18 = arith.constant 0 : index
    %33 = vector.load %arg11[%c0_17, %c0_18] : memref<82x192xf32, #tpu.memory_space<vmem>>, vector<64x192xf32>
    %c0_i32_19 = arith.constant 0 : i32
    %34 = vector.broadcast %c0_i32_19 : i32 to vector<64x1xi32>
    %35 = arith.cmpi ne, %28, %34 : vector<64x1xi32>
    %cst_20 = arith.constant 0.000000e+00 : f32
    %36 = vector.shape_cast %35 : vector<64x1xi1> to vector<64x1xi1>
    %37 = vector.broadcast %36 : vector<64x1xi1> to vector<64x192xi1>
    %38 = vector.broadcast %cst_20 : f32 to vector<64x192xf32>
    %39 = arith.select %37, %33, %38 : vector<64x192xi1>, vector<64x192xf32>
    %40 = arith.truncf %39 : vector<64x192xf32> to vector<64x192xbf16>
    %c0_21 = arith.constant 0 : index
    %c0_22 = arith.constant 0 : index
    %c0_23 = arith.constant 0 : index
    %41 = vector.load %arg4[%c0_21, %c0_22, %c0_23] : memref<9x192x192xbf16, #tpu.memory_space<vmem>>, vector<1x192x192xbf16>
    %42 = vector.shape_cast %41 : vector<1x192x192xbf16> to vector<192x192xbf16>
    %cst_24 = arith.constant dense<0.000000e+00> : vector<64x192xf32>
    %43 = tpu.matmul %40, %42, %cst_24 {dimension_numbers = #tpu.dot_dimension_numbers<[1], [0], [0], [1], [0, 0, 1, 1], [], []>} : vector<64x192xbf16>, vector<192x192xbf16>, vector<64x192xf32> -> vector<64x192xf32>
    %44 = arith.addf %32, %43 : vector<64x192xf32>
    %c1 = arith.constant 1 : index
    %c0_25 = arith.constant 0 : index
    %45 = vector.load %arg11[%c1, %c0_25] : memref<82x192xf32, #tpu.memory_space<vmem>>, vector<64x192xf32>
    %46 = arith.truncf %45 : vector<64x192xf32> to vector<64x192xbf16>
    %c1_26 = arith.constant 1 : index
    %c0_27 = arith.constant 0 : index
    %c0_28 = arith.constant 0 : index
    %47 = vector.load %arg4[%c1_26, %c0_27, %c0_28] : memref<9x192x192xbf16, #tpu.memory_space<vmem>>, vector<1x192x192xbf16>
    %48 = vector.shape_cast %47 : vector<1x192x192xbf16> to vector<192x192xbf16>
    %cst_29 = arith.constant dense<0.000000e+00> : vector<64x192xf32>
    %49 = tpu.matmul %46, %48, %cst_29 {dimension_numbers = #tpu.dot_dimension_numbers<[1], [0], [0], [1], [0, 0, 1, 1], [], []>} : vector<64x192xbf16>, vector<192x192xbf16>, vector<64x192xf32> -> vector<64x192xf32>
    %50 = arith.addf %44, %49 : vector<64x192xf32>
    %c2 = arith.constant 2 : index
    %c0_30 = arith.constant 0 : index
    %51 = vector.load %arg11[%c2, %c0_30] : memref<82x192xf32, #tpu.memory_space<vmem>>, vector<64x192xf32>
    %c7_i32 = arith.constant 7 : i32
    %52 = vector.broadcast %c7_i32 : i32 to vector<64x1xi32>
    %53 = arith.cmpi ne, %28, %52 : vector<64x1xi32>
    %cst_31 = arith.constant 0.000000e+00 : f32
    %54 = vector.shape_cast %53 : vector<64x1xi1> to vector<64x1xi1>
    %55 = vector.broadcast %54 : vector<64x1xi1> to vector<64x192xi1>
    %56 = vector.broadcast %cst_31 : f32 to vector<64x192xf32>
    %57 = arith.select %55, %51, %56 : vector<64x192xi1>, vector<64x192xf32>
    %58 = arith.truncf %57 : vector<64x192xf32> to vector<64x192xbf16>
    %c2_32 = arith.constant 2 : index
    %c0_33 = arith.constant 0 : index
    %c0_34 = arith.constant 0 : index
    %59 = vector.load %arg4[%c2_32, %c0_33, %c0_34] : memref<9x192x192xbf16, #tpu.memory_space<vmem>>, vector<1x192x192xbf16>
    %60 = vector.shape_cast %59 : vector<1x192x192xbf16> to vector<192x192xbf16>
    %cst_35 = arith.constant dense<0.000000e+00> : vector<64x192xf32>
    %61 = tpu.matmul %58, %60, %cst_35 {dimension_numbers = #tpu.dot_dimension_numbers<[1], [0], [0], [1], [0, 0, 1, 1], [], []>} : vector<64x192xbf16>, vector<192x192xbf16>, vector<64x192xf32> -> vector<64x192xf32>
    %62 = arith.addf %50, %61 : vector<64x192xf32>
    %c8 = arith.constant 8 : index
    %c0_36 = arith.constant 0 : index
    %63 = vector.load %arg11[%c8, %c0_36] : memref<82x192xf32, #tpu.memory_space<vmem>>, vector<64x192xf32>
    %c0_i32_37 = arith.constant 0 : i32
    %64 = vector.broadcast %c0_i32_37 : i32 to vector<64x1xi32>
    %65 = arith.cmpi ne, %28, %64 : vector<64x1xi32>
    %cst_38 = arith.constant 0.000000e+00 : f32
    %66 = vector.shape_cast %65 : vector<64x1xi1> to vector<64x1xi1>
    %67 = vector.broadcast %66 : vector<64x1xi1> to vector<64x192xi1>
    %68 = vector.broadcast %cst_38 : f32 to vector<64x192xf32>
    %69 = arith.select %67, %63, %68 : vector<64x192xi1>, vector<64x192xf32>
    %70 = arith.truncf %69 : vector<64x192xf32> to vector<64x192xbf16>
    %c3 = arith.constant 3 : index
    %c0_39 = arith.constant 0 : index
    %c0_40 = arith.constant 0 : index
    %71 = vector.load %arg4[%c3, %c0_39, %c0_40] : memref<9x192x192xbf16, #tpu.memory_space<vmem>>, vector<1x192x192xbf16>
    %72 = vector.shape_cast %71 : vector<1x192x192xbf16> to vector<192x192xbf16>
    %cst_41 = arith.constant dense<0.000000e+00> : vector<64x192xf32>
    %73 = tpu.matmul %70, %72, %cst_41 {dimension_numbers = #tpu.dot_dimension_numbers<[1], [0], [0], [1], [0, 0, 1, 1], [], []>} : vector<64x192xbf16>, vector<192x192xbf16>, vector<64x192xf32> -> vector<64x192xf32>
    %74 = arith.addf %62, %73 : vector<64x192xf32>
    %c9_42 = arith.constant 9 : index
    %c0_43 = arith.constant 0 : index
    %75 = vector.load %arg11[%c9_42, %c0_43] : memref<82x192xf32, #tpu.memory_space<vmem>>, vector<64x192xf32>
    %76 = arith.truncf %75 : vector<64x192xf32> to vector<64x192xbf16>
    %c4 = arith.constant 4 : index
    %c0_44 = arith.constant 0 : index
    %c0_45 = arith.constant 0 : index
    %77 = vector.load %arg4[%c4, %c0_44, %c0_45] : memref<9x192x192xbf16, #tpu.memory_space<vmem>>, vector<1x192x192xbf16>
    %78 = vector.shape_cast %77 : vector<1x192x192xbf16> to vector<192x192xbf16>
    %cst_46 = arith.constant dense<0.000000e+00> : vector<64x192xf32>
    %79 = tpu.matmul %76, %78, %cst_46 {dimension_numbers = #tpu.dot_dimension_numbers<[1], [0], [0], [1], [0, 0, 1, 1], [], []>} : vector<64x192xbf16>, vector<192x192xbf16>, vector<64x192xf32> -> vector<64x192xf32>
    %80 = arith.addf %74, %79 : vector<64x192xf32>
    %c10 = arith.constant 10 : index
    %c0_47 = arith.constant 0 : index
    %81 = vector.load %arg11[%c10, %c0_47] : memref<82x192xf32, #tpu.memory_space<vmem>>, vector<64x192xf32>
    %c7_i32_48 = arith.constant 7 : i32
    %82 = vector.broadcast %c7_i32_48 : i32 to vector<64x1xi32>
    %83 = arith.cmpi ne, %28, %82 : vector<64x1xi32>
    %cst_49 = arith.constant 0.000000e+00 : f32
    %84 = vector.shape_cast %83 : vector<64x1xi1> to vector<64x1xi1>
    %85 = vector.broadcast %84 : vector<64x1xi1> to vector<64x192xi1>
    %86 = vector.broadcast %cst_49 : f32 to vector<64x192xf32>
    %87 = arith.select %85, %81, %86 : vector<64x192xi1>, vector<64x192xf32>
    %88 = arith.truncf %87 : vector<64x192xf32> to vector<64x192xbf16>
    %c5 = arith.constant 5 : index
    %c0_50 = arith.constant 0 : index
    %c0_51 = arith.constant 0 : index
    %89 = vector.load %arg4[%c5, %c0_50, %c0_51] : memref<9x192x192xbf16, #tpu.memory_space<vmem>>, vector<1x192x192xbf16>
    %90 = vector.shape_cast %89 : vector<1x192x192xbf16> to vector<192x192xbf16>
    %cst_52 = arith.constant dense<0.000000e+00> : vector<64x192xf32>
    %91 = tpu.matmul %88, %90, %cst_52 {dimension_numbers = #tpu.dot_dimension_numbers<[1], [0], [0], [1], [0, 0, 1, 1], [], []>} : vector<64x192xbf16>, vector<192x192xbf16>, vector<64x192xf32> -> vector<64x192xf32>
    %92 = arith.addf %80, %91 : vector<64x192xf32>
    %c16 = arith.constant 16 : index
    %c0_53 = arith.constant 0 : index
    %93 = vector.load %arg11[%c16, %c0_53] : memref<82x192xf32, #tpu.memory_space<vmem>>, vector<64x192xf32>
    %c0_i32_54 = arith.constant 0 : i32
    %94 = vector.broadcast %c0_i32_54 : i32 to vector<64x1xi32>
    %95 = arith.cmpi ne, %28, %94 : vector<64x1xi32>
    %cst_55 = arith.constant 0.000000e+00 : f32
    %96 = vector.shape_cast %95 : vector<64x1xi1> to vector<64x1xi1>
    %97 = vector.broadcast %96 : vector<64x1xi1> to vector<64x192xi1>
    %98 = vector.broadcast %cst_55 : f32 to vector<64x192xf32>
    %99 = arith.select %97, %93, %98 : vector<64x192xi1>, vector<64x192xf32>
    %100 = arith.truncf %99 : vector<64x192xf32> to vector<64x192xbf16>
    %c6 = arith.constant 6 : index
    %c0_56 = arith.constant 0 : index
    %c0_57 = arith.constant 0 : index
    %101 = vector.load %arg4[%c6, %c0_56, %c0_57] : memref<9x192x192xbf16, #tpu.memory_space<vmem>>, vector<1x192x192xbf16>
    %102 = vector.shape_cast %101 : vector<1x192x192xbf16> to vector<192x192xbf16>
    %cst_58 = arith.constant dense<0.000000e+00> : vector<64x192xf32>
    %103 = tpu.matmul %100, %102, %cst_58 {dimension_numbers = #tpu.dot_dimension_numbers<[1], [0], [0], [1], [0, 0, 1, 1], [], []>} : vector<64x192xbf16>, vector<192x192xbf16>, vector<64x192xf32> -> vector<64x192xf32>
    %104 = arith.addf %92, %103 : vector<64x192xf32>
    %c17 = arith.constant 17 : index
    %c0_59 = arith.constant 0 : index
    %105 = vector.load %arg11[%c17, %c0_59] : memref<82x192xf32, #tpu.memory_space<vmem>>, vector<64x192xf32>
    %106 = arith.truncf %105 : vector<64x192xf32> to vector<64x192xbf16>
    %c7 = arith.constant 7 : index
    %c0_60 = arith.constant 0 : index
    %c0_61 = arith.constant 0 : index
    %107 = vector.load %arg4[%c7, %c0_60, %c0_61] : memref<9x192x192xbf16, #tpu.memory_space<vmem>>, vector<1x192x192xbf16>
    %108 = vector.shape_cast %107 : vector<1x192x192xbf16> to vector<192x192xbf16>
    %cst_62 = arith.constant dense<0.000000e+00> : vector<64x192xf32>
    %109 = tpu.matmul %106, %108, %cst_62 {dimension_numbers = #tpu.dot_dimension_numbers<[1], [0], [0], [1], [0, 0, 1, 1], [], []>} : vector<64x192xbf16>, vector<192x192xbf16>, vector<64x192xf32> -> vector<64x192xf32>
    %110 = arith.addf %104, %109 : vector<64x192xf32>
    %c18 = arith.constant 18 : index
    %c0_63 = arith.constant 0 : index
    %111 = vector.load %arg11[%c18, %c0_63] : memref<82x192xf32, #tpu.memory_space<vmem>>, vector<64x192xf32>
    %c7_i32_64 = arith.constant 7 : i32
    %112 = vector.broadcast %c7_i32_64 : i32 to vector<64x1xi32>
    %113 = arith.cmpi ne, %28, %112 : vector<64x1xi32>
    %cst_65 = arith.constant 0.000000e+00 : f32
    %114 = vector.shape_cast %113 : vector<64x1xi1> to vector<64x1xi1>
    %115 = vector.broadcast %114 : vector<64x1xi1> to vector<64x192xi1>
    %116 = vector.broadcast %cst_65 : f32 to vector<64x192xf32>
    %117 = arith.select %115, %111, %116 : vector<64x192xi1>, vector<64x192xf32>
    %118 = arith.truncf %117 : vector<64x192xf32> to vector<64x192xbf16>
    %c8_66 = arith.constant 8 : index
    %c0_67 = arith.constant 0 : index
    %c0_68 = arith.constant 0 : index
    %119 = vector.load %arg4[%c8_66, %c0_67, %c0_68] : memref<9x192x192xbf16, #tpu.memory_space<vmem>>, vector<1x192x192xbf16>
    %120 = vector.shape_cast %119 : vector<1x192x192xbf16> to vector<192x192xbf16>
    %cst_69 = arith.constant dense<0.000000e+00> : vector<64x192xf32>
    %121 = tpu.matmul %118, %120, %cst_69 {dimension_numbers = #tpu.dot_dimension_numbers<[1], [0], [0], [1], [0, 0, 1, 1], [], []>} : vector<64x192xbf16>, vector<192x192xbf16>, vector<64x192xf32> -> vector<64x192xf32>
    %122 = arith.addf %110, %121 : vector<64x192xf32>
    %cst_70 = arith.constant 0.000000e+00 : f32
    %123 = vector.broadcast %cst_70 : f32 to vector<64x192xf32>
    %124 = arith.maximumf %122, %123 : vector<64x192xf32>
    %125 = arith.truncf %124 : vector<64x192xf32> to vector<64x192xbf16>
    %c0_71 = arith.constant 0 : index
    %c0_72 = arith.constant 0 : index
    %126 = vector.load %arg6[%c0_71, %c0_72] : memref<192x544xbf16, #tpu.memory_space<vmem>>, vector<192x544xbf16>
    %cst_73 = arith.constant dense<0.000000e+00> : vector<64x544xf32>
    %127 = tpu.matmul %125, %126, %cst_73 {dimension_numbers = #tpu.dot_dimension_numbers<[1], [0], [0], [1], [0, 0, 1, 1], [], []>} : vector<64x192xbf16>, vector<192x544xbf16>, vector<64x544xf32> -> vector<64x544xf32>
    %c0_74 = arith.constant 0 : index
    %c0_75 = arith.constant 0 : index
    %128 = vector.load %arg7[%c0_74, %c0_75] : memref<1x544xf32, #tpu.memory_space<vmem>>, vector<1x544xf32>
    %129 = vector.broadcast %128 : vector<1x544xf32> to vector<64x544xf32>
    %130 = arith.addf %127, %129 : vector<64x544xf32>
    %c0_76 = arith.constant 0 : index
    %c0_77 = arith.constant 0 : index
    %131 = vector.load %arg8[%c0_76, %c0_77] : memref<304x544xbf16, #tpu.memory_space<vmem>>, vector<304x544xbf16>
    %cst_78 = arith.constant dense<0.000000e+00> : vector<64x544xf32>
    %132 = tpu.matmul %1, %131, %cst_78 {dimension_numbers = #tpu.dot_dimension_numbers<[1], [0], [0], [1], [0, 0, 1, 1], [], []>} : vector<64x304xbf16>, vector<304x544xbf16>, vector<64x544xf32> -> vector<64x544xf32>
    %c0_79 = arith.constant 0 : index
    %c0_80 = arith.constant 0 : index
    %133 = vector.load %arg9[%c0_79, %c0_80] : memref<1x544xf32, #tpu.memory_space<vmem>>, vector<1x544xf32>
    %134 = vector.broadcast %133 : vector<1x544xf32> to vector<64x544xf32>
    %135 = arith.addf %132, %134 : vector<64x544xf32>
    %136 = vector.extract_strided_slice %135 {offsets = [0, 0], sizes = [64, 512], strides = [1, 1]} : vector<64x544xf32> to vector<64x512xf32>
    %137 = vector.extract_strided_slice %130 {offsets = [0, 0], sizes = [64, 512], strides = [1, 1]} : vector<64x544xf32> to vector<64x512xf32>
    %138 = arith.addf %136, %137 : vector<64x512xf32>
    %139 = vector.extract_strided_slice %135 {offsets = [0, 512], sizes = [64, 32], strides = [1, 1]} : vector<64x544xf32> to vector<64x32xf32>
    %140 = vector.extract_strided_slice %130 {offsets = [0, 512], sizes = [64, 32], strides = [1, 1]} : vector<64x544xf32> to vector<64x32xf32>
    %141 = tpu.concatenate %138, %139, %140 in 1 : vector<64x512xf32>, vector<64x32xf32>, vector<64x32xf32> -> vector<64x576xf32>
    %cst_81 = arith.constant 0.000000e+00 : f32
    %142 = vector.broadcast %cst_81 : f32 to vector<64x576xf32>
    %143 = arith.maximumf %141, %142 : vector<64x576xf32>
    %144 = arith.truncf %143 : vector<64x576xf32> to vector<64x576xbf16>
    %c0_82 = arith.constant 0 : index
    %c0_83 = arith.constant 0 : index
    %c0_84 = arith.constant 0 : index
    %145 = vector.load %arg10[%c0_82, %c0_83, %c0_84] : memref<1x64x576xbf16, #tpu.memory_space<vmem>>, vector<1x64x576xbf16>
    %146 = vector.shape_cast %145 : vector<1x64x576xbf16> to vector<64x576xbf16>
    %147 = vector.shape_cast %144 : vector<64x576xbf16> to vector<1x64x576xbf16>
    tpu.vector_store %arg10[%c0_82, %c0_83, %c0_84], %147 {strides = array<i32>} : memref<1x64x576xbf16, #tpu.memory_space<vmem>>, vector<1x64x576xbf16>,
    return
  }
  func.func @transform_0(%arg0: i32) -> (i32, i32, i32) {
    %c0_i32 = arith.constant 0 : i32
    %c0_i32_0 = arith.constant 0 : i32
    %c0_i32_1 = arith.constant 0 : i32
    return %arg0, %c0_i32, %c0_i32_0 : i32, i32, i32
  }
  func.func @transform_1(%arg0: i32) -> (i32, i32) {
    %c0_i32 = arith.constant 0 : i32
    %c0_i32_0 = arith.constant 0 : i32
    %c0_i32_1 = arith.constant 0 : i32
    return %c0_i32, %c0_i32_0 : i32, i32
  }
  func.func @transform_2(%arg0: i32) -> (i32, i32) {
    %c0_i32 = arith.constant 0 : i32
    %c0_i32_0 = arith.constant 0 : i32
    %c0_i32_1 = arith.constant 0 : i32
    return %c0_i32, %c0_i32_0 : i32, i32
  }
  func.func @transform_3(%arg0: i32) -> (i32, i32, i32) {
    %c0_i32 = arith.constant 0 : i32
    %c0_i32_0 = arith.constant 0 : i32
    %c0_i32_1 = arith.constant 0 : i32
    %c0_i32_2 = arith.constant 0 : i32
    return %c0_i32, %c0_i32_0, %c0_i32_1 : i32, i32, i32
  }
  func.func @transform_4(%arg0: i32) -> (i32, i32) {
    %c0_i32 = arith.constant 0 : i32
    %c0_i32_0 = arith.constant 0 : i32
    %c0_i32_1 = arith.constant 0 : i32
    return %c0_i32, %c0_i32_0 : i32, i32
  }
  func.func @transform_5(%arg0: i32) -> (i32, i32) {
    %c0_i32 = arith.constant 0 : i32
    %c0_i32_0 = arith.constant 0 : i32
    %c0_i32_1 = arith.constant 0 : i32
    return %c0_i32, %c0_i32_0 : i32, i32
  }
  func.func @transform_6(%arg0: i32) -> (i32, i32) {
    %c0_i32 = arith.constant 0 : i32
    %c0_i32_0 = arith.constant 0 : i32
    %c0_i32_1 = arith.constant 0 : i32
    return %c0_i32, %c0_i32_0 : i32, i32
  }
  func.func @transform_7(%arg0: i32) -> (i32, i32) {
    %c0_i32 = arith.constant 0 : i32
    %c0_i32_0 = arith.constant 0 : i32
    %c0_i32_1 = arith.constant 0 : i32
    return %c0_i32, %c0_i32_0 : i32, i32
  }
  func.func @transform_8(%arg0: i32) -> (i32, i32) {
    %c0_i32 = arith.constant 0 : i32
    %c0_i32_0 = arith.constant 0 : i32
    %c0_i32_1 = arith.constant 0 : i32
    return %c0_i32, %c0_i32_0 : i32, i32
  }
  func.func @transform_9(%arg0: i32) -> (i32, i32, i32) {
    %c0_i32 = arith.constant 0 : i32
    %c0_i32_0 = arith.constant 0 : i32
    %c0_i32_1 = arith.constant 0 : i32
    return %arg0, %c0_i32, %c0_i32_0 : i32, i32, i32
  }
}

</mosaic_0001>

<llo_original>
// kernel: forward.3
$region0: #{forward.3}
  #allocation0 [shape = 'u32[]', space=smem, size = 0x4, offset = 0x4, fixed_abs, tag = 'smem constant byte address 0x4 - core index']
  #allocation1 [shape = 'u32[144,128]{1,0:T(1,128)}', space=vmem, size = 0x12000, scoped, tag = 'internal scratch']
  #allocation2 [shape = 'f32[82,96]{1,0:T(8,128)}', space=vmem, size = 0xb000, scoped, tag = 'scratch operand']
  %s0 = inlined_call_operand.vmem [shape: bf16[2,64,64], index: 0, kind: input, shape index: {}]
  %s1 = inlined_call_operand.vmem [shape: bf16[64,96], index: 1, kind: input, shape index: {}]
  %s2 = inlined_call_operand.vmem [shape: f32[1,96], index: 2, kind: input, shape index: {}]
  %s3 = inlined_call_operand.vmem [shape: bf16[9,96,96], index: 3, kind: input, shape index: {}]
  %s4 = inlined_call_operand.vmem [shape: f32[1,96], index: 4, kind: input, shape index: {}]
  %s5 = inlined_call_operand.vmem [shape: bf16[96,272], index: 5, kind: input, shape index: {}]
  %s6 = inlined_call_operand.vmem [shape: f32[1,272], index: 6, kind: input, shape index: {}]
  %s7 = inlined_call_operand.vmem [shape: bf16[64,272], index: 7, kind: input, shape index: {}]
  %s8 = inlined_call_operand.vmem [shape: f32[1,272], index: 8, kind: input, shape index: {}]
  %s9 = inlined_call_operand.vmem [shape: bf16[2,64,288], index: 9, kind: output, shape index: {}]
  %s10 = sld [smem:[#allocation0]]
  $region69: #{forward.3} parent=0
    _
  %s12 = ssub.s32 1, %s10
  %s13 = scalar_select 0, %s12, %s10
  loop: start=0, step=1, limit=4
  $region2: #{forward.3} parent=0 // loop_pre_header
    _
  $region3: #{forward.3} parent=0 // loop_header
    %s15 = sphi 0, %s19
    %p16 = scmp.ge.s32.totalorder %s15, 4
    %s25 = sphi 0, %s27
    %s28 = sphi 0, %s25
    %s29 = sphi 0, %s28
    %s45 = sphi 0, %s29
    %s49 = sphi 0, %s49
    %s51 = sphi 0, %s49
    %s52 = sphi 0, %s51
    %s66 = sphi 0, %s52
    %s70 = sphi 0, %s70
    %s72 = sphi 0, %s70
    %s73 = sphi 0, %s72
    %s87 = sphi 0, %s73
    %s91 = sphi 0, %s91
    %s93 = sphi 0, %s91
    %s94 = sphi 0, %s93
    %s108 = sphi 0, %s94
    %s112 = sphi 0, %s112
    %s114 = sphi 0, %s112
    %s115 = sphi 0, %s114
    %s129 = sphi 0, %s115
    %s133 = sphi 0, %s133
    %s135 = sphi 0, %s133
    %s136 = sphi 0, %s135
    %s150 = sphi 0, %s136
    %s154 = sphi 0, %s154
    %s156 = sphi 0, %s154
    %s157 = sphi 0, %s156
    %s171 = sphi 0, %s157
    %s175 = sphi 0, %s175
    %s177 = sphi 0, %s175
    %s178 = sphi 0, %s177
    %s192 = sphi 0, %s178
    %s196 = sphi 0, %s196
    %s198 = sphi 0, %s196
    %s199 = sphi 0, %s198
    %s213 = sphi 0, %s199
    %s219 = sphi 0, %s221
    %s222 = sphi 0, %s219
    %s223 = sphi 0, %s222
    %s239 = sphi 0, %s223
  $region4: #{forward.3} parent=0 // loop_header_branch
    %18 = sbr.rel (%p16) target = $region8
  $region5: #{forward.3} parent=0 // loop_body
    %s20 = ssub.s32 %s15, 1
    %s21 = ssub.s32 %s15, 2
    %s22 = sadd.s32 %s15, 1
    %s23 = ssub.s32 %s15, %s22
    %p24 = scmp.eq.s32.totalorder %s23, 0
    %s26 = sadd.s32 %s25, 1
    %s27 = scalar_select %p24, %s25, %s26
    %p30 = pneg %p24
    %p31 = scmp.eq.s32.totalorder %s15, 1
    %p32 = por %p30, %p31
    %p33 = scmp.ne.s32.totalorder %s25, %s28
    %p34 = scmp.eq.s32.totalorder %s15, 0
    %p35 = por %p33, %p34
    %p36 = scmp.ne.s32.totalorder %s25, %s28
    %p37 = scmp.eq.s32.totalorder %s20, 1
    %p38 = por %p36, %p37
    %p39 = scmp.ne.s32.totalorder %s28, %s29
    %p40 = scmp.eq.s32.totalorder %s20, 0
    %p41 = por %p39, %p40
    %p42 = scmp.ne.s32.totalorder %s28, %s29
    %p43 = scmp.eq.s32.totalorder %s21, 1
    %p44 = por %p42, %p43
    %p46 = scmp.ne.s32.totalorder %s29, %s45
    %p47 = scmp.eq.s32.totalorder %s21, 0
    %p48 = por %p46, %p47
    %s50 = sadd.s32 %s49, 1
    %p53 = scmp.eq.s32.totalorder %s15, 1
    %p54 = scmp.ne.s32.totalorder %s49, %s51
    %p55 = scmp.eq.s32.totalorder %s15, 0
    %p56 = por %p54, %p55
    %p57 = scmp.ne.s32.totalorder %s49, %s51
    %p58 = scmp.eq.s32.totalorder %s20, 1
    %p59 = por %p57, %p58
    %p60 = scmp.ne.s32.totalorder %s51, %s52
    %p61 = scmp.eq.s32.totalorder %s20, 0
    %p62 = por %p60, %p61
    %p63 = scmp.ne.s32.totalorder %s51, %s52
    %p64 = scmp.eq.s32.totalorder %s21, 1
    %p65 = por %p63, %p64
    %p67 = scmp.ne.s32.totalorder %s52, %s66
    %p68 = scmp.eq.s32.totalorder %s21, 0
    %p69 = por %p67, %p68
    %s71 = sadd.s32 %s70, 1
    %p74 = scmp.eq.s32.totalorder %s15, 1
    %p75 = scmp.ne.s32.totalorder %s70, %s72
    %p76 = scmp.eq.s32.totalorder %s15, 0
    %p77 = por %p75, %p76
    %p78 = scmp.ne.s32.totalorder %s70, %s72
    %p79 = scmp.eq.s32.totalorder %s20, 1
    %p80 = por %p78, %p79
    %p81 = scmp.ne.s32.totalorder %s72, %s73
    %p82 = scmp.eq.s32.totalorder %s20, 0
    %p83 = por %p81, %p82
    %p84 = scmp.ne.s32.totalorder %s72, %s73
    %p85 = scmp.eq.s32.totalorder %s21, 1
    %p86 = por %p84, %p85
    %p88 = scmp.ne.s32.totalorder %s73, %s87
    %p89 = scmp.eq.s32.totalorder %s21, 0
    %p90 = por %p88, %p89
    %s92 = sadd.s32 %s91, 1
    %p95 = scmp.eq.s32.totalorder %s15, 1
    %p96 = scmp.ne.s32.totalorder %s91, %s93
    %p97 = scmp.eq.s32.totalorder %s15, 0
    %p98 = por %p96, %p97
    %p99 = scmp.ne.s32.totalorder %s91, %s93
    %p100 = scmp.eq.s32.totalorder %s20, 1
    %p101 = por %p99, %p100
    %p102 = scmp.ne.s32.totalorder %s93, %s94
    %p103 = scmp.eq.s32.totalorder %s20, 0
    %p104 = por %p102, %p103
    %p105 = scmp.ne.s32.totalorder %s93, %s94
    %p106 = scmp.eq.s32.totalorder %s21, 1
    %p107 = por %p105, %p106
    %p109 = scmp.ne.s32.totalorder %s94, %s108
    %p110 = scmp.eq.s32.totalorder %s21, 0
    %p111 = por %p109, %p110
    %s113 = sadd.s32 %s112, 1
    %p116 = scmp.eq.s32.totalorder %s15, 1
    %p117 = scmp.ne.s32.totalorder %s112, %s114
    %p118 = scmp.eq.s32.totalorder %s15, 0
    %p119 = por %p117, %p118
    %p120 = scmp.ne.s32.totalorder %s112, %s114
    %p121 = scmp.eq.s32.totalorder %s20, 1
    %p122 = por %p120, %p121
    %p123 = scmp.ne.s32.totalorder %s114, %s115
    %p124 = scmp.eq.s32.totalorder %s20, 0
    %p125 = por %p123, %p124
    %p126 = scmp.ne.s32.totalorder %s114, %s115
    %p127 = scmp.eq.s32.totalorder %s21, 1
    %p128 = por %p126, %p127
    %p130 = scmp.ne.s32.totalorder %s115, %s129
    %p131 = scmp.eq.s32.totalorder %s21, 0
    %p132 = por %p130, %p131
    %s134 = sadd.s32 %s133, 1
    %p137 = scmp.eq.s32.totalorder %s15, 1
    %p138 = scmp.ne.s32.totalorder %s133, %s135
    %p139 = scmp.eq.s32.totalorder %s15, 0
    %p140 = por %p138, %p139
    %p141 = scmp.ne.s32.totalorder %s133, %s135
    %p142 = scmp.eq.s32.totalorder %s20, 1
    %p143 = por %p141, %p142
    %p144 = scmp.ne.s32.totalorder %s135, %s136
    %p145 = scmp.eq.s32.totalorder %s20, 0
    %p146 = por %p144, %p145
    %p147 = scmp.ne.s32.totalorder %s135, %s136
    %p148 = scmp.eq.s32.totalorder %s21, 1
    %p149 = por %p147, %p148
    %p151 = scmp.ne.s32.totalorder %s136, %s150
    %p152 = scmp.eq.s32.totalorder %s21, 0
    %p153 = por %p151, %p152
    %s155 = sadd.s32 %s154, 1
    %p158 = scmp.eq.s32.totalorder %s15, 1
    %p159 = scmp.ne.s32.totalorder %s154, %s156
    %p160 = scmp.eq.s32.totalorder %s15, 0
    %p161 = por %p159, %p160
    %p162 = scmp.ne.s32.totalorder %s154, %s156
    %p163 = scmp.eq.s32.totalorder %s20, 1
    %p164 = por %p162, %p163
    %p165 = scmp.ne.s32.totalorder %s156, %s157
    %p166 = scmp.eq.s32.totalorder %s20, 0
    %p167 = por %p165, %p166
    %p168 = scmp.ne.s32.totalorder %s156, %s157
    %p169 = scmp.eq.s32.totalorder %s21, 1
    %p170 = por %p168, %p169
    %p172 = scmp.ne.s32.totalorder %s157, %s171
    %p173 = scmp.eq.s32.totalorder %s21, 0
    %p174 = por %p172, %p173
    %s176 = sadd.s32 %s175, 1
    %p179 = scmp.eq.s32.totalorder %s15, 1
    %p180 = scmp.ne.s32.totalorder %s175, %s177
    %p181 = scmp.eq.s32.totalorder %s15, 0
    %p182 = por %p180, %p181
    %p183 = scmp.ne.s32.totalorder %s175, %s177
    %p184 = scmp.eq.s32.totalorder %s20, 1
    %p185 = por %p183, %p184
    %p186 = scmp.ne.s32.totalorder %s177, %s178
    %p187 = scmp.eq.s32.totalorder %s20, 0
    %p188 = por %p186, %p187
    %p189 = scmp.ne.s32.totalorder %s177, %s178
    %p190 = scmp.eq.s32.totalorder %s21, 1
    %p191 = por %p189, %p190
    %p193 = scmp.ne.s32.totalorder %s178, %s192
    %p194 = scmp.eq.s32.totalorder %s21, 0
    %p195 = por %p193, %p194
    %s197 = sadd.s32 %s196, 1
    %p200 = scmp.eq.s32.totalorder %s15, 1
    %p201 = scmp.ne.s32.totalorder %s196, %s198
    %p202 = scmp.eq.s32.totalorder %s15, 0
    %p203 = por %p201, %p202
    %p204 = scmp.ne.s32.totalorder %s196, %s198
    %p205 = scmp.eq.s32.totalorder %s20, 1
    %p206 = por %p204, %p205
    %p207 = scmp.ne.s32.totalorder %s198, %s199
    %p208 = scmp.eq.s32.totalorder %s20, 0
    %p209 = por %p207, %p208
    %p210 = scmp.ne.s32.totalorder %s198, %s199
    %p211 = scmp.eq.s32.totalorder %s21, 1
    %p212 = por %p210, %p211
    %p214 = scmp.ne.s32.totalorder %s199, %s213
    %p215 = scmp.eq.s32.totalorder %s21, 0
    %p216 = por %p214, %p215
    %s217 = ssub.s32 %s15, %s22
    %p218 = scmp.eq.s32.totalorder %s217, 0
    %s220 = sadd.s32 %s219, 1
    %s221 = scalar_select %p218, %s219, %s220
    %p224 = pneg %p218
    %p225 = scmp.eq.s32.totalorder %s15, 1
    %p226 = por %p224, %p225
    %p227 = scmp.ne.s32.totalorder %s219, %s222
    %p228 = scmp.eq.s32.totalorder %s15, 0
    %p229 = por %p227, %p228
    %p230 = scmp.ne.s32.totalorder %s219, %s222
    %p231 = scmp.eq.s32.totalorder %s20, 1
    %p232 = por %p230, %p231
    %p233 = scmp.ne.s32.totalorder %s222, %s223
    %p234 = scmp.eq.s32.totalorder %s20, 0
    %p235 = por %p233, %p234
    %p236 = scmp.ne.s32.totalorder %s222, %s223
    %p237 = scmp.eq.s32.totalorder %s21, 1
    %p238 = por %p236, %p237
    %p240 = scmp.ne.s32.totalorder %s223, %s239
    %p241 = scmp.eq.s32.totalorder %s21, 0
    %p242 = por %p240, %p241
    %p243 = scmp.le.s32.totalorder 1, %s15
    %p244 = scmp.lt.s32.totalorder %s15, 3
    %p245 = pnand %p243, %p244
    %p246 = pneg %p245
    // Predicated region
    $region9: #{forward.3} parent=5 // pred_check
      _
    $region10: #{forward.3} parent=5 // pred_check_branch
      %248 = sbr.rel (%p245) target = $region12
    $region11: #{forward.3} parent=5 // pred_region
      %s249 = ssub.s32 %s15, 1
      // Predicated region
      $region13: #{forward.3} parent=11 // pred_check
        %p250 = pneg %p62
      $region14: #{forward.3} parent=11 // pred_check_branch
        %252 = sbr.rel (%p250) target = $region16
      $region15: #{forward.3} parent=11 // pred_region
        _
      $region16: #{forward.3} parent=11 // pred_fallthru
        _
      // Predicated region
      $region17: #{forward.3} parent=11 // pred_check
        %p253 = pneg %p83
      $region18: #{forward.3} parent=11 // pred_check_branch
        %255 = sbr.rel (%p253) target = $region20
      $region19: #{forward.3} parent=11 // pred_region
        _
      $region20: #{forward.3} parent=11 // pred_fallthru
        _
      // Predicated region
      $region21: #{forward.3} parent=11 // pred_check
        %p256 = pneg %p104
      $region22: #{forward.3} parent=11 // pred_check_branch
        %258 = sbr.rel (%p256) target = $region24
      $region23: #{forward.3} parent=11 // pred_region
        _
      $region24: #{forward.3} parent=11 // pred_fallthru
        _
      // Predicated region
      $region25: #{forward.3} parent=11 // pred_check
        %p259 = pneg %p125
      $region26: #{forward.3} parent=11 // pred_check_branch
        %261 = sbr.rel (%p259) target = $region28
      $region27: #{forward.3} parent=11 // pred_region
        _
      $region28: #{forward.3} parent=11 // pred_fallthru
        _
      // Predicated region
      $region29: #{forward.3} parent=11 // pred_check
        %p262 = pneg %p146
      $region30: #{forward.3} parent=11 // pred_check_branch
        %264 = sbr.rel (%p262) target = $region32
      $region31: #{forward.3} parent=11 // pred_region
        _
      $region32: #{forward.3} parent=11 // pred_fallthru
        _
      // Predicated region
      $region33: #{forward.3} parent=11 // pred_check
        %p265 = pneg %p167
      $region34: #{forward.3} parent=11 // pred_check_branch
        %267 = sbr.rel (%p265) target = $region36
      $region35: #{forward.3} parent=11 // pred_region
        _
      $region36: #{forward.3} parent=11 // pred_fallthru
        _
      // Predicated region
      $region37: #{forward.3} parent=11 // pred_check
        %p268 = pneg %p188
      $region38: #{forward.3} parent=11 // pred_check_branch
        %270 = sbr.rel (%p268) target = $region40
      $region39: #{forward.3} parent=11 // pred_region
        _
      $region40: #{forward.3} parent=11 // pred_fallthru
        _
      // Predicated region
      $region41: #{forward.3} parent=11 // pred_check
        %p271 = pneg %p209
      $region42: #{forward.3} parent=11 // pred_check_branch
        %273 = sbr.rel (%p271) target = $region44
      $region43: #{forward.3} parent=11 // pred_region
        _
      $region44: #{forward.3} parent=11 // pred_fallthru
        _
    $region12: #{forward.3} parent=5 // pred_fallthru
      _
    %p274 = scmp.lt.s32.totalorder %s15, 2
    // Predicated region
    $region45: #{forward.3} parent=5 // pred_check
      %p275 = pneg %p274
    $region46: #{forward.3} parent=5 // pred_check_branch
      %277 = sbr.rel (%p275) target = $region48
    $region47: #{forward.3} parent=5 // pred_region
      // Predicated region
      $region49: #{forward.3} parent=47 // pred_check
        %p278 = pneg %p35
      $region50: #{forward.3} parent=47 // pred_check_branch
        %280 = sbr.rel (%p278) target = $region52
      $region51: #{forward.3} parent=47 // pred_region
        %p281 = scmp.lt.s32.totalorder %s15, 1
        %s282 = scalar_select %p281, %s15, 1
        %s283 = smul.addr %s282, 8
        %s284 = smul.addr %s283, 4
        %s285 = scalar_lea.vmem %s0, %s284
      $region52: #{forward.3} parent=47 // pred_fallthru
        _
    $region48: #{forward.3} parent=5 // pred_fallthru
      _
    %p286 = scmp.le.s32.totalorder 1, %s15
    %p287 = scmp.lt.s32.totalorder %s15, 3
    %p288 = pnand %p286, %p287
    %p289 = pneg %p288
    // Predicated region
    $region53: #{forward.3} parent=5 // pred_check
      _
    $region54: #{forward.3} parent=5 // pred_check_branch
      %291 = sbr.rel (%p288) target = $region56
    $region55: #{forward.3} parent=5 // pred_region
      %s292 = ssub.s32 %s15, 1
      %p293 = scmp.lt.s32.totalorder %s20, 1
      %s294 = scalar_select %p293, %s20, 1
      %s295 = smul.addr %s294, 8
      %s296 = smul.addr %s295, 4
      %s297 = scalar_lea.vmem %s0, %s296
      %p298 = pneg %p41
      %p299 = pneg %p38
      %p300 = pneg %p62
      %p301 = pneg %p59
      %p302 = pneg %p83
      %p303 = pneg %p80
      %p304 = pneg %p104
      %p305 = pneg %p101
      %p306 = pneg %p125
      %p307 = pneg %p122
      %p308 = pneg %p146
      %p309 = pneg %p143
      %p310 = pneg %p167
      %p311 = pneg %p164
      %p312 = pneg %p188
      %p313 = pneg %p185
      %p314 = pneg %p209
      %p315 = pneg %p206
      %p316 = pneg %p235
      %p317 = pneg %p232
      %p318 = scmp.lt.s32.totalorder %s20, 1
      %s319 = scalar_select %p318, %s20, 1
      %s320 = smul.addr %s319, 24
      %s321 = smul.addr %s320, 4
      %s322 = scalar_lea.vmem %s9, %s321
      %p323 = scmp.lt.s32.totalorder %s20, 1
      %s324 = scalar_select %p323, %s20, 1
      %s325 = smul.addr %s324, 8
      %s326 = smul.addr %s325, 4
      %s327 = scalar_lea.vmem %s0, %s326
      %p328 = scmp.lt.s32.totalorder %s20, 1
      %s329 = scalar_select %p328, %s20, 1
      %s330 = smul.addr %s329, 24
      %s331 = smul.addr %s330, 4
      %s332 = scalar_lea.vmem %s9, %s331
      %v334 = vld [vmem:[%s327] sm:$0xf]
      %v335 = vld [vmem:[%s327 + $0x4] sm:$0xf]
      %v336 = vld [vmem:[%s327 + $0x8] sm:$0xf]
      %v337 = vld [vmem:[%s327 + $0xc] sm:$0xf]
      %v338 = vld [vmem:[%s327 + $0x10] sm:$0xf]
      %v339 = vld [vmem:[%s327 + $0x14] sm:$0xf]
      %v340 = vld [vmem:[%s327 + $0x18] sm:$0xf]
      %v341 = vld [vmem:[%s327 + $0x1c] sm:$0xf]
      %v342 = vld [vmem:[%s1] sm:$0xf]
      %v343 = vld [vmem:[%s1 + $0x4] sm:$0xf]
      %v344 = vld [vmem:[%s1 + $0x8] sm:$0xf]
      %v345 = vld [vmem:[%s1 + $0xc] sm:$0xf]
      %v346 = vld [vmem:[%s1 + $0x10] sm:$0xf]
      %v347 = vld [vmem:[%s1 + $0x14] sm:$0xf]
      %v348 = vld [vmem:[%s1 + $0x18] sm:$0xf]
      %v349 = vld [vmem:[%s1 + $0x1c] sm:$0xf]
      %v350 = vld [vmem:[%s2] sm:$0x1]
      %v352 = vlaneseq
      %v353 = vshrl.u32 %v352, 7
      %v354 = vsub.s32 0, %v353
      %v355 = vrot.slane %v350, %v354
      %v365 = vunpack.c.l.b16 %v334
      %v366 = vunpack.c.l.b16 %v335
      %v367 = vunpack.c.l.b16 %v336
      %v368 = vunpack.c.l.b16 %v337
      %v369 = vunpack.c.l.b16 %v338
      %v370 = vunpack.c.l.b16 %v339
      %v371 = vunpack.c.l.b16 %v340
      %v372 = vunpack.c.l.b16 %v341
      %v373 = vpack.c.b16 %v366, %v365
      %v374 = vpack.c.b16 %v368, %v367
      %v375 = vpack.c.b16 %v370, %v369
      %v376 = vpack.c.b16 %v372, %v371
      %v385 = vunpack.c.l.b16 %v342
      %v386 = vunpack.c.l.b16 %v343
      %v387 = vunpack.c.l.b16 %v344
      %v388 = vunpack.c.l.b16 %v345
      %v389 = vunpack.c.l.b16 %v346
      %v390 = vunpack.c.l.b16 %v347
      %v391 = vunpack.c.l.b16 %v348
      %v392 = vunpack.c.l.b16 %v349
      %v393 = vpack.c.b16 %v386, %v385
      %v394 = vpack.c.b16 %v388, %v387
      %v395 = vpack.c.b16 %v390, %v389
      %v396 = vpack.c.b16 %v392, %v391
      %vm401 = vcmask 523264
      %v403 = vsel %vm401, %v373, 0
      %v406 = vsel %vm401, %v374, 0
      %v409 = vsel %vm401, %v375, 0
      %v412 = vsel %vm401, %v376, 0
      %414 = vmatprep.subr.bf16.mxu0 0
      %415 = vmatpush1.bf16.msra.mxu0 %v393
      %416 = vmatprep.subr.bf16.mxu0 0
      %417 = vmatpush1.bf16.msra.mxu0 %v394
      %418 = vmatprep.subr.bf16.mxu0 0
      %419 = vmatpush1.bf16.msra.mxu0 %v395
      %420 = vmatprep.subr.bf16.mxu0 0
      %421 = vmatpush1.bf16.msra.mxu0 %v396
      %422 = vmatprep.subr.bf16.mxu0 0
      %423 = vmatpush1.bf16.msra.mxu0 0
      %424 = vmatprep.subr.bf16.mxu0 0
      %425 = vmatpush1.bf16.msra.mxu0 0
      %426 = vmatprep.subr.bf16.mxu0 0
      %427 = vmatpush1.bf16.msra.mxu0 0
      %428 = vmatprep.subr.bf16.mxu0 0
      %429 = vmatpush1.bf16.msra.mxu0 0
      %430 = vmatprep.subr.bf16.mxu0 0
      %431 = vmatpush1.bf16.msra.mxu0 0
      %432 = vmatprep.subr.bf16.mxu0 0
      %433 = vmatpush1.bf16.msra.mxu0 0
      %434 = vmatprep.subr.bf16.mxu0 0
      %435 = vmatpush1.bf16.msra.mxu0 0
      %436 = vmatprep.subr.bf16.mxu0 0
      %437 = vmatpush1.bf16.msra.mxu0 0
      %438 = vmatprep.subr.bf16.mxu0 0
      %439 = vmatpush1.bf16.msra.mxu0 0
      %440 = vmatprep.subr.bf16.mxu0 0
      %441 = vmatpush1.bf16.msra.mxu0 0
      %442 = vmatprep.subr.bf16.mxu0 0
      %443 = vmatpush1.bf16.msra.mxu0 0
      %444 = vmatprep.subr.bf16.mxu0 0
      %445 = vmatpush1.bf16.msra.mxu0 0
      %446 = vmatprep.mubr.bf16.mxu0 0
      %447 = vmatmul.mubr.bf16.gmra.mrb[0].mxu0 %v403
      %v448 = vpop.f32.mrb[0].mxu0
      %v449 = vadd.f32 %v355, %v448
      %v450 = vpop.f32.mrb[0].mxu0
      %v451 = vpop.f32.mrb[0].mxu0
      %v452 = vadd.f32 %v355, %v451
      %v453 = vpop.f32.mrb[0].mxu0
      %454 = vmatprep.mubr.bf16.mxu0 0
      %455 = vmatmul.mubr.bf16.gmra.mrb[0].mxu0 %v406
      %v456 = vpop.f32.mrb[0].mxu0
      %v457 = vadd.f32 %v355, %v456
      %v458 = vpop.f32.mrb[0].mxu0
      %v459 = vpop.f32.mrb[0].mxu0
      %v460 = vadd.f32 %v355, %v459
      %v461 = vpop.f32.mrb[0].mxu0
      %462 = vmatprep.mubr.bf16.mxu0 0
      %463 = vmatmul.mubr.bf16.gmra.mrb[0].mxu0 %v409
      %v464 = vpop.f32.mrb[0].mxu0
      %v465 = vadd.f32 %v355, %v464
      %v466 = vpop.f32.mrb[0].mxu0
      %v467 = vpop.f32.mrb[0].mxu0
      %v468 = vadd.f32 %v355, %v467
      %v469 = vpop.f32.mrb[0].mxu0
      %470 = vmatprep.mubr.bf16.mxu0 0
      %471 = vmatmul.mubr.bf16.gmra.mrb[0].mxu0 %v412
      %v472 = vpop.f32.mrb[0].mxu0
      %v473 = vadd.f32 %v355, %v472
      %v474 = vpop.f32.mrb[0].mxu0
      %v475 = vpop.f32.mrb[0].mxu0
      %v476 = vadd.f32 %v355, %v475
      %v477 = vpop.f32.mrb[0].mxu0
      %478 = vdwg.mxu0
      %v479 = vmax.f32 %v449, 0.0
      %v480 = vmax.f32 %v452, 0.0
      %v481 = vmax.f32 %v457, 0.0
      %v482 = vmax.f32 %v460, 0.0
      %v483 = vmax.f32 %v465, 0.0
      %v484 = vmax.f32 %v468, 0.0
      %v485 = vmax.f32 %v473, 0.0
      %v486 = vmax.f32 %v476, 0.0
      %vm487 = vcmask 785408
      %488 = vst.msk [vmem:[#allocation2] sm:$0xff] %vm487, 0.0
      %489 = vst.msk [vmem:[#allocation2 + $0x8] sm:$0xff] %vm487, 0.0
      %490 = vst.msk [vmem:[#allocation2 + $0x10] sm:$0xff] %vm487, 0.0
      %491 = vst.msk [vmem:[#allocation2 + $0x18] sm:$0xff] %vm487, 0.0
      %492 = vst.msk [vmem:[#allocation2 + $0x20] sm:$0xff] %vm487, 0.0
      %493 = vst.msk [vmem:[#allocation2 + $0x28] sm:$0xff] %vm487, 0.0
      %494 = vst.msk [vmem:[#allocation2 + $0x30] sm:$0xff] %vm487, 0.0
      %495 = vst.msk [vmem:[#allocation2 + $0x38] sm:$0xff] %vm487, 0.0
      %496 = vst.msk [vmem:[#allocation2 + $0x40] sm:$0xff] %vm487, 0.0
      %497 = vst.msk [vmem:[#allocation2 + $0x48] sm:$0xff] %vm487, 0.0
      %vm498 = vcmask 779264
      %499 = vst.msk [vmem:[#allocation2 + $0x50] sm:$0x3] %vm498, 0.0
      %500 = vst.msk [vmem:[#allocation2 + $0x9] sm:$0xff] %vm487, %v479
      %501 = vst.msk [vmem:[#allocation2 + $0x11] sm:$0xff] %vm487, %v480
      %502 = vst.msk [vmem:[#allocation2 + $0x19] sm:$0xff] %vm487, %v481
      %503 = vst.msk [vmem:[#allocation2 + $0x21] sm:$0xff] %vm487, %v482
      %504 = vst.msk [vmem:[#allocation2 + $0x29] sm:$0xff] %vm487, %v483
      %505 = vst.msk [vmem:[#allocation2 + $0x31] sm:$0xff] %vm487, %v484
      %506 = vst.msk [vmem:[#allocation2 + $0x39] sm:$0xff] %vm487, %v485
      %507 = vst.msk [vmem:[#allocation2 + $0x41] sm:$0xff] %vm487, %v486
      %v508 = vlaneseq
      %v509 = vshrl.u32 %v508, 7
      %v510 = vadd.s32 %v509, 8
      %v511 = vadd.s32 %v509, 16
      %v512 = vadd.s32 %v509, 24
      %v513 = vadd.s32 %v509, 32
      %v514 = vadd.s32 %v509, 40
      %v515 = vadd.s32 %v509, 48
      %v516 = vadd.s32 %v509, 56
      %vm517 = vcmp.lt.s32.totalorder %v509, 0
      %v518 = vsub.s32 0, %v509
      %v519 = vsel %vm517, %v518, %v509
      %v520 = vshrl.u32 %v519, 3
      %v521 = vand.u32 %v519, 7
      %v522 = vsub.s32 0, %v521
      %v523 = vsel %vm517, %v522, %v521
      %vm524 = vcmp.lt.s32.totalorder %v510, 0
      %v525 = vsub.s32 0, %v510
      %v526 = vsel %vm524, %v525, %v510
      %v527 = vshrl.u32 %v526, 3
      %v528 = vand.u32 %v526, 7
      %v529 = vsub.s32 0, %v528
      %v530 = vsel %vm524, %v529, %v528
      %vm531 = vcmp.lt.s32.totalorder %v511, 0
      %v532 = vsub.s32 0, %v511
      %v533 = vsel %vm531, %v532, %v511
      %v534 = vshrl.u32 %v533, 3
      %v535 = vand.u32 %v533, 7
      %v536 = vsub.s32 0, %v535
      %v537 = vsel %vm531, %v536, %v535
      %vm538 = vcmp.lt.s32.totalorder %v512, 0
      %v539 = vsub.s32 0, %v512
      %v540 = vsel %vm538, %v539, %v512
      %v541 = vshrl.u32 %v540, 3
      %v542 = vand.u32 %v540, 7
      %v543 = vsub.s32 0, %v542
      %v544 = vsel %vm538, %v543, %v542
      %vm545 = vcmp.lt.s32.totalorder %v513, 0
      %v546 = vsub.s32 0, %v513
      %v547 = vsel %vm545, %v546, %v513
      %v548 = vshrl.u32 %v547, 3
      %v549 = vand.u32 %v547, 7
      %v550 = vsub.s32 0, %v549
      %v551 = vsel %vm545, %v550, %v549
      %vm552 = vcmp.lt.s32.totalorder %v514, 0
      %v553 = vsub.s32 0, %v514
      %v554 = vsel %vm552, %v553, %v514
      %v555 = vshrl.u32 %v554, 3
      %v556 = vand.u32 %v554, 7
      %v557 = vsub.s32 0, %v556
      %v558 = vsel %vm552, %v557, %v556
      %vm559 = vcmp.lt.s32.totalorder %v515, 0
      %v560 = vsub.s32 0, %v515
      %v561 = vsel %vm559, %v560, %v515
      %v562 = vshrl.u32 %v561, 3
      %v563 = vand.u32 %v561, 7
      %v564 = vsub.s32 0, %v563
      %v565 = vsel %vm559, %v564, %v563
      %vm566 = vcmp.lt.s32.totalorder %v516, 0
      %v567 = vsub.s32 0, %v516
      %v568 = vsel %vm566, %v567, %v516
      %v569 = vshrl.u32 %v568, 3
      %v570 = vand.u32 %v568, 7
      %v571 = vsub.s32 0, %v570
      %v572 = vsel %vm566, %v571, %v570
      %vm573 = vcmp.ne.s32.totalorder %v523, 0
      %vm574 = vcmp.ne.s32.totalorder %v530, 0
      %vm575 = vcmp.ne.s32.totalorder %v537, 0
      %vm576 = vcmp.ne.s32.totalorder %v544, 0
      %vm577 = vcmp.ne.s32.totalorder %v551, 0
      %vm578 = vcmp.ne.s32.totalorder %v558, 0
      %vm579 = vcmp.ne.s32.totalorder %v565, 0
      %vm580 = vcmp.ne.s32.totalorder %v572, 0
      %vm581 = vcmp.lt.s32.totalorder %v523, 0
      %vm582 = vcmp.lt.s32.totalorder %v530, 0
      %vm583 = vcmp.lt.s32.totalorder %v537, 0
      %vm584 = vcmp.lt.s32.totalorder %v544, 0
      %vm585 = vcmp.lt.s32.totalorder %v551, 0
      %vm586 = vcmp.lt.s32.totalorder %v558, 0
      %vm587 = vcmp.lt.s32.totalorder %v565, 0
      %vm588 = vcmp.lt.s32.totalorder %v572, 0
      %vm589 = vmand %vm581, %vm573
      %vm590 = vmand %vm582, %vm574
      %vm591 = vmand %vm583, %vm575
      %vm592 = vmand %vm584, %vm576
      %vm593 = vmand %vm585, %vm577
      %vm594 = vmand %vm586, %vm578
      %vm595 = vmand %vm587, %vm579
      %vm596 = vmand %vm588, %vm580
      %v597 = vadd.s32 %v523, 8
      %v598 = vadd.s32 %v530, 8
      %v599 = vadd.s32 %v537, 8
      %v600 = vadd.s32 %v544, 8
      %v601 = vadd.s32 %v551, 8
      %v602 = vadd.s32 %v558, 8
      %v603 = vadd.s32 %v565, 8
      %v604 = vadd.s32 %v572, 8
      %v605 = vsel %vm589, %v597, %v523
      %v606 = vsel %vm590, %v598, %v530
      %v607 = vsel %vm591, %v599, %v537
      %v608 = vsel %vm592, %v600, %v544
      %v609 = vsel %vm593, %v601, %v551
      %v610 = vsel %vm594, %v602, %v558
      %v611 = vsel %vm595, %v603, %v565
      %v612 = vsel %vm596, %v604, %v572
      %v613 = vld [vmem:[%s4] sm:$0x1]
      %v615 = vlaneseq
      %v616 = vshrl.u32 %v615, 7
      %v617 = vsub.s32 0, %v616
      %v618 = vrot.slane %v613, %v617
      %v620 = vadd.f32 %v618, 0.0
      %v621 = vld [vmem:[#allocation2] sm:$0xff]
      %v622 = vld [vmem:[#allocation2 + $0x8] sm:$0xff]
      %v623 = vld [vmem:[#allocation2 + $0x10] sm:$0xff]
      %v624 = vld [vmem:[#allocation2 + $0x18] sm:$0xff]
      %v625 = vld [vmem:[#allocation2 + $0x20] sm:$0xff]
      %v626 = vld [vmem:[#allocation2 + $0x28] sm:$0xff]
      %v627 = vld [vmem:[#allocation2 + $0x30] sm:$0xff]
      %v628 = vld [vmem:[#allocation2 + $0x38] sm:$0xff]
      %vm629 = vcmp.ne.s32.totalorder %v605, 0
      %vm630 = vcmp.ne.s32.totalorder %v606, 0
      %vm631 = vcmp.ne.s32.totalorder %v607, 0
      %vm632 = vcmp.ne.s32.totalorder %v608, 0
      %vm633 = vcmp.ne.s32.totalorder %v609, 0
      %vm634 = vcmp.ne.s32.totalorder %v610, 0
      %vm635 = vcmp.ne.s32.totalorder %v611, 0
      %vm636 = vcmp.ne.s32.totalorder %v612, 0
      %v637 = vsel %vm629, 1, 0
      %v638 = vsel %vm630, 1, 0
      %v639 = vsel %vm631, 1, 0
      %v640 = vsel %vm632, 1, 0
      %v641 = vsel %vm633, 1, 0
      %v642 = vsel %vm634, 1, 0
      %v643 = vsel %vm635, 1, 0
      %v644 = vsel %vm636, 1, 0
      %vm645 = vcmp.eq.s32.totalorder %v637, 1
      %vm646 = vcmp.eq.s32.totalorder %v638, 1
      %vm647 = vcmp.eq.s32.totalorder %v639, 1
      %vm648 = vcmp.eq.s32.totalorder %v640, 1
      %vm649 = vcmp.eq.s32.totalorder %v641, 1
      %vm650 = vcmp.eq.s32.totalorder %v642, 1
      %vm651 = vcmp.eq.s32.totalorder %v643, 1
      %vm652 = vcmp.eq.s32.totalorder %v644, 1
      %v653 = vsel %vm645, %v621, 0.0
      %v654 = vsel %vm646, %v622, 0.0
      %v655 = vsel %vm647, %v623, 0.0
      %v656 = vsel %vm648, %v624, 0.0
      %v657 = vsel %vm649, %v625, 0.0
      %v658 = vsel %vm650, %v626, 0.0
      %v659 = vsel %vm651, %v627, 0.0
      %v660 = vsel %vm652, %v628, 0.0
      %v661 = vpack.c.bf16 %v654, %v653
      %v662 = vpack.c.bf16 %v656, %v655
      %v663 = vpack.c.bf16 %v658, %v657
      %v664 = vpack.c.bf16 %v660, %v659
      %v665 = vld [vmem:[%s3] sm:$0xf]
      %v666 = vld [vmem:[%s3 + $0x4] sm:$0xf]
      %v667 = vld [vmem:[%s3 + $0x8] sm:$0xf]
      %v668 = vld [vmem:[%s3 + $0xc] sm:$0xf]
      %v669 = vld [vmem:[%s3 + $0x10] sm:$0xf]
      %v670 = vld [vmem:[%s3 + $0x14] sm:$0xf]
      %v671 = vld [vmem:[%s3 + $0x18] sm:$0xf]
      %v672 = vld [vmem:[%s3 + $0x1c] sm:$0xf]
      %v673 = vld [vmem:[%s3 + $0x20] sm:$0xf]
      %v674 = vld [vmem:[%s3 + $0x24] sm:$0xf]
      %v675 = vld [vmem:[%s3 + $0x28] sm:$0xf]
      %v676 = vld [vmem:[%s3 + $0x2c] sm:$0xf]
      %v689 = vunpack.c.l.b16 %v665
      %v690 = vunpack.c.l.b16 %v666
      %v691 = vunpack.c.l.b16 %v667
      %v692 = vunpack.c.l.b16 %v668
      %v693 = vunpack.c.l.b16 %v669
      %v694 = vunpack.c.l.b16 %v670
      %v695 = vunpack.c.l.b16 %v671
      %v696 = vunpack.c.l.b16 %v672
      %v697 = vunpack.c.l.b16 %v673
      %v698 = vunpack.c.l.b16 %v674
      %v699 = vunpack.c.l.b16 %v675
      %v700 = vunpack.c.l.b16 %v676
      %v701 = vpack.c.b16 %v690, %v689
      %v702 = vpack.c.b16 %v692, %v691
      %v703 = vpack.c.b16 %v694, %v693
      %v704 = vpack.c.b16 %v696, %v695
      %v705 = vpack.c.b16 %v698, %v697
      %v706 = vpack.c.b16 %v700, %v699
      %v714 = vsel %vm487, %v661, 0
      %v717 = vsel %vm487, %v662, 0
      %v720 = vsel %vm487, %v663, 0
      %v723 = vsel %vm487, %v664, 0
      %725 = vmatprep.subr.bf16.mxu0 0
      %726 = vmatpush1.bf16.msra.mxu0 %v701
      %727 = vmatprep.subr.bf16.mxu0 0
      %728 = vmatpush1.bf16.msra.mxu0 %v702
      %729 = vmatprep.subr.bf16.mxu0 0
      %730 = vmatpush1.bf16.msra.mxu0 %v703
      %731 = vmatprep.subr.bf16.mxu0 0
      %732 = vmatpush1.bf16.msra.mxu0 %v704
      %733 = vmatprep.subr.bf16.mxu0 0
      %734 = vmatpush1.bf16.msra.mxu0 %v705
      %735 = vmatprep.subr.bf16.mxu0 0
      %736 = vmatpush1.bf16.msra.mxu0 %v706
      %737 = vmatprep.subr.bf16.mxu0 0
      %738 = vmatpush1.bf16.msra.mxu0 0
      %739 = vmatprep.subr.bf16.mxu0 0
      %740 = vmatpush1.bf16.msra.mxu0 0
      %741 = vmatprep.subr.bf16.mxu0 0
      %742 = vmatpush1.bf16.msra.mxu0 0
      %743 = vmatprep.subr.bf16.mxu0 0
      %744 = vmatpush1.bf16.msra.mxu0 0
      %745 = vmatprep.subr.bf16.mxu0 0
      %746 = vmatpush1.bf16.msra.mxu0 0
      %747 = vmatprep.subr.bf16.mxu0 0
      %748 = vmatpush1.bf16.msra.mxu0 0
      %749 = vmatprep.subr.bf16.mxu0 0
      %750 = vmatpush1.bf16.msra.mxu0 0
      %751 = vmatprep.subr.bf16.mxu0 0
      %752 = vmatpush1.bf16.msra.mxu0 0
      %753 = vmatprep.subr.bf16.mxu0 0
      %754 = vmatpush1.bf16.msra.mxu0 0
      %755 = vmatprep.subr.bf16.mxu0 0
      %756 = vmatpush1.bf16.msra.mxu0 0
      %757 = vmatprep.mubr.bf16.mxu0 0
      %758 = vmatmul.mubr.bf16.gmra.mrb[0].mxu0 %v714
      %v759 = vpop.f32.mrb[0].mxu0
      %v760 = vadd.f32 0.0, %v759
      %v761 = vpop.f32.mrb[0].mxu0
      %v762 = vpop.f32.mrb[0].mxu0
      %v763 = vadd.f32 0.0, %v762
      %v764 = vpop.f32.mrb[0].mxu0
      %765 = vmatprep.mubr.bf16.mxu0 0
      %766 = vmatmul.mubr.bf16.gmra.mrb[0].mxu0 %v717
      %v767 = vpop.f32.mrb[0].mxu0
      %v768 = vadd.f32 0.0, %v767
      %v769 = vpop.f32.mrb[0].mxu0
      %v770 = vpop.f32.mrb[0].mxu0
      %v771 = vadd.f32 0.0, %v770
      %v772 = vpop.f32.mrb[0].mxu0
      %773 = vmatprep.mubr.bf16.mxu0 0
      %774 = vmatmul.mubr.bf16.gmra.mrb[0].mxu0 %v720
      %v775 = vpop.f32.mrb[0].mxu0
      %v776 = vadd.f32 0.0, %v775
      %v777 = vpop.f32.mrb[0].mxu0
      %v778 = vpop.f32.mrb[0].mxu0
      %v779 = vadd.f32 0.0, %v778
      %v780 = vpop.f32.mrb[0].mxu0
      %781 = vmatprep.mubr.bf16.mxu0 0
      %782 = vmatmul.mubr.bf16.gmra.mrb[0].mxu0 %v723
      %v783 = vpop.f32.mrb[0].mxu0
      %v784 = vadd.f32 0.0, %v783
      %v785 = vpop.f32.mrb[0].mxu0
      %v786 = vpop.f32.mrb[0].mxu0
      %v787 = vadd.f32 0.0, %v786
      %v788 = vpop.f32.mrb[0].mxu0
      %789 = vdwg.mxu0
      %v790 = vadd.f32 %v620, %v760
      %v791 = vadd.f32 %v620, %v763
      %v792 = vadd.f32 %v620, %v768
      %v793 = vadd.f32 %v620, %v771
      %v794 = vadd.f32 %v620, %v776
      %v795 = vadd.f32 %v620, %v779
      %v796 = vadd.f32 %v620, %v784
      %v797 = vadd.f32 %v620, %v787
      %v798 = vld [vmem:[#allocation2 + $0x1] sm:$0xff]
      %v799 = vld [vmem:[#allocation2 + $0x9] sm:$0xff]
      %v800 = vld [vmem:[#allocation2 + $0x11] sm:$0xff]
      %v801 = vld [vmem:[#allocation2 + $0x19] sm:$0xff]
      %v802 = vld [vmem:[#allocation2 + $0x21] sm:$0xff]
      %v803 = vld [vmem:[#allocation2 + $0x29] sm:$0xff]
      %v804 = vld [vmem:[#allocation2 + $0x31] sm:$0xff]
      %v805 = vld [vmem:[#allocation2 + $0x39] sm:$0xff]
      %v806 = vpack.c.bf16 %v799, %v798
      %v807 = vpack.c.bf16 %v801, %v800
      %v808 = vpack.c.bf16 %v803, %v802
      %v809 = vpack.c.bf16 %v805, %v804
      %s810 = scalar_lea.vmem %s3, 48
      %v811 = vld [vmem:[%s810] sm:$0xf]
      %v812 = vld [vmem:[%s810 + $0x4] sm:$0xf]
      %v813 = vld [vmem:[%s810 + $0x8] sm:$0xf]
      %v814 = vld [vmem:[%s810 + $0xc] sm:$0xf]
      %v815 = vld [vmem:[%s810 + $0x10] sm:$0xf]
      %v816 = vld [vmem:[%s810 + $0x14] sm:$0xf]
      %v817 = vld [vmem:[%s810 + $0x18] sm:$0xf]
      %v818 = vld [vmem:[%s810 + $0x1c] sm:$0xf]
      %v819 = vld [vmem:[%s810 + $0x20] sm:$0xf]
      %v820 = vld [vmem:[%s810 + $0x24] sm:$0xf]
      %v821 = vld [vmem:[%s810 + $0x28] sm:$0xf]
      %v822 = vld [vmem:[%s810 + $0x2c] sm:$0xf]
      %v835 = vunpack.c.l.b16 %v811
      %v836 = vunpack.c.l.b16 %v812
      %v837 = vunpack.c.l.b16 %v813
      %v838 = vunpack.c.l.b16 %v814
      %v839 = vunpack.c.l.b16 %v815
      %v840 = vunpack.c.l.b16 %v816
      %v841 = vunpack.c.l.b16 %v817
      %v842 = vunpack.c.l.b16 %v818
      %v843 = vunpack.c.l.b16 %v819
      %v844 = vunpack.c.l.b16 %v820
      %v845 = vunpack.c.l.b16 %v821
      %v846 = vunpack.c.l.b16 %v822
      %v847 = vpack.c.b16 %v836, %v835
      %v848 = vpack.c.b16 %v838, %v837
      %v849 = vpack.c.b16 %v840, %v839
      %v850 = vpack.c.b16 %v842, %v841
      %v851 = vpack.c.b16 %v844, %v843
      %v852 = vpack.c.b16 %v846, %v845
      %v860 = vsel %vm487, %v806, 0
      %v863 = vsel %vm487, %v807, 0
      %v866 = vsel %vm487, %v808, 0
      %v869 = vsel %vm487, %v809, 0
      %871 = vmatprep.subr.bf16.mxu0 0
      %872 = vmatpush1.bf16.msra.mxu0 %v847
      %873 = vmatprep.subr.bf16.mxu0 0
      %874 = vmatpush1.bf16.msra.mxu0 %v848
      %875 = vmatprep.subr.bf16.mxu0 0
      %876 = vmatpush1.bf16.msra.mxu0 %v849
      %877 = vmatprep.subr.bf16.mxu0 0
      %878 = vmatpush1.bf16.msra.mxu0 %v850
      %879 = vmatprep.subr.bf16.mxu0 0
      %880 = vmatpush1.bf16.msra.mxu0 %v851
      %881 = vmatprep.subr.bf16.mxu0 0
      %882 = vmatpush1.bf16.msra.mxu0 %v852
      %883 = vmatprep.subr.bf16.mxu0 0
      %884 = vmatpush1.bf16.msra.mxu0 0
      %885 = vmatprep.subr.bf16.mxu0 0
      %886 = vmatpush1.bf16.msra.mxu0 0
      %887 = vmatprep.subr.bf16.mxu0 0
      %888 = vmatpush1.bf16.msra.mxu0 0
      %889 = vmatprep.subr.bf16.mxu0 0
      %890 = vmatpush1.bf16.msra.mxu0 0
      %891 = vmatprep.subr.bf16.mxu0 0
      %892 = vmatpush1.bf16.msra.mxu0 0
      %893 = vmatprep.subr.bf16.mxu0 0
      %894 = vmatpush1.bf16.msra.mxu0 0
      %895 = vmatprep.subr.bf16.mxu0 0
      %896 = vmatpush1.bf16.msra.mxu0 0
      %897 = vmatprep.subr.bf16.mxu0 0
      %898 = vmatpush1.bf16.msra.mxu0 0
      %899 = vmatprep.subr.bf16.mxu0 0
      %900 = vmatpush1.bf16.msra.mxu0 0
      %901 = vmatprep.subr.bf16.mxu0 0
      %902 = vmatpush1.bf16.msra.mxu0 0
      %903 = vmatprep.mubr.bf16.mxu0 0
      %904 = vmatmul.mubr.bf16.gmra.mrb[0].mxu0 %v860
      %v905 = vpop.f32.mrb[0].mxu0
      %v906 = vadd.f32 0.0, %v905
      %v907 = vpop.f32.mrb[0].mxu0
      %v908 = vpop.f32.mrb[0].mxu0
      %v909 = vadd.f32 0.0, %v908
      %v910 = vpop.f32.mrb[0].mxu0
      %911 = vmatprep.mubr.bf16.mxu0 0
      %912 = vmatmul.mubr.bf16.gmra.mrb[0].mxu0 %v863
      %v913 = vpop.f32.mrb[0].mxu0
      %v914 = vadd.f32 0.0, %v913
      %v915 = vpop.f32.mrb[0].mxu0
      %v916 = vpop.f32.mrb[0].mxu0
      %v917 = vadd.f32 0.0, %v916
      %v918 = vpop.f32.mrb[0].mxu0
      %919 = vmatprep.mubr.bf16.mxu0 0
      %920 = vmatmul.mubr.bf16.gmra.mrb[0].mxu0 %v866
      %v921 = vpop.f32.mrb[0].mxu0
      %v922 = vadd.f32 0.0, %v921
      %v923 = vpop.f32.mrb[0].mxu0
      %v924 = vpop.f32.mrb[0].mxu0
      %v925 = vadd.f32 0.0, %v924
      %v926 = vpop.f32.mrb[0].mxu0
      %927 = vmatprep.mubr.bf16.mxu0 0
      %928 = vmatmul.mubr.bf16.gmra.mrb[0].mxu0 %v869
      %v929 = vpop.f32.mrb[0].mxu0
      %v930 = vadd.f32 0.0, %v929
      %v931 = vpop.f32.mrb[0].mxu0
      %v932 = vpop.f32.mrb[0].mxu0
      %v933 = vadd.f32 0.0, %v932
      %v934 = vpop.f32.mrb[0].mxu0
      %935 = vdwg.mxu0
      %v936 = vadd.f32 %v790, %v906
      %v937 = vadd.f32 %v791, %v909
      %v938 = vadd.f32 %v792, %v914
      %v939 = vadd.f32 %v793, %v917
      %v940 = vadd.f32 %v794, %v922
      %v941 = vadd.f32 %v795, %v925
      %v942 = vadd.f32 %v796, %v930
      %v943 = vadd.f32 %v797, %v933
      %v944 = vld [vmem:[#allocation2 + $0x2] sm:$0xff]
      %v945 = vld [vmem:[#allocation2 + $0xa] sm:$0xff]
      %v946 = vld [vmem:[#allocation2 + $0x12] sm:$0xff]
      %v947 = vld [vmem:[#allocation2 + $0x1a] sm:$0xff]
      %v948 = vld [vmem:[#allocation2 + $0x22] sm:$0xff]
      %v949 = vld [vmem:[#allocation2 + $0x2a] sm:$0xff]
      %v950 = vld [vmem:[#allocation2 + $0x32] sm:$0xff]
      %v951 = vld [vmem:[#allocation2 + $0x3a] sm:$0xff]
      %vm952 = vcmp.ne.s32.totalorder %v605, 7
      %vm953 = vcmp.ne.s32.totalorder %v606, 7
      %vm954 = vcmp.ne.s32.totalorder %v607, 7
      %vm955 = vcmp.ne.s32.totalorder %v608, 7
      %vm956 = vcmp.ne.s32.totalorder %v609, 7
      %vm957 = vcmp.ne.s32.totalorder %v610, 7
      %vm958 = vcmp.ne.s32.totalorder %v611, 7
      %vm959 = vcmp.ne.s32.totalorder %v612, 7
      %v960 = vsel %vm952, 1, 0
      %v961 = vsel %vm953, 1, 0
      %v962 = vsel %vm954, 1, 0
      %v963 = vsel %vm955, 1, 0
      %v964 = vsel %vm956, 1, 0
      %v965 = vsel %vm957, 1, 0
      %v966 = vsel %vm958, 1, 0
      %v967 = vsel %vm959, 1, 0
      %vm968 = vcmp.eq.s32.totalorder %v960, 1
      %vm969 = vcmp.eq.s32.totalorder %v961, 1
      %vm970 = vcmp.eq.s32.totalorder %v962, 1
      %vm971 = vcmp.eq.s32.totalorder %v963, 1
      %vm972 = vcmp.eq.s32.totalorder %v964, 1
      %vm973 = vcmp.eq.s32.totalorder %v965, 1
      %vm974 = vcmp.eq.s32.totalorder %v966, 1
      %vm975 = vcmp.eq.s32.totalorder %v967, 1
      %v976 = vsel %vm968, %v944, 0.0
      %v977 = vsel %vm969, %v945, 0.0
      %v978 = vsel %vm970, %v946, 0.0
      %v979 = vsel %vm971, %v947, 0.0
      %v980 = vsel %vm972, %v948, 0.0
      %v981 = vsel %vm973, %v949, 0.0
      %v982 = vsel %vm974, %v950, 0.0
      %v983 = vsel %vm975, %v951, 0.0
      %v984 = vpack.c.bf16 %v977, %v976
      %v985 = vpack.c.bf16 %v979, %v978
      %v986 = vpack.c.bf16 %v981, %v980
      %v987 = vpack.c.bf16 %v983, %v982
      %s988 = scalar_lea.vmem %s3, 96
      %v989 = vld [vmem:[%s988] sm:$0xf]
      %v990 = vld [vmem:[%s988 + $0x4] sm:$0xf]
      %v991 = vld [vmem:[%s988 + $0x8] sm:$0xf]
      %v992 = vld [vmem:[%s988 + $0xc] sm:$0xf]
      %v993 = vld [vmem:[%s988 + $0x10] sm:$0xf]
      %v994 = vld [vmem:[%s988 + $0x14] sm:$0xf]
      %v995 = vld [vmem:[%s988 + $0x18] sm:$0xf]
      %v996 = vld [vmem:[%s988 + $0x1c] sm:$0xf]
      %v997 = vld [vmem:[%s988 + $0x20] sm:$0xf]
      %v998 = vld [vmem:[%s988 + $0x24] sm:$0xf]
      %v999 = vld [vmem:[%s988 + $0x28] sm:$0xf]
      %v1000 = vld [vmem:[%s988 + $0x2c] sm:$0xf]
      %v1013 = vunpack.c.l.b16 %v989
      %v1014 = vunpack.c.l.b16 %v990
      %v1015 = vunpack.c.l.b16 %v991
      %v1016 = vunpack.c.l.b16 %v992
      %v1017 = vunpack.c.l.b16 %v993
      %v1018 = vunpack.c.l.b16 %v994
      %v1019 = vunpack.c.l.b16 %v995
      %v1020 = vunpack.c.l.b16 %v996
      %v1021 = vunpack.c.l.b16 %v997
      %v1022 = vunpack.c.l.b16 %v998
      %v1023 = vunpack.c.l.b16 %v999
      %v1024 = vunpack.c.l.b16 %v1000
      %v1025 = vpack.c.b16 %v1014, %v1013
      %v1026 = vpack.c.b16 %v1016, %v1015
      %v1027 = vpack.c.b16 %v1018, %v1017
      %v1028 = vpack.c.b16 %v1020, %v1019
      %v1029 = vpack.c.b16 %v1022, %v1021
      %v1030 = vpack.c.b16 %v1024, %v1023
      %v1038 = vsel %vm487, %v984, 0
      %v1041 = vsel %vm487, %v985, 0
      %v1044 = vsel %vm487, %v986, 0
      %v1047 = vsel %vm487, %v987, 0
      %1049 = vmatprep.subr.bf16.mxu0 0
      %1050 = vmatpush1.bf16.msra.mxu0 %v1025
      %1051 = vmatprep.subr.bf16.mxu0 0
      %1052 = vmatpush1.bf16.msra.mxu0 %v1026
      %1053 = vmatprep.subr.bf16.mxu0 0
      %1054 = vmatpush1.bf16.msra.mxu0 %v1027
      %1055 = vmatprep.subr.bf16.mxu0 0
      %1056 = vmatpush1.bf16.msra.mxu0 %v1028
      %1057 = vmatprep.subr.bf16.mxu0 0
      %1058 = vmatpush1.bf16.msra.mxu0 %v1029
      %1059 = vmatprep.subr.bf16.mxu0 0
      %1060 = vmatpush1.bf16.msra.mxu0 %v1030
      %1061 = vmatprep.subr.bf16.mxu0 0
      %1062 = vmatpush1.bf16.msra.mxu0 0
      %1063 = vmatprep.subr.bf16.mxu0 0
      %1064 = vmatpush1.bf16.msra.mxu0 0
      %1065 = vmatprep.subr.bf16.mxu0 0
      %1066 = vmatpush1.bf16.msra.mxu0 0
      %1067 = vmatprep.subr.bf16.mxu0 0
      %1068 = vmatpush1.bf16.msra.mxu0 0
      %1069 = vmatprep.subr.bf16.mxu0 0
      %1070 = vmatpush1.bf16.msra.mxu0 0
      %1071 = vmatprep.subr.bf16.mxu0 0
      %1072 = vmatpush1.bf16.msra.mxu0 0
      %1073 = vmatprep.subr.bf16.mxu0 0
      %1074 = vmatpush1.bf16.msra.mxu0 0
      %1075 = vmatprep.subr.bf16.mxu0 0
      %1076 = vmatpush1.bf16.msra.mxu0 0
      %1077 = vmatprep.subr.bf16.mxu0 0
      %1078 = vmatpush1.bf16.msra.mxu0 0
      %1079 = vmatprep.subr.bf16.mxu0 0
      %1080 = vmatpush1.bf16.msra.mxu0 0
      %1081 = vmatprep.mubr.bf16.mxu0 0
      %1082 = vmatmul.mubr.bf16.gmra.mrb[0].mxu0 %v1038
      %v1083 = vpop.f32.mrb[0].mxu0
      %v1084 = vadd.f32 0.0, %v1083
      %v1085 = vpop.f32.mrb[0].mxu0
      %v1086 = vpop.f32.mrb[0].mxu0
      %v1087 = vadd.f32 0.0, %v1086
      %v1088 = vpop.f32.mrb[0].mxu0
      %1089 = vmatprep.mubr.bf16.mxu0 0
      %1090 = vmatmul.mubr.bf16.gmra.mrb[0].mxu0 %v1041
      %v1091 = vpop.f32.mrb[0].mxu0
      %v1092 = vadd.f32 0.0, %v1091
      %v1093 = vpop.f32.mrb[0].mxu0
      %v1094 = vpop.f32.mrb[0].mxu0
      %v1095 = vadd.f32 0.0, %v1094
      %v1096 = vpop.f32.mrb[0].mxu0
      %1097 = vmatprep.mubr.bf16.mxu0 0
      %1098 = vmatmul.mubr.bf16.gmra.mrb[0].mxu0 %v1044
      %v1099 = vpop.f32.mrb[0].mxu0
      %v1100 = vadd.f32 0.0, %v1099
      %v1101 = vpop.f32.mrb[0].mxu0
      %v1102 = vpop.f32.mrb[0].mxu0
      %v1103 = vadd.f32 0.0, %v1102
      %v1104 = vpop.f32.mrb[0].mxu0
      %1105 = vmatprep.mubr.bf16.mxu0 0
      %1106 = vmatmul.mubr.bf16.gmra.mrb[0].mxu0 %v1047
      %v1107 = vpop.f32.mrb[0].mxu0
      %v1108 = vadd.f32 0.0, %v1107
      %v1109 = vpop.f32.mrb[0].mxu0
      %v1110 = vpop.f32.mrb[0].mxu0
      %v1111 = vadd.f32 0.0, %v1110
      %v1112 = vpop.f32.mrb[0].mxu0
      %1113 = vdwg.mxu0
      %v1114 = vadd.f32 %v936, %v1084
      %v1115 = vadd.f32 %v937, %v1087
      %v1116 = vadd.f32 %v938, %v1092
      %v1117 = vadd.f32 %v939, %v1095
      %v1118 = vadd.f32 %v940, %v1100
      %v1119 = vadd.f32 %v941, %v1103
      %v1120 = vadd.f32 %v942, %v1108
      %v1121 = vadd.f32 %v943, %v1111
      %v1122 = vld [vmem:[#allocation2 + $0x8] sm:$0xff]
      %v1123 = vld [vmem:[#allocation2 + $0x10] sm:$0xff]
      %v1124 = vld [vmem:[#allocation2 + $0x18] sm:$0xff]
      %v1125 = vld [vmem:[#allocation2 + $0x20] sm:$0xff]
      %v1126 = vld [vmem:[#allocation2 + $0x28] sm:$0xff]
      %v1127 = vld [vmem:[#allocation2 + $0x30] sm:$0xff]
      %v1128 = vld [vmem:[#allocation2 + $0x38] sm:$0xff]
      %v1129 = vld [vmem:[#allocation2 + $0x40] sm:$0xff]
      %v1130 = vsel %vm645, %v1122, 0.0
      %v1131 = vsel %vm646, %v1123, 0.0
      %v1132 = vsel %vm647, %v1124, 0.0
      %v1133 = vsel %vm648, %v1125, 0.0
      %v1134 = vsel %vm649, %v1126, 0.0
      %v1135 = vsel %vm650, %v1127, 0.0
      %v1136 = vsel %vm651, %v1128, 0.0
      %v1137 = vsel %vm652, %v1129, 0.0
      %v1138 = vpack.c.bf16 %v1131, %v1130
      %v1139 = vpack.c.bf16 %v1133, %v1132
      %v1140 = vpack.c.bf16 %v1135, %v1134
      %v1141 = vpack.c.bf16 %v1137, %v1136
      %s1142 = scalar_lea.vmem %s3, 144
      %v1143 = vld [vmem:[%s1142] sm:$0xf]
      %v1144 = vld [vmem:[%s1142 + $0x4] sm:$0xf]
      %v1145 = vld [vmem:[%s1142 + $0x8] sm:$0xf]
      %v1146 = vld [vmem:[%s1142 + $0xc] sm:$0xf]
      %v1147 = vld [vmem:[%s1142 + $0x10] sm:$0xf]
      %v1148 = vld [vmem:[%s1142 + $0x14] sm:$0xf]
      %v1149 = vld [vmem:[%s1142 + $0x18] sm:$0xf]
      %v1150 = vld [vmem:[%s1142 + $0x1c] sm:$0xf]
      %v1151 = vld [vmem:[%s1142 + $0x20] sm:$0xf]
      %v1152 = vld [vmem:[%s1142 + $0x24] sm:$0xf]
      %v1153 = vld [vmem:[%s1142 + $0x28] sm:$0xf]
      %v1154 = vld [vmem:[%s1142 + $0x2c] sm:$0xf]
      %v1167 = vunpack.c.l.b16 %v1143
      %v1168 = vunpack.c.l.b16 %v1144
      %v1169 = vunpack.c.l.b16 %v1145
      %v1170 = vunpack.c.l.b16 %v1146
      %v1171 = vunpack.c.l.b16 %v1147
      %v1172 = vunpack.c.l.b16 %v1148
      %v1173 = vunpack.c.l.b16 %v1149
      %v1174 = vunpack.c.l.b16 %v1150
      %v1175 = vunpack.c.l.b16 %v1151
      %v1176 = vunpack.c.l.b16 %v1152
      %v1177 = vunpack.c.l.b16 %v1153
      %v1178 = vunpack.c.l.b16 %v1154
      %v1179 = vpack.c.b16 %v1168, %v1167
      %v1180 = vpack.c.b16 %v1170, %v1169
      %v1181 = vpack.c.b16 %v1172, %v1171
      %v1182 = vpack.c.b16 %v1174, %v1173
      %v1183 = vpack.c.b16 %v1176, %v1175
      %v1184 = vpack.c.b16 %v1178, %v1177
      %v1192 = vsel %vm487, %v1138, 0
      %v1195 = vsel %vm487, %v1139, 0
      %v1198 = vsel %vm487, %v1140, 0
      %v1201 = vsel %vm487, %v1141, 0
      %1203 = vmatprep.subr.bf16.mxu0 0
      %1204 = vmatpush1.bf16.msra.mxu0 %v1179
      %1205 = vmatprep.subr.bf16.mxu0 0
      %1206 = vmatpush1.bf16.msra.mxu0 %v1180
      %1207 = vmatprep.subr.bf16.mxu0 0
      %1208 = vmatpush1.bf16.msra.mxu0 %v1181
      %1209 = vmatprep.subr.bf16.mxu0 0
      %1210 = vmatpush1.bf16.msra.mxu0 %v1182
      %1211 = vmatprep.subr.bf16.mxu0 0
      %1212 = vmatpush1.bf16.msra.mxu0 %v1183
      %1213 = vmatprep.subr.bf16.mxu0 0
      %1214 = vmatpush1.bf16.msra.mxu0 %v1184
      %1215 = vmatprep.subr.bf16.mxu0 0
      %1216 = vmatpush1.bf16.msra.mxu0 0
      %1217 = vmatprep.subr.bf16.mxu0 0
      %1218 = vmatpush1.bf16.msra.mxu0 0
      %1219 = vmatprep.subr.bf16.mxu0 0
      %1220 = vmatpush1.bf16.msra.mxu0 0
      %1221 = vmatprep.subr.bf16.mxu0 0
      %1222 = vmatpush1.bf16.msra.mxu0 0
      %1223 = vmatprep.subr.bf16.mxu0 0
      %1224 = vmatpush1.bf16.msra.mxu0 0
      %1225 = vmatprep.subr.bf16.mxu0 0
      %1226 = vmatpush1.bf16.msra.mxu0 0
      %1227 = vmatprep.subr.bf16.mxu0 0
      %1228 = vmatpush1.bf16.msra.mxu0 0
      %1229 = vmatprep.subr.bf16.mxu0 0
      %1230 = vmatpush1.bf16.msra.mxu0 0
      %1231 = vmatprep.subr.bf16.mxu0 0
      %1232 = vmatpush1.bf16.msra.mxu0 0
      %1233 = vmatprep.subr.bf16.mxu0 0
      %1234 = vmatpush1.bf16.msra.mxu0 0
      %1235 = vmatprep.mubr.bf16.mxu0 0
      %1236 = vmatmul.mubr.bf16.gmra.mrb[0].mxu0 %v1192
      %v1237 = vpop.f32.mrb[0].mxu0
      %v1238 = vadd.f32 0.0, %v1237
      %v1239 = vpop.f32.mrb[0].mxu0
      %v1240 = vpop.f32.mrb[0].mxu0
      %v1241 = vadd.f32 0.0, %v1240
      %v1242 = vpop.f32.mrb[0].mxu0
      %1243 = vmatprep.mubr.bf16.mxu0 0
      %1244 = vmatmul.mubr.bf16.gmra.mrb[0].mxu0 %v1195
      %v1245 = vpop.f32.mrb[0].mxu0
      %v1246 = vadd.f32 0.0, %v1245
      %v1247 = vpop.f32.mrb[0].mxu0
      %v1248 = vpop.f32.mrb[0].mxu0
      %v1249 = vadd.f32 0.0, %v1248
      %v1250 = vpop.f32.mrb[0].mxu0
      %1251 = vmatprep.mubr.bf16.mxu0 0
      %1252 = vmatmul.mubr.bf16.gmra.mrb[0].mxu0 %v1198
      %v1253 = vpop.f32.mrb[0].mxu0
      %v1254 = vadd.f32 0.0, %v1253
      %v1255 = vpop.f32.mrb[0].mxu0
      %v1256 = vpop.f32.mrb[0].mxu0
      %v1257 = vadd.f32 0.0, %v1256
      %v1258 = vpop.f32.mrb[0].mxu0
      %1259 = vmatprep.mubr.bf16.mxu0 0
      %1260 = vmatmul.mubr.bf16.gmra.mrb[0].mxu0 %v1201
      %v1261 = vpop.f32.mrb[0].mxu0
      %v1262 = vadd.f32 0.0, %v1261
      %v1263 = vpop.f32.mrb[0].mxu0
      %v1264 = vpop.f32.mrb[0].mxu0
      %v1265 = vadd.f32 0.0, %v1264
      %v1266 = vpop.f32.mrb[0].mxu0
      %1267 = vdwg.mxu0
      %v1268 = vadd.f32 %v1114, %v1238
      %v1269 = vadd.f32 %v1115, %v1241
      %v1270 = vadd.f32 %v1116, %v1246
      %v1271 = vadd.f32 %v1117, %v1249
      %v1272 = vadd.f32 %v1118, %v1254
      %v1273 = vadd.f32 %v1119, %v1257
      %v1274 = vadd.f32 %v1120, %v1262
      %v1275 = vadd.f32 %v1121, %v1265
      %v1276 = vld [vmem:[#allocation2 + $0x9] sm:$0xff]
      %v1277 = vld [vmem:[#allocation2 + $0x11] sm:$0xff]
      %v1278 = vld [vmem:[#allocation2 + $0x19] sm:$0xff]
      %v1279 = vld [vmem:[#allocation2 + $0x21] sm:$0xff]
      %v1280 = vld [vmem:[#allocation2 + $0x29] sm:$0xff]
      %v1281 = vld [vmem:[#allocation2 + $0x31] sm:$0xff]
      %v1282 = vld [vmem:[#allocation2 + $0x39] sm:$0xff]
      %v1283 = vld [vmem:[#allocation2 + $0x41] sm:$0xff]
      %v1284 = vpack.c.bf16 %v1277, %v1276
      %v1285 = vpack.c.bf16 %v1279, %v1278
      %v1286 = vpack.c.bf16 %v1281, %v1280
      %v1287 = vpack.c.bf16 %v1283, %v1282
      %s1288 = scalar_lea.vmem %s3, 192
      %v1289 = vld [vmem:[%s1288] sm:$0xf]
      %v1290 = vld [vmem:[%s1288 + $0x4] sm:$0xf]
      %v1291 = vld [vmem:[%s1288 + $0x8] sm:$0xf]
      %v1292 = vld [vmem:[%s1288 + $0xc] sm:$0xf]
      %v1293 = vld [vmem:[%s1288 + $0x10] sm:$0xf]
      %v1294 = vld [vmem:[%s1288 + $0x14] sm:$0xf]
      %v1295 = vld [vmem:[%s1288 + $0x18] sm:$0xf]
      %v1296 = vld [vmem:[%s1288 + $0x1c] sm:$0xf]
      %v1297 = vld [vmem:[%s1288 + $0x20] sm:$0xf]
      %v1298 = vld [vmem:[%s1288 + $0x24] sm:$0xf]
      %v1299 = vld [vmem:[%s1288 + $0x28] sm:$0xf]
      %v1300 = vld [vmem:[%s1288 + $0x2c] sm:$0xf]
      %v1313 = vunpack.c.l.b16 %v1289
      %v1314 = vunpack.c.l.b16 %v1290
      %v1315 = vunpack.c.l.b16 %v1291
      %v1316 = vunpack.c.l.b16 %v1292
      %v1317 = vunpack.c.l.b16 %v1293
      %v1318 = vunpack.c.l.b16 %v1294
      %v1319 = vunpack.c.l.b16 %v1295
      %v1320 = vunpack.c.l.b16 %v1296
      %v1321 = vunpack.c.l.b16 %v1297
      %v1322 = vunpack.c.l.b16 %v1298
      %v1323 = vunpack.c.l.b16 %v1299
      %v1324 = vunpack.c.l.b16 %v1300
      %v1325 = vpack.c.b16 %v1314, %v1313
      %v1326 = vpack.c.b16 %v1316, %v1315
      %v1327 = vpack.c.b16 %v1318, %v1317
      %v1328 = vpack.c.b16 %v1320, %v1319
      %v1329 = vpack.c.b16 %v1322, %v1321
      %v1330 = vpack.c.b16 %v1324, %v1323
      %v1338 = vsel %vm487, %v1284, 0
      %v1341 = vsel %vm487, %v1285, 0
      %v1344 = vsel %vm487, %v1286, 0
      %v1347 = vsel %vm487, %v1287, 0
      %1349 = vmatprep.subr.bf16.mxu0 0
      %1350 = vmatpush1.bf16.msra.mxu0 %v1325
      %1351 = vmatprep.subr.bf16.mxu0 0
      %1352 = vmatpush1.bf16.msra.mxu0 %v1326
      %1353 = vmatprep.subr.bf16.mxu0 0
      %1354 = vmatpush1.bf16.msra.mxu0 %v1327
      %1355 = vmatprep.subr.bf16.mxu0 0
      %1356 = vmatpush1.bf16.msra.mxu0 %v1328
      %1357 = vmatprep.subr.bf16.mxu0 0
      %1358 = vmatpush1.bf16.msra.mxu0 %v1329
      %1359 = vmatprep.subr.bf16.mxu0 0
      %1360 = vmatpush1.bf16.msra.mxu0 %v1330
      %1361 = vmatprep.subr.bf16.mxu0 0
      %1362 = vmatpush1.bf16.msra.mxu0 0
      %1363 = vmatprep.subr.bf16.mxu0 0
      %1364 = vmatpush1.bf16.msra.mxu0 0
      %1365 = vmatprep.subr.bf16.mxu0 0
      %1366 = vmatpush1.bf16.msra.mxu0 0
      %1367 = vmatprep.subr.bf16.mxu0 0
      %1368 = vmatpush1.bf16.msra.mxu0 0
      %1369 = vmatprep.subr.bf16.mxu0 0
      %1370 = vmatpush1.bf16.msra.mxu0 0
      %1371 = vmatprep.subr.bf16.mxu0 0
      %1372 = vmatpush1.bf16.msra.mxu0 0
      %1373 = vmatprep.subr.bf16.mxu0 0
      %1374 = vmatpush1.bf16.msra.mxu0 0
      %1375 = vmatprep.subr.bf16.mxu0 0
      %1376 = vmatpush1.bf16.msra.mxu0 0
      %1377 = vmatprep.subr.bf16.mxu0 0
      %1378 = vmatpush1.bf16.msra.mxu0 0
      %1379 = vmatprep.subr.bf16.mxu0 0
      %1380 = vmatpush1.bf16.msra.mxu0 0
      %1381 = vmatprep.mubr.bf16.mxu0 0
      %1382 = vmatmul.mubr.bf16.gmra.mrb[0].mxu0 %v1338
      %v1383 = vpop.f32.mrb[0].mxu0
      %v1384 = vadd.f32 0.0, %v1383
      %v1385 = vpop.f32.mrb[0].mxu0
      %v1386 = vpop.f32.mrb[0].mxu0
      %v1387 = vadd.f32 0.0, %v1386
      %v1388 = vpop.f32.mrb[0].mxu0
      %1389 = vmatprep.mubr.bf16.mxu0 0
      %1390 = vmatmul.mubr.bf16.gmra.mrb[0].mxu0 %v1341
      %v1391 = vpop.f32.mrb[0].mxu0
      %v1392 = vadd.f32 0.0, %v1391
      %v1393 = vpop.f32.mrb[0].mxu0
      %v1394 = vpop.f32.mrb[0].mxu0
      %v1395 = vadd.f32 0.0, %v1394
      %v1396 = vpop.f32.mrb[0].mxu0
      %1397 = vmatprep.mubr.bf16.mxu0 0
      %1398 = vmatmul.mubr.bf16.gmra.mrb[0].mxu0 %v1344
      %v1399 = vpop.f32.mrb[0].mxu0
      %v1400 = vadd.f32 0.0, %v1399
      %v1401 = vpop.f32.mrb[0].mxu0
      %v1402 = vpop.f32.mrb[0].mxu0
      %v1403 = vadd.f32 0.0, %v1402
      %v1404 = vpop.f32.mrb[0].mxu0
      %1405 = vmatprep.mubr.bf16.mxu0 0
      %1406 = vmatmul.mubr.bf16.gmra.mrb[0].mxu0 %v1347
      %v1407 = vpop.f32.mrb[0].mxu0
      %v1408 = vadd.f32 0.0, %v1407
      %v1409 = vpop.f32.mrb[0].mxu0
      %v1410 = vpop.f32.mrb[0].mxu0
      %v1411 = vadd.f32 0.0, %v1410
      %v1412 = vpop.f32.mrb[0].mxu0
      %1413 = vdwg.mxu0
      %v1414 = vadd.f32 %v1268, %v1384
      %v1415 = vadd.f32 %v1269, %v1387
      %v1416 = vadd.f32 %v1270, %v1392
      %v1417 = vadd.f32 %v1271, %v1395
      %v1418 = vadd.f32 %v1272, %v1400
      %v1419 = vadd.f32 %v1273, %v1403
      %v1420 = vadd.f32 %v1274, %v1408
      %v1421 = vadd.f32 %v1275, %v1411
      %v1422 = vld [vmem:[#allocation2 + $0xa] sm:$0xff]
      %v1423 = vld [vmem:[#allocation2 + $0x12] sm:$0xff]
      %v1424 = vld [vmem:[#allocation2 + $0x1a] sm:$0xff]
      %v1425 = vld [vmem:[#allocation2 + $0x22] sm:$0xff]
      %v1426 = vld [vmem:[#allocation2 + $0x2a] sm:$0xff]
      %v1427 = vld [vmem:[#allocation2 + $0x32] sm:$0xff]
      %v1428 = vld [vmem:[#allocation2 + $0x3a] sm:$0xff]
      %v1429 = vld [vmem:[#allocation2 + $0x42] sm:$0xff]
      %v1430 = vsel %vm968, %v1422, 0.0
      %v1431 = vsel %vm969, %v1423, 0.0
      %v1432 = vsel %vm970, %v1424, 0.0
      %v1433 = vsel %vm971, %v1425, 0.0
      %v1434 = vsel %vm972, %v1426, 0.0
      %v1435 = vsel %vm973, %v1427, 0.0
      %v1436 = vsel %vm974, %v1428, 0.0
      %v1437 = vsel %vm975, %v1429, 0.0
      %v1438 = vpack.c.bf16 %v1431, %v1430
      %v1439 = vpack.c.bf16 %v1433, %v1432
      %v1440 = vpack.c.bf16 %v1435, %v1434
      %v1441 = vpack.c.bf16 %v1437, %v1436
      %s1442 = scalar_lea.vmem %s3, 240
      %v1443 = vld [vmem:[%s1442] sm:$0xf]
      %v1444 = vld [vmem:[%s1442 + $0x4] sm:$0xf]
      %v1445 = vld [vmem:[%s1442 + $0x8] sm:$0xf]
      %v1446 = vld [vmem:[%s1442 + $0xc] sm:$0xf]
      %v1447 = vld [vmem:[%s1442 + $0x10] sm:$0xf]
      %v1448 = vld [vmem:[%s1442 + $0x14] sm:$0xf]
      %v1449 = vld [vmem:[%s1442 + $0x18] sm:$0xf]
      %v1450 = vld [vmem:[%s1442 + $0x1c] sm:$0xf]
      %v1451 = vld [vmem:[%s1442 + $0x20] sm:$0xf]
      %v1452 = vld [vmem:[%s1442 + $0x24] sm:$0xf]
      %v1453 = vld [vmem:[%s1442 + $0x28] sm:$0xf]
      %v1454 = vld [vmem:[%s1442 + $0x2c] sm:$0xf]
      %v1467 = vunpack.c.l.b16 %v1443
      %v1468 = vunpack.c.l.b16 %v1444
      %v1469 = vunpack.c.l.b16 %v1445
      %v1470 = vunpack.c.l.b16 %v1446
      %v1471 = vunpack.c.l.b16 %v1447
      %v1472 = vunpack.c.l.b16 %v1448
      %v1473 = vunpack.c.l.b16 %v1449
      %v1474 = vunpack.c.l.b16 %v1450
      %v1475 = vunpack.c.l.b16 %v1451
      %v1476 = vunpack.c.l.b16 %v1452
      %v1477 = vunpack.c.l.b16 %v1453
      %v1478 = vunpack.c.l.b16 %v1454
      %v1479 = vpack.c.b16 %v1468, %v1467
      %v1480 = vpack.c.b16 %v1470, %v1469
      %v1481 = vpack.c.b16 %v1472, %v1471
      %v1482 = vpack.c.b16 %v1474, %v1473
      %v1483 = vpack.c.b16 %v1476, %v1475
      %v1484 = vpack.c.b16 %v1478, %v1477
      %v1492 = vsel %vm487, %v1438, 0
      %v1495 = vsel %vm487, %v1439, 0
      %v1498 = vsel %vm487, %v1440, 0
      %v1501 = vsel %vm487, %v1441, 0
      %1503 = vmatprep.subr.bf16.mxu0 0
      %1504 = vmatpush1.bf16.msra.mxu0 %v1479
      %1505 = vmatprep.subr.bf16.mxu0 0
      %1506 = vmatpush1.bf16.msra.mxu0 %v1480
      %1507 = vmatprep.subr.bf16.mxu0 0
      %1508 = vmatpush1.bf16.msra.mxu0 %v1481
      %1509 = vmatprep.subr.bf16.mxu0 0
      %1510 = vmatpush1.bf16.msra.mxu0 %v1482
      %1511 = vmatprep.subr.bf16.mxu0 0
      %1512 = vmatpush1.bf16.msra.mxu0 %v1483
      %1513 = vmatprep.subr.bf16.mxu0 0
      %1514 = vmatpush1.bf16.msra.mxu0 %v1484
      %1515 = vmatprep.subr.bf16.mxu0 0
      %1516 = vmatpush1.bf16.msra.mxu0 0
      %1517 = vmatprep.subr.bf16.mxu0 0
      %1518 = vmatpush1.bf16.msra.mxu0 0
      %1519 = vmatprep.subr.bf16.mxu0 0
      %1520 = vmatpush1.bf16.msra.mxu0 0
      %1521 = vmatprep.subr.bf16.mxu0 0
      %1522 = vmatpush1.bf16.msra.mxu0 0
      %1523 = vmatprep.subr.bf16.mxu0 0
      %1524 = vmatpush1.bf16.msra.mxu0 0
      %1525 = vmatprep.subr.bf16.mxu0 0
      %1526 = vmatpush1.bf16.msra.mxu0 0
      %1527 = vmatprep.subr.bf16.mxu0 0
      %1528 = vmatpush1.bf16.msra.mxu0 0
      %1529 = vmatprep.subr.bf16.mxu0 0
      %1530 = vmatpush1.bf16.msra.mxu0 0
      %1531 = vmatprep.subr.bf16.mxu0 0
      %1532 = vmatpush1.bf16.msra.mxu0 0
      %1533 = vmatprep.subr.bf16.mxu0 0
      %1534 = vmatpush1.bf16.msra.mxu0 0
      %1535 = vmatprep.mubr.bf16.mxu0 0
      %1536 = vmatmul.mubr.bf16.gmra.mrb[0].mxu0 %v1492
      %v1537 = vpop.f32.mrb[0].mxu0
      %v1538 = vadd.f32 0.0, %v1537
      %v1539 = vpop.f32.mrb[0].mxu0
      %v1540 = vpop.f32.mrb[0].mxu0
      %v1541 = vadd.f32 0.0, %v1540
      %v1542 = vpop.f32.mrb[0].mxu0
      %1543 = vmatprep.mubr.bf16.mxu0 0
      %1544 = vmatmul.mubr.bf16.gmra.mrb[0].mxu0 %v1495
      %v1545 = vpop.f32.mrb[0].mxu0
      %v1546 = vadd.f32 0.0, %v1545
      %v1547 = vpop.f32.mrb[0].mxu0
      %v1548 = vpop.f32.mrb[0].mxu0
      %v1549 = vadd.f32 0.0, %v1548
      %v1550 = vpop.f32.mrb[0].mxu0
      %1551 = vmatprep.mubr.bf16.mxu0 0
      %1552 = vmatmul.mubr.bf16.gmra.mrb[0].mxu0 %v1498
      %v1553 = vpop.f32.mrb[0].mxu0
      %v1554 = vadd.f32 0.0, %v1553
      %v1555 = vpop.f32.mrb[0].mxu0
      %v1556 = vpop.f32.mrb[0].mxu0
      %v1557 = vadd.f32 0.0, %v1556
      %v1558 = vpop.f32.mrb[0].mxu0
      %1559 = vmatprep.mubr.bf16.mxu0 0
      %1560 = vmatmul.mubr.bf16.gmra.mrb[0].mxu0 %v1501
      %v1561 = vpop.f32.mrb[0].mxu0
      %v1562 = vadd.f32 0.0, %v1561
      %v1563 = vpop.f32.mrb[0].mxu0
      %v1564 = vpop.f32.mrb[0].mxu0
      %v1565 = vadd.f32 0.0, %v1564
      %v1566 = vpop.f32.mrb[0].mxu0
      %1567 = vdwg.mxu0
      %v1568 = vadd.f32 %v1414, %v1538
      %v1569 = vadd.f32 %v1415, %v1541
      %v1570 = vadd.f32 %v1416, %v1546
      %v1571 = vadd.f32 %v1417, %v1549
      %v1572 = vadd.f32 %v1418, %v1554
      %v1573 = vadd.f32 %v1419, %v1557
      %v1574 = vadd.f32 %v1420, %v1562
      %v1575 = vadd.f32 %v1421, %v1565
      %v1576 = vld [vmem:[#allocation2 + $0x10] sm:$0xff]
      %v1577 = vld [vmem:[#allocation2 + $0x18] sm:$0xff]
      %v1578 = vld [vmem:[#allocation2 + $0x20] sm:$0xff]
      %v1579 = vld [vmem:[#allocation2 + $0x28] sm:$0xff]
      %v1580 = vld [vmem:[#allocation2 + $0x30] sm:$0xff]
      %v1581 = vld [vmem:[#allocation2 + $0x38] sm:$0xff]
      %v1582 = vld [vmem:[#allocation2 + $0x40] sm:$0xff]
      %v1583 = vld [vmem:[#allocation2 + $0x48] sm:$0xff]
      %v1584 = vsel %vm645, %v1576, 0.0
      %v1585 = vsel %vm646, %v1577, 0.0
      %v1586 = vsel %vm647, %v1578, 0.0
      %v1587 = vsel %vm648, %v1579, 0.0
      %v1588 = vsel %vm649, %v1580, 0.0
      %v1589 = vsel %vm650, %v1581, 0.0
      %v1590 = vsel %vm651, %v1582, 0.0
      %v1591 = vsel %vm652, %v1583, 0.0
      %v1592 = vpack.c.bf16 %v1585, %v1584
      %v1593 = vpack.c.bf16 %v1587, %v1586
      %v1594 = vpack.c.bf16 %v1589, %v1588
      %v1595 = vpack.c.bf16 %v1591, %v1590
      %s1596 = scalar_lea.vmem %s3, 288
      %v1597 = vld [vmem:[%s1596] sm:$0xf]
      %v1598 = vld [vmem:[%s1596 + $0x4] sm:$0xf]
      %v1599 = vld [vmem:[%s1596 + $0x8] sm:$0xf]
      %v1600 = vld [vmem:[%s1596 + $0xc] sm:$0xf]
      %v1601 = vld [vmem:[%s1596 + $0x10] sm:$0xf]
      %v1602 = vld [vmem:[%s1596 + $0x14] sm:$0xf]
      %v1603 = vld [vmem:[%s1596 + $0x18] sm:$0xf]
      %v1604 = vld [vmem:[%s1596 + $0x1c] sm:$0xf]
      %v1605 = vld [vmem:[%s1596 + $0x20] sm:$0xf]
      %v1606 = vld [vmem:[%s1596 + $0x24] sm:$0xf]
      %v1607 = vld [vmem:[%s1596 + $0x28] sm:$0xf]
      %v1608 = vld [vmem:[%s1596 + $0x2c] sm:$0xf]
      %v1621 = vunpack.c.l.b16 %v1597
      %v1622 = vunpack.c.l.b16 %v1598
      %v1623 = vunpack.c.l.b16 %v1599
      %v1624 = vunpack.c.l.b16 %v1600
      %v1625 = vunpack.c.l.b16 %v1601
      %v1626 = vunpack.c.l.b16 %v1602
      %v1627 = vunpack.c.l.b16 %v1603
      %v1628 = vunpack.c.l.b16 %v1604
      %v1629 = vunpack.c.l.b16 %v1605
      %v1630 = vunpack.c.l.b16 %v1606
      %v1631 = vunpack.c.l.b16 %v1607
      %v1632 = vunpack.c.l.b16 %v1608
      %v1633 = vpack.c.b16 %v1622, %v1621
      %v1634 = vpack.c.b16 %v1624, %v1623
      %v1635 = vpack.c.b16 %v1626, %v1625
      %v1636 = vpack.c.b16 %v1628, %v1627
      %v1637 = vpack.c.b16 %v1630, %v1629
      %v1638 = vpack.c.b16 %v1632, %v1631
      %v1646 = vsel %vm487, %v1592, 0
      %v1649 = vsel %vm487, %v1593, 0
      %v1652 = vsel %vm487, %v1594, 0
      %v1655 = vsel %vm487, %v1595, 0
      %1657 = vmatprep.subr.bf16.mxu0 0
      %1658 = vmatpush1.bf16.msra.mxu0 %v1633
      %1659 = vmatprep.subr.bf16.mxu0 0
      %1660 = vmatpush1.bf16.msra.mxu0 %v1634
      %1661 = vmatprep.subr.bf16.mxu0 0
      %1662 = vmatpush1.bf16.msra.mxu0 %v1635
      %1663 = vmatprep.subr.bf16.mxu0 0
      %1664 = vmatpush1.bf16.msra.mxu0 %v1636
      %1665 = vmatprep.subr.bf16.mxu0 0
      %1666 = vmatpush1.bf16.msra.mxu0 %v1637
      %1667 = vmatprep.subr.bf16.mxu0 0
      %1668 = vmatpush1.bf16.msra.mxu0 %v1638
      %1669 = vmatprep.subr.bf16.mxu0 0
      %1670 = vmatpush1.bf16.msra.mxu0 0
      %1671 = vmatprep.subr.bf16.mxu0 0
      %1672 = vmatpush1.bf16.msra.mxu0 0
      %1673 = vmatprep.subr.bf16.mxu0 0
      %1674 = vmatpush1.bf16.msra.mxu0 0
      %1675 = vmatprep.subr.bf16.mxu0 0
      %1676 = vmatpush1.bf16.msra.mxu0 0
      %1677 = vmatprep.subr.bf16.mxu0 0
      %1678 = vmatpush1.bf16.msra.mxu0 0
      %1679 = vmatprep.subr.bf16.mxu0 0
      %1680 = vmatpush1.bf16.msra.mxu0 0
      %1681 = vmatprep.subr.bf16.mxu0 0
      %1682 = vmatpush1.bf16.msra.mxu0 0
      %1683 = vmatprep.subr.bf16.mxu0 0
      %1684 = vmatpush1.bf16.msra.mxu0 0
      %1685 = vmatprep.subr.bf16.mxu0 0
      %1686 = vmatpush1.bf16.msra.mxu0 0
      %1687 = vmatprep.subr.bf16.mxu0 0
      %1688 = vmatpush1.bf16.msra.mxu0 0
      %1689 = vmatprep.mubr.bf16.mxu0 0
      %1690 = vmatmul.mubr.bf16.gmra.mrb[0].mxu0 %v1646
      %v1691 = vpop.f32.mrb[0].mxu0
      %v1692 = vadd.f32 0.0, %v1691
      %v1693 = vpop.f32.mrb[0].mxu0
      %v1694 = vpop.f32.mrb[0].mxu0
      %v1695 = vadd.f32 0.0, %v1694
      %v1696 = vpop.f32.mrb[0].mxu0
      %1697 = vmatprep.mubr.bf16.mxu0 0
      %1698 = vmatmul.mubr.bf16.gmra.mrb[0].mxu0 %v1649
      %v1699 = vpop.f32.mrb[0].mxu0
      %v1700 = vadd.f32 0.0, %v1699
      %v1701 = vpop.f32.mrb[0].mxu0
      %v1702 = vpop.f32.mrb[0].mxu0
      %v1703 = vadd.f32 0.0, %v1702
      %v1704 = vpop.f32.mrb[0].mxu0
      %1705 = vmatprep.mubr.bf16.mxu0 0
      %1706 = vmatmul.mubr.bf16.gmra.mrb[0].mxu0 %v1652
      %v1707 = vpop.f32.mrb[0].mxu0
      %v1708 = vadd.f32 0.0, %v1707
      %v1709 = vpop.f32.mrb[0].mxu0
      %v1710 = vpop.f32.mrb[0].mxu0
      %v1711 = vadd.f32 0.0, %v1710
      %v1712 = vpop.f32.mrb[0].mxu0
      %1713 = vmatprep.mubr.bf16.mxu0 0
      %1714 = vmatmul.mubr.bf16.gmra.mrb[0].mxu0 %v1655
      %v1715 = vpop.f32.mrb[0].mxu0
      %v1716 = vadd.f32 0.0, %v1715
      %v1717 = vpop.f32.mrb[0].mxu0
      %v1718 = vpop.f32.mrb[0].mxu0
      %v1719 = vadd.f32 0.0, %v1718
      %v1720 = vpop.f32.mrb[0].mxu0
      %1721 = vdwg.mxu0
      %v1722 = vadd.f32 %v1568, %v1692
      %v1723 = vadd.f32 %v1569, %v1695
      %v1724 = vadd.f32 %v1570, %v1700
      %v1725 = vadd.f32 %v1571, %v1703
      %v1726 = vadd.f32 %v1572, %v1708
      %v1727 = vadd.f32 %v1573, %v1711
      %v1728 = vadd.f32 %v1574, %v1716
      %v1729 = vadd.f32 %v1575, %v1719
      %v1730 = vld [vmem:[#allocation2 + $0x11] sm:$0xff]
      %v1731 = vld [vmem:[#allocation2 + $0x19] sm:$0xff]
      %v1732 = vld [vmem:[#allocation2 + $0x21] sm:$0xff]
      %v1733 = vld [vmem:[#allocation2 + $0x29] sm:$0xff]
      %v1734 = vld [vmem:[#allocation2 + $0x31] sm:$0xff]
      %v1735 = vld [vmem:[#allocation2 + $0x39] sm:$0xff]
      %v1736 = vld [vmem:[#allocation2 + $0x41] sm:$0xff]
      %v1737 = vld [vmem:[#allocation2 + $0x49] sm:$0xff]
      %v1738 = vpack.c.bf16 %v1731, %v1730
      %v1739 = vpack.c.bf16 %v1733, %v1732
      %v1740 = vpack.c.bf16 %v1735, %v1734
      %v1741 = vpack.c.bf16 %v1737, %v1736
      %s1742 = scalar_lea.vmem %s3, 336
      %v1743 = vld [vmem:[%s1742] sm:$0xf]
      %v1744 = vld [vmem:[%s1742 + $0x4] sm:$0xf]
      %v1745 = vld [vmem:[%s1742 + $0x8] sm:$0xf]
      %v1746 = vld [vmem:[%s1742 + $0xc] sm:$0xf]
      %v1747 = vld [vmem:[%s1742 + $0x10] sm:$0xf]
      %v1748 = vld [vmem:[%s1742 + $0x14] sm:$0xf]
      %v1749 = vld [vmem:[%s1742 + $0x18] sm:$0xf]
      %v1750 = vld [vmem:[%s1742 + $0x1c] sm:$0xf]
      %v1751 = vld [vmem:[%s1742 + $0x20] sm:$0xf]
      %v1752 = vld [vmem:[%s1742 + $0x24] sm:$0xf]
      %v1753 = vld [vmem:[%s1742 + $0x28] sm:$0xf]
      %v1754 = vld [vmem:[%s1742 + $0x2c] sm:$0xf]
      %v1767 = vunpack.c.l.b16 %v1743
      %v1768 = vunpack.c.l.b16 %v1744
      %v1769 = vunpack.c.l.b16 %v1745
      %v1770 = vunpack.c.l.b16 %v1746
      %v1771 = vunpack.c.l.b16 %v1747
      %v1772 = vunpack.c.l.b16 %v1748
      %v1773 = vunpack.c.l.b16 %v1749
      %v1774 = vunpack.c.l.b16 %v1750
      %v1775 = vunpack.c.l.b16 %v1751
      %v1776 = vunpack.c.l.b16 %v1752
      %v1777 = vunpack.c.l.b16 %v1753
      %v1778 = vunpack.c.l.b16 %v1754
      %v1779 = vpack.c.b16 %v1768, %v1767
      %v1780 = vpack.c.b16 %v1770, %v1769
      %v1781 = vpack.c.b16 %v1772, %v1771
      %v1782 = vpack.c.b16 %v1774, %v1773
      %v1783 = vpack.c.b16 %v1776, %v1775
      %v1784 = vpack.c.b16 %v1778, %v1777
      %v1792 = vsel %vm487, %v1738, 0
      %v1795 = vsel %vm487, %v1739, 0
      %v1798 = vsel %vm487, %v1740, 0
      %v1801 = vsel %vm487, %v1741, 0
      %1803 = vmatprep.subr.bf16.mxu0 0
      %1804 = vmatpush1.bf16.msra.mxu0 %v1779
      %1805 = vmatprep.subr.bf16.mxu0 0
      %1806 = vmatpush1.bf16.msra.mxu0 %v1780
      %1807 = vmatprep.subr.bf16.mxu0 0
      %1808 = vmatpush1.bf16.msra.mxu0 %v1781
      %1809 = vmatprep.subr.bf16.mxu0 0
      %1810 = vmatpush1.bf16.msra.mxu0 %v1782
      %1811 = vmatprep.subr.bf16.mxu0 0
      %1812 = vmatpush1.bf16.msra.mxu0 %v1783
      %1813 = vmatprep.subr.bf16.mxu0 0
      %1814 = vmatpush1.bf16.msra.mxu0 %v1784
      %1815 = vmatprep.subr.bf16.mxu0 0
      %1816 = vmatpush1.bf16.msra.mxu0 0
      %1817 = vmatprep.subr.bf16.mxu0 0
      %1818 = vmatpush1.bf16.msra.mxu0 0
      %1819 = vmatprep.subr.bf16.mxu0 0
      %1820 = vmatpush1.bf16.msra.mxu0 0
      %1821 = vmatprep.subr.bf16.mxu0 0
      %1822 = vmatpush1.bf16.msra.mxu0 0
      %1823 = vmatprep.subr.bf16.mxu0 0
      %1824 = vmatpush1.bf16.msra.mxu0 0
      %1825 = vmatprep.subr.bf16.mxu0 0
      %1826 = vmatpush1.bf16.msra.mxu0 0
      %1827 = vmatprep.subr.bf16.mxu0 0
      %1828 = vmatpush1.bf16.msra.mxu0 0
      %1829 = vmatprep.subr.bf16.mxu0 0
      %1830 = vmatpush1.bf16.msra.mxu0 0
      %1831 = vmatprep.subr.bf16.mxu0 0
      %1832 = vmatpush1.bf16.msra.mxu0 0
      %1833 = vmatprep.subr.bf16.mxu0 0
      %1834 = vmatpush1.bf16.msra.mxu0 0
      %1835 = vmatprep.mubr.bf16.mxu0 0
      %1836 = vmatmul.mubr.bf16.gmra.mrb[0].mxu0 %v1792
      %v1837 = vpop.f32.mrb[0].mxu0
      %v1838 = vadd.f32 0.0, %v1837
      %v1839 = vpop.f32.mrb[0].mxu0
      %v1840 = vpop.f32.mrb[0].mxu0
      %v1841 = vadd.f32 0.0, %v1840
      %v1842 = vpop.f32.mrb[0].mxu0
      %1843 = vmatprep.mubr.bf16.mxu0 0
      %1844 = vmatmul.mubr.bf16.gmra.mrb[0].mxu0 %v1795
      %v1845 = vpop.f32.mrb[0].mxu0
      %v1846 = vadd.f32 0.0, %v1845
      %v1847 = vpop.f32.mrb[0].mxu0
      %v1848 = vpop.f32.mrb[0].mxu0
      %v1849 = vadd.f32 0.0, %v1848
      %v1850 = vpop.f32.mrb[0].mxu0
      %1851 = vmatprep.mubr.bf16.mxu0 0
      %1852 = vmatmul.mubr.bf16.gmra.mrb[0].mxu0 %v1798
      %v1853 = vpop.f32.mrb[0].mxu0
      %v1854 = vadd.f32 0.0, %v1853
      %v1855 = vpop.f32.mrb[0].mxu0
      %v1856 = vpop.f32.mrb[0].mxu0
      %v1857 = vadd.f32 0.0, %v1856
      %v1858 = vpop.f32.mrb[0].mxu0
      %1859 = vmatprep.mubr.bf16.mxu0 0
      %1860 = vmatmul.mubr.bf16.gmra.mrb[0].mxu0 %v1801
      %v1861 = vpop.f32.mrb[0].mxu0
      %v1862 = vadd.f32 0.0, %v1861
      %v1863 = vpop.f32.mrb[0].mxu0
      %v1864 = vpop.f32.mrb[0].mxu0
      %v1865 = vadd.f32 0.0, %v1864
      %v1866 = vpop.f32.mrb[0].mxu0
      %1867 = vdwg.mxu0
      %v1868 = vadd.f32 %v1722, %v1838
      %v1869 = vadd.f32 %v1723, %v1841
      %v1870 = vadd.f32 %v1724, %v1846
      %v1871 = vadd.f32 %v1725, %v1849
      %v1872 = vadd.f32 %v1726, %v1854
      %v1873 = vadd.f32 %v1727, %v1857
      %v1874 = vadd.f32 %v1728, %v1862
      %v1875 = vadd.f32 %v1729, %v1865
      %v1876 = vld [vmem:[#allocation2 + $0x12] sm:$0xff]
      %v1877 = vld [vmem:[#allocation2 + $0x1a] sm:$0xff]
      %v1878 = vld [vmem:[#allocation2 + $0x22] sm:$0xff]
      %v1879 = vld [vmem:[#allocation2 + $0x2a] sm:$0xff]
      %v1880 = vld [vmem:[#allocation2 + $0x32] sm:$0xff]
      %v1881 = vld [vmem:[#allocation2 + $0x3a] sm:$0xff]
      %v1882 = vld [vmem:[#allocation2 + $0x42] sm:$0xff]
      %v1883 = vld [vmem:[#allocation2 + $0x4a] sm:$0xff]
      %v1884 = vsel %vm968, %v1876, 0.0
      %v1885 = vsel %vm969, %v1877, 0.0
      %v1886 = vsel %vm970, %v1878, 0.0
      %v1887 = vsel %vm971, %v1879, 0.0
      %v1888 = vsel %vm972, %v1880, 0.0
      %v1889 = vsel %vm973, %v1881, 0.0
      %v1890 = vsel %vm974, %v1882, 0.0
      %v1891 = vsel %vm975, %v1883, 0.0
      %v1892 = vpack.c.bf16 %v1885, %v1884
      %v1893 = vpack.c.bf16 %v1887, %v1886
      %v1894 = vpack.c.bf16 %v1889, %v1888
      %v1895 = vpack.c.bf16 %v1891, %v1890
      %s1896 = scalar_lea.vmem %s3, 384
      %v1897 = vld [vmem:[%s1896] sm:$0xf]
      %v1898 = vld [vmem:[%s1896 + $0x4] sm:$0xf]
      %v1899 = vld [vmem:[%s1896 + $0x8] sm:$0xf]
      %v1900 = vld [vmem:[%s1896 + $0xc] sm:$0xf]
      %v1901 = vld [vmem:[%s1896 + $0x10] sm:$0xf]
      %v1902 = vld [vmem:[%s1896 + $0x14] sm:$0xf]
      %v1903 = vld [vmem:[%s1896 + $0x18] sm:$0xf]
      %v1904 = vld [vmem:[%s1896 + $0x1c] sm:$0xf]
      %v1905 = vld [vmem:[%s1896 + $0x20] sm:$0xf]
      %v1906 = vld [vmem:[%s1896 + $0x24] sm:$0xf]
      %v1907 = vld [vmem:[%s1896 + $0x28] sm:$0xf]
      %v1908 = vld [vmem:[%s1896 + $0x2c] sm:$0xf]
      %v1921 = vunpack.c.l.b16 %v1897
      %v1922 = vunpack.c.l.b16 %v1898
      %v1923 = vunpack.c.l.b16 %v1899
      %v1924 = vunpack.c.l.b16 %v1900
      %v1925 = vunpack.c.l.b16 %v1901
      %v1926 = vunpack.c.l.b16 %v1902
      %v1927 = vunpack.c.l.b16 %v1903
      %v1928 = vunpack.c.l.b16 %v1904
      %v1929 = vunpack.c.l.b16 %v1905
      %v1930 = vunpack.c.l.b16 %v1906
      %v1931 = vunpack.c.l.b16 %v1907
      %v1932 = vunpack.c.l.b16 %v1908
      %v1933 = vpack.c.b16 %v1922, %v1921
      %v1934 = vpack.c.b16 %v1924, %v1923
      %v1935 = vpack.c.b16 %v1926, %v1925
      %v1936 = vpack.c.b16 %v1928, %v1927
      %v1937 = vpack.c.b16 %v1930, %v1929
      %v1938 = vpack.c.b16 %v1932, %v1931
      %v1946 = vsel %vm487, %v1892, 0
      %v1949 = vsel %vm487, %v1893, 0
      %v1952 = vsel %vm487, %v1894, 0
      %v1955 = vsel %vm487, %v1895, 0
      %1957 = vmatprep.subr.bf16.mxu0 0
      %1958 = vmatpush1.bf16.msra.mxu0 %v1933
      %1959 = vmatprep.subr.bf16.mxu0 0
      %1960 = vmatpush1.bf16.msra.mxu0 %v1934
      %1961 = vmatprep.subr.bf16.mxu0 0
      %1962 = vmatpush1.bf16.msra.mxu0 %v1935
      %1963 = vmatprep.subr.bf16.mxu0 0
      %1964 = vmatpush1.bf16.msra.mxu0 %v1936
      %1965 = vmatprep.subr.bf16.mxu0 0
      %1966 = vmatpush1.bf16.msra.mxu0 %v1937
      %1967 = vmatprep.subr.bf16.mxu0 0
      %1968 = vmatpush1.bf16.msra.mxu0 %v1938
      %1969 = vmatprep.subr.bf16.mxu0 0
      %1970 = vmatpush1.bf16.msra.mxu0 0
      %1971 = vmatprep.subr.bf16.mxu0 0
      %1972 = vmatpush1.bf16.msra.mxu0 0
      %1973 = vmatprep.subr.bf16.mxu0 0
      %1974 = vmatpush1.bf16.msra.mxu0 0
      %1975 = vmatprep.subr.bf16.mxu0 0
      %1976 = vmatpush1.bf16.msra.mxu0 0
      %1977 = vmatprep.subr.bf16.mxu0 0
      %1978 = vmatpush1.bf16.msra.mxu0 0
      %1979 = vmatprep.subr.bf16.mxu0 0
      %1980 = vmatpush1.bf16.msra.mxu0 0
      %1981 = vmatprep.subr.bf16.mxu0 0
      %1982 = vmatpush1.bf16.msra.mxu0 0
      %1983 = vmatprep.subr.bf16.mxu0 0
      %1984 = vmatpush1.bf16.msra.mxu0 0
      %1985 = vmatprep.subr.bf16.mxu0 0
      %1986 = vmatpush1.bf16.msra.mxu0 0
      %1987 = vmatprep.subr.bf16.mxu0 0
      %1988 = vmatpush1.bf16.msra.mxu0 0
      %1989 = vmatprep.mubr.bf16.mxu0 0
      %1990 = vmatmul.mubr.bf16.gmra.mrb[0].mxu0 %v1946
      %v1991 = vpop.f32.mrb[0].mxu0
      %v1992 = vadd.f32 0.0, %v1991
      %v1993 = vpop.f32.mrb[0].mxu0
      %v1994 = vpop.f32.mrb[0].mxu0
      %v1995 = vadd.f32 0.0, %v1994
      %v1996 = vpop.f32.mrb[0].mxu0
      %1997 = vmatprep.mubr.bf16.mxu0 0
      %1998 = vmatmul.mubr.bf16.gmra.mrb[0].mxu0 %v1949
      %v1999 = vpop.f32.mrb[0].mxu0
      %v2000 = vadd.f32 0.0, %v1999
      %v2001 = vpop.f32.mrb[0].mxu0
      %v2002 = vpop.f32.mrb[0].mxu0
      %v2003 = vadd.f32 0.0, %v2002
      %v2004 = vpop.f32.mrb[0].mxu0
      %2005 = vmatprep.mubr.bf16.mxu0 0
      %2006 = vmatmul.mubr.bf16.gmra.mrb[0].mxu0 %v1952
      %v2007 = vpop.f32.mrb[0].mxu0
      %v2008 = vadd.f32 0.0, %v2007
      %v2009 = vpop.f32.mrb[0].mxu0
      %v2010 = vpop.f32.mrb[0].mxu0
      %v2011 = vadd.f32 0.0, %v2010
      %v2012 = vpop.f32.mrb[0].mxu0
      %2013 = vmatprep.mubr.bf16.mxu0 0
      %2014 = vmatmul.mubr.bf16.gmra.mrb[0].mxu0 %v1955
      %v2015 = vpop.f32.mrb[0].mxu0
      %v2016 = vadd.f32 0.0, %v2015
      %v2017 = vpop.f32.mrb[0].mxu0
      %v2018 = vpop.f32.mrb[0].mxu0
      %v2019 = vadd.f32 0.0, %v2018
      %v2020 = vpop.f32.mrb[0].mxu0
      %2021 = vdwg.mxu0
      %v2022 = vadd.f32 %v1868, %v1992
      %v2023 = vadd.f32 %v1869, %v1995
      %v2024 = vadd.f32 %v1870, %v2000
      %v2025 = vadd.f32 %v1871, %v2003
      %v2026 = vadd.f32 %v1872, %v2008
      %v2027 = vadd.f32 %v1873, %v2011
      %v2028 = vadd.f32 %v1874, %v2016
      %v2029 = vadd.f32 %v1875, %v2019
      %v2030 = vmax.f32 %v2022, 0.0
      %v2031 = vmax.f32 %v2023, 0.0
      %v2032 = vmax.f32 %v2024, 0.0
      %v2033 = vmax.f32 %v2025, 0.0
      %v2034 = vmax.f32 %v2026, 0.0
      %v2035 = vmax.f32 %v2027, 0.0
      %v2036 = vmax.f32 %v2028, 0.0
      %v2037 = vmax.f32 %v2029, 0.0
      %v2038 = vpack.c.bf16 %v2031, %v2030
      %v2039 = vpack.c.bf16 %v2033, %v2032
      %v2040 = vpack.c.bf16 %v2035, %v2034
      %v2041 = vpack.c.bf16 %v2037, %v2036
      %v2042 = vld [vmem:[%s5] sm:$0xff]
      %v2043 = vld [vmem:[%s5 + $0x8] sm:$0xf]
      %v2044 = vld [vmem:[%s5 + $0xc] sm:$0xff]
      %v2045 = vld [vmem:[%s5 + $0x14] sm:$0xf]
      %v2046 = vld [vmem:[%s5 + $0x18] sm:$0xff]
      %v2047 = vld [vmem:[%s5 + $0x20] sm:$0xf]
      %v2048 = vld [vmem:[%s5 + $0x24] sm:$0xff]
      %v2049 = vld [vmem:[%s5 + $0x2c] sm:$0xf]
      %v2050 = vld [vmem:[%s5 + $0x30] sm:$0xff]
      %v2051 = vld [vmem:[%s5 + $0x38] sm:$0xf]
      %v2052 = vld [vmem:[%s5 + $0x3c] sm:$0xff]
      %v2053 = vld [vmem:[%s5 + $0x44] sm:$0xf]
      %v2054 = vld [vmem:[%s5 + $0x48] sm:$0xff]
      %v2055 = vld [vmem:[%s5 + $0x50] sm:$0xf]
      %v2056 = vld [vmem:[%s5 + $0x54] sm:$0xff]
      %v2057 = vld [vmem:[%s5 + $0x5c] sm:$0xf]
      %v2058 = vld [vmem:[%s5 + $0x60] sm:$0xff]
      %v2059 = vld [vmem:[%s5 + $0x68] sm:$0xf]
      %v2060 = vld [vmem:[%s5 + $0x6c] sm:$0xff]
      %v2061 = vld [vmem:[%s5 + $0x74] sm:$0xf]
      %v2062 = vld [vmem:[%s5 + $0x78] sm:$0xff]
      %v2063 = vld [vmem:[%s5 + $0x80] sm:$0xf]
      %v2064 = vld [vmem:[%s5 + $0x84] sm:$0xff]
      %v2065 = vld [vmem:[%s5 + $0x8c] sm:$0xf]
      %v2066 = vld [vmem:[%s6] sm:$0x7]
      %v2068 = vlaneseq
      %v2069 = vshrl.u32 %v2068, 7
      %v2070 = vsub.s32 0, %v2069
      %v2071 = vrot.slane %v2066, %v2070
      %v2072 = vlaneseq
      %v2073 = vshrl.u32 %v2072, 7
      %v2074 = vsub.s32 1, %v2073
      %v2075 = vrot.slane %v2066, %v2074
      %v2076 = vlaneseq
      %v2077 = vshrl.u32 %v2076, 7
      %v2078 = vsub.s32 2, %v2077
      %v2079 = vrot.slane %v2066, %v2078
      %v2107 = vunpack.c.l.b16 %v2042
      %v2108 = vunpack.c.h.b16 %v2042
      %v2109 = vunpack.c.l.b16 %v2043
      %v2110 = vunpack.c.l.b16 %v2044
      %v2111 = vunpack.c.h.b16 %v2044
      %v2112 = vunpack.c.l.b16 %v2045
      %v2113 = vunpack.c.l.b16 %v2046
      %v2114 = vunpack.c.h.b16 %v2046
      %v2115 = vunpack.c.l.b16 %v2047
      %v2116 = vunpack.c.l.b16 %v2048
      %v2117 = vunpack.c.h.b16 %v2048
      %v2118 = vunpack.c.l.b16 %v2049
      %v2119 = vunpack.c.l.b16 %v2050
      %v2120 = vunpack.c.h.b16 %v2050
      %v2121 = vunpack.c.l.b16 %v2051
      %v2122 = vunpack.c.l.b16 %v2052
      %v2123 = vunpack.c.h.b16 %v2052
      %v2124 = vunpack.c.l.b16 %v2053
      %v2125 = vunpack.c.l.b16 %v2054
      %v2126 = vunpack.c.h.b16 %v2054
      %v2127 = vunpack.c.l.b16 %v2055
      %v2128 = vunpack.c.l.b16 %v2056
      %v2129 = vunpack.c.h.b16 %v2056
      %v2130 = vunpack.c.l.b16 %v2057
      %v2131 = vunpack.c.l.b16 %v2058
      %v2132 = vunpack.c.h.b16 %v2058
      %v2133 = vunpack.c.l.b16 %v2059
      %v2134 = vunpack.c.l.b16 %v2060
      %v2135 = vunpack.c.h.b16 %v2060
      %v2136 = vunpack.c.l.b16 %v2061
      %v2137 = vunpack.c.l.b16 %v2062
      %v2138 = vunpack.c.h.b16 %v2062
      %v2139 = vunpack.c.l.b16 %v2063
      %v2140 = vunpack.c.l.b16 %v2064
      %v2141 = vunpack.c.h.b16 %v2064
      %v2142 = vunpack.c.l.b16 %v2065
      %v2143 = vpack.c.b16 %v2110, %v2107
      %v2144 = vpack.c.b16 %v2111, %v2108
      %v2145 = vpack.c.b16 %v2112, %v2109
      %v2146 = vpack.c.b16 %v2116, %v2113
      %v2147 = vpack.c.b16 %v2117, %v2114
      %v2148 = vpack.c.b16 %v2118, %v2115
      %v2149 = vpack.c.b16 %v2122, %v2119
      %v2150 = vpack.c.b16 %v2123, %v2120
      %v2151 = vpack.c.b16 %v2124, %v2121
      %v2152 = vpack.c.b16 %v2128, %v2125
      %v2153 = vpack.c.b16 %v2129, %v2126
      %v2154 = vpack.c.b16 %v2130, %v2127
      %v2155 = vpack.c.b16 %v2134, %v2131
      %v2156 = vpack.c.b16 %v2135, %v2132
      %v2157 = vpack.c.b16 %v2136, %v2133
      %v2158 = vpack.c.b16 %v2140, %v2137
      %v2159 = vpack.c.b16 %v2141, %v2138
      %v2160 = vpack.c.b16 %v2142, %v2139
      %v2180 = vsel %vm487, %v2038, 0
      %v2183 = vsel %vm487, %v2039, 0
      %v2186 = vsel %vm487, %v2040, 0
      %v2189 = vsel %vm487, %v2041, 0
      %2191 = vmatprep.subr.bf16.mxu0 %v2144
      %2192 = vmatpush1.bf16.msra.mxu0 %v2143
      %2193 = vmatprep.subr.bf16.mxu0 %v2147
      %2194 = vmatpush1.bf16.msra.mxu0 %v2146
      %2195 = vmatprep.subr.bf16.mxu0 %v2150
      %2196 = vmatpush1.bf16.msra.mxu0 %v2149
      %2197 = vmatprep.subr.bf16.mxu0 %v2153
      %2198 = vmatpush1.bf16.msra.mxu0 %v2152
      %2199 = vmatprep.subr.bf16.mxu0 %v2156
      %2200 = vmatpush1.bf16.msra.mxu0 %v2155
      %2201 = vmatprep.subr.bf16.mxu0 %v2159
      %2202 = vmatpush1.bf16.msra.mxu0 %v2158
      %2203 = vmatprep.subr.bf16.mxu0 0
      %2204 = vmatpush1.bf16.msra.mxu0 0
      %2205 = vmatprep.subr.bf16.mxu0 0
      %2206 = vmatpush1.bf16.msra.mxu0 0
      %2207 = vmatprep.subr.bf16.mxu0 0
      %2208 = vmatpush1.bf16.msra.mxu0 0
      %2209 = vmatprep.subr.bf16.mxu0 0
      %2210 = vmatpush1.bf16.msra.mxu0 0
      %2211 = vmatprep.subr.bf16.mxu0 0
      %2212 = vmatpush1.bf16.msra.mxu0 0
      %2213 = vmatprep.subr.bf16.mxu0 0
      %2214 = vmatpush1.bf16.msra.mxu0 0
      %2215 = vmatprep.subr.bf16.mxu0 0
      %2216 = vmatpush1.bf16.msra.mxu0 0
      %2217 = vmatprep.subr.bf16.mxu0 0
      %2218 = vmatpush1.bf16.msra.mxu0 0
      %2219 = vmatprep.subr.bf16.mxu0 0
      %2220 = vmatpush1.bf16.msra.mxu0 0
      %2221 = vmatprep.subr.bf16.mxu0 0
      %2222 = vmatpush1.bf16.msra.mxu0 0
      %2223 = vmatprep.mubr.bf16.mxu0 0
      %2224 = vmatmul.mubr.bf16.gmra.mrb[0].mxu0 %v2180
      %v2225 = vpop.f32.mrb[0].mxu0
      %v2226 = vadd.f32 %v2071, %v2225
      %v2227 = vpop.f32.mrb[0].mxu0
      %v2228 = vadd.f32 %v2075, %v2227
      %v2229 = vpop.f32.mrb[0].mxu0
      %v2230 = vadd.f32 %v2071, %v2229
      %v2231 = vpop.f32.mrb[0].mxu0
      %v2232 = vadd.f32 %v2075, %v2231
      %2233 = vmatprep.mubr.bf16.mxu0 0
      %2234 = vmatmul.mubr.bf16.gmra.mrb[0].mxu0 %v2183
      %v2235 = vpop.f32.mrb[0].mxu0
      %v2236 = vadd.f32 %v2071, %v2235
      %v2237 = vpop.f32.mrb[0].mxu0
      %v2238 = vadd.f32 %v2075, %v2237
      %v2239 = vpop.f32.mrb[0].mxu0
      %v2240 = vadd.f32 %v2071, %v2239
      %v2241 = vpop.f32.mrb[0].mxu0
      %v2242 = vadd.f32 %v2075, %v2241
      %2243 = vmatprep.mubr.bf16.mxu0 0
      %2244 = vmatmul.mubr.bf16.gmra.mrb[0].mxu0 %v2186
      %v2245 = vpop.f32.mrb[0].mxu0
      %v2246 = vadd.f32 %v2071, %v2245
      %v2247 = vpop.f32.mrb[0].mxu0
      %v2248 = vadd.f32 %v2075, %v2247
      %v2249 = vpop.f32.mrb[0].mxu0
      %v2250 = vadd.f32 %v2071, %v2249
      %v2251 = vpop.f32.mrb[0].mxu0
      %v2252 = vadd.f32 %v2075, %v2251
      %2253 = vmatprep.mubr.bf16.mxu0 0
      %2254 = vmatmul.mubr.bf16.gmra.mrb[0].mxu0 %v2189
      %v2255 = vpop.f32.mrb[0].mxu0
      %v2256 = vadd.f32 %v2071, %v2255
      %v2257 = vpop.f32.mrb[0].mxu0
      %v2258 = vadd.f32 %v2075, %v2257
      %v2259 = vpop.f32.mrb[0].mxu0
      %v2260 = vadd.f32 %v2071, %v2259
      %v2261 = vpop.f32.mrb[0].mxu0
      %v2262 = vadd.f32 %v2075, %v2261
      %2263 = vdwg.mxu0
      %2264 = vmatprep.subr.bf16.mxu0 0
      %2265 = vmatpush1.bf16.msra.mxu0 %v2145
      %2266 = vmatprep.subr.bf16.mxu0 0
      %2267 = vmatpush1.bf16.msra.mxu0 %v2148
      %2268 = vmatprep.subr.bf16.mxu0 0
      %2269 = vmatpush1.bf16.msra.mxu0 %v2151
      %2270 = vmatprep.subr.bf16.mxu0 0
      %2271 = vmatpush1.bf16.msra.mxu0 %v2154
      %2272 = vmatprep.subr.bf16.mxu0 0
      %2273 = vmatpush1.bf16.msra.mxu0 %v2157
      %2274 = vmatprep.subr.bf16.mxu0 0
      %2275 = vmatpush1.bf16.msra.mxu0 %v2160
      %2276 = vmatprep.subr.bf16.mxu0 0
      %2277 = vmatpush1.bf16.msra.mxu0 0
      %2278 = vmatprep.subr.bf16.mxu0 0
      %2279 = vmatpush1.bf16.msra.mxu0 0
      %2280 = vmatprep.subr.bf16.mxu0 0
      %2281 = vmatpush1.bf16.msra.mxu0 0
      %2282 = vmatprep.subr.bf16.mxu0 0
      %2283 = vmatpush1.bf16.msra.mxu0 0
      %2284 = vmatprep.subr.bf16.mxu0 0
      %2285 = vmatpush1.bf16.msra.mxu0 0
      %2286 = vmatprep.subr.bf16.mxu0 0
      %2287 = vmatpush1.bf16.msra.mxu0 0
      %2288 = vmatprep.subr.bf16.mxu0 0
      %2289 = vmatpush1.bf16.msra.mxu0 0
      %2290 = vmatprep.subr.bf16.mxu0 0
      %2291 = vmatpush1.bf16.msra.mxu0 0
      %2292 = vmatprep.subr.bf16.mxu0 0
      %2293 = vmatpush1.bf16.msra.mxu0 0
      %2294 = vmatprep.subr.bf16.mxu0 0
      %2295 = vmatpush1.bf16.msra.mxu0 0
      %2296 = vmatprep.mubr.bf16.mxu0 0
      %2297 = vmatmul.mubr.bf16.gmra.mrb[0].mxu0 %v2180
      %v2298 = vpop.f32.mrb[0].mxu0
      %v2299 = vadd.f32 %v2079, %v2298
      %v2300 = vpop.f32.mrb[0].mxu0
      %v2301 = vpop.f32.mrb[0].mxu0
      %v2302 = vadd.f32 %v2079, %v2301
      %v2303 = vpop.f32.mrb[0].mxu0
      %2304 = vmatprep.mubr.bf16.mxu0 0
      %2305 = vmatmul.mubr.bf16.gmra.mrb[0].mxu0 %v2183
      %v2306 = vpop.f32.mrb[0].mxu0
      %v2307 = vadd.f32 %v2079, %v2306
      %v2308 = vpop.f32.mrb[0].mxu0
      %v2309 = vpop.f32.mrb[0].mxu0
      %v2310 = vadd.f32 %v2079, %v2309
      %v2311 = vpop.f32.mrb[0].mxu0
      %2312 = vmatprep.mubr.bf16.mxu0 0
      %2313 = vmatmul.mubr.bf16.gmra.mrb[0].mxu0 %v2186
      %v2314 = vpop.f32.mrb[0].mxu0
      %v2315 = vadd.f32 %v2079, %v2314
      %v2316 = vpop.f32.mrb[0].mxu0
      %v2317 = vpop.f32.mrb[0].mxu0
      %v2318 = vadd.f32 %v2079, %v2317
      %v2319 = vpop.f32.mrb[0].mxu0
      %2320 = vmatprep.mubr.bf16.mxu0 0
      %2321 = vmatmul.mubr.bf16.gmra.mrb[0].mxu0 %v2189
      %v2322 = vpop.f32.mrb[0].mxu0
      %v2323 = vadd.f32 %v2079, %v2322
      %v2324 = vpop.f32.mrb[0].mxu0
      %v2325 = vpop.f32.mrb[0].mxu0
      %v2326 = vadd.f32 %v2079, %v2325
      %v2327 = vpop.f32.mrb[0].mxu0
      %2328 = vdwg.mxu0
      %v2329 = vld [vmem:[%s7] sm:$0xff]
      %v2330 = vld [vmem:[%s7 + $0x8] sm:$0xf]
      %v2331 = vld [vmem:[%s7 + $0xc] sm:$0xff]
      %v2332 = vld [vmem:[%s7 + $0x14] sm:$0xf]
      %v2333 = vld [vmem:[%s7 + $0x18] sm:$0xff]
      %v2334 = vld [vmem:[%s7 + $0x20] sm:$0xf]
      %v2335 = vld [vmem:[%s7 + $0x24] sm:$0xff]
      %v2336 = vld [vmem:[%s7 + $0x2c] sm:$0xf]
      %v2337 = vld [vmem:[%s7 + $0x30] sm:$0xff]
      %v2338 = vld [vmem:[%s7 + $0x38] sm:$0xf]
      %v2339 = vld [vmem:[%s7 + $0x3c] sm:$0xff]
      %v2340 = vld [vmem:[%s7 + $0x44] sm:$0xf]
      %v2341 = vld [vmem:[%s7 + $0x48] sm:$0xff]
      %v2342 = vld [vmem:[%s7 + $0x50] sm:$0xf]
      %v2343 = vld [vmem:[%s7 + $0x54] sm:$0xff]
      %v2344 = vld [vmem:[%s7 + $0x5c] sm:$0xf]
      %v2345 = vld [vmem:[%s8] sm:$0x7]
      %v2347 = vlaneseq
      %v2348 = vshrl.u32 %v2347, 7
      %v2349 = vsub.s32 0, %v2348
      %v2350 = vrot.slane %v2345, %v2349
      %v2351 = vlaneseq
      %v2352 = vshrl.u32 %v2351, 7
      %v2353 = vsub.s32 1, %v2352
      %v2354 = vrot.slane %v2345, %v2353
      %v2355 = vlaneseq
      %v2356 = vshrl.u32 %v2355, 7
      %v2357 = vsub.s32 2, %v2356
      %v2358 = vrot.slane %v2345, %v2357
      %v2378 = vunpack.c.l.b16 %v2329
      %v2379 = vunpack.c.h.b16 %v2329
      %v2380 = vunpack.c.l.b16 %v2330
      %v2381 = vunpack.c.l.b16 %v2331
      %v2382 = vunpack.c.h.b16 %v2331
      %v2383 = vunpack.c.l.b16 %v2332
      %v2384 = vunpack.c.l.b16 %v2333
      %v2385 = vunpack.c.h.b16 %v2333
      %v2386 = vunpack.c.l.b16 %v2334
      %v2387 = vunpack.c.l.b16 %v2335
      %v2388 = vunpack.c.h.b16 %v2335
      %v2389 = vunpack.c.l.b16 %v2336
      %v2390 = vunpack.c.l.b16 %v2337
      %v2391 = vunpack.c.h.b16 %v2337
      %v2392 = vunpack.c.l.b16 %v2338
      %v2393 = vunpack.c.l.b16 %v2339
      %v2394 = vunpack.c.h.b16 %v2339
      %v2395 = vunpack.c.l.b16 %v2340
      %v2396 = vunpack.c.l.b16 %v2341
      %v2397 = vunpack.c.h.b16 %v2341
      %v2398 = vunpack.c.l.b16 %v2342
      %v2399 = vunpack.c.l.b16 %v2343
      %v2400 = vunpack.c.h.b16 %v2343
      %v2401 = vunpack.c.l.b16 %v2344
      %v2402 = vpack.c.b16 %v2381, %v2378
      %v2403 = vpack.c.b16 %v2382, %v2379
      %v2404 = vpack.c.b16 %v2383, %v2380
      %v2405 = vpack.c.b16 %v2387, %v2384
      %v2406 = vpack.c.b16 %v2388, %v2385
      %v2407 = vpack.c.b16 %v2389, %v2386
      %v2408 = vpack.c.b16 %v2393, %v2390
      %v2409 = vpack.c.b16 %v2394, %v2391
      %v2410 = vpack.c.b16 %v2395, %v2392
      %v2411 = vpack.c.b16 %v2399, %v2396
      %v2412 = vpack.c.b16 %v2400, %v2397
      %v2413 = vpack.c.b16 %v2401, %v2398
      %2426 = vmatprep.subr.bf16.mxu0 %v2403
      %2427 = vmatpush1.bf16.msra.mxu0 %v2402
      %2428 = vmatprep.subr.bf16.mxu0 %v2406
      %2429 = vmatpush1.bf16.msra.mxu0 %v2405
      %2430 = vmatprep.subr.bf16.mxu0 %v2409
      %2431 = vmatpush1.bf16.msra.mxu0 %v2408
      %2432 = vmatprep.subr.bf16.mxu0 %v2412
      %2433 = vmatpush1.bf16.msra.mxu0 %v2411
      %2434 = vmatprep.subr.bf16.mxu0 0
      %2435 = vmatpush1.bf16.msra.mxu0 0
      %2436 = vmatprep.subr.bf16.mxu0 0
      %2437 = vmatpush1.bf16.msra.mxu0 0
      %2438 = vmatprep.subr.bf16.mxu0 0
      %2439 = vmatpush1.bf16.msra.mxu0 0
      %2440 = vmatprep.subr.bf16.mxu0 0
      %2441 = vmatpush1.bf16.msra.mxu0 0
      %2442 = vmatprep.subr.bf16.mxu0 0
      %2443 = vmatpush1.bf16.msra.mxu0 0
      %2444 = vmatprep.subr.bf16.mxu0 0
      %2445 = vmatpush1.bf16.msra.mxu0 0
      %2446 = vmatprep.subr.bf16.mxu0 0
      %2447 = vmatpush1.bf16.msra.mxu0 0
      %2448 = vmatprep.subr.bf16.mxu0 0
      %2449 = vmatpush1.bf16.msra.mxu0 0
      %2450 = vmatprep.subr.bf16.mxu0 0
      %2451 = vmatpush1.bf16.msra.mxu0 0
      %2452 = vmatprep.subr.bf16.mxu0 0
      %2453 = vmatpush1.bf16.msra.mxu0 0
      %2454 = vmatprep.subr.bf16.mxu0 0
      %2455 = vmatpush1.bf16.msra.mxu0 0
      %2456 = vmatprep.subr.bf16.mxu0 0
      %2457 = vmatpush1.bf16.msra.mxu0 0
      %2458 = vmatprep.mubr.bf16.mxu0 0
      %2459 = vmatmul.mubr.bf16.gmra.mrb[0].mxu0 %v403
      %v2460 = vpop.f32.mrb[0].mxu0
      %v2461 = vadd.f32 %v2350, %v2460
      %v2462 = vpop.f32.mrb[0].mxu0
      %v2463 = vadd.f32 %v2354, %v2462
      %v2464 = vpop.f32.mrb[0].mxu0
      %v2465 = vadd.f32 %v2350, %v2464
      %v2466 = vpop.f32.mrb[0].mxu0
      %v2467 = vadd.f32 %v2354, %v2466
      %2468 = vmatprep.mubr.bf16.mxu0 0
      %2469 = vmatmul.mubr.bf16.gmra.mrb[0].mxu0 %v406
      %v2470 = vpop.f32.mrb[0].mxu0
      %v2471 = vadd.f32 %v2350, %v2470
      %v2472 = vpop.f32.mrb[0].mxu0
      %v2473 = vadd.f32 %v2354, %v2472
      %v2474 = vpop.f32.mrb[0].mxu0
      %v2475 = vadd.f32 %v2350, %v2474
      %v2476 = vpop.f32.mrb[0].mxu0
      %v2477 = vadd.f32 %v2354, %v2476
      %2478 = vmatprep.mubr.bf16.mxu0 0
      %2479 = vmatmul.mubr.bf16.gmra.mrb[0].mxu0 %v409
      %v2480 = vpop.f32.mrb[0].mxu0
      %v2481 = vadd.f32 %v2350, %v2480
      %v2482 = vpop.f32.mrb[0].mxu0
      %v2483 = vadd.f32 %v2354, %v2482
      %v2484 = vpop.f32.mrb[0].mxu0
      %v2485 = vadd.f32 %v2350, %v2484
      %v2486 = vpop.f32.mrb[0].mxu0
      %v2487 = vadd.f32 %v2354, %v2486
      %2488 = vmatprep.mubr.bf16.mxu0 0
      %2489 = vmatmul.mubr.bf16.gmra.mrb[0].mxu0 %v412
      %v2490 = vpop.f32.mrb[0].mxu0
      %v2491 = vadd.f32 %v2350, %v2490
      %v2492 = vpop.f32.mrb[0].mxu0
      %v2493 = vadd.f32 %v2354, %v2492
      %v2494 = vpop.f32.mrb[0].mxu0
      %v2495 = vadd.f32 %v2350, %v2494
      %v2496 = vpop.f32.mrb[0].mxu0
      %v2497 = vadd.f32 %v2354, %v2496
      %2498 = vdwg.mxu0
      %2499 = vmatprep.subr.bf16.mxu0 0
      %2500 = vmatpush1.bf16.msra.mxu0 %v2404
      %2501 = vmatprep.subr.bf16.mxu0 0
      %2502 = vmatpush1.bf16.msra.mxu0 %v2407
      %2503 = vmatprep.subr.bf16.mxu0 0
      %2504 = vmatpush1.bf16.msra.mxu0 %v2410
      %2505 = vmatprep.subr.bf16.mxu0 0
      %2506 = vmatpush1.bf16.msra.mxu0 %v2413
      %2507 = vmatprep.subr.bf16.mxu0 0
      %2508 = vmatpush1.bf16.msra.mxu0 0
      %2509 = vmatprep.subr.bf16.mxu0 0
      %2510 = vmatpush1.bf16.msra.mxu0 0
      %2511 = vmatprep.subr.bf16.mxu0 0
      %2512 = vmatpush1.bf16.msra.mxu0 0
      %2513 = vmatprep.subr.bf16.mxu0 0
      %2514 = vmatpush1.bf16.msra.mxu0 0
      %2515 = vmatprep.subr.bf16.mxu0 0
      %2516 = vmatpush1.bf16.msra.mxu0 0
      %2517 = vmatprep.subr.bf16.mxu0 0
      %2518 = vmatpush1.bf16.msra.mxu0 0
      %2519 = vmatprep.subr.bf16.mxu0 0
      %2520 = vmatpush1.bf16.msra.mxu0 0
      %2521 = vmatprep.subr.bf16.mxu0 0
      %2522 = vmatpush1.bf16.msra.mxu0 0
      %2523 = vmatprep.subr.bf16.mxu0 0
      %2524 = vmatpush1.bf16.msra.mxu0 0
      %2525 = vmatprep.subr.bf16.mxu0 0
      %2526 = vmatpush1.bf16.msra.mxu0 0
      %2527 = vmatprep.subr.bf16.mxu0 0
      %2528 = vmatpush1.bf16.msra.mxu0 0
      %2529 = vmatprep.subr.bf16.mxu0 0
      %2530 = vmatpush1.bf16.msra.mxu0 0
      %2531 = vmatprep.mubr.bf16.mxu0 0
      %2532 = vmatmul.mubr.bf16.gmra.mrb[0].mxu0 %v403
      %v2533 = vpop.f32.mrb[0].mxu0
      %v2534 = vadd.f32 %v2358, %v2533
      %v2535 = vpop.f32.mrb[0].mxu0
      %v2536 = vpop.f32.mrb[0].mxu0
      %v2537 = vadd.f32 %v2358, %v2536
      %v2538 = vpop.f32.mrb[0].mxu0
      %2539 = vmatprep.mubr.bf16.mxu0 0
      %2540 = vmatmul.mubr.bf16.gmra.mrb[0].mxu0 %v406
      %v2541 = vpop.f32.mrb[0].mxu0
      %v2542 = vadd.f32 %v2358, %v2541
      %v2543 = vpop.f32.mrb[0].mxu0
      %v2544 = vpop.f32.mrb[0].mxu0
      %v2545 = vadd.f32 %v2358, %v2544
      %v2546 = vpop.f32.mrb[0].mxu0
      %2547 = vmatprep.mubr.bf16.mxu0 0
      %2548 = vmatmul.mubr.bf16.gmra.mrb[0].mxu0 %v409
      %v2549 = vpop.f32.mrb[0].mxu0
      %v2550 = vadd.f32 %v2358, %v2549
      %v2551 = vpop.f32.mrb[0].mxu0
      %v2552 = vpop.f32.mrb[0].mxu0
      %v2553 = vadd.f32 %v2358, %v2552
      %v2554 = vpop.f32.mrb[0].mxu0
      %2555 = vmatprep.mubr.bf16.mxu0 0
      %2556 = vmatmul.mubr.bf16.gmra.mrb[0].mxu0 %v412
      %v2557 = vpop.f32.mrb[0].mxu0
      %v2558 = vadd.f32 %v2358, %v2557
      %v2559 = vpop.f32.mrb[0].mxu0
      %v2560 = vpop.f32.mrb[0].mxu0
      %v2561 = vadd.f32 %v2358, %v2560
      %v2562 = vpop.f32.mrb[0].mxu0
      %2563 = vdwg.mxu0
      %v2564 = vadd.f32 %v2461, %v2226
      %v2565 = vadd.f32 %v2463, %v2228
      %v2566 = vadd.f32 %v2465, %v2230
      %v2567 = vadd.f32 %v2467, %v2232
      %v2568 = vadd.f32 %v2471, %v2236
      %v2569 = vadd.f32 %v2473, %v2238
      %v2570 = vadd.f32 %v2475, %v2240
      %v2571 = vadd.f32 %v2477, %v2242
      %v2572 = vadd.f32 %v2481, %v2246
      %v2573 = vadd.f32 %v2483, %v2248
      %v2574 = vadd.f32 %v2485, %v2250
      %v2575 = vadd.f32 %v2487, %v2252
      %v2576 = vadd.f32 %v2491, %v2256
      %v2577 = vadd.f32 %v2493, %v2258
      %v2578 = vadd.f32 %v2495, %v2260
      %v2579 = vadd.f32 %v2497, %v2262
      %2588 = vrot.lane.b32.xlu0 %v2299, 16
      %v2589 = vpop.permute.xlu0 %2588
      %2590 = vrot.lane.b32.xlu0 %v2302, 16
      %v2591 = vpop.permute.xlu0 %2590
      %2592 = vrot.lane.b32.xlu0 %v2307, 16
      %v2593 = vpop.permute.xlu0 %2592
      %2594 = vrot.lane.b32.xlu0 %v2310, 16
      %v2595 = vpop.permute.xlu0 %2594
      %2596 = vrot.lane.b32.xlu0 %v2315, 16
      %v2597 = vpop.permute.xlu0 %2596
      %2598 = vrot.lane.b32.xlu0 %v2318, 16
      %v2599 = vpop.permute.xlu0 %2598
      %2600 = vrot.lane.b32.xlu0 %v2323, 16
      %v2601 = vpop.permute.xlu0 %2600
      %2602 = vrot.lane.b32.xlu0 %v2326, 16
      %v2603 = vpop.permute.xlu0 %2602
      %vm2612 = vcmask 130048
      %v2613 = vsel %vm2612, %v2534, %v2589
      %v2614 = vsel %vm2612, %v2537, %v2591
      %v2615 = vsel %vm2612, %v2542, %v2593
      %v2616 = vsel %vm2612, %v2545, %v2595
      %v2617 = vsel %vm2612, %v2550, %v2597
      %v2618 = vsel %vm2612, %v2553, %v2599
      %v2619 = vsel %vm2612, %v2558, %v2601
      %v2620 = vsel %vm2612, %v2561, %v2603
      %v2621 = vmax.f32 %v2564, 0.0
      %v2622 = vmax.f32 %v2565, 0.0
      %v2623 = vmax.f32 %v2613, 0.0
      %v2624 = vmax.f32 %v2566, 0.0
      %v2625 = vmax.f32 %v2567, 0.0
      %v2626 = vmax.f32 %v2614, 0.0
      %v2627 = vmax.f32 %v2568, 0.0
      %v2628 = vmax.f32 %v2569, 0.0
      %v2629 = vmax.f32 %v2615, 0.0
      %v2630 = vmax.f32 %v2570, 0.0
      %v2631 = vmax.f32 %v2571, 0.0
      %v2632 = vmax.f32 %v2616, 0.0
      %v2633 = vmax.f32 %v2572, 0.0
      %v2634 = vmax.f32 %v2573, 0.0
      %v2635 = vmax.f32 %v2617, 0.0
      %v2636 = vmax.f32 %v2574, 0.0
      %v2637 = vmax.f32 %v2575, 0.0
      %v2638 = vmax.f32 %v2618, 0.0
      %v2639 = vmax.f32 %v2576, 0.0
      %v2640 = vmax.f32 %v2577, 0.0
      %v2641 = vmax.f32 %v2619, 0.0
      %v2642 = vmax.f32 %v2578, 0.0
      %v2643 = vmax.f32 %v2579, 0.0
      %v2644 = vmax.f32 %v2620, 0.0
      %v2645 = vpack.c.bf16 %v2624, %v2621
      %v2646 = vpack.c.bf16 %v2625, %v2622
      %v2647 = vpack.c.bf16 %v2626, %v2623
      %v2648 = vpack.c.bf16 %v2630, %v2627
      %v2649 = vpack.c.bf16 %v2631, %v2628
      %v2650 = vpack.c.bf16 %v2632, %v2629
      %v2651 = vpack.c.bf16 %v2636, %v2633
      %v2652 = vpack.c.bf16 %v2637, %v2634
      %v2653 = vpack.c.bf16 %v2638, %v2635
      %v2654 = vpack.c.bf16 %v2642, %v2639
      %v2655 = vpack.c.bf16 %v2643, %v2640
      %v2656 = vpack.c.bf16 %v2644, %v2641
      %v2669 = vunpack.c.l.b16 %v2645
      %v2670 = vunpack.c.l.b16 %v2646
      %v2671 = vunpack.c.l.b16 %v2647
      %v2672 = vunpack.c.h.b16 %v2645
      %v2673 = vunpack.c.h.b16 %v2646
      %v2674 = vunpack.c.h.b16 %v2647
      %v2675 = vunpack.c.l.b16 %v2648
      %v2676 = vunpack.c.l.b16 %v2649
      %v2677 = vunpack.c.l.b16 %v2650
      %v2678 = vunpack.c.h.b16 %v2648
      %v2679 = vunpack.c.h.b16 %v2649
      %v2680 = vunpack.c.h.b16 %v2650
      %v2681 = vunpack.c.l.b16 %v2651
      %v2682 = vunpack.c.l.b16 %v2652
      %v2683 = vunpack.c.l.b16 %v2653
      %v2684 = vunpack.c.h.b16 %v2651
      %v2685 = vunpack.c.h.b16 %v2652
      %v2686 = vunpack.c.h.b16 %v2653
      %v2687 = vunpack.c.l.b16 %v2654
      %v2688 = vunpack.c.l.b16 %v2655
      %v2689 = vunpack.c.l.b16 %v2656
      %v2690 = vunpack.c.h.b16 %v2654
      %v2691 = vunpack.c.h.b16 %v2655
      %v2692 = vunpack.c.h.b16 %v2656
      %v2693 = vpack.c.b16 %v2670, %v2669
      %v2694 = vpack.c.b16 %v2671, %v2671
      %v2695 = vpack.c.b16 %v2673, %v2672
      %v2696 = vpack.c.b16 %v2674, %v2674
      %v2697 = vpack.c.b16 %v2676, %v2675
      %v2698 = vpack.c.b16 %v2677, %v2677
      %v2699 = vpack.c.b16 %v2679, %v2678
      %v2700 = vpack.c.b16 %v2680, %v2680
      %v2701 = vpack.c.b16 %v2682, %v2681
      %v2702 = vpack.c.b16 %v2683, %v2683
      %v2703 = vpack.c.b16 %v2685, %v2684
      %v2704 = vpack.c.b16 %v2686, %v2686
      %v2705 = vpack.c.b16 %v2688, %v2687
      %v2706 = vpack.c.b16 %v2689, %v2689
      %v2707 = vpack.c.b16 %v2691, %v2690
      %v2708 = vpack.c.b16 %v2692, %v2692
      %2725 = vst [vmem:[%s332] sm:$0xff] %v2693
      %vm2726 = vcmask 257024
      %2727 = vst.msk [vmem:[%s332 + $0x8] sm:$0xf] %vm2726, %v2694
      %2728 = vst [vmem:[%s332 + $0xc] sm:$0xff] %v2695
      %2729 = vst.msk [vmem:[%s332 + $0x14] sm:$0xf] %vm2726, %v2696
      %2730 = vst [vmem:[%s332 + $0x18] sm:$0xff] %v2697
      %2731 = vst.msk [vmem:[%s332 + $0x20] sm:$0xf] %vm2726, %v2698
      %2732 = vst [vmem:[%s332 + $0x24] sm:$0xff] %v2699
      %2733 = vst.msk [vmem:[%s332 + $0x2c] sm:$0xf] %vm2726, %v2700
      %2734 = vst [vmem:[%s332 + $0x30] sm:$0xff] %v2701
      %2735 = vst.msk [vmem:[%s332 + $0x38] sm:$0xf] %vm2726, %v2702
      %2736 = vst [vmem:[%s332 + $0x3c] sm:$0xff] %v2703
      %2737 = vst.msk [vmem:[%s332 + $0x44] sm:$0xf] %vm2726, %v2704
      %2738 = vst [vmem:[%s332 + $0x48] sm:$0xff] %v2705
      %2739 = vst.msk [vmem:[%s332 + $0x50] sm:$0xf] %vm2726, %v2706
      %2740 = vst [vmem:[%s332 + $0x54] sm:$0xff] %v2707
      %2741 = vst.msk [vmem:[%s332 + $0x5c] sm:$0xf] %vm2726, %v2708
      %p2742 = scmp.lt.s32.totalorder %s20, 1
      %s2743 = scalar_select %p2742, %s20, 1
      %s2744 = smul.addr %s2743, 24
      %s2745 = smul.addr %s2744, 4
      %s2746 = scalar_lea.vmem %s9, %s2745
      // Predicated region
      $region57: #{forward.3} parent=55 // pred_check
        %p2747 = pneg %p232
      $region58: #{forward.3} parent=55 // pred_check_branch
        %2749 = sbr.rel (%p2747) target = $region60
      $region59: #{forward.3} parent=55 // pred_region
        _
      $region60: #{forward.3} parent=55 // pred_fallthru
        _
    $region56: #{forward.3} parent=5 // pred_fallthru
      _
    %p2750 = scmp.le.s32.totalorder 2, %s15
    // Predicated region
    $region61: #{forward.3} parent=5 // pred_check
      %p2751 = pneg %p2750
    $region62: #{forward.3} parent=5 // pred_check_branch
      %2753 = sbr.rel (%p2751) target = $region64
    $region63: #{forward.3} parent=5 // pred_region
      %s2754 = ssub.s32 %s15, 2
      // Predicated region
      $region65: #{forward.3} parent=63 // pred_check
        %p2755 = pneg %p238
      $region66: #{forward.3} parent=63 // pred_check_branch
        %2757 = sbr.rel (%p2755) target = $region68
      $region67: #{forward.3} parent=63 // pred_region
        %p2758 = scmp.lt.s32.totalorder %s21, 1
        %s2759 = scalar_select %p2758, %s21, 1
        %s2760 = smul.addr %s2759, 24
        %s2761 = smul.addr %s2760, 4
        %s2762 = scalar_lea.vmem %s9, %s2761
      $region68: #{forward.3} parent=63 // pred_fallthru
        _
    $region64: #{forward.3} parent=5 // pred_fallthru
      _
  $region6: #{forward.3} parent=0 // loop_footer
    %s19 = sadd.s32 1, %s15
  $region7: #{forward.3} parent=0 // loop_footer_branch
    %14 = sbr.rel target = $region3
  $region8: #{forward.3} parent=0 // loop_exit
    _

// kernel: forward.4
$region0: #{forward.4}
  #allocation0 [shape = 'u32[]', space=smem, size = 0x4, offset = 0x4, fixed_abs, tag = 'smem constant byte address 0x4 - core index']
  #allocation1 [shape = 'u32[144,128]{1,0:T(1,128)}', space=vmem, size = 0x12000, scoped, tag = 'internal scratch']
  #allocation2 [shape = 'f32[82,96]{1,0:T(8,128)}', space=vmem, size = 0xb000, scoped, tag = 'scratch operand']
  %s0 = inlined_call_operand.vmem [shape: bf16[2,64,288], index: 0, kind: input, shape index: {}]
  %s1 = inlined_call_operand.vmem [shape: bf16[288,96], index: 1, kind: input, shape index: {}]
  %s2 = inlined_call_operand.vmem [shape: f32[1,96], index: 2, kind: input, shape index: {}]
  %s3 = inlined_call_operand.vmem [shape: bf16[9,96,96], index: 3, kind: input, shape index: {}]
  %s4 = inlined_call_operand.vmem [shape: f32[1,96], index: 4, kind: input, shape index: {}]
  %s5 = inlined_call_operand.vmem [shape: bf16[96,272], index: 5, kind: input, shape index: {}]
  %s6 = inlined_call_operand.vmem [shape: f32[1,272], index: 6, kind: input, shape index: {}]
  %s7 = inlined_call_operand.vmem [shape: bf16[2,64,304], index: 7, kind: output, shape index: {}]
  %s8 = sld [smem:[#allocation0]]
  $region61: #{forward.4} parent=0
    _
  %s10 = ssub.s32 1, %s8
  %s11 = scalar_select 0, %s10, %s8
  loop: start=0, step=1, limit=4
  $region2: #{forward.4} parent=0 // loop_pre_header
    _
  $region3: #{forward.4} parent=0 // loop_header
    %s13 = sphi 0, %s17
    %p14 = scmp.ge.s32.totalorder %s13, 4
    %s23 = sphi 0, %s25
    %s26 = sphi 0, %s23
    %s27 = sphi 0, %s26
    %s43 = sphi 0, %s27
    %s47 = sphi 0, %s47
    %s49 = sphi 0, %s47
    %s50 = sphi 0, %s49
    %s64 = sphi 0, %s50
    %s68 = sphi 0, %s68
    %s70 = sphi 0, %s68
    %s71 = sphi 0, %s70
    %s85 = sphi 0, %s71
    %s89 = sphi 0, %s89
    %s91 = sphi 0, %s89
    %s92 = sphi 0, %s91
    %s106 = sphi 0, %s92
    %s110 = sphi 0, %s110
    %s112 = sphi 0, %s110
    %s113 = sphi 0, %s112
    %s127 = sphi 0, %s113
    %s131 = sphi 0, %s131
    %s133 = sphi 0, %s131
    %s134 = sphi 0, %s133
    %s148 = sphi 0, %s134
    %s152 = sphi 0, %s152
    %s154 = sphi 0, %s152
    %s155 = sphi 0, %s154
    %s169 = sphi 0, %s155
    %s175 = sphi 0, %s177
    %s178 = sphi 0, %s175
    %s179 = sphi 0, %s178
    %s195 = sphi 0, %s179
  $region4: #{forward.4} parent=0 // loop_header_branch
    %16 = sbr.rel (%p14) target = $region8
  $region5: #{forward.4} parent=0 // loop_body
    %s18 = ssub.s32 %s13, 1
    %s19 = ssub.s32 %s13, 2
    %s20 = sadd.s32 %s13, 1
    %s21 = ssub.s32 %s13, %s20
    %p22 = scmp.eq.s32.totalorder %s21, 0
    %s24 = sadd.s32 %s23, 1
    %s25 = scalar_select %p22, %s23, %s24
    %p28 = pneg %p22
    %p29 = scmp.eq.s32.totalorder %s13, 1
    %p30 = por %p28, %p29
    %p31 = scmp.ne.s32.totalorder %s23, %s26
    %p32 = scmp.eq.s32.totalorder %s13, 0
    %p33 = por %p31, %p32
    %p34 = scmp.ne.s32.totalorder %s23, %s26
    %p35 = scmp.eq.s32.totalorder %s18, 1
    %p36 = por %p34, %p35
    %p37 = scmp.ne.s32.totalorder %s26, %s27
    %p38 = scmp.eq.s32.totalorder %s18, 0
    %p39 = por %p37, %p38
    %p40 = scmp.ne.s32.totalorder %s26, %s27
    %p41 = scmp.eq.s32.totalorder %s19, 1
    %p42 = por %p40, %p41
    %p44 = scmp.ne.s32.totalorder %s27, %s43
    %p45 = scmp.eq.s32.totalorder %s19, 0
    %p46 = por %p44, %p45
    %s48 = sadd.s32 %s47, 1
    %p51 = scmp.eq.s32.totalorder %s13, 1
    %p52 = scmp.ne.s32.totalorder %s47, %s49
    %p53 = scmp.eq.s32.totalorder %s13, 0
    %p54 = por %p52, %p53
    %p55 = scmp.ne.s32.totalorder %s47, %s49
    %p56 = scmp.eq.s32.totalorder %s18, 1
    %p57 = por %p55, %p56
    %p58 = scmp.ne.s32.totalorder %s49, %s50
    %p59 = scmp.eq.s32.totalorder %s18, 0
    %p60 = por %p58, %p59
    %p61 = scmp.ne.s32.totalorder %s49, %s50
    %p62 = scmp.eq.s32.totalorder %s19, 1
    %p63 = por %p61, %p62
    %p65 = scmp.ne.s32.totalorder %s50, %s64
    %p66 = scmp.eq.s32.totalorder %s19, 0
    %p67 = por %p65, %p66
    %s69 = sadd.s32 %s68, 1
    %p72 = scmp.eq.s32.totalorder %s13, 1
    %p73 = scmp.ne.s32.totalorder %s68, %s70
    %p74 = scmp.eq.s32.totalorder %s13, 0
    %p75 = por %p73, %p74
    %p76 = scmp.ne.s32.totalorder %s68, %s70
    %p77 = scmp.eq.s32.totalorder %s18, 1
    %p78 = por %p76, %p77
    %p79 = scmp.ne.s32.totalorder %s70, %s71
    %p80 = scmp.eq.s32.totalorder %s18, 0
    %p81 = por %p79, %p80
    %p82 = scmp.ne.s32.totalorder %s70, %s71
    %p83 = scmp.eq.s32.totalorder %s19, 1
    %p84 = por %p82, %p83
    %p86 = scmp.ne.s32.totalorder %s71, %s85
    %p87 = scmp.eq.s32.totalorder %s19, 0
    %p88 = por %p86, %p87
    %s90 = sadd.s32 %s89, 1
    %p93 = scmp.eq.s32.totalorder %s13, 1
    %p94 = scmp.ne.s32.totalorder %s89, %s91
    %p95 = scmp.eq.s32.totalorder %s13, 0
    %p96 = por %p94, %p95
    %p97 = scmp.ne.s32.totalorder %s89, %s91
    %p98 = scmp.eq.s32.totalorder %s18, 1
    %p99 = por %p97, %p98
    %p100 = scmp.ne.s32.totalorder %s91, %s92
    %p101 = scmp.eq.s32.totalorder %s18, 0
    %p102 = por %p100, %p101
    %p103 = scmp.ne.s32.totalorder %s91, %s92
    %p104 = scmp.eq.s32.totalorder %s19, 1
    %p105 = por %p103, %p104
    %p107 = scmp.ne.s32.totalorder %s92, %s106
    %p108 = scmp.eq.s32.totalorder %s19, 0
    %p109 = por %p107, %p108
    %s111 = sadd.s32 %s110, 1
    %p114 = scmp.eq.s32.totalorder %s13, 1
    %p115 = scmp.ne.s32.totalorder %s110, %s112
    %p116 = scmp.eq.s32.totalorder %s13, 0
    %p117 = por %p115, %p116
    %p118 = scmp.ne.s32.totalorder %s110, %s112
    %p119 = scmp.eq.s32.totalorder %s18, 1
    %p120 = por %p118, %p119
    %p121 = scmp.ne.s32.totalorder %s112, %s113
    %p122 = scmp.eq.s32.totalorder %s18, 0
    %p123 = por %p121, %p122
    %p124 = scmp.ne.s32.totalorder %s112, %s113
    %p125 = scmp.eq.s32.totalorder %s19, 1
    %p126 = por %p124, %p125
    %p128 = scmp.ne.s32.totalorder %s113, %s127
    %p129 = scmp.eq.s32.totalorder %s19, 0
    %p130 = por %p128, %p129
    %s132 = sadd.s32 %s131, 1
    %p135 = scmp.eq.s32.totalorder %s13, 1
    %p136 = scmp.ne.s32.totalorder %s131, %s133
    %p137 = scmp.eq.s32.totalorder %s13, 0
    %p138 = por %p136, %p137
    %p139 = scmp.ne.s32.totalorder %s131, %s133
    %p140 = scmp.eq.s32.totalorder %s18, 1
    %p141 = por %p139, %p140
    %p142 = scmp.ne.s32.totalorder %s133, %s134
    %p143 = scmp.eq.s32.totalorder %s18, 0
    %p144 = por %p142, %p143
    %p145 = scmp.ne.s32.totalorder %s133, %s134
    %p146 = scmp.eq.s32.totalorder %s19, 1
    %p147 = por %p145, %p146
    %p149 = scmp.ne.s32.totalorder %s134, %s148
    %p150 = scmp.eq.s32.totalorder %s19, 0
    %p151 = por %p149, %p150
    %s153 = sadd.s32 %s152, 1
    %p156 = scmp.eq.s32.totalorder %s13, 1
    %p157 = scmp.ne.s32.totalorder %s152, %s154
    %p158 = scmp.eq.s32.totalorder %s13, 0
    %p159 = por %p157, %p158
    %p160 = scmp.ne.s32.totalorder %s152, %s154
    %p161 = scmp.eq.s32.totalorder %s18, 1
    %p162 = por %p160, %p161
    %p163 = scmp.ne.s32.totalorder %s154, %s155
    %p164 = scmp.eq.s32.totalorder %s18, 0
    %p165 = por %p163, %p164
    %p166 = scmp.ne.s32.totalorder %s154, %s155
    %p167 = scmp.eq.s32.totalorder %s19, 1
    %p168 = por %p166, %p167
    %p170 = scmp.ne.s32.totalorder %s155, %s169
    %p171 = scmp.eq.s32.totalorder %s19, 0
    %p172 = por %p170, %p171
    %s173 = ssub.s32 %s13, %s20
    %p174 = scmp.eq.s32.totalorder %s173, 0
    %s176 = sadd.s32 %s175, 1
    %s177 = scalar_select %p174, %s175, %s176
    %p180 = pneg %p174
    %p181 = scmp.eq.s32.totalorder %s13, 1
    %p182 = por %p180, %p181
    %p183 = scmp.ne.s32.totalorder %s175, %s178
    %p184 = scmp.eq.s32.totalorder %s13, 0
    %p185 = por %p183, %p184
    %p186 = scmp.ne.s32.totalorder %s175, %s178
    %p187 = scmp.eq.s32.totalorder %s18, 1
    %p188 = por %p186, %p187
    %p189 = scmp.ne.s32.totalorder %s178, %s179
    %p190 = scmp.eq.s32.totalorder %s18, 0
    %p191 = por %p189, %p190
    %p192 = scmp.ne.s32.totalorder %s178, %s179
    %p193 = scmp.eq.s32.totalorder %s19, 1
    %p194 = por %p192, %p193
    %p196 = scmp.ne.s32.totalorder %s179, %s195
    %p197 = scmp.eq.s32.totalorder %s19, 0
    %p198 = por %p196, %p197
    %p199 = scmp.le.s32.totalorder 1, %s13
    %p200 = scmp.lt.s32.totalorder %s13, 3
    %p201 = pnand %p199, %p200
    %p202 = pneg %p201
    // Predicated region
    $region9: #{forward.4} parent=5 // pred_check
      _
    $region10: #{forward.4} parent=5 // pred_check_branch
      %204 = sbr.rel (%p201) target = $region12
    $region11: #{forward.4} parent=5 // pred_region
      %s205 = ssub.s32 %s13, 1
      // Predicated region
      $region13: #{forward.4} parent=11 // pred_check
        %p206 = pneg %p60
      $region14: #{forward.4} parent=11 // pred_check_branch
        %208 = sbr.rel (%p206) target = $region16
      $region15: #{forward.4} parent=11 // pred_region
        _
      $region16: #{forward.4} parent=11 // pred_fallthru
        _
      // Predicated region
      $region17: #{forward.4} parent=11 // pred_check
        %p209 = pneg %p81
      $region18: #{forward.4} parent=11 // pred_check_branch
        %211 = sbr.rel (%p209) target = $region20
      $region19: #{forward.4} parent=11 // pred_region
        _
      $region20: #{forward.4} parent=11 // pred_fallthru
        _
      // Predicated region
      $region21: #{forward.4} parent=11 // pred_check
        %p212 = pneg %p102
      $region22: #{forward.4} parent=11 // pred_check_branch
        %214 = sbr.rel (%p212) target = $region24
      $region23: #{forward.4} parent=11 // pred_region
        _
      $region24: #{forward.4} parent=11 // pred_fallthru
        _
      // Predicated region
      $region25: #{forward.4} parent=11 // pred_check
        %p215 = pneg %p123
      $region26: #{forward.4} parent=11 // pred_check_branch
        %217 = sbr.rel (%p215) target = $region28
      $region27: #{forward.4} parent=11 // pred_region
        _
      $region28: #{forward.4} parent=11 // pred_fallthru
        _
      // Predicated region
      $region29: #{forward.4} parent=11 // pred_check
        %p218 = pneg %p144
      $region30: #{forward.4} parent=11 // pred_check_branch
        %220 = sbr.rel (%p218) target = $region32
      $region31: #{forward.4} parent=11 // pred_region
        _
      $region32: #{forward.4} parent=11 // pred_fallthru
        _
      // Predicated region
      $region33: #{forward.4} parent=11 // pred_check
        %p221 = pneg %p165
      $region34: #{forward.4} parent=11 // pred_check_branch
        %223 = sbr.rel (%p221) target = $region36
      $region35: #{forward.4} parent=11 // pred_region
        _
      $region36: #{forward.4} parent=11 // pred_fallthru
        _
    $region12: #{forward.4} parent=5 // pred_fallthru
      _
    %p224 = scmp.lt.s32.totalorder %s13, 2
    // Predicated region
    $region37: #{forward.4} parent=5 // pred_check
      %p225 = pneg %p224
    $region38: #{forward.4} parent=5 // pred_check_branch
      %227 = sbr.rel (%p225) target = $region40
    $region39: #{forward.4} parent=5 // pred_region
      // Predicated region
      $region41: #{forward.4} parent=39 // pred_check
        %p228 = pneg %p33
      $region42: #{forward.4} parent=39 // pred_check_branch
        %230 = sbr.rel (%p228) target = $region44
      $region43: #{forward.4} parent=39 // pred_region
        %p231 = scmp.lt.s32.totalorder %s13, 1
        %s232 = scalar_select %p231, %s13, 1
        %s233 = smul.addr %s232, 24
        %s234 = smul.addr %s233, 4
        %s235 = scalar_lea.vmem %s0, %s234
      $region44: #{forward.4} parent=39 // pred_fallthru
        _
    $region40: #{forward.4} parent=5 // pred_fallthru
      _
    %p236 = scmp.le.s32.totalorder 1, %s13
    %p237 = scmp.lt.s32.totalorder %s13, 3
    %p238 = pnand %p236, %p237
    %p239 = pneg %p238
    // Predicated region
    $region45: #{forward.4} parent=5 // pred_check
      _
    $region46: #{forward.4} parent=5 // pred_check_branch
      %241 = sbr.rel (%p238) target = $region48
    $region47: #{forward.4} parent=5 // pred_region
      %s242 = ssub.s32 %s13, 1
      %p243 = scmp.lt.s32.totalorder %s18, 1
      %s244 = scalar_select %p243, %s18, 1
      %s245 = smul.addr %s244, 24
      %s246 = smul.addr %s245, 4
      %s247 = scalar_lea.vmem %s0, %s246
      %p248 = pneg %p39
      %p249 = pneg %p36
      %p250 = pneg %p60
      %p251 = pneg %p57
      %p252 = pneg %p81
      %p253 = pneg %p78
      %p254 = pneg %p102
      %p255 = pneg %p99
      %p256 = pneg %p123
      %p257 = pneg %p120
      %p258 = pneg %p144
      %p259 = pneg %p141
      %p260 = pneg %p165
      %p261 = pneg %p162
      %p262 = pneg %p191
      %p263 = pneg %p188
      %p264 = scmp.lt.s32.totalorder %s18, 1
      %s265 = scalar_select %p264, %s18, 1
      %s266 = smul.addr %s265, 24
      %s267 = smul.addr %s266, 4
      %s268 = scalar_lea.vmem %s7, %s267
      %p269 = scmp.lt.s32.totalorder %s18, 1
      %s270 = scalar_select %p269, %s18, 1
      %s271 = smul.addr %s270, 24
      %s272 = smul.addr %s271, 4
      %s273 = scalar_lea.vmem %s0, %s272
      %p274 = scmp.lt.s32.totalorder %s18, 1
      %s275 = scalar_select %p274, %s18, 1
      %s276 = smul.addr %s275, 24
      %s277 = smul.addr %s276, 4
      %s278 = scalar_lea.vmem %s7, %s277
      %v280 = vld [vmem:[%s273] sm:$0xff]
      %v281 = vld [vmem:[%s273 + $0x8] sm:$0xf]
      %v282 = vld [vmem:[%s273 + $0xc] sm:$0xff]
      %v283 = vld [vmem:[%s273 + $0x14] sm:$0xf]
      %v284 = vld [vmem:[%s273 + $0x18] sm:$0xff]
      %v285 = vld [vmem:[%s273 + $0x20] sm:$0xf]
      %v286 = vld [vmem:[%s273 + $0x24] sm:$0xff]
      %v287 = vld [vmem:[%s273 + $0x2c] sm:$0xf]
      %v288 = vld [vmem:[%s273 + $0x30] sm:$0xff]
      %v289 = vld [vmem:[%s273 + $0x38] sm:$0xf]
      %v290 = vld [vmem:[%s273 + $0x3c] sm:$0xff]
      %v291 = vld [vmem:[%s273 + $0x44] sm:$0xf]
      %v292 = vld [vmem:[%s273 + $0x48] sm:$0xff]
      %v293 = vld [vmem:[%s273 + $0x50] sm:$0xf]
      %v294 = vld [vmem:[%s273 + $0x54] sm:$0xff]
      %v295 = vld [vmem:[%s273 + $0x5c] sm:$0xf]
      %v296 = vld [vmem:[%s1] sm:$0xf]
      %v297 = vld [vmem:[%s1 + $0x4] sm:$0xf]
      %v298 = vld [vmem:[%s1 + $0x8] sm:$0xf]
      %v299 = vld [vmem:[%s1 + $0xc] sm:$0xf]
      %v300 = vld [vmem:[%s1 + $0x10] sm:$0xf]
      %v301 = vld [vmem:[%s1 + $0x14] sm:$0xf]
      %v302 = vld [vmem:[%s1 + $0x18] sm:$0xf]
      %v303 = vld [vmem:[%s1 + $0x1c] sm:$0xf]
      %v304 = vld [vmem:[%s1 + $0x20] sm:$0xf]
      %v305 = vld [vmem:[%s1 + $0x24] sm:$0xf]
      %v306 = vld [vmem:[%s1 + $0x28] sm:$0xf]
      %v307 = vld [vmem:[%s1 + $0x2c] sm:$0xf]
      %v308 = vld [vmem:[%s1 + $0x30] sm:$0xf]
      %v309 = vld [vmem:[%s1 + $0x34] sm:$0xf]
      %v310 = vld [vmem:[%s1 + $0x38] sm:$0xf]
      %v311 = vld [vmem:[%s1 + $0x3c] sm:$0xf]
      %v312 = vld [vmem:[%s1 + $0x40] sm:$0xf]
      %v313 = vld [vmem:[%s1 + $0x44] sm:$0xf]
      %v314 = vld [vmem:[%s1 + $0x48] sm:$0xf]
      %v315 = vld [vmem:[%s1 + $0x4c] sm:$0xf]
      %v316 = vld [vmem:[%s1 + $0x50] sm:$0xf]
      %v317 = vld [vmem:[%s1 + $0x54] sm:$0xf]
      %v318 = vld [vmem:[%s1 + $0x58] sm:$0xf]
      %v319 = vld [vmem:[%s1 + $0x5c] sm:$0xf]
      %v320 = vld [vmem:[%s1 + $0x60] sm:$0xf]
      %v321 = vld [vmem:[%s1 + $0x64] sm:$0xf]
      %v322 = vld [vmem:[%s1 + $0x68] sm:$0xf]
      %v323 = vld [vmem:[%s1 + $0x6c] sm:$0xf]
      %v324 = vld [vmem:[%s1 + $0x70] sm:$0xf]
      %v325 = vld [vmem:[%s1 + $0x74] sm:$0xf]
      %v326 = vld [vmem:[%s1 + $0x78] sm:$0xf]
      %v327 = vld [vmem:[%s1 + $0x7c] sm:$0xf]
      %v328 = vld [vmem:[%s1 + $0x80] sm:$0xf]
      %v329 = vld [vmem:[%s1 + $0x84] sm:$0xf]
      %v330 = vld [vmem:[%s1 + $0x88] sm:$0xf]
      %v331 = vld [vmem:[%s1 + $0x8c] sm:$0xf]
      %v332 = vld [vmem:[%s2] sm:$0x1]
      %v334 = vlaneseq
      %v335 = vshrl.u32 %v334, 7
      %v336 = vsub.s32 0, %v335
      %v337 = vrot.slane %v332, %v336
      %v355 = vunpack.c.l.b16 %v280
      %v356 = vunpack.c.h.b16 %v280
      %v357 = vunpack.c.l.b16 %v281
      %v358 = vunpack.c.l.b16 %v282
      %v359 = vunpack.c.h.b16 %v282
      %v360 = vunpack.c.l.b16 %v283
      %v361 = vunpack.c.l.b16 %v284
      %v362 = vunpack.c.h.b16 %v284
      %v363 = vunpack.c.l.b16 %v285
      %v364 = vunpack.c.l.b16 %v286
      %v365 = vunpack.c.h.b16 %v286
      %v366 = vunpack.c.l.b16 %v287
      %v367 = vunpack.c.l.b16 %v288
      %v368 = vunpack.c.h.b16 %v288
      %v369 = vunpack.c.l.b16 %v289
      %v370 = vunpack.c.l.b16 %v290
      %v371 = vunpack.c.h.b16 %v290
      %v372 = vunpack.c.l.b16 %v291
      %v373 = vunpack.c.l.b16 %v292
      %v374 = vunpack.c.h.b16 %v292
      %v375 = vunpack.c.l.b16 %v293
      %v376 = vunpack.c.l.b16 %v294
      %v377 = vunpack.c.h.b16 %v294
      %v378 = vunpack.c.l.b16 %v295
      %v379 = vpack.c.b16 %v358, %v355
      %v380 = vpack.c.b16 %v359, %v356
      %v381 = vpack.c.b16 %v360, %v357
      %v382 = vpack.c.b16 %v364, %v361
      %v383 = vpack.c.b16 %v365, %v362
      %v384 = vpack.c.b16 %v366, %v363
      %v385 = vpack.c.b16 %v370, %v367
      %v386 = vpack.c.b16 %v371, %v368
      %v387 = vpack.c.b16 %v372, %v369
      %v388 = vpack.c.b16 %v376, %v373
      %v389 = vpack.c.b16 %v377, %v374
      %v390 = vpack.c.b16 %v378, %v375
      %v435 = vunpack.c.l.b16 %v296
      %v436 = vunpack.c.l.b16 %v297
      %v437 = vunpack.c.l.b16 %v298
      %v438 = vunpack.c.l.b16 %v299
      %v439 = vunpack.c.l.b16 %v300
      %v440 = vunpack.c.l.b16 %v301
      %v441 = vunpack.c.l.b16 %v302
      %v442 = vunpack.c.l.b16 %v303
      %v443 = vunpack.c.l.b16 %v304
      %v444 = vunpack.c.l.b16 %v305
      %v445 = vunpack.c.l.b16 %v306
      %v446 = vunpack.c.l.b16 %v307
      %v447 = vunpack.c.l.b16 %v308
      %v448 = vunpack.c.l.b16 %v309
      %v449 = vunpack.c.l.b16 %v310
      %v450 = vunpack.c.l.b16 %v311
      %v451 = vunpack.c.l.b16 %v312
      %v452 = vunpack.c.l.b16 %v313
      %v453 = vunpack.c.l.b16 %v314
      %v454 = vunpack.c.l.b16 %v315
      %v455 = vunpack.c.l.b16 %v316
      %v456 = vunpack.c.l.b16 %v317
      %v457 = vunpack.c.l.b16 %v318
      %v458 = vunpack.c.l.b16 %v319
      %v459 = vunpack.c.l.b16 %v320
      %v460 = vunpack.c.l.b16 %v321
      %v461 = vunpack.c.l.b16 %v322
      %v462 = vunpack.c.l.b16 %v323
      %v463 = vunpack.c.l.b16 %v324
      %v464 = vunpack.c.l.b16 %v325
      %v465 = vunpack.c.l.b16 %v326
      %v466 = vunpack.c.l.b16 %v327
      %v467 = vunpack.c.l.b16 %v328
      %v468 = vunpack.c.l.b16 %v329
      %v469 = vunpack.c.l.b16 %v330
      %v470 = vunpack.c.l.b16 %v331
      %v471 = vpack.c.b16 %v436, %v435
      %v472 = vpack.c.b16 %v438, %v437
      %v473 = vpack.c.b16 %v440, %v439
      %v474 = vpack.c.b16 %v442, %v441
      %v475 = vpack.c.b16 %v444, %v443
      %v476 = vpack.c.b16 %v446, %v445
      %v477 = vpack.c.b16 %v448, %v447
      %v478 = vpack.c.b16 %v450, %v449
      %v479 = vpack.c.b16 %v452, %v451
      %v480 = vpack.c.b16 %v454, %v453
      %v481 = vpack.c.b16 %v456, %v455
      %v482 = vpack.c.b16 %v458, %v457
      %v483 = vpack.c.b16 %v460, %v459
      %v484 = vpack.c.b16 %v462, %v461
      %v485 = vpack.c.b16 %v464, %v463
      %v486 = vpack.c.b16 %v466, %v465
      %v487 = vpack.c.b16 %v468, %v467
      %v488 = vpack.c.b16 %v470, %v469
      %vm507 = vcmask 261120
      %v509 = vsel %vm507, %v381, 0
      %v512 = vsel %vm507, %v384, 0
      %v515 = vsel %vm507, %v387, 0
      %v518 = vsel %vm507, %v390, 0
      %520 = vmatprep.subr.bf16.mxu0 0
      %521 = vmatpush1.bf16.msra.mxu0 %v471
      %522 = vmatprep.subr.bf16.mxu0 0
      %523 = vmatpush1.bf16.msra.mxu0 %v472
      %524 = vmatprep.subr.bf16.mxu0 0
      %525 = vmatpush1.bf16.msra.mxu0 %v473
      %526 = vmatprep.subr.bf16.mxu0 0
      %527 = vmatpush1.bf16.msra.mxu0 %v474
      %528 = vmatprep.subr.bf16.mxu0 0
      %529 = vmatpush1.bf16.msra.mxu0 %v475
      %530 = vmatprep.subr.bf16.mxu0 0
      %531 = vmatpush1.bf16.msra.mxu0 %v476
      %532 = vmatprep.subr.bf16.mxu0 0
      %533 = vmatpush1.bf16.msra.mxu0 %v477
      %534 = vmatprep.subr.bf16.mxu0 0
      %535 = vmatpush1.bf16.msra.mxu0 %v478
      %536 = vmatprep.subr.bf16.mxu0 0
      %537 = vmatpush1.bf16.msra.mxu0 %v479
      %538 = vmatprep.subr.bf16.mxu0 0
      %539 = vmatpush1.bf16.msra.mxu0 %v480
      %540 = vmatprep.subr.bf16.mxu0 0
      %541 = vmatpush1.bf16.msra.mxu0 %v481
      %542 = vmatprep.subr.bf16.mxu0 0
      %543 = vmatpush1.bf16.msra.mxu0 %v482
      %544 = vmatprep.subr.bf16.mxu0 0
      %545 = vmatpush1.bf16.msra.mxu0 %v483
      %546 = vmatprep.subr.bf16.mxu0 0
      %547 = vmatpush1.bf16.msra.mxu0 %v484
      %548 = vmatprep.subr.bf16.mxu0 0
      %549 = vmatpush1.bf16.msra.mxu0 %v485
      %550 = vmatprep.subr.bf16.mxu0 0
      %551 = vmatpush1.bf16.msra.mxu0 %v486
      %552 = vmatprep.mubr.bf16.mxu0 %v380
      %553 = vmatmul.mubr.bf16.gmra.mrb[0].mxu0 %v379
      %v554 = vpop.f32.mrb[0].mxu0
      %v555 = vadd.f32 %v337, %v554
      %v556 = vpop.f32.mrb[0].mxu0
      %v557 = vpop.f32.mrb[0].mxu0
      %v558 = vadd.f32 %v337, %v557
      %v559 = vpop.f32.mrb[0].mxu0
      %560 = vmatprep.mubr.bf16.mxu0 %v383
      %561 = vmatmul.mubr.bf16.gmra.mrb[0].mxu0 %v382
      %v562 = vpop.f32.mrb[0].mxu0
      %v563 = vadd.f32 %v337, %v562
      %v564 = vpop.f32.mrb[0].mxu0
      %v565 = vpop.f32.mrb[0].mxu0
      %v566 = vadd.f32 %v337, %v565
      %v567 = vpop.f32.mrb[0].mxu0
      %568 = vmatprep.mubr.bf16.mxu0 %v386
      %569 = vmatmul.mubr.bf16.gmra.mrb[0].mxu0 %v385
      %v570 = vpop.f32.mrb[0].mxu0
      %v571 = vadd.f32 %v337, %v570
      %v572 = vpop.f32.mrb[0].mxu0
      %v573 = vpop.f32.mrb[0].mxu0
      %v574 = vadd.f32 %v337, %v573
      %v575 = vpop.f32.mrb[0].mxu0
      %576 = vmatprep.mubr.bf16.mxu0 %v389
      %577 = vmatmul.mubr.bf16.gmra.mrb[0].mxu0 %v388
      %v578 = vpop.f32.mrb[0].mxu0
      %v579 = vadd.f32 %v337, %v578
      %v580 = vpop.f32.mrb[0].mxu0
      %v581 = vpop.f32.mrb[0].mxu0
      %v582 = vadd.f32 %v337, %v581
      %v583 = vpop.f32.mrb[0].mxu0
      %584 = vdwg.mxu0
      %585 = vmatprep.subr.bf16.mxu0 0
      %586 = vmatpush1.bf16.msra.mxu0 %v487
      %587 = vmatprep.subr.bf16.mxu0 0
      %588 = vmatpush1.bf16.msra.mxu0 %v488
      %589 = vmatprep.subr.bf16.mxu0 0
      %590 = vmatpush1.bf16.msra.mxu0 0
      %591 = vmatprep.subr.bf16.mxu0 0
      %592 = vmatpush1.bf16.msra.mxu0 0
      %593 = vmatprep.subr.bf16.mxu0 0
      %594 = vmatpush1.bf16.msra.mxu0 0
      %595 = vmatprep.subr.bf16.mxu0 0
      %596 = vmatpush1.bf16.msra.mxu0 0
      %597 = vmatprep.subr.bf16.mxu0 0
      %598 = vmatpush1.bf16.msra.mxu0 0
      %599 = vmatprep.subr.bf16.mxu0 0
      %600 = vmatpush1.bf16.msra.mxu0 0
      %601 = vmatprep.subr.bf16.mxu0 0
      %602 = vmatpush1.bf16.msra.mxu0 0
      %603 = vmatprep.subr.bf16.mxu0 0
      %604 = vmatpush1.bf16.msra.mxu0 0
      %605 = vmatprep.subr.bf16.mxu0 0
      %606 = vmatpush1.bf16.msra.mxu0 0
      %607 = vmatprep.subr.bf16.mxu0 0
      %608 = vmatpush1.bf16.msra.mxu0 0
      %609 = vmatprep.subr.bf16.mxu0 0
      %610 = vmatpush1.bf16.msra.mxu0 0
      %611 = vmatprep.subr.bf16.mxu0 0
      %612 = vmatpush1.bf16.msra.mxu0 0
      %613 = vmatprep.subr.bf16.mxu0 0
      %614 = vmatpush1.bf16.msra.mxu0 0
      %615 = vmatprep.subr.bf16.mxu0 0
      %616 = vmatpush1.bf16.msra.mxu0 0
      %617 = vmatprep.mubr.bf16.mxu0 0
      %618 = vmatmul.mubr.bf16.gmra.mrb[0].mxu0 %v509
      %v619 = vpop.f32.mrb[0].mxu0
      %v620 = vadd.f32 %v555, %v619
      %v621 = vpop.f32.mrb[0].mxu0
      %v622 = vpop.f32.mrb[0].mxu0
      %v623 = vadd.f32 %v558, %v622
      %v624 = vpop.f32.mrb[0].mxu0
      %625 = vmatprep.mubr.bf16.mxu0 0
      %626 = vmatmul.mubr.bf16.gmra.mrb[0].mxu0 %v512
      %v627 = vpop.f32.mrb[0].mxu0
      %v628 = vadd.f32 %v563, %v627
      %v629 = vpop.f32.mrb[0].mxu0
      %v630 = vpop.f32.mrb[0].mxu0
      %v631 = vadd.f32 %v566, %v630
      %v632 = vpop.f32.mrb[0].mxu0
      %633 = vmatprep.mubr.bf16.mxu0 0
      %634 = vmatmul.mubr.bf16.gmra.mrb[0].mxu0 %v515
      %v635 = vpop.f32.mrb[0].mxu0
      %v636 = vadd.f32 %v571, %v635
      %v637 = vpop.f32.mrb[0].mxu0
      %v638 = vpop.f32.mrb[0].mxu0
      %v639 = vadd.f32 %v574, %v638
      %v640 = vpop.f32.mrb[0].mxu0
      %641 = vmatprep.mubr.bf16.mxu0 0
      %642 = vmatmul.mubr.bf16.gmra.mrb[0].mxu0 %v518
      %v643 = vpop.f32.mrb[0].mxu0
      %v644 = vadd.f32 %v579, %v643
      %v645 = vpop.f32.mrb[0].mxu0
      %v646 = vpop.f32.mrb[0].mxu0
      %v647 = vadd.f32 %v582, %v646
      %v648 = vpop.f32.mrb[0].mxu0
      %649 = vdwg.mxu0
      %v650 = vmax.f32 %v620, 0.0
      %v651 = vmax.f32 %v623, 0.0
      %v652 = vmax.f32 %v628, 0.0
      %v653 = vmax.f32 %v631, 0.0
      %v654 = vmax.f32 %v636, 0.0
      %v655 = vmax.f32 %v639, 0.0
      %v656 = vmax.f32 %v644, 0.0
      %v657 = vmax.f32 %v647, 0.0
      %vm658 = vcmask 785408
      %659 = vst.msk [vmem:[#allocation2] sm:$0xff] %vm658, 0.0
      %660 = vst.msk [vmem:[#allocation2 + $0x8] sm:$0xff] %vm658, 0.0
      %661 = vst.msk [vmem:[#allocation2 + $0x10] sm:$0xff] %vm658, 0.0
      %662 = vst.msk [vmem:[#allocation2 + $0x18] sm:$0xff] %vm658, 0.0
      %663 = vst.msk [vmem:[#allocation2 + $0x20] sm:$0xff] %vm658, 0.0
      %664 = vst.msk [vmem:[#allocation2 + $0x28] sm:$0xff] %vm658, 0.0
      %665 = vst.msk [vmem:[#allocation2 + $0x30] sm:$0xff] %vm658, 0.0
      %666 = vst.msk [vmem:[#allocation2 + $0x38] sm:$0xff] %vm658, 0.0
      %667 = vst.msk [vmem:[#allocation2 + $0x40] sm:$0xff] %vm658, 0.0
      %668 = vst.msk [vmem:[#allocation2 + $0x48] sm:$0xff] %vm658, 0.0
      %vm669 = vcmask 779264
      %670 = vst.msk [vmem:[#allocation2 + $0x50] sm:$0x3] %vm669, 0.0
      %671 = vst.msk [vmem:[#allocation2 + $0x9] sm:$0xff] %vm658, %v650
      %672 = vst.msk [vmem:[#allocation2 + $0x11] sm:$0xff] %vm658, %v651
      %673 = vst.msk [vmem:[#allocation2 + $0x19] sm:$0xff] %vm658, %v652
      %674 = vst.msk [vmem:[#allocation2 + $0x21] sm:$0xff] %vm658, %v653
      %675 = vst.msk [vmem:[#allocation2 + $0x29] sm:$0xff] %vm658, %v654
      %676 = vst.msk [vmem:[#allocation2 + $0x31] sm:$0xff] %vm658, %v655
      %677 = vst.msk [vmem:[#allocation2 + $0x39] sm:$0xff] %vm658, %v656
      %678 = vst.msk [vmem:[#allocation2 + $0x41] sm:$0xff] %vm658, %v657
      %v679 = vlaneseq
      %v680 = vshrl.u32 %v679, 7
      %v681 = vadd.s32 %v680, 8
      %v682 = vadd.s32 %v680, 16
      %v683 = vadd.s32 %v680, 24
      %v684 = vadd.s32 %v680, 32
      %v685 = vadd.s32 %v680, 40
      %v686 = vadd.s32 %v680, 48
      %v687 = vadd.s32 %v680, 56
      %vm688 = vcmp.lt.s32.totalorder %v680, 0
      %v689 = vsub.s32 0, %v680
      %v690 = vsel %vm688, %v689, %v680
      %v691 = vshrl.u32 %v690, 3
      %v692 = vand.u32 %v690, 7
      %v693 = vsub.s32 0, %v692
      %v694 = vsel %vm688, %v693, %v692
      %vm695 = vcmp.lt.s32.totalorder %v681, 0
      %v696 = vsub.s32 0, %v681
      %v697 = vsel %vm695, %v696, %v681
      %v698 = vshrl.u32 %v697, 3
      %v699 = vand.u32 %v697, 7
      %v700 = vsub.s32 0, %v699
      %v701 = vsel %vm695, %v700, %v699
      %vm702 = vcmp.lt.s32.totalorder %v682, 0
      %v703 = vsub.s32 0, %v682
      %v704 = vsel %vm702, %v703, %v682
      %v705 = vshrl.u32 %v704, 3
      %v706 = vand.u32 %v704, 7
      %v707 = vsub.s32 0, %v706
      %v708 = vsel %vm702, %v707, %v706
      %vm709 = vcmp.lt.s32.totalorder %v683, 0
      %v710 = vsub.s32 0, %v683
      %v711 = vsel %vm709, %v710, %v683
      %v712 = vshrl.u32 %v711, 3
      %v713 = vand.u32 %v711, 7
      %v714 = vsub.s32 0, %v713
      %v715 = vsel %vm709, %v714, %v713
      %vm716 = vcmp.lt.s32.totalorder %v684, 0
      %v717 = vsub.s32 0, %v684
      %v718 = vsel %vm716, %v717, %v684
      %v719 = vshrl.u32 %v718, 3
      %v720 = vand.u32 %v718, 7
      %v721 = vsub.s32 0, %v720
      %v722 = vsel %vm716, %v721, %v720
      %vm723 = vcmp.lt.s32.totalorder %v685, 0
      %v724 = vsub.s32 0, %v685
      %v725 = vsel %vm723, %v724, %v685
      %v726 = vshrl.u32 %v725, 3
      %v727 = vand.u32 %v725, 7
      %v728 = vsub.s32 0, %v727
      %v729 = vsel %vm723, %v728, %v727
      %vm730 = vcmp.lt.s32.totalorder %v686, 0
      %v731 = vsub.s32 0, %v686
      %v732 = vsel %vm730, %v731, %v686
      %v733 = vshrl.u32 %v732, 3
      %v734 = vand.u32 %v732, 7
      %v735 = vsub.s32 0, %v734
      %v736 = vsel %vm730, %v735, %v734
      %vm737 = vcmp.lt.s32.totalorder %v687, 0
      %v738 = vsub.s32 0, %v687
      %v739 = vsel %vm737, %v738, %v687
      %v740 = vshrl.u32 %v739, 3
      %v741 = vand.u32 %v739, 7
      %v742 = vsub.s32 0, %v741
      %v743 = vsel %vm737, %v742, %v741
      %vm744 = vcmp.ne.s32.totalorder %v694, 0
      %vm745 = vcmp.ne.s32.totalorder %v701, 0
      %vm746 = vcmp.ne.s32.totalorder %v708, 0
      %vm747 = vcmp.ne.s32.totalorder %v715, 0
      %vm748 = vcmp.ne.s32.totalorder %v722, 0
      %vm749 = vcmp.ne.s32.totalorder %v729, 0
      %vm750 = vcmp.ne.s32.totalorder %v736, 0
      %vm751 = vcmp.ne.s32.totalorder %v743, 0
      %vm752 = vcmp.lt.s32.totalorder %v694, 0
      %vm753 = vcmp.lt.s32.totalorder %v701, 0
      %vm754 = vcmp.lt.s32.totalorder %v708, 0
      %vm755 = vcmp.lt.s32.totalorder %v715, 0
      %vm756 = vcmp.lt.s32.totalorder %v722, 0
      %vm757 = vcmp.lt.s32.totalorder %v729, 0
      %vm758 = vcmp.lt.s32.totalorder %v736, 0
      %vm759 = vcmp.lt.s32.totalorder %v743, 0
      %vm760 = vmand %vm752, %vm744
      %vm761 = vmand %vm753, %vm745
      %vm762 = vmand %vm754, %vm746
      %vm763 = vmand %vm755, %vm747
      %vm764 = vmand %vm756, %vm748
      %vm765 = vmand %vm757, %vm749
      %vm766 = vmand %vm758, %vm750
      %vm767 = vmand %vm759, %vm751
      %v768 = vadd.s32 %v694, 8
      %v769 = vadd.s32 %v701, 8
      %v770 = vadd.s32 %v708, 8
      %v771 = vadd.s32 %v715, 8
      %v772 = vadd.s32 %v722, 8
      %v773 = vadd.s32 %v729, 8
      %v774 = vadd.s32 %v736, 8
      %v775 = vadd.s32 %v743, 8
      %v776 = vsel %vm760, %v768, %v694
      %v777 = vsel %vm761, %v769, %v701
      %v778 = vsel %vm762, %v770, %v708
      %v779 = vsel %vm763, %v771, %v715
      %v780 = vsel %vm764, %v772, %v722
      %v781 = vsel %vm765, %v773, %v729
      %v782 = vsel %vm766, %v774, %v736
      %v783 = vsel %vm767, %v775, %v743
      %v784 = vld [vmem:[%s4] sm:$0x1]
      %v786 = vlaneseq
      %v787 = vshrl.u32 %v786, 7
      %v788 = vsub.s32 0, %v787
      %v789 = vrot.slane %v784, %v788
      %v791 = vadd.f32 %v789, 0.0
      %v792 = vld [vmem:[#allocation2] sm:$0xff]
      %v793 = vld [vmem:[#allocation2 + $0x8] sm:$0xff]
      %v794 = vld [vmem:[#allocation2 + $0x10] sm:$0xff]
      %v795 = vld [vmem:[#allocation2 + $0x18] sm:$0xff]
      %v796 = vld [vmem:[#allocation2 + $0x20] sm:$0xff]
      %v797 = vld [vmem:[#allocation2 + $0x28] sm:$0xff]
      %v798 = vld [vmem:[#allocation2 + $0x30] sm:$0xff]
      %v799 = vld [vmem:[#allocation2 + $0x38] sm:$0xff]
      %vm800 = vcmp.ne.s32.totalorder %v776, 0
      %vm801 = vcmp.ne.s32.totalorder %v777, 0
      %vm802 = vcmp.ne.s32.totalorder %v778, 0
      %vm803 = vcmp.ne.s32.totalorder %v779, 0
      %vm804 = vcmp.ne.s32.totalorder %v780, 0
      %vm805 = vcmp.ne.s32.totalorder %v781, 0
      %vm806 = vcmp.ne.s32.totalorder %v782, 0
      %vm807 = vcmp.ne.s32.totalorder %v783, 0
      %v808 = vsel %vm800, 1, 0
      %v809 = vsel %vm801, 1, 0
      %v810 = vsel %vm802, 1, 0
      %v811 = vsel %vm803, 1, 0
      %v812 = vsel %vm804, 1, 0
      %v813 = vsel %vm805, 1, 0
      %v814 = vsel %vm806, 1, 0
      %v815 = vsel %vm807, 1, 0
      %vm816 = vcmp.eq.s32.totalorder %v808, 1
      %vm817 = vcmp.eq.s32.totalorder %v809, 1
      %vm818 = vcmp.eq.s32.totalorder %v810, 1
      %vm819 = vcmp.eq.s32.totalorder %v811, 1
      %vm820 = vcmp.eq.s32.totalorder %v812, 1
      %vm821 = vcmp.eq.s32.totalorder %v813, 1
      %vm822 = vcmp.eq.s32.totalorder %v814, 1
      %vm823 = vcmp.eq.s32.totalorder %v815, 1
      %v824 = vsel %vm816, %v792, 0.0
      %v825 = vsel %vm817, %v793, 0.0
      %v826 = vsel %vm818, %v794, 0.0
      %v827 = vsel %vm819, %v795, 0.0
      %v828 = vsel %vm820, %v796, 0.0
      %v829 = vsel %vm821, %v797, 0.0
      %v830 = vsel %vm822, %v798, 0.0
      %v831 = vsel %vm823, %v799, 0.0
      %v832 = vpack.c.bf16 %v825, %v824
      %v833 = vpack.c.bf16 %v827, %v826
      %v834 = vpack.c.bf16 %v829, %v828
      %v835 = vpack.c.bf16 %v831, %v830
      %v836 = vld [vmem:[%s3] sm:$0xf]
      %v837 = vld [vmem:[%s3 + $0x4] sm:$0xf]
      %v838 = vld [vmem:[%s3 + $0x8] sm:$0xf]
      %v839 = vld [vmem:[%s3 + $0xc] sm:$0xf]
      %v840 = vld [vmem:[%s3 + $0x10] sm:$0xf]
      %v841 = vld [vmem:[%s3 + $0x14] sm:$0xf]
      %v842 = vld [vmem:[%s3 + $0x18] sm:$0xf]
      %v843 = vld [vmem:[%s3 + $0x1c] sm:$0xf]
      %v844 = vld [vmem:[%s3 + $0x20] sm:$0xf]
      %v845 = vld [vmem:[%s3 + $0x24] sm:$0xf]
      %v846 = vld [vmem:[%s3 + $0x28] sm:$0xf]
      %v847 = vld [vmem:[%s3 + $0x2c] sm:$0xf]
      %v860 = vunpack.c.l.b16 %v836
      %v861 = vunpack.c.l.b16 %v837
      %v862 = vunpack.c.l.b16 %v838
      %v863 = vunpack.c.l.b16 %v839
      %v864 = vunpack.c.l.b16 %v840
      %v865 = vunpack.c.l.b16 %v841
      %v866 = vunpack.c.l.b16 %v842
      %v867 = vunpack.c.l.b16 %v843
      %v868 = vunpack.c.l.b16 %v844
      %v869 = vunpack.c.l.b16 %v845
      %v870 = vunpack.c.l.b16 %v846
      %v871 = vunpack.c.l.b16 %v847
      %v872 = vpack.c.b16 %v861, %v860
      %v873 = vpack.c.b16 %v863, %v862
      %v874 = vpack.c.b16 %v865, %v864
      %v875 = vpack.c.b16 %v867, %v866
      %v876 = vpack.c.b16 %v869, %v868
      %v877 = vpack.c.b16 %v871, %v870
      %v885 = vsel %vm658, %v832, 0
      %v888 = vsel %vm658, %v833, 0
      %v891 = vsel %vm658, %v834, 0
      %v894 = vsel %vm658, %v835, 0
      %896 = vmatprep.subr.bf16.mxu0 0
      %897 = vmatpush1.bf16.msra.mxu0 %v872
      %898 = vmatprep.subr.bf16.mxu0 0
      %899 = vmatpush1.bf16.msra.mxu0 %v873
      %900 = vmatprep.subr.bf16.mxu0 0
      %901 = vmatpush1.bf16.msra.mxu0 %v874
      %902 = vmatprep.subr.bf16.mxu0 0
      %903 = vmatpush1.bf16.msra.mxu0 %v875
      %904 = vmatprep.subr.bf16.mxu0 0
      %905 = vmatpush1.bf16.msra.mxu0 %v876
      %906 = vmatprep.subr.bf16.mxu0 0
      %907 = vmatpush1.bf16.msra.mxu0 %v877
      %908 = vmatprep.subr.bf16.mxu0 0
      %909 = vmatpush1.bf16.msra.mxu0 0
      %910 = vmatprep.subr.bf16.mxu0 0
      %911 = vmatpush1.bf16.msra.mxu0 0
      %912 = vmatprep.subr.bf16.mxu0 0
      %913 = vmatpush1.bf16.msra.mxu0 0
      %914 = vmatprep.subr.bf16.mxu0 0
      %915 = vmatpush1.bf16.msra.mxu0 0
      %916 = vmatprep.subr.bf16.mxu0 0
      %917 = vmatpush1.bf16.msra.mxu0 0
      %918 = vmatprep.subr.bf16.mxu0 0
      %919 = vmatpush1.bf16.msra.mxu0 0
      %920 = vmatprep.subr.bf16.mxu0 0
      %921 = vmatpush1.bf16.msra.mxu0 0
      %922 = vmatprep.subr.bf16.mxu0 0
      %923 = vmatpush1.bf16.msra.mxu0 0
      %924 = vmatprep.subr.bf16.mxu0 0
      %925 = vmatpush1.bf16.msra.mxu0 0
      %926 = vmatprep.subr.bf16.mxu0 0
      %927 = vmatpush1.bf16.msra.mxu0 0
      %928 = vmatprep.mubr.bf16.mxu0 0
      %929 = vmatmul.mubr.bf16.gmra.mrb[0].mxu0 %v885
      %v930 = vpop.f32.mrb[0].mxu0
      %v931 = vadd.f32 0.0, %v930
      %v932 = vpop.f32.mrb[0].mxu0
      %v933 = vpop.f32.mrb[0].mxu0
      %v934 = vadd.f32 0.0, %v933
      %v935 = vpop.f32.mrb[0].mxu0
      %936 = vmatprep.mubr.bf16.mxu0 0
      %937 = vmatmul.mubr.bf16.gmra.mrb[0].mxu0 %v888
      %v938 = vpop.f32.mrb[0].mxu0
      %v939 = vadd.f32 0.0, %v938
      %v940 = vpop.f32.mrb[0].mxu0
      %v941 = vpop.f32.mrb[0].mxu0
      %v942 = vadd.f32 0.0, %v941
      %v943 = vpop.f32.mrb[0].mxu0
      %944 = vmatprep.mubr.bf16.mxu0 0
      %945 = vmatmul.mubr.bf16.gmra.mrb[0].mxu0 %v891
      %v946 = vpop.f32.mrb[0].mxu0
      %v947 = vadd.f32 0.0, %v946
      %v948 = vpop.f32.mrb[0].mxu0
      %v949 = vpop.f32.mrb[0].mxu0
      %v950 = vadd.f32 0.0, %v949
      %v951 = vpop.f32.mrb[0].mxu0
      %952 = vmatprep.mubr.bf16.mxu0 0
      %953 = vmatmul.mubr.bf16.gmra.mrb[0].mxu0 %v894
      %v954 = vpop.f32.mrb[0].mxu0
      %v955 = vadd.f32 0.0, %v954
      %v956 = vpop.f32.mrb[0].mxu0
      %v957 = vpop.f32.mrb[0].mxu0
      %v958 = vadd.f32 0.0, %v957
      %v959 = vpop.f32.mrb[0].mxu0
      %960 = vdwg.mxu0
      %v961 = vadd.f32 %v791, %v931
      %v962 = vadd.f32 %v791, %v934
      %v963 = vadd.f32 %v791, %v939
      %v964 = vadd.f32 %v791, %v942
      %v965 = vadd.f32 %v791, %v947
      %v966 = vadd.f32 %v791, %v950
      %v967 = vadd.f32 %v791, %v955
      %v968 = vadd.f32 %v791, %v958
      %v969 = vld [vmem:[#allocation2 + $0x1] sm:$0xff]
      %v970 = vld [vmem:[#allocation2 + $0x9] sm:$0xff]
      %v971 = vld [vmem:[#allocation2 + $0x11] sm:$0xff]
      %v972 = vld [vmem:[#allocation2 + $0x19] sm:$0xff]
      %v973 = vld [vmem:[#allocation2 + $0x21] sm:$0xff]
      %v974 = vld [vmem:[#allocation2 + $0x29] sm:$0xff]
      %v975 = vld [vmem:[#allocation2 + $0x31] sm:$0xff]
      %v976 = vld [vmem:[#allocation2 + $0x39] sm:$0xff]
      %v977 = vpack.c.bf16 %v970, %v969
      %v978 = vpack.c.bf16 %v972, %v971
      %v979 = vpack.c.bf16 %v974, %v973
      %v980 = vpack.c.bf16 %v976, %v975
      %s981 = scalar_lea.vmem %s3, 48
      %v982 = vld [vmem:[%s981] sm:$0xf]
      %v983 = vld [vmem:[%s981 + $0x4] sm:$0xf]
      %v984 = vld [vmem:[%s981 + $0x8] sm:$0xf]
      %v985 = vld [vmem:[%s981 + $0xc] sm:$0xf]
      %v986 = vld [vmem:[%s981 + $0x10] sm:$0xf]
      %v987 = vld [vmem:[%s981 + $0x14] sm:$0xf]
      %v988 = vld [vmem:[%s981 + $0x18] sm:$0xf]
      %v989 = vld [vmem:[%s981 + $0x1c] sm:$0xf]
      %v990 = vld [vmem:[%s981 + $0x20] sm:$0xf]
      %v991 = vld [vmem:[%s981 + $0x24] sm:$0xf]
      %v992 = vld [vmem:[%s981 + $0x28] sm:$0xf]
      %v993 = vld [vmem:[%s981 + $0x2c] sm:$0xf]
      %v1006 = vunpack.c.l.b16 %v982
      %v1007 = vunpack.c.l.b16 %v983
      %v1008 = vunpack.c.l.b16 %v984
      %v1009 = vunpack.c.l.b16 %v985
      %v1010 = vunpack.c.l.b16 %v986
      %v1011 = vunpack.c.l.b16 %v987
      %v1012 = vunpack.c.l.b16 %v988
      %v1013 = vunpack.c.l.b16 %v989
      %v1014 = vunpack.c.l.b16 %v990
      %v1015 = vunpack.c.l.b16 %v991
      %v1016 = vunpack.c.l.b16 %v992
      %v1017 = vunpack.c.l.b16 %v993
      %v1018 = vpack.c.b16 %v1007, %v1006
      %v1019 = vpack.c.b16 %v1009, %v1008
      %v1020 = vpack.c.b16 %v1011, %v1010
      %v1021 = vpack.c.b16 %v1013, %v1012
      %v1022 = vpack.c.b16 %v1015, %v1014
      %v1023 = vpack.c.b16 %v1017, %v1016
      %v1031 = vsel %vm658, %v977, 0
      %v1034 = vsel %vm658, %v978, 0
      %v1037 = vsel %vm658, %v979, 0
      %v1040 = vsel %vm658, %v980, 0
      %1042 = vmatprep.subr.bf16.mxu0 0
      %1043 = vmatpush1.bf16.msra.mxu0 %v1018
      %1044 = vmatprep.subr.bf16.mxu0 0
      %1045 = vmatpush1.bf16.msra.mxu0 %v1019
      %1046 = vmatprep.subr.bf16.mxu0 0
      %1047 = vmatpush1.bf16.msra.mxu0 %v1020
      %1048 = vmatprep.subr.bf16.mxu0 0
      %1049 = vmatpush1.bf16.msra.mxu0 %v1021
      %1050 = vmatprep.subr.bf16.mxu0 0
      %1051 = vmatpush1.bf16.msra.mxu0 %v1022
      %1052 = vmatprep.subr.bf16.mxu0 0
      %1053 = vmatpush1.bf16.msra.mxu0 %v1023
      %1054 = vmatprep.subr.bf16.mxu0 0
      %1055 = vmatpush1.bf16.msra.mxu0 0
      %1056 = vmatprep.subr.bf16.mxu0 0
      %1057 = vmatpush1.bf16.msra.mxu0 0
      %1058 = vmatprep.subr.bf16.mxu0 0
      %1059 = vmatpush1.bf16.msra.mxu0 0
      %1060 = vmatprep.subr.bf16.mxu0 0
      %1061 = vmatpush1.bf16.msra.mxu0 0
      %1062 = vmatprep.subr.bf16.mxu0 0
      %1063 = vmatpush1.bf16.msra.mxu0 0
      %1064 = vmatprep.subr.bf16.mxu0 0
      %1065 = vmatpush1.bf16.msra.mxu0 0
      %1066 = vmatprep.subr.bf16.mxu0 0
      %1067 = vmatpush1.bf16.msra.mxu0 0
      %1068 = vmatprep.subr.bf16.mxu0 0
      %1069 = vmatpush1.bf16.msra.mxu0 0
      %1070 = vmatprep.subr.bf16.mxu0 0
      %1071 = vmatpush1.bf16.msra.mxu0 0
      %1072 = vmatprep.subr.bf16.mxu0 0
      %1073 = vmatpush1.bf16.msra.mxu0 0
      %1074 = vmatprep.mubr.bf16.mxu0 0
      %1075 = vmatmul.mubr.bf16.gmra.mrb[0].mxu0 %v1031
      %v1076 = vpop.f32.mrb[0].mxu0
      %v1077 = vadd.f32 0.0, %v1076
      %v1078 = vpop.f32.mrb[0].mxu0
      %v1079 = vpop.f32.mrb[0].mxu0
      %v1080 = vadd.f32 0.0, %v1079
      %v1081 = vpop.f32.mrb[0].mxu0
      %1082 = vmatprep.mubr.bf16.mxu0 0
      %1083 = vmatmul.mubr.bf16.gmra.mrb[0].mxu0 %v1034
      %v1084 = vpop.f32.mrb[0].mxu0
      %v1085 = vadd.f32 0.0, %v1084
      %v1086 = vpop.f32.mrb[0].mxu0
      %v1087 = vpop.f32.mrb[0].mxu0
      %v1088 = vadd.f32 0.0, %v1087
      %v1089 = vpop.f32.mrb[0].mxu0
      %1090 = vmatprep.mubr.bf16.mxu0 0
      %1091 = vmatmul.mubr.bf16.gmra.mrb[0].mxu0 %v1037
      %v1092 = vpop.f32.mrb[0].mxu0
      %v1093 = vadd.f32 0.0, %v1092
      %v1094 = vpop.f32.mrb[0].mxu0
      %v1095 = vpop.f32.mrb[0].mxu0
      %v1096 = vadd.f32 0.0, %v1095
      %v1097 = vpop.f32.mrb[0].mxu0
      %1098 = vmatprep.mubr.bf16.mxu0 0
      %1099 = vmatmul.mubr.bf16.gmra.mrb[0].mxu0 %v1040
      %v1100 = vpop.f32.mrb[0].mxu0
      %v1101 = vadd.f32 0.0, %v1100
      %v1102 = vpop.f32.mrb[0].mxu0
      %v1103 = vpop.f32.mrb[0].mxu0
      %v1104 = vadd.f32 0.0, %v1103
      %v1105 = vpop.f32.mrb[0].mxu0
      %1106 = vdwg.mxu0
      %v1107 = vadd.f32 %v961, %v1077
      %v1108 = vadd.f32 %v962, %v1080
      %v1109 = vadd.f32 %v963, %v1085
      %v1110 = vadd.f32 %v964, %v1088
      %v1111 = vadd.f32 %v965, %v1093
      %v1112 = vadd.f32 %v966, %v1096
      %v1113 = vadd.f32 %v967, %v1101
      %v1114 = vadd.f32 %v968, %v1104
      %v1115 = vld [vmem:[#allocation2 + $0x2] sm:$0xff]
      %v1116 = vld [vmem:[#allocation2 + $0xa] sm:$0xff]
      %v1117 = vld [vmem:[#allocation2 + $0x12] sm:$0xff]
      %v1118 = vld [vmem:[#allocation2 + $0x1a] sm:$0xff]
      %v1119 = vld [vmem:[#allocation2 + $0x22] sm:$0xff]
      %v1120 = vld [vmem:[#allocation2 + $0x2a] sm:$0xff]
      %v1121 = vld [vmem:[#allocation2 + $0x32] sm:$0xff]
      %v1122 = vld [vmem:[#allocation2 + $0x3a] sm:$0xff]
      %vm1123 = vcmp.ne.s32.totalorder %v776, 7
      %vm1124 = vcmp.ne.s32.totalorder %v777, 7
      %vm1125 = vcmp.ne.s32.totalorder %v778, 7
      %vm1126 = vcmp.ne.s32.totalorder %v779, 7
      %vm1127 = vcmp.ne.s32.totalorder %v780, 7
      %vm1128 = vcmp.ne.s32.totalorder %v781, 7
      %vm1129 = vcmp.ne.s32.totalorder %v782, 7
      %vm1130 = vcmp.ne.s32.totalorder %v783, 7
      %v1131 = vsel %vm1123, 1, 0
      %v1132 = vsel %vm1124, 1, 0
      %v1133 = vsel %vm1125, 1, 0
      %v1134 = vsel %vm1126, 1, 0
      %v1135 = vsel %vm1127, 1, 0
      %v1136 = vsel %vm1128, 1, 0
      %v1137 = vsel %vm1129, 1, 0
      %v1138 = vsel %vm1130, 1, 0
      %vm1139 = vcmp.eq.s32.totalorder %v1131, 1
      %vm1140 = vcmp.eq.s32.totalorder %v1132, 1
      %vm1141 = vcmp.eq.s32.totalorder %v1133, 1
      %vm1142 = vcmp.eq.s32.totalorder %v1134, 1
      %vm1143 = vcmp.eq.s32.totalorder %v1135, 1
      %vm1144 = vcmp.eq.s32.totalorder %v1136, 1
      %vm1145 = vcmp.eq.s32.totalorder %v1137, 1
      %vm1146 = vcmp.eq.s32.totalorder %v1138, 1
      %v1147 = vsel %vm1139, %v1115, 0.0
      %v1148 = vsel %vm1140, %v1116, 0.0
      %v1149 = vsel %vm1141, %v1117, 0.0
      %v1150 = vsel %vm1142, %v1118, 0.0
      %v1151 = vsel %vm1143, %v1119, 0.0
      %v1152 = vsel %vm1144, %v1120, 0.0
      %v1153 = vsel %vm1145, %v1121, 0.0
      %v1154 = vsel %vm1146, %v1122, 0.0
      %v1155 = vpack.c.bf16 %v1148, %v1147
      %v1156 = vpack.c.bf16 %v1150, %v1149
      %v1157 = vpack.c.bf16 %v1152, %v1151
      %v1158 = vpack.c.bf16 %v1154, %v1153
      %s1159 = scalar_lea.vmem %s3, 96
      %v1160 = vld [vmem:[%s1159] sm:$0xf]
      %v1161 = vld [vmem:[%s1159 + $0x4] sm:$0xf]
      %v1162 = vld [vmem:[%s1159 + $0x8] sm:$0xf]
      %v1163 = vld [vmem:[%s1159 + $0xc] sm:$0xf]
      %v1164 = vld [vmem:[%s1159 + $0x10] sm:$0xf]
      %v1165 = vld [vmem:[%s1159 + $0x14] sm:$0xf]
      %v1166 = vld [vmem:[%s1159 + $0x18] sm:$0xf]
      %v1167 = vld [vmem:[%s1159 + $0x1c] sm:$0xf]
      %v1168 = vld [vmem:[%s1159 + $0x20] sm:$0xf]
      %v1169 = vld [vmem:[%s1159 + $0x24] sm:$0xf]
      %v1170 = vld [vmem:[%s1159 + $0x28] sm:$0xf]
      %v1171 = vld [vmem:[%s1159 + $0x2c] sm:$0xf]
      %v1184 = vunpack.c.l.b16 %v1160
      %v1185 = vunpack.c.l.b16 %v1161
      %v1186 = vunpack.c.l.b16 %v1162
      %v1187 = vunpack.c.l.b16 %v1163
      %v1188 = vunpack.c.l.b16 %v1164
      %v1189 = vunpack.c.l.b16 %v1165
      %v1190 = vunpack.c.l.b16 %v1166
      %v1191 = vunpack.c.l.b16 %v1167
      %v1192 = vunpack.c.l.b16 %v1168
      %v1193 = vunpack.c.l.b16 %v1169
      %v1194 = vunpack.c.l.b16 %v1170
      %v1195 = vunpack.c.l.b16 %v1171
      %v1196 = vpack.c.b16 %v1185, %v1184
      %v1197 = vpack.c.b16 %v1187, %v1186
      %v1198 = vpack.c.b16 %v1189, %v1188
      %v1199 = vpack.c.b16 %v1191, %v1190
      %v1200 = vpack.c.b16 %v1193, %v1192
      %v1201 = vpack.c.b16 %v1195, %v1194
      %v1209 = vsel %vm658, %v1155, 0
      %v1212 = vsel %vm658, %v1156, 0
      %v1215 = vsel %vm658, %v1157, 0
      %v1218 = vsel %vm658, %v1158, 0
      %1220 = vmatprep.subr.bf16.mxu0 0
      %1221 = vmatpush1.bf16.msra.mxu0 %v1196
      %1222 = vmatprep.subr.bf16.mxu0 0
      %1223 = vmatpush1.bf16.msra.mxu0 %v1197
      %1224 = vmatprep.subr.bf16.mxu0 0
      %1225 = vmatpush1.bf16.msra.mxu0 %v1198
      %1226 = vmatprep.subr.bf16.mxu0 0
      %1227 = vmatpush1.bf16.msra.mxu0 %v1199
      %1228 = vmatprep.subr.bf16.mxu0 0
      %1229 = vmatpush1.bf16.msra.mxu0 %v1200
      %1230 = vmatprep.subr.bf16.mxu0 0
      %1231 = vmatpush1.bf16.msra.mxu0 %v1201
      %1232 = vmatprep.subr.bf16.mxu0 0
      %1233 = vmatpush1.bf16.msra.mxu0 0
      %1234 = vmatprep.subr.bf16.mxu0 0
      %1235 = vmatpush1.bf16.msra.mxu0 0
      %1236 = vmatprep.subr.bf16.mxu0 0
      %1237 = vmatpush1.bf16.msra.mxu0 0
      %1238 = vmatprep.subr.bf16.mxu0 0
      %1239 = vmatpush1.bf16.msra.mxu0 0
      %1240 = vmatprep.subr.bf16.mxu0 0
      %1241 = vmatpush1.bf16.msra.mxu0 0
      %1242 = vmatprep.subr.bf16.mxu0 0
      %1243 = vmatpush1.bf16.msra.mxu0 0
      %1244 = vmatprep.subr.bf16.mxu0 0
      %1245 = vmatpush1.bf16.msra.mxu0 0
      %1246 = vmatprep.subr.bf16.mxu0 0
      %1247 = vmatpush1.bf16.msra.mxu0 0
      %1248 = vmatprep.subr.bf16.mxu0 0
      %1249 = vmatpush1.bf16.msra.mxu0 0
      %1250 = vmatprep.subr.bf16.mxu0 0
      %1251 = vmatpush1.bf16.msra.mxu0 0
      %1252 = vmatprep.mubr.bf16.mxu0 0
      %1253 = vmatmul.mubr.bf16.gmra.mrb[0].mxu0 %v1209
      %v1254 = vpop.f32.mrb[0].mxu0
      %v1255 = vadd.f32 0.0, %v1254
      %v1256 = vpop.f32.mrb[0].mxu0
      %v1257 = vpop.f32.mrb[0].mxu0
      %v1258 = vadd.f32 0.0, %v1257
      %v1259 = vpop.f32.mrb[0].mxu0
      %1260 = vmatprep.mubr.bf16.mxu0 0
      %1261 = vmatmul.mubr.bf16.gmra.mrb[0].mxu0 %v1212
      %v1262 = vpop.f32.mrb[0].mxu0
      %v1263 = vadd.f32 0.0, %v1262
      %v1264 = vpop.f32.mrb[0].mxu0
      %v1265 = vpop.f32.mrb[0].mxu0
      %v1266 = vadd.f32 0.0, %v1265
      %v1267 = vpop.f32.mrb[0].mxu0
      %1268 = vmatprep.mubr.bf16.mxu0 0
      %1269 = vmatmul.mubr.bf16.gmra.mrb[0].mxu0 %v1215
      %v1270 = vpop.f32.mrb[0].mxu0
      %v1271 = vadd.f32 0.0, %v1270
      %v1272 = vpop.f32.mrb[0].mxu0
      %v1273 = vpop.f32.mrb[0].mxu0
      %v1274 = vadd.f32 0.0, %v1273
      %v1275 = vpop.f32.mrb[0].mxu0
      %1276 = vmatprep.mubr.bf16.mxu0 0
      %1277 = vmatmul.mubr.bf16.gmra.mrb[0].mxu0 %v1218
      %v1278 = vpop.f32.mrb[0].mxu0
      %v1279 = vadd.f32 0.0, %v1278
      %v1280 = vpop.f32.mrb[0].mxu0
      %v1281 = vpop.f32.mrb[0].mxu0
      %v1282 = vadd.f32 0.0, %v1281
      %v1283 = vpop.f32.mrb[0].mxu0
      %1284 = vdwg.mxu0
      %v1285 = vadd.f32 %v1107, %v1255
      %v1286 = vadd.f32 %v1108, %v1258
      %v1287 = vadd.f32 %v1109, %v1263
      %v1288 = vadd.f32 %v1110, %v1266
      %v1289 = vadd.f32 %v1111, %v1271
      %v1290 = vadd.f32 %v1112, %v1274
      %v1291 = vadd.f32 %v1113, %v1279
      %v1292 = vadd.f32 %v1114, %v1282
      %v1293 = vld [vmem:[#allocation2 + $0x8] sm:$0xff]
      %v1294 = vld [vmem:[#allocation2 + $0x10] sm:$0xff]
      %v1295 = vld [vmem:[#allocation2 + $0x18] sm:$0xff]
      %v1296 = vld [vmem:[#allocation2 + $0x20] sm:$0xff]
      %v1297 = vld [vmem:[#allocation2 + $0x28] sm:$0xff]
      %v1298 = vld [vmem:[#allocation2 + $0x30] sm:$0xff]
      %v1299 = vld [vmem:[#allocation2 + $0x38] sm:$0xff]
      %v1300 = vld [vmem:[#allocation2 + $0x40] sm:$0xff]
      %v1301 = vsel %vm816, %v1293, 0.0
      %v1302 = vsel %vm817, %v1294, 0.0
      %v1303 = vsel %vm818, %v1295, 0.0
      %v1304 = vsel %vm819, %v1296, 0.0
      %v1305 = vsel %vm820, %v1297, 0.0
      %v1306 = vsel %vm821, %v1298, 0.0
      %v1307 = vsel %vm822, %v1299, 0.0
      %v1308 = vsel %vm823, %v1300, 0.0
      %v1309 = vpack.c.bf16 %v1302, %v1301
      %v1310 = vpack.c.bf16 %v1304, %v1303
      %v1311 = vpack.c.bf16 %v1306, %v1305
      %v1312 = vpack.c.bf16 %v1308, %v1307
      %s1313 = scalar_lea.vmem %s3, 144
      %v1314 = vld [vmem:[%s1313] sm:$0xf]
      %v1315 = vld [vmem:[%s1313 + $0x4] sm:$0xf]
      %v1316 = vld [vmem:[%s1313 + $0x8] sm:$0xf]
      %v1317 = vld [vmem:[%s1313 + $0xc] sm:$0xf]
      %v1318 = vld [vmem:[%s1313 + $0x10] sm:$0xf]
      %v1319 = vld [vmem:[%s1313 + $0x14] sm:$0xf]
      %v1320 = vld [vmem:[%s1313 + $0x18] sm:$0xf]
      %v1321 = vld [vmem:[%s1313 + $0x1c] sm:$0xf]
      %v1322 = vld [vmem:[%s1313 + $0x20] sm:$0xf]
      %v1323 = vld [vmem:[%s1313 + $0x24] sm:$0xf]
      %v1324 = vld [vmem:[%s1313 + $0x28] sm:$0xf]
      %v1325 = vld [vmem:[%s1313 + $0x2c] sm:$0xf]
      %v1338 = vunpack.c.l.b16 %v1314
      %v1339 = vunpack.c.l.b16 %v1315
      %v1340 = vunpack.c.l.b16 %v1316
      %v1341 = vunpack.c.l.b16 %v1317
      %v1342 = vunpack.c.l.b16 %v1318
      %v1343 = vunpack.c.l.b16 %v1319
      %v1344 = vunpack.c.l.b16 %v1320
      %v1345 = vunpack.c.l.b16 %v1321
      %v1346 = vunpack.c.l.b16 %v1322
      %v1347 = vunpack.c.l.b16 %v1323
      %v1348 = vunpack.c.l.b16 %v1324
      %v1349 = vunpack.c.l.b16 %v1325
      %v1350 = vpack.c.b16 %v1339, %v1338
      %v1351 = vpack.c.b16 %v1341, %v1340
      %v1352 = vpack.c.b16 %v1343, %v1342
      %v1353 = vpack.c.b16 %v1345, %v1344
      %v1354 = vpack.c.b16 %v1347, %v1346
      %v1355 = vpack.c.b16 %v1349, %v1348
      %v1363 = vsel %vm658, %v1309, 0
      %v1366 = vsel %vm658, %v1310, 0
      %v1369 = vsel %vm658, %v1311, 0
      %v1372 = vsel %vm658, %v1312, 0
      %1374 = vmatprep.subr.bf16.mxu0 0
      %1375 = vmatpush1.bf16.msra.mxu0 %v1350
      %1376 = vmatprep.subr.bf16.mxu0 0
      %1377 = vmatpush1.bf16.msra.mxu0 %v1351
      %1378 = vmatprep.subr.bf16.mxu0 0
      %1379 = vmatpush1.bf16.msra.mxu0 %v1352
      %1380 = vmatprep.subr.bf16.mxu0 0
      %1381 = vmatpush1.bf16.msra.mxu0 %v1353
      %1382 = vmatprep.subr.bf16.mxu0 0
      %1383 = vmatpush1.bf16.msra.mxu0 %v1354
      %1384 = vmatprep.subr.bf16.mxu0 0
      %1385 = vmatpush1.bf16.msra.mxu0 %v1355
      %1386 = vmatprep.subr.bf16.mxu0 0
      %1387 = vmatpush1.bf16.msra.mxu0 0
      %1388 = vmatprep.subr.bf16.mxu0 0
      %1389 = vmatpush1.bf16.msra.mxu0 0
      %1390 = vmatprep.subr.bf16.mxu0 0
      %1391 = vmatpush1.bf16.msra.mxu0 0
      %1392 = vmatprep.subr.bf16.mxu0 0
      %1393 = vmatpush1.bf16.msra.mxu0 0
      %1394 = vmatprep.subr.bf16.mxu0 0
      %1395 = vmatpush1.bf16.msra.mxu0 0
      %1396 = vmatprep.subr.bf16.mxu0 0
      %1397 = vmatpush1.bf16.msra.mxu0 0
      %1398 = vmatprep.subr.bf16.mxu0 0
      %1399 = vmatpush1.bf16.msra.mxu0 0
      %1400 = vmatprep.subr.bf16.mxu0 0
      %1401 = vmatpush1.bf16.msra.mxu0 0
      %1402 = vmatprep.subr.bf16.mxu0 0
      %1403 = vmatpush1.bf16.msra.mxu0 0
      %1404 = vmatprep.subr.bf16.mxu0 0
      %1405 = vmatpush1.bf16.msra.mxu0 0
      %1406 = vmatprep.mubr.bf16.mxu0 0
      %1407 = vmatmul.mubr.bf16.gmra.mrb[0].mxu0 %v1363
      %v1408 = vpop.f32.mrb[0].mxu0
      %v1409 = vadd.f32 0.0, %v1408
      %v1410 = vpop.f32.mrb[0].mxu0
      %v1411 = vpop.f32.mrb[0].mxu0
      %v1412 = vadd.f32 0.0, %v1411
      %v1413 = vpop.f32.mrb[0].mxu0
      %1414 = vmatprep.mubr.bf16.mxu0 0
      %1415 = vmatmul.mubr.bf16.gmra.mrb[0].mxu0 %v1366
      %v1416 = vpop.f32.mrb[0].mxu0
      %v1417 = vadd.f32 0.0, %v1416
      %v1418 = vpop.f32.mrb[0].mxu0
      %v1419 = vpop.f32.mrb[0].mxu0
      %v1420 = vadd.f32 0.0, %v1419
      %v1421 = vpop.f32.mrb[0].mxu0
      %1422 = vmatprep.mubr.bf16.mxu0 0
      %1423 = vmatmul.mubr.bf16.gmra.mrb[0].mxu0 %v1369
      %v1424 = vpop.f32.mrb[0].mxu0
      %v1425 = vadd.f32 0.0, %v1424
      %v1426 = vpop.f32.mrb[0].mxu0
      %v1427 = vpop.f32.mrb[0].mxu0
      %v1428 = vadd.f32 0.0, %v1427
      %v1429 = vpop.f32.mrb[0].mxu0
      %1430 = vmatprep.mubr.bf16.mxu0 0
      %1431 = vmatmul.mubr.bf16.gmra.mrb[0].mxu0 %v1372
      %v1432 = vpop.f32.mrb[0].mxu0
      %v1433 = vadd.f32 0.0, %v1432
      %v1434 = vpop.f32.mrb[0].mxu0
      %v1435 = vpop.f32.mrb[0].mxu0
      %v1436 = vadd.f32 0.0, %v1435
      %v1437 = vpop.f32.mrb[0].mxu0
      %1438 = vdwg.mxu0
      %v1439 = vadd.f32 %v1285, %v1409
      %v1440 = vadd.f32 %v1286, %v1412
      %v1441 = vadd.f32 %v1287, %v1417
      %v1442 = vadd.f32 %v1288, %v1420
      %v1443 = vadd.f32 %v1289, %v1425
      %v1444 = vadd.f32 %v1290, %v1428
      %v1445 = vadd.f32 %v1291, %v1433
      %v1446 = vadd.f32 %v1292, %v1436
      %v1447 = vld [vmem:[#allocation2 + $0x9] sm:$0xff]
      %v1448 = vld [vmem:[#allocation2 + $0x11] sm:$0xff]
      %v1449 = vld [vmem:[#allocation2 + $0x19] sm:$0xff]
      %v1450 = vld [vmem:[#allocation2 + $0x21] sm:$0xff]
      %v1451 = vld [vmem:[#allocation2 + $0x29] sm:$0xff]
      %v1452 = vld [vmem:[#allocation2 + $0x31] sm:$0xff]
      %v1453 = vld [vmem:[#allocation2 + $0x39] sm:$0xff]
      %v1454 = vld [vmem:[#allocation2 + $0x41] sm:$0xff]
      %v1455 = vpack.c.bf16 %v1448, %v1447
      %v1456 = vpack.c.bf16 %v1450, %v1449
      %v1457 = vpack.c.bf16 %v1452, %v1451
      %v1458 = vpack.c.bf16 %v1454, %v1453
      %s1459 = scalar_lea.vmem %s3, 192
      %v1460 = vld [vmem:[%s1459] sm:$0xf]
      %v1461 = vld [vmem:[%s1459 + $0x4] sm:$0xf]
      %v1462 = vld [vmem:[%s1459 + $0x8] sm:$0xf]
      %v1463 = vld [vmem:[%s1459 + $0xc] sm:$0xf]
      %v1464 = vld [vmem:[%s1459 + $0x10] sm:$0xf]
      %v1465 = vld [vmem:[%s1459 + $0x14] sm:$0xf]
      %v1466 = vld [vmem:[%s1459 + $0x18] sm:$0xf]
      %v1467 = vld [vmem:[%s1459 + $0x1c] sm:$0xf]
      %v1468 = vld [vmem:[%s1459 + $0x20] sm:$0xf]
      %v1469 = vld [vmem:[%s1459 + $0x24] sm:$0xf]
      %v1470 = vld [vmem:[%s1459 + $0x28] sm:$0xf]
      %v1471 = vld [vmem:[%s1459 + $0x2c] sm:$0xf]
      %v1484 = vunpack.c.l.b16 %v1460
      %v1485 = vunpack.c.l.b16 %v1461
      %v1486 = vunpack.c.l.b16 %v1462
      %v1487 = vunpack.c.l.b16 %v1463
      %v1488 = vunpack.c.l.b16 %v1464
      %v1489 = vunpack.c.l.b16 %v1465
      %v1490 = vunpack.c.l.b16 %v1466
      %v1491 = vunpack.c.l.b16 %v1467
      %v1492 = vunpack.c.l.b16 %v1468
      %v1493 = vunpack.c.l.b16 %v1469
      %v1494 = vunpack.c.l.b16 %v1470
      %v1495 = vunpack.c.l.b16 %v1471
      %v1496 = vpack.c.b16 %v1485, %v1484
      %v1497 = vpack.c.b16 %v1487, %v1486
      %v1498 = vpack.c.b16 %v1489, %v1488
      %v1499 = vpack.c.b16 %v1491, %v1490
      %v1500 = vpack.c.b16 %v1493, %v1492
      %v1501 = vpack.c.b16 %v1495, %v1494
      %v1509 = vsel %vm658, %v1455, 0
      %v1512 = vsel %vm658, %v1456, 0
      %v1515 = vsel %vm658, %v1457, 0
      %v1518 = vsel %vm658, %v1458, 0
      %1520 = vmatprep.subr.bf16.mxu0 0
      %1521 = vmatpush1.bf16.msra.mxu0 %v1496
      %1522 = vmatprep.subr.bf16.mxu0 0
      %1523 = vmatpush1.bf16.msra.mxu0 %v1497
      %1524 = vmatprep.subr.bf16.mxu0 0
      %1525 = vmatpush1.bf16.msra.mxu0 %v1498
      %1526 = vmatprep.subr.bf16.mxu0 0
      %1527 = vmatpush1.bf16.msra.mxu0 %v1499
      %1528 = vmatprep.subr.bf16.mxu0 0
      %1529 = vmatpush1.bf16.msra.mxu0 %v1500
      %1530 = vmatprep.subr.bf16.mxu0 0
      %1531 = vmatpush1.bf16.msra.mxu0 %v1501
      %1532 = vmatprep.subr.bf16.mxu0 0
      %1533 = vmatpush1.bf16.msra.mxu0 0
      %1534 = vmatprep.subr.bf16.mxu0 0
      %1535 = vmatpush1.bf16.msra.mxu0 0
      %1536 = vmatprep.subr.bf16.mxu0 0
      %1537 = vmatpush1.bf16.msra.mxu0 0
      %1538 = vmatprep.subr.bf16.mxu0 0
      %1539 = vmatpush1.bf16.msra.mxu0 0
      %1540 = vmatprep.subr.bf16.mxu0 0
      %1541 = vmatpush1.bf16.msra.mxu0 0
      %1542 = vmatprep.subr.bf16.mxu0 0
      %1543 = vmatpush1.bf16.msra.mxu0 0
      %1544 = vmatprep.subr.bf16.mxu0 0
      %1545 = vmatpush1.bf16.msra.mxu0 0
      %1546 = vmatprep.subr.bf16.mxu0 0
      %1547 = vmatpush1.bf16.msra.mxu0 0
      %1548 = vmatprep.subr.bf16.mxu0 0
      %1549 = vmatpush1.bf16.msra.mxu0 0
      %1550 = vmatprep.subr.bf16.mxu0 0
      %1551 = vmatpush1.bf16.msra.mxu0 0
      %1552 = vmatprep.mubr.bf16.mxu0 0
      %1553 = vmatmul.mubr.bf16.gmra.mrb[0].mxu0 %v1509
      %v1554 = vpop.f32.mrb[0].mxu0
      %v1555 = vadd.f32 0.0, %v1554
      %v1556 = vpop.f32.mrb[0].mxu0
      %v1557 = vpop.f32.mrb[0].mxu0
      %v1558 = vadd.f32 0.0, %v1557
      %v1559 = vpop.f32.mrb[0].mxu0
      %1560 = vmatprep.mubr.bf16.mxu0 0
      %1561 = vmatmul.mubr.bf16.gmra.mrb[0].mxu0 %v1512
      %v1562 = vpop.f32.mrb[0].mxu0
      %v1563 = vadd.f32 0.0, %v1562
      %v1564 = vpop.f32.mrb[0].mxu0
      %v1565 = vpop.f32.mrb[0].mxu0
      %v1566 = vadd.f32 0.0, %v1565
      %v1567 = vpop.f32.mrb[0].mxu0
      %1568 = vmatprep.mubr.bf16.mxu0 0
      %1569 = vmatmul.mubr.bf16.gmra.mrb[0].mxu0 %v1515
      %v1570 = vpop.f32.mrb[0].mxu0
      %v1571 = vadd.f32 0.0, %v1570
      %v1572 = vpop.f32.mrb[0].mxu0
      %v1573 = vpop.f32.mrb[0].mxu0
      %v1574 = vadd.f32 0.0, %v1573
      %v1575 = vpop.f32.mrb[0].mxu0
      %1576 = vmatprep.mubr.bf16.mxu0 0
      %1577 = vmatmul.mubr.bf16.gmra.mrb[0].mxu0 %v1518
      %v1578 = vpop.f32.mrb[0].mxu0
      %v1579 = vadd.f32 0.0, %v1578
      %v1580 = vpop.f32.mrb[0].mxu0
      %v1581 = vpop.f32.mrb[0].mxu0
      %v1582 = vadd.f32 0.0, %v1581
      %v1583 = vpop.f32.mrb[0].mxu0
      %1584 = vdwg.mxu0
      %v1585 = vadd.f32 %v1439, %v1555
      %v1586 = vadd.f32 %v1440, %v1558
      %v1587 = vadd.f32 %v1441, %v1563
      %v1588 = vadd.f32 %v1442, %v1566
      %v1589 = vadd.f32 %v1443, %v1571
      %v1590 = vadd.f32 %v1444, %v1574
      %v1591 = vadd.f32 %v1445, %v1579
      %v1592 = vadd.f32 %v1446, %v1582
      %v1593 = vld [vmem:[#allocation2 + $0xa] sm:$0xff]
      %v1594 = vld [vmem:[#allocation2 + $0x12] sm:$0xff]
      %v1595 = vld [vmem:[#allocation2 + $0x1a] sm:$0xff]
      %v1596 = vld [vmem:[#allocation2 + $0x22] sm:$0xff]
      %v1597 = vld [vmem:[#allocation2 + $0x2a] sm:$0xff]
      %v1598 = vld [vmem:[#allocation2 + $0x32] sm:$0xff]
      %v1599 = vld [vmem:[#allocation2 + $0x3a] sm:$0xff]
      %v1600 = vld [vmem:[#allocation2 + $0x42] sm:$0xff]
      %v1601 = vsel %vm1139, %v1593, 0.0
      %v1602 = vsel %vm1140, %v1594, 0.0
      %v1603 = vsel %vm1141, %v1595, 0.0
      %v1604 = vsel %vm1142, %v1596, 0.0
      %v1605 = vsel %vm1143, %v1597, 0.0
      %v1606 = vsel %vm1144, %v1598, 0.0
      %v1607 = vsel %vm1145, %v1599, 0.0
      %v1608 = vsel %vm1146, %v1600, 0.0
      %v1609 = vpack.c.bf16 %v1602, %v1601
      %v1610 = vpack.c.bf16 %v1604, %v1603
      %v1611 = vpack.c.bf16 %v1606, %v1605
      %v1612 = vpack.c.bf16 %v1608, %v1607
      %s1613 = scalar_lea.vmem %s3, 240
      %v1614 = vld [vmem:[%s1613] sm:$0xf]
      %v1615 = vld [vmem:[%s1613 + $0x4] sm:$0xf]
      %v1616 = vld [vmem:[%s1613 + $0x8] sm:$0xf]
      %v1617 = vld [vmem:[%s1613 + $0xc] sm:$0xf]
      %v1618 = vld [vmem:[%s1613 + $0x10] sm:$0xf]
      %v1619 = vld [vmem:[%s1613 + $0x14] sm:$0xf]
      %v1620 = vld [vmem:[%s1613 + $0x18] sm:$0xf]
      %v1621 = vld [vmem:[%s1613 + $0x1c] sm:$0xf]
      %v1622 = vld [vmem:[%s1613 + $0x20] sm:$0xf]
      %v1623 = vld [vmem:[%s1613 + $0x24] sm:$0xf]
      %v1624 = vld [vmem:[%s1613 + $0x28] sm:$0xf]
      %v1625 = vld [vmem:[%s1613 + $0x2c] sm:$0xf]
      %v1638 = vunpack.c.l.b16 %v1614
      %v1639 = vunpack.c.l.b16 %v1615
      %v1640 = vunpack.c.l.b16 %v1616
      %v1641 = vunpack.c.l.b16 %v1617
      %v1642 = vunpack.c.l.b16 %v1618
      %v1643 = vunpack.c.l.b16 %v1619
      %v1644 = vunpack.c.l.b16 %v1620
      %v1645 = vunpack.c.l.b16 %v1621
      %v1646 = vunpack.c.l.b16 %v1622
      %v1647 = vunpack.c.l.b16 %v1623
      %v1648 = vunpack.c.l.b16 %v1624
      %v1649 = vunpack.c.l.b16 %v1625
      %v1650 = vpack.c.b16 %v1639, %v1638
      %v1651 = vpack.c.b16 %v1641, %v1640
      %v1652 = vpack.c.b16 %v1643, %v1642
      %v1653 = vpack.c.b16 %v1645, %v1644
      %v1654 = vpack.c.b16 %v1647, %v1646
      %v1655 = vpack.c.b16 %v1649, %v1648
      %v1663 = vsel %vm658, %v1609, 0
      %v1666 = vsel %vm658, %v1610, 0
      %v1669 = vsel %vm658, %v1611, 0
      %v1672 = vsel %vm658, %v1612, 0
      %1674 = vmatprep.subr.bf16.mxu0 0
      %1675 = vmatpush1.bf16.msra.mxu0 %v1650
      %1676 = vmatprep.subr.bf16.mxu0 0
      %1677 = vmatpush1.bf16.msra.mxu0 %v1651
      %1678 = vmatprep.subr.bf16.mxu0 0
      %1679 = vmatpush1.bf16.msra.mxu0 %v1652
      %1680 = vmatprep.subr.bf16.mxu0 0
      %1681 = vmatpush1.bf16.msra.mxu0 %v1653
      %1682 = vmatprep.subr.bf16.mxu0 0
      %1683 = vmatpush1.bf16.msra.mxu0 %v1654
      %1684 = vmatprep.subr.bf16.mxu0 0
      %1685 = vmatpush1.bf16.msra.mxu0 %v1655
      %1686 = vmatprep.subr.bf16.mxu0 0
      %1687 = vmatpush1.bf16.msra.mxu0 0
      %1688 = vmatprep.subr.bf16.mxu0 0
      %1689 = vmatpush1.bf16.msra.mxu0 0
      %1690 = vmatprep.subr.bf16.mxu0 0
      %1691 = vmatpush1.bf16.msra.mxu0 0
      %1692 = vmatprep.subr.bf16.mxu0 0
      %1693 = vmatpush1.bf16.msra.mxu0 0
      %1694 = vmatprep.subr.bf16.mxu0 0
      %1695 = vmatpush1.bf16.msra.mxu0 0
      %1696 = vmatprep.subr.bf16.mxu0 0
      %1697 = vmatpush1.bf16.msra.mxu0 0
      %1698 = vmatprep.subr.bf16.mxu0 0
      %1699 = vmatpush1.bf16.msra.mxu0 0
      %1700 = vmatprep.subr.bf16.mxu0 0
      %1701 = vmatpush1.bf16.msra.mxu0 0
      %1702 = vmatprep.subr.bf16.mxu0 0
      %1703 = vmatpush1.bf16.msra.mxu0 0
      %1704 = vmatprep.subr.bf16.mxu0 0
      %1705 = vmatpush1.bf16.msra.mxu0 0
      %1706 = vmatprep.mubr.bf16.mxu0 0
      %1707 = vmatmul.mubr.bf16.gmra.mrb[0].mxu0 %v1663
      %v1708 = vpop.f32.mrb[0].mxu0
      %v1709 = vadd.f32 0.0, %v1708
      %v1710 = vpop.f32.mrb[0].mxu0
      %v1711 = vpop.f32.mrb[0].mxu0
      %v1712 = vadd.f32 0.0, %v1711
      %v1713 = vpop.f32.mrb[0].mxu0
      %1714 = vmatprep.mubr.bf16.mxu0 0
      %1715 = vmatmul.mubr.bf16.gmra.mrb[0].mxu0 %v1666
      %v1716 = vpop.f32.mrb[0].mxu0
      %v1717 = vadd.f32 0.0, %v1716
      %v1718 = vpop.f32.mrb[0].mxu0
      %v1719 = vpop.f32.mrb[0].mxu0
      %v1720 = vadd.f32 0.0, %v1719
      %v1721 = vpop.f32.mrb[0].mxu0
      %1722 = vmatprep.mubr.bf16.mxu0 0
      %1723 = vmatmul.mubr.bf16.gmra.mrb[0].mxu0 %v1669
      %v1724 = vpop.f32.mrb[0].mxu0
      %v1725 = vadd.f32 0.0, %v1724
      %v1726 = vpop.f32.mrb[0].mxu0
      %v1727 = vpop.f32.mrb[0].mxu0
      %v1728 = vadd.f32 0.0, %v1727
      %v1729 = vpop.f32.mrb[0].mxu0
      %1730 = vmatprep.mubr.bf16.mxu0 0
      %1731 = vmatmul.mubr.bf16.gmra.mrb[0].mxu0 %v1672
      %v1732 = vpop.f32.mrb[0].mxu0
      %v1733 = vadd.f32 0.0, %v1732
      %v1734 = vpop.f32.mrb[0].mxu0
      %v1735 = vpop.f32.mrb[0].mxu0
      %v1736 = vadd.f32 0.0, %v1735
      %v1737 = vpop.f32.mrb[0].mxu0
      %1738 = vdwg.mxu0
      %v1739 = vadd.f32 %v1585, %v1709
      %v1740 = vadd.f32 %v1586, %v1712
      %v1741 = vadd.f32 %v1587, %v1717
      %v1742 = vadd.f32 %v1588, %v1720
      %v1743 = vadd.f32 %v1589, %v1725
      %v1744 = vadd.f32 %v1590, %v1728
      %v1745 = vadd.f32 %v1591, %v1733
      %v1746 = vadd.f32 %v1592, %v1736
      %v1747 = vld [vmem:[#allocation2 + $0x10] sm:$0xff]
      %v1748 = vld [vmem:[#allocation2 + $0x18] sm:$0xff]
      %v1749 = vld [vmem:[#allocation2 + $0x20] sm:$0xff]
      %v1750 = vld [vmem:[#allocation2 + $0x28] sm:$0xff]
      %v1751 = vld [vmem:[#allocation2 + $0x30] sm:$0xff]
      %v1752 = vld [vmem:[#allocation2 + $0x38] sm:$0xff]
      %v1753 = vld [vmem:[#allocation2 + $0x40] sm:$0xff]
      %v1754 = vld [vmem:[#allocation2 + $0x48] sm:$0xff]
      %v1755 = vsel %vm816, %v1747, 0.0
      %v1756 = vsel %vm817, %v1748, 0.0
      %v1757 = vsel %vm818, %v1749, 0.0
      %v1758 = vsel %vm819, %v1750, 0.0
      %v1759 = vsel %vm820, %v1751, 0.0
      %v1760 = vsel %vm821, %v1752, 0.0
      %v1761 = vsel %vm822, %v1753, 0.0
      %v1762 = vsel %vm823, %v1754, 0.0
      %v1763 = vpack.c.bf16 %v1756, %v1755
      %v1764 = vpack.c.bf16 %v1758, %v1757
      %v1765 = vpack.c.bf16 %v1760, %v1759
      %v1766 = vpack.c.bf16 %v1762, %v1761
      %s1767 = scalar_lea.vmem %s3, 288
      %v1768 = vld [vmem:[%s1767] sm:$0xf]
      %v1769 = vld [vmem:[%s1767 + $0x4] sm:$0xf]
      %v1770 = vld [vmem:[%s1767 + $0x8] sm:$0xf]
      %v1771 = vld [vmem:[%s1767 + $0xc] sm:$0xf]
      %v1772 = vld [vmem:[%s1767 + $0x10] sm:$0xf]
      %v1773 = vld [vmem:[%s1767 + $0x14] sm:$0xf]
      %v1774 = vld [vmem:[%s1767 + $0x18] sm:$0xf]
      %v1775 = vld [vmem:[%s1767 + $0x1c] sm:$0xf]
      %v1776 = vld [vmem:[%s1767 + $0x20] sm:$0xf]
      %v1777 = vld [vmem:[%s1767 + $0x24] sm:$0xf]
      %v1778 = vld [vmem:[%s1767 + $0x28] sm:$0xf]
      %v1779 = vld [vmem:[%s1767 + $0x2c] sm:$0xf]
      %v1792 = vunpack.c.l.b16 %v1768
      %v1793 = vunpack.c.l.b16 %v1769
      %v1794 = vunpack.c.l.b16 %v1770
      %v1795 = vunpack.c.l.b16 %v1771
      %v1796 = vunpack.c.l.b16 %v1772
      %v1797 = vunpack.c.l.b16 %v1773
      %v1798 = vunpack.c.l.b16 %v1774
      %v1799 = vunpack.c.l.b16 %v1775
      %v1800 = vunpack.c.l.b16 %v1776
      %v1801 = vunpack.c.l.b16 %v1777
      %v1802 = vunpack.c.l.b16 %v1778
      %v1803 = vunpack.c.l.b16 %v1779
      %v1804 = vpack.c.b16 %v1793, %v1792
      %v1805 = vpack.c.b16 %v1795, %v1794
      %v1806 = vpack.c.b16 %v1797, %v1796
      %v1807 = vpack.c.b16 %v1799, %v1798
      %v1808 = vpack.c.b16 %v1801, %v1800
      %v1809 = vpack.c.b16 %v1803, %v1802
      %v1817 = vsel %vm658, %v1763, 0
      %v1820 = vsel %vm658, %v1764, 0
      %v1823 = vsel %vm658, %v1765, 0
      %v1826 = vsel %vm658, %v1766, 0
      %1828 = vmatprep.subr.bf16.mxu0 0
      %1829 = vmatpush1.bf16.msra.mxu0 %v1804
      %1830 = vmatprep.subr.bf16.mxu0 0
      %1831 = vmatpush1.bf16.msra.mxu0 %v1805
      %1832 = vmatprep.subr.bf16.mxu0 0
      %1833 = vmatpush1.bf16.msra.mxu0 %v1806
      %1834 = vmatprep.subr.bf16.mxu0 0
      %1835 = vmatpush1.bf16.msra.mxu0 %v1807
      %1836 = vmatprep.subr.bf16.mxu0 0
      %1837 = vmatpush1.bf16.msra.mxu0 %v1808
      %1838 = vmatprep.subr.bf16.mxu0 0
      %1839 = vmatpush1.bf16.msra.mxu0 %v1809
      %1840 = vmatprep.subr.bf16.mxu0 0
      %1841 = vmatpush1.bf16.msra.mxu0 0
      %1842 = vmatprep.subr.bf16.mxu0 0
      %1843 = vmatpush1.bf16.msra.mxu0 0
      %1844 = vmatprep.subr.bf16.mxu0 0
      %1845 = vmatpush1.bf16.msra.mxu0 0
      %1846 = vmatprep.subr.bf16.mxu0 0
      %1847 = vmatpush1.bf16.msra.mxu0 0
      %1848 = vmatprep.subr.bf16.mxu0 0
      %1849 = vmatpush1.bf16.msra.mxu0 0
      %1850 = vmatprep.subr.bf16.mxu0 0
      %1851 = vmatpush1.bf16.msra.mxu0 0
      %1852 = vmatprep.subr.bf16.mxu0 0
      %1853 = vmatpush1.bf16.msra.mxu0 0
      %1854 = vmatprep.subr.bf16.mxu0 0
      %1855 = vmatpush1.bf16.msra.mxu0 0
      %1856 = vmatprep.subr.bf16.mxu0 0
      %1857 = vmatpush1.bf16.msra.mxu0 0
      %1858 = vmatprep.subr.bf16.mxu0 0
      %1859 = vmatpush1.bf16.msra.mxu0 0
      %1860 = vmatprep.mubr.bf16.mxu0 0
      %1861 = vmatmul.mubr.bf16.gmra.mrb[0].mxu0 %v1817
      %v1862 = vpop.f32.mrb[0].mxu0
      %v1863 = vadd.f32 0.0, %v1862
      %v1864 = vpop.f32.mrb[0].mxu0
      %v1865 = vpop.f32.mrb[0].mxu0
      %v1866 = vadd.f32 0.0, %v1865
      %v1867 = vpop.f32.mrb[0].mxu0
      %1868 = vmatprep.mubr.bf16.mxu0 0
      %1869 = vmatmul.mubr.bf16.gmra.mrb[0].mxu0 %v1820
      %v1870 = vpop.f32.mrb[0].mxu0
      %v1871 = vadd.f32 0.0, %v1870
      %v1872 = vpop.f32.mrb[0].mxu0
      %v1873 = vpop.f32.mrb[0].mxu0
      %v1874 = vadd.f32 0.0, %v1873
      %v1875 = vpop.f32.mrb[0].mxu0
      %1876 = vmatprep.mubr.bf16.mxu0 0
      %1877 = vmatmul.mubr.bf16.gmra.mrb[0].mxu0 %v1823
      %v1878 = vpop.f32.mrb[0].mxu0
      %v1879 = vadd.f32 0.0, %v1878
      %v1880 = vpop.f32.mrb[0].mxu0
      %v1881 = vpop.f32.mrb[0].mxu0
      %v1882 = vadd.f32 0.0, %v1881
      %v1883 = vpop.f32.mrb[0].mxu0
      %1884 = vmatprep.mubr.bf16.mxu0 0
      %1885 = vmatmul.mubr.bf16.gmra.mrb[0].mxu0 %v1826
      %v1886 = vpop.f32.mrb[0].mxu0
      %v1887 = vadd.f32 0.0, %v1886
      %v1888 = vpop.f32.mrb[0].mxu0
      %v1889 = vpop.f32.mrb[0].mxu0
      %v1890 = vadd.f32 0.0, %v1889
      %v1891 = vpop.f32.mrb[0].mxu0
      %1892 = vdwg.mxu0
      %v1893 = vadd.f32 %v1739, %v1863
      %v1894 = vadd.f32 %v1740, %v1866
      %v1895 = vadd.f32 %v1741, %v1871
      %v1896 = vadd.f32 %v1742, %v1874
      %v1897 = vadd.f32 %v1743, %v1879
      %v1898 = vadd.f32 %v1744, %v1882
      %v1899 = vadd.f32 %v1745, %v1887
      %v1900 = vadd.f32 %v1746, %v1890
      %v1901 = vld [vmem:[#allocation2 + $0x11] sm:$0xff]
      %v1902 = vld [vmem:[#allocation2 + $0x19] sm:$0xff]
      %v1903 = vld [vmem:[#allocation2 + $0x21] sm:$0xff]
      %v1904 = vld [vmem:[#allocation2 + $0x29] sm:$0xff]
      %v1905 = vld [vmem:[#allocation2 + $0x31] sm:$0xff]
      %v1906 = vld [vmem:[#allocation2 + $0x39] sm:$0xff]
      %v1907 = vld [vmem:[#allocation2 + $0x41] sm:$0xff]
      %v1908 = vld [vmem:[#allocation2 + $0x49] sm:$0xff]
      %v1909 = vpack.c.bf16 %v1902, %v1901
      %v1910 = vpack.c.bf16 %v1904, %v1903
      %v1911 = vpack.c.bf16 %v1906, %v1905
      %v1912 = vpack.c.bf16 %v1908, %v1907
      %s1913 = scalar_lea.vmem %s3, 336
      %v1914 = vld [vmem:[%s1913] sm:$0xf]
      %v1915 = vld [vmem:[%s1913 + $0x4] sm:$0xf]
      %v1916 = vld [vmem:[%s1913 + $0x8] sm:$0xf]
      %v1917 = vld [vmem:[%s1913 + $0xc] sm:$0xf]
      %v1918 = vld [vmem:[%s1913 + $0x10] sm:$0xf]
      %v1919 = vld [vmem:[%s1913 + $0x14] sm:$0xf]
      %v1920 = vld [vmem:[%s1913 + $0x18] sm:$0xf]
      %v1921 = vld [vmem:[%s1913 + $0x1c] sm:$0xf]
      %v1922 = vld [vmem:[%s1913 + $0x20] sm:$0xf]
      %v1923 = vld [vmem:[%s1913 + $0x24] sm:$0xf]
      %v1924 = vld [vmem:[%s1913 + $0x28] sm:$0xf]
      %v1925 = vld [vmem:[%s1913 + $0x2c] sm:$0xf]
      %v1938 = vunpack.c.l.b16 %v1914
      %v1939 = vunpack.c.l.b16 %v1915
      %v1940 = vunpack.c.l.b16 %v1916
      %v1941 = vunpack.c.l.b16 %v1917
      %v1942 = vunpack.c.l.b16 %v1918
      %v1943 = vunpack.c.l.b16 %v1919
      %v1944 = vunpack.c.l.b16 %v1920
      %v1945 = vunpack.c.l.b16 %v1921
      %v1946 = vunpack.c.l.b16 %v1922
      %v1947 = vunpack.c.l.b16 %v1923
      %v1948 = vunpack.c.l.b16 %v1924
      %v1949 = vunpack.c.l.b16 %v1925
      %v1950 = vpack.c.b16 %v1939, %v1938
      %v1951 = vpack.c.b16 %v1941, %v1940
      %v1952 = vpack.c.b16 %v1943, %v1942
      %v1953 = vpack.c.b16 %v1945, %v1944
      %v1954 = vpack.c.b16 %v1947, %v1946
      %v1955 = vpack.c.b16 %v1949, %v1948
      %v1963 = vsel %vm658, %v1909, 0
      %v1966 = vsel %vm658, %v1910, 0
      %v1969 = vsel %vm658, %v1911, 0
      %v1972 = vsel %vm658, %v1912, 0
      %1974 = vmatprep.subr.bf16.mxu0 0
      %1975 = vmatpush1.bf16.msra.mxu0 %v1950
      %1976 = vmatprep.subr.bf16.mxu0 0
      %1977 = vmatpush1.bf16.msra.mxu0 %v1951
      %1978 = vmatprep.subr.bf16.mxu0 0
      %1979 = vmatpush1.bf16.msra.mxu0 %v1952
      %1980 = vmatprep.subr.bf16.mxu0 0
      %1981 = vmatpush1.bf16.msra.mxu0 %v1953
      %1982 = vmatprep.subr.bf16.mxu0 0
      %1983 = vmatpush1.bf16.msra.mxu0 %v1954
      %1984 = vmatprep.subr.bf16.mxu0 0
      %1985 = vmatpush1.bf16.msra.mxu0 %v1955
      %1986 = vmatprep.subr.bf16.mxu0 0
      %1987 = vmatpush1.bf16.msra.mxu0 0
      %1988 = vmatprep.subr.bf16.mxu0 0
      %1989 = vmatpush1.bf16.msra.mxu0 0
      %1990 = vmatprep.subr.bf16.mxu0 0
      %1991 = vmatpush1.bf16.msra.mxu0 0
      %1992 = vmatprep.subr.bf16.mxu0 0
      %1993 = vmatpush1.bf16.msra.mxu0 0
      %1994 = vmatprep.subr.bf16.mxu0 0
      %1995 = vmatpush1.bf16.msra.mxu0 0
      %1996 = vmatprep.subr.bf16.mxu0 0
      %1997 = vmatpush1.bf16.msra.mxu0 0
      %1998 = vmatprep.subr.bf16.mxu0 0
      %1999 = vmatpush1.bf16.msra.mxu0 0
      %2000 = vmatprep.subr.bf16.mxu0 0
      %2001 = vmatpush1.bf16.msra.mxu0 0
      %2002 = vmatprep.subr.bf16.mxu0 0
      %2003 = vmatpush1.bf16.msra.mxu0 0
      %2004 = vmatprep.subr.bf16.mxu0 0
      %2005 = vmatpush1.bf16.msra.mxu0 0
      %2006 = vmatprep.mubr.bf16.mxu0 0
      %2007 = vmatmul.mubr.bf16.gmra.mrb[0].mxu0 %v1963
      %v2008 = vpop.f32.mrb[0].mxu0
      %v2009 = vadd.f32 0.0, %v2008
      %v2010 = vpop.f32.mrb[0].mxu0
      %v2011 = vpop.f32.mrb[0].mxu0
      %v2012 = vadd.f32 0.0, %v2011
      %v2013 = vpop.f32.mrb[0].mxu0
      %2014 = vmatprep.mubr.bf16.mxu0 0
      %2015 = vmatmul.mubr.bf16.gmra.mrb[0].mxu0 %v1966
      %v2016 = vpop.f32.mrb[0].mxu0
      %v2017 = vadd.f32 0.0, %v2016
      %v2018 = vpop.f32.mrb[0].mxu0
      %v2019 = vpop.f32.mrb[0].mxu0
      %v2020 = vadd.f32 0.0, %v2019
      %v2021 = vpop.f32.mrb[0].mxu0
      %2022 = vmatprep.mubr.bf16.mxu0 0
      %2023 = vmatmul.mubr.bf16.gmra.mrb[0].mxu0 %v1969
      %v2024 = vpop.f32.mrb[0].mxu0
      %v2025 = vadd.f32 0.0, %v2024
      %v2026 = vpop.f32.mrb[0].mxu0
      %v2027 = vpop.f32.mrb[0].mxu0
      %v2028 = vadd.f32 0.0, %v2027
      %v2029 = vpop.f32.mrb[0].mxu0
      %2030 = vmatprep.mubr.bf16.mxu0 0
      %2031 = vmatmul.mubr.bf16.gmra.mrb[0].mxu0 %v1972
      %v2032 = vpop.f32.mrb[0].mxu0
      %v2033 = vadd.f32 0.0, %v2032
      %v2034 = vpop.f32.mrb[0].mxu0
      %v2035 = vpop.f32.mrb[0].mxu0
      %v2036 = vadd.f32 0.0, %v2035
      %v2037 = vpop.f32.mrb[0].mxu0
      %2038 = vdwg.mxu0
      %v2039 = vadd.f32 %v1893, %v2009
      %v2040 = vadd.f32 %v1894, %v2012
      %v2041 = vadd.f32 %v1895, %v2017
      %v2042 = vadd.f32 %v1896, %v2020
      %v2043 = vadd.f32 %v1897, %v2025
      %v2044 = vadd.f32 %v1898, %v2028
      %v2045 = vadd.f32 %v1899, %v2033
      %v2046 = vadd.f32 %v1900, %v2036
      %v2047 = vld [vmem:[#allocation2 + $0x12] sm:$0xff]
      %v2048 = vld [vmem:[#allocation2 + $0x1a] sm:$0xff]
      %v2049 = vld [vmem:[#allocation2 + $0x22] sm:$0xff]
      %v2050 = vld [vmem:[#allocation2 + $0x2a] sm:$0xff]
      %v2051 = vld [vmem:[#allocation2 + $0x32] sm:$0xff]
      %v2052 = vld [vmem:[#allocation2 + $0x3a] sm:$0xff]
      %v2053 = vld [vmem:[#allocation2 + $0x42] sm:$0xff]
      %v2054 = vld [vmem:[#allocation2 + $0x4a] sm:$0xff]
      %v2055 = vsel %vm1139, %v2047, 0.0
      %v2056 = vsel %vm1140, %v2048, 0.0
      %v2057 = vsel %vm1141, %v2049, 0.0
      %v2058 = vsel %vm1142, %v2050, 0.0
      %v2059 = vsel %vm1143, %v2051, 0.0
      %v2060 = vsel %vm1144, %v2052, 0.0
      %v2061 = vsel %vm1145, %v2053, 0.0
      %v2062 = vsel %vm1146, %v2054, 0.0
      %v2063 = vpack.c.bf16 %v2056, %v2055
      %v2064 = vpack.c.bf16 %v2058, %v2057
      %v2065 = vpack.c.bf16 %v2060, %v2059
      %v2066 = vpack.c.bf16 %v2062, %v2061
      %s2067 = scalar_lea.vmem %s3, 384
      %v2068 = vld [vmem:[%s2067] sm:$0xf]
      %v2069 = vld [vmem:[%s2067 + $0x4] sm:$0xf]
      %v2070 = vld [vmem:[%s2067 + $0x8] sm:$0xf]
      %v2071 = vld [vmem:[%s2067 + $0xc] sm:$0xf]
      %v2072 = vld [vmem:[%s2067 + $0x10] sm:$0xf]
      %v2073 = vld [vmem:[%s2067 + $0x14] sm:$0xf]
      %v2074 = vld [vmem:[%s2067 + $0x18] sm:$0xf]
      %v2075 = vld [vmem:[%s2067 + $0x1c] sm:$0xf]
      %v2076 = vld [vmem:[%s2067 + $0x20] sm:$0xf]
      %v2077 = vld [vmem:[%s2067 + $0x24] sm:$0xf]
      %v2078 = vld [vmem:[%s2067 + $0x28] sm:$0xf]
      %v2079 = vld [vmem:[%s2067 + $0x2c] sm:$0xf]
      %v2092 = vunpack.c.l.b16 %v2068
      %v2093 = vunpack.c.l.b16 %v2069
      %v2094 = vunpack.c.l.b16 %v2070
      %v2095 = vunpack.c.l.b16 %v2071
      %v2096 = vunpack.c.l.b16 %v2072
      %v2097 = vunpack.c.l.b16 %v2073
      %v2098 = vunpack.c.l.b16 %v2074
      %v2099 = vunpack.c.l.b16 %v2075
      %v2100 = vunpack.c.l.b16 %v2076
      %v2101 = vunpack.c.l.b16 %v2077
      %v2102 = vunpack.c.l.b16 %v2078
      %v2103 = vunpack.c.l.b16 %v2079
      %v2104 = vpack.c.b16 %v2093, %v2092
      %v2105 = vpack.c.b16 %v2095, %v2094
      %v2106 = vpack.c.b16 %v2097, %v2096
      %v2107 = vpack.c.b16 %v2099, %v2098
      %v2108 = vpack.c.b16 %v2101, %v2100
      %v2109 = vpack.c.b16 %v2103, %v2102
      %v2117 = vsel %vm658, %v2063, 0
      %v2120 = vsel %vm658, %v2064, 0
      %v2123 = vsel %vm658, %v2065, 0
      %v2126 = vsel %vm658, %v2066, 0
      %2128 = vmatprep.subr.bf16.mxu0 0
      %2129 = vmatpush1.bf16.msra.mxu0 %v2104
      %2130 = vmatprep.subr.bf16.mxu0 0
      %2131 = vmatpush1.bf16.msra.mxu0 %v2105
      %2132 = vmatprep.subr.bf16.mxu0 0
      %2133 = vmatpush1.bf16.msra.mxu0 %v2106
      %2134 = vmatprep.subr.bf16.mxu0 0
      %2135 = vmatpush1.bf16.msra.mxu0 %v2107
      %2136 = vmatprep.subr.bf16.mxu0 0
      %2137 = vmatpush1.bf16.msra.mxu0 %v2108
      %2138 = vmatprep.subr.bf16.mxu0 0
      %2139 = vmatpush1.bf16.msra.mxu0 %v2109
      %2140 = vmatprep.subr.bf16.mxu0 0
      %2141 = vmatpush1.bf16.msra.mxu0 0
      %2142 = vmatprep.subr.bf16.mxu0 0
      %2143 = vmatpush1.bf16.msra.mxu0 0
      %2144 = vmatprep.subr.bf16.mxu0 0
      %2145 = vmatpush1.bf16.msra.mxu0 0
      %2146 = vmatprep.subr.bf16.mxu0 0
      %2147 = vmatpush1.bf16.msra.mxu0 0
      %2148 = vmatprep.subr.bf16.mxu0 0
      %2149 = vmatpush1.bf16.msra.mxu0 0
      %2150 = vmatprep.subr.bf16.mxu0 0
      %2151 = vmatpush1.bf16.msra.mxu0 0
      %2152 = vmatprep.subr.bf16.mxu0 0
      %2153 = vmatpush1.bf16.msra.mxu0 0
      %2154 = vmatprep.subr.bf16.mxu0 0
      %2155 = vmatpush1.bf16.msra.mxu0 0
      %2156 = vmatprep.subr.bf16.mxu0 0
      %2157 = vmatpush1.bf16.msra.mxu0 0
      %2158 = vmatprep.subr.bf16.mxu0 0
      %2159 = vmatpush1.bf16.msra.mxu0 0
      %2160 = vmatprep.mubr.bf16.mxu0 0
      %2161 = vmatmul.mubr.bf16.gmra.mrb[0].mxu0 %v2117
      %v2162 = vpop.f32.mrb[0].mxu0
      %v2163 = vadd.f32 0.0, %v2162
      %v2164 = vpop.f32.mrb[0].mxu0
      %v2165 = vpop.f32.mrb[0].mxu0
      %v2166 = vadd.f32 0.0, %v2165
      %v2167 = vpop.f32.mrb[0].mxu0
      %2168 = vmatprep.mubr.bf16.mxu0 0
      %2169 = vmatmul.mubr.bf16.gmra.mrb[0].mxu0 %v2120
      %v2170 = vpop.f32.mrb[0].mxu0
      %v2171 = vadd.f32 0.0, %v2170
      %v2172 = vpop.f32.mrb[0].mxu0
      %v2173 = vpop.f32.mrb[0].mxu0
      %v2174 = vadd.f32 0.0, %v2173
      %v2175 = vpop.f32.mrb[0].mxu0
      %2176 = vmatprep.mubr.bf16.mxu0 0
      %2177 = vmatmul.mubr.bf16.gmra.mrb[0].mxu0 %v2123
      %v2178 = vpop.f32.mrb[0].mxu0
      %v2179 = vadd.f32 0.0, %v2178
      %v2180 = vpop.f32.mrb[0].mxu0
      %v2181 = vpop.f32.mrb[0].mxu0
      %v2182 = vadd.f32 0.0, %v2181
      %v2183 = vpop.f32.mrb[0].mxu0
      %2184 = vmatprep.mubr.bf16.mxu0 0
      %2185 = vmatmul.mubr.bf16.gmra.mrb[0].mxu0 %v2126
      %v2186 = vpop.f32.mrb[0].mxu0
      %v2187 = vadd.f32 0.0, %v2186
      %v2188 = vpop.f32.mrb[0].mxu0
      %v2189 = vpop.f32.mrb[0].mxu0
      %v2190 = vadd.f32 0.0, %v2189
      %v2191 = vpop.f32.mrb[0].mxu0
      %2192 = vdwg.mxu0
      %v2193 = vadd.f32 %v2039, %v2163
      %v2194 = vadd.f32 %v2040, %v2166
      %v2195 = vadd.f32 %v2041, %v2171
      %v2196 = vadd.f32 %v2042, %v2174
      %v2197 = vadd.f32 %v2043, %v2179
      %v2198 = vadd.f32 %v2044, %v2182
      %v2199 = vadd.f32 %v2045, %v2187
      %v2200 = vadd.f32 %v2046, %v2190
      %v2201 = vmax.f32 %v2193, 0.0
      %v2202 = vmax.f32 %v2194, 0.0
      %v2203 = vmax.f32 %v2195, 0.0
      %v2204 = vmax.f32 %v2196, 0.0
      %v2205 = vmax.f32 %v2197, 0.0
      %v2206 = vmax.f32 %v2198, 0.0
      %v2207 = vmax.f32 %v2199, 0.0
      %v2208 = vmax.f32 %v2200, 0.0
      %v2209 = vpack.c.bf16 %v2202, %v2201
      %v2210 = vpack.c.bf16 %v2204, %v2203
      %v2211 = vpack.c.bf16 %v2206, %v2205
      %v2212 = vpack.c.bf16 %v2208, %v2207
      %v2213 = vld [vmem:[%s5] sm:$0xff]
      %v2214 = vld [vmem:[%s5 + $0x8] sm:$0xf]
      %v2215 = vld [vmem:[%s5 + $0xc] sm:$0xff]
      %v2216 = vld [vmem:[%s5 + $0x14] sm:$0xf]
      %v2217 = vld [vmem:[%s5 + $0x18] sm:$0xff]
      %v2218 = vld [vmem:[%s5 + $0x20] sm:$0xf]
      %v2219 = vld [vmem:[%s5 + $0x24] sm:$0xff]
      %v2220 = vld [vmem:[%s5 + $0x2c] sm:$0xf]
      %v2221 = vld [vmem:[%s5 + $0x30] sm:$0xff]
      %v2222 = vld [vmem:[%s5 + $0x38] sm:$0xf]
      %v2223 = vld [vmem:[%s5 + $0x3c] sm:$0xff]
      %v2224 = vld [vmem:[%s5 + $0x44] sm:$0xf]
      %v2225 = vld [vmem:[%s5 + $0x48] sm:$0xff]
      %v2226 = vld [vmem:[%s5 + $0x50] sm:$0xf]
      %v2227 = vld [vmem:[%s5 + $0x54] sm:$0xff]
      %v2228 = vld [vmem:[%s5 + $0x5c] sm:$0xf]
      %v2229 = vld [vmem:[%s5 + $0x60] sm:$0xff]
      %v2230 = vld [vmem:[%s5 + $0x68] sm:$0xf]
      %v2231 = vld [vmem:[%s5 + $0x6c] sm:$0xff]
      %v2232 = vld [vmem:[%s5 + $0x74] sm:$0xf]
      %v2233 = vld [vmem:[%s5 + $0x78] sm:$0xff]
      %v2234 = vld [vmem:[%s5 + $0x80] sm:$0xf]
      %v2235 = vld [vmem:[%s5 + $0x84] sm:$0xff]
      %v2236 = vld [vmem:[%s5 + $0x8c] sm:$0xf]
      %v2237 = vld [vmem:[%s6] sm:$0x7]
      %v2239 = vlaneseq
      %v2240 = vshrl.u32 %v2239, 7
      %v2241 = vsub.s32 0, %v2240
      %v2242 = vrot.slane %v2237, %v2241
      %v2243 = vlaneseq
      %v2244 = vshrl.u32 %v2243, 7
      %v2245 = vsub.s32 1, %v2244
      %v2246 = vrot.slane %v2237, %v2245
      %v2247 = vlaneseq
      %v2248 = vshrl.u32 %v2247, 7
      %v2249 = vsub.s32 2, %v2248
      %v2250 = vrot.slane %v2237, %v2249
      %v2278 = vunpack.c.l.b16 %v2213
      %v2279 = vunpack.c.h.b16 %v2213
      %v2280 = vunpack.c.l.b16 %v2214
      %v2281 = vunpack.c.l.b16 %v2215
      %v2282 = vunpack.c.h.b16 %v2215
      %v2283 = vunpack.c.l.b16 %v2216
      %v2284 = vunpack.c.l.b16 %v2217
      %v2285 = vunpack.c.h.b16 %v2217
      %v2286 = vunpack.c.l.b16 %v2218
      %v2287 = vunpack.c.l.b16 %v2219
      %v2288 = vunpack.c.h.b16 %v2219
      %v2289 = vunpack.c.l.b16 %v2220
      %v2290 = vunpack.c.l.b16 %v2221
      %v2291 = vunpack.c.h.b16 %v2221
      %v2292 = vunpack.c.l.b16 %v2222
      %v2293 = vunpack.c.l.b16 %v2223
      %v2294 = vunpack.c.h.b16 %v2223
      %v2295 = vunpack.c.l.b16 %v2224
      %v2296 = vunpack.c.l.b16 %v2225
      %v2297 = vunpack.c.h.b16 %v2225
      %v2298 = vunpack.c.l.b16 %v2226
      %v2299 = vunpack.c.l.b16 %v2227
      %v2300 = vunpack.c.h.b16 %v2227
      %v2301 = vunpack.c.l.b16 %v2228
      %v2302 = vunpack.c.l.b16 %v2229
      %v2303 = vunpack.c.h.b16 %v2229
      %v2304 = vunpack.c.l.b16 %v2230
      %v2305 = vunpack.c.l.b16 %v2231
      %v2306 = vunpack.c.h.b16 %v2231
      %v2307 = vunpack.c.l.b16 %v2232
      %v2308 = vunpack.c.l.b16 %v2233
      %v2309 = vunpack.c.h.b16 %v2233
      %v2310 = vunpack.c.l.b16 %v2234
      %v2311 = vunpack.c.l.b16 %v2235
      %v2312 = vunpack.c.h.b16 %v2235
      %v2313 = vunpack.c.l.b16 %v2236
      %v2314 = vpack.c.b16 %v2281, %v2278
      %v2315 = vpack.c.b16 %v2282, %v2279
      %v2316 = vpack.c.b16 %v2283, %v2280
      %v2317 = vpack.c.b16 %v2287, %v2284
      %v2318 = vpack.c.b16 %v2288, %v2285
      %v2319 = vpack.c.b16 %v2289, %v2286
      %v2320 = vpack.c.b16 %v2293, %v2290
      %v2321 = vpack.c.b16 %v2294, %v2291
      %v2322 = vpack.c.b16 %v2295, %v2292
      %v2323 = vpack.c.b16 %v2299, %v2296
      %v2324 = vpack.c.b16 %v2300, %v2297
      %v2325 = vpack.c.b16 %v2301, %v2298
      %v2326 = vpack.c.b16 %v2305, %v2302
      %v2327 = vpack.c.b16 %v2306, %v2303
      %v2328 = vpack.c.b16 %v2307, %v2304
      %v2329 = vpack.c.b16 %v2311, %v2308
      %v2330 = vpack.c.b16 %v2312, %v2309
      %v2331 = vpack.c.b16 %v2313, %v2310
      %v2351 = vsel %vm658, %v2209, 0
      %v2354 = vsel %vm658, %v2210, 0
      %v2357 = vsel %vm658, %v2211, 0
      %v2360 = vsel %vm658, %v2212, 0
      %2362 = vmatprep.subr.bf16.mxu0 %v2315
      %2363 = vmatpush1.bf16.msra.mxu0 %v2314
      %2364 = vmatprep.subr.bf16.mxu0 %v2318
      %2365 = vmatpush1.bf16.msra.mxu0 %v2317
      %2366 = vmatprep.subr.bf16.mxu0 %v2321
      %2367 = vmatpush1.bf16.msra.mxu0 %v2320
      %2368 = vmatprep.subr.bf16.mxu0 %v2324
      %2369 = vmatpush1.bf16.msra.mxu0 %v2323
      %2370 = vmatprep.subr.bf16.mxu0 %v2327
      %2371 = vmatpush1.bf16.msra.mxu0 %v2326
      %2372 = vmatprep.subr.bf16.mxu0 %v2330
      %2373 = vmatpush1.bf16.msra.mxu0 %v2329
      %2374 = vmatprep.subr.bf16.mxu0 0
      %2375 = vmatpush1.bf16.msra.mxu0 0
      %2376 = vmatprep.subr.bf16.mxu0 0
      %2377 = vmatpush1.bf16.msra.mxu0 0
      %2378 = vmatprep.subr.bf16.mxu0 0
      %2379 = vmatpush1.bf16.msra.mxu0 0
      %2380 = vmatprep.subr.bf16.mxu0 0
      %2381 = vmatpush1.bf16.msra.mxu0 0
      %2382 = vmatprep.subr.bf16.mxu0 0
      %2383 = vmatpush1.bf16.msra.mxu0 0
      %2384 = vmatprep.subr.bf16.mxu0 0
      %2385 = vmatpush1.bf16.msra.mxu0 0
      %2386 = vmatprep.subr.bf16.mxu0 0
      %2387 = vmatpush1.bf16.msra.mxu0 0
      %2388 = vmatprep.subr.bf16.mxu0 0
      %2389 = vmatpush1.bf16.msra.mxu0 0
      %2390 = vmatprep.subr.bf16.mxu0 0
      %2391 = vmatpush1.bf16.msra.mxu0 0
      %2392 = vmatprep.subr.bf16.mxu0 0
      %2393 = vmatpush1.bf16.msra.mxu0 0
      %2394 = vmatprep.mubr.bf16.mxu0 0
      %2395 = vmatmul.mubr.bf16.gmra.mrb[0].mxu0 %v2351
      %v2396 = vpop.f32.mrb[0].mxu0
      %v2397 = vadd.f32 %v2242, %v2396
      %v2398 = vpop.f32.mrb[0].mxu0
      %v2399 = vadd.f32 %v2246, %v2398
      %v2400 = vpop.f32.mrb[0].mxu0
      %v2401 = vadd.f32 %v2242, %v2400
      %v2402 = vpop.f32.mrb[0].mxu0
      %v2403 = vadd.f32 %v2246, %v2402
      %2404 = vmatprep.mubr.bf16.mxu0 0
      %2405 = vmatmul.mubr.bf16.gmra.mrb[0].mxu0 %v2354
      %v2406 = vpop.f32.mrb[0].mxu0
      %v2407 = vadd.f32 %v2242, %v2406
      %v2408 = vpop.f32.mrb[0].mxu0
      %v2409 = vadd.f32 %v2246, %v2408
      %v2410 = vpop.f32.mrb[0].mxu0
      %v2411 = vadd.f32 %v2242, %v2410
      %v2412 = vpop.f32.mrb[0].mxu0
      %v2413 = vadd.f32 %v2246, %v2412
      %2414 = vmatprep.mubr.bf16.mxu0 0
      %2415 = vmatmul.mubr.bf16.gmra.mrb[0].mxu0 %v2357
      %v2416 = vpop.f32.mrb[0].mxu0
      %v2417 = vadd.f32 %v2242, %v2416
      %v2418 = vpop.f32.mrb[0].mxu0
      %v2419 = vadd.f32 %v2246, %v2418
      %v2420 = vpop.f32.mrb[0].mxu0
      %v2421 = vadd.f32 %v2242, %v2420
      %v2422 = vpop.f32.mrb[0].mxu0
      %v2423 = vadd.f32 %v2246, %v2422
      %2424 = vmatprep.mubr.bf16.mxu0 0
      %2425 = vmatmul.mubr.bf16.gmra.mrb[0].mxu0 %v2360
      %v2426 = vpop.f32.mrb[0].mxu0
      %v2427 = vadd.f32 %v2242, %v2426
      %v2428 = vpop.f32.mrb[0].mxu0
      %v2429 = vadd.f32 %v2246, %v2428
      %v2430 = vpop.f32.mrb[0].mxu0
      %v2431 = vadd.f32 %v2242, %v2430
      %v2432 = vpop.f32.mrb[0].mxu0
      %v2433 = vadd.f32 %v2246, %v2432
      %2434 = vdwg.mxu0
      %2435 = vmatprep.subr.bf16.mxu0 0
      %2436 = vmatpush1.bf16.msra.mxu0 %v2316
      %2437 = vmatprep.subr.bf16.mxu0 0
      %2438 = vmatpush1.bf16.msra.mxu0 %v2319
      %2439 = vmatprep.subr.bf16.mxu0 0
      %2440 = vmatpush1.bf16.msra.mxu0 %v2322
      %2441 = vmatprep.subr.bf16.mxu0 0
      %2442 = vmatpush1.bf16.msra.mxu0 %v2325
      %2443 = vmatprep.subr.bf16.mxu0 0
      %2444 = vmatpush1.bf16.msra.mxu0 %v2328
      %2445 = vmatprep.subr.bf16.mxu0 0
      %2446 = vmatpush1.bf16.msra.mxu0 %v2331
      %2447 = vmatprep.subr.bf16.mxu0 0
      %2448 = vmatpush1.bf16.msra.mxu0 0
      %2449 = vmatprep.subr.bf16.mxu0 0
      %2450 = vmatpush1.bf16.msra.mxu0 0
      %2451 = vmatprep.subr.bf16.mxu0 0
      %2452 = vmatpush1.bf16.msra.mxu0 0
      %2453 = vmatprep.subr.bf16.mxu0 0
      %2454 = vmatpush1.bf16.msra.mxu0 0
      %2455 = vmatprep.subr.bf16.mxu0 0
      %2456 = vmatpush1.bf16.msra.mxu0 0
      %2457 = vmatprep.subr.bf16.mxu0 0
      %2458 = vmatpush1.bf16.msra.mxu0 0
      %2459 = vmatprep.subr.bf16.mxu0 0
      %2460 = vmatpush1.bf16.msra.mxu0 0
      %2461 = vmatprep.subr.bf16.mxu0 0
      %2462 = vmatpush1.bf16.msra.mxu0 0
      %2463 = vmatprep.subr.bf16.mxu0 0
      %2464 = vmatpush1.bf16.msra.mxu0 0
      %2465 = vmatprep.subr.bf16.mxu0 0
      %2466 = vmatpush1.bf16.msra.mxu0 0
      %2467 = vmatprep.mubr.bf16.mxu0 0
      %2468 = vmatmul.mubr.bf16.gmra.mrb[0].mxu0 %v2351
      %v2469 = vpop.f32.mrb[0].mxu0
      %v2470 = vadd.f32 %v2250, %v2469
      %v2471 = vpop.f32.mrb[0].mxu0
      %v2472 = vpop.f32.mrb[0].mxu0
      %v2473 = vadd.f32 %v2250, %v2472
      %v2474 = vpop.f32.mrb[0].mxu0
      %2475 = vmatprep.mubr.bf16.mxu0 0
      %2476 = vmatmul.mubr.bf16.gmra.mrb[0].mxu0 %v2354
      %v2477 = vpop.f32.mrb[0].mxu0
      %v2478 = vadd.f32 %v2250, %v2477
      %v2479 = vpop.f32.mrb[0].mxu0
      %v2480 = vpop.f32.mrb[0].mxu0
      %v2481 = vadd.f32 %v2250, %v2480
      %v2482 = vpop.f32.mrb[0].mxu0
      %2483 = vmatprep.mubr.bf16.mxu0 0
      %2484 = vmatmul.mubr.bf16.gmra.mrb[0].mxu0 %v2357
      %v2485 = vpop.f32.mrb[0].mxu0
      %v2486 = vadd.f32 %v2250, %v2485
      %v2487 = vpop.f32.mrb[0].mxu0
      %v2488 = vpop.f32.mrb[0].mxu0
      %v2489 = vadd.f32 %v2250, %v2488
      %v2490 = vpop.f32.mrb[0].mxu0
      %2491 = vmatprep.mubr.bf16.mxu0 0
      %2492 = vmatmul.mubr.bf16.gmra.mrb[0].mxu0 %v2360
      %v2493 = vpop.f32.mrb[0].mxu0
      %v2494 = vadd.f32 %v2250, %v2493
      %v2495 = vpop.f32.mrb[0].mxu0
      %v2496 = vpop.f32.mrb[0].mxu0
      %v2497 = vadd.f32 %v2250, %v2496
      %v2498 = vpop.f32.mrb[0].mxu0
      %2499 = vdwg.mxu0
      %v2500 = vunpack.c.l.bf16 %v280
      %v2501 = vunpack.c.h.bf16 %v280
      %v2502 = vunpack.c.l.bf16 %v281
      %v2503 = vunpack.c.l.bf16 %v282
      %v2504 = vunpack.c.h.bf16 %v282
      %v2505 = vunpack.c.l.bf16 %v283
      %v2506 = vunpack.c.l.bf16 %v284
      %v2507 = vunpack.c.h.bf16 %v284
      %v2508 = vunpack.c.l.bf16 %v285
      %v2509 = vunpack.c.l.bf16 %v286
      %v2510 = vunpack.c.h.bf16 %v286
      %v2511 = vunpack.c.l.bf16 %v287
      %v2512 = vunpack.c.l.bf16 %v288
      %v2513 = vunpack.c.h.bf16 %v288
      %v2514 = vunpack.c.l.bf16 %v289
      %v2515 = vunpack.c.l.bf16 %v290
      %v2516 = vunpack.c.h.bf16 %v290
      %v2517 = vunpack.c.l.bf16 %v291
      %v2518 = vunpack.c.l.bf16 %v292
      %v2519 = vunpack.c.h.bf16 %v292
      %v2520 = vunpack.c.l.bf16 %v293
      %v2521 = vunpack.c.l.bf16 %v294
      %v2522 = vunpack.c.h.bf16 %v294
      %v2523 = vunpack.c.l.bf16 %v295
      %v2524 = vadd.f32 %v2500, %v2397
      %v2525 = vadd.f32 %v2501, %v2399
      %v2526 = vadd.f32 %v2503, %v2401
      %v2527 = vadd.f32 %v2504, %v2403
      %v2528 = vadd.f32 %v2506, %v2407
      %v2529 = vadd.f32 %v2507, %v2409
      %v2530 = vadd.f32 %v2509, %v2411
      %v2531 = vadd.f32 %v2510, %v2413
      %v2532 = vadd.f32 %v2512, %v2417
      %v2533 = vadd.f32 %v2513, %v2419
      %v2534 = vadd.f32 %v2515, %v2421
      %v2535 = vadd.f32 %v2516, %v2423
      %v2536 = vadd.f32 %v2518, %v2427
      %v2537 = vadd.f32 %v2519, %v2429
      %v2538 = vadd.f32 %v2521, %v2431
      %v2539 = vadd.f32 %v2522, %v2433
      %2548 = vrot.lane.b32.xlu0 %v2470, 32
      %v2549 = vpop.permute.xlu0 %2548
      %2550 = vrot.lane.b32.xlu0 %v2473, 32
      %v2551 = vpop.permute.xlu0 %2550
      %2552 = vrot.lane.b32.xlu0 %v2478, 32
      %v2553 = vpop.permute.xlu0 %2552
      %2554 = vrot.lane.b32.xlu0 %v2481, 32
      %v2555 = vpop.permute.xlu0 %2554
      %2556 = vrot.lane.b32.xlu0 %v2486, 32
      %v2557 = vpop.permute.xlu0 %2556
      %2558 = vrot.lane.b32.xlu0 %v2489, 32
      %v2559 = vpop.permute.xlu0 %2558
      %2560 = vrot.lane.b32.xlu0 %v2494, 32
      %v2561 = vpop.permute.xlu0 %2560
      %2562 = vrot.lane.b32.xlu0 %v2497, 32
      %v2563 = vpop.permute.xlu0 %2562
      %v2572 = vsel %vm507, %v2502, %v2549
      %v2573 = vsel %vm507, %v2505, %v2551
      %v2574 = vsel %vm507, %v2508, %v2553
      %v2575 = vsel %vm507, %v2511, %v2555
      %v2576 = vsel %vm507, %v2514, %v2557
      %v2577 = vsel %vm507, %v2517, %v2559
      %v2578 = vsel %vm507, %v2520, %v2561
      %v2579 = vsel %vm507, %v2523, %v2563
      %v2580 = vmax.f32 %v2524, 0.0
      %v2581 = vmax.f32 %v2525, 0.0
      %v2582 = vmax.f32 %v2572, 0.0
      %v2583 = vmax.f32 %v2526, 0.0
      %v2584 = vmax.f32 %v2527, 0.0
      %v2585 = vmax.f32 %v2573, 0.0
      %v2586 = vmax.f32 %v2528, 0.0
      %v2587 = vmax.f32 %v2529, 0.0
      %v2588 = vmax.f32 %v2574, 0.0
      %v2589 = vmax.f32 %v2530, 0.0
      %v2590 = vmax.f32 %v2531, 0.0
      %v2591 = vmax.f32 %v2575, 0.0
      %v2592 = vmax.f32 %v2532, 0.0
      %v2593 = vmax.f32 %v2533, 0.0
      %v2594 = vmax.f32 %v2576, 0.0
      %v2595 = vmax.f32 %v2534, 0.0
      %v2596 = vmax.f32 %v2535, 0.0
      %v2597 = vmax.f32 %v2577, 0.0
      %v2598 = vmax.f32 %v2536, 0.0
      %v2599 = vmax.f32 %v2537, 0.0
      %v2600 = vmax.f32 %v2578, 0.0
      %v2601 = vmax.f32 %v2538, 0.0
      %v2602 = vmax.f32 %v2539, 0.0
      %v2603 = vmax.f32 %v2579, 0.0
      %v2604 = vpack.c.bf16 %v2583, %v2580
      %v2605 = vpack.c.bf16 %v2584, %v2581
      %v2606 = vpack.c.bf16 %v2585, %v2582
      %v2607 = vpack.c.bf16 %v2589, %v2586
      %v2608 = vpack.c.bf16 %v2590, %v2587
      %v2609 = vpack.c.bf16 %v2591, %v2588
      %v2610 = vpack.c.bf16 %v2595, %v2592
      %v2611 = vpack.c.bf16 %v2596, %v2593
      %v2612 = vpack.c.bf16 %v2597, %v2594
      %v2613 = vpack.c.bf16 %v2601, %v2598
      %v2614 = vpack.c.bf16 %v2602, %v2599
      %v2615 = vpack.c.bf16 %v2603, %v2600
      %v2628 = vunpack.c.l.b16 %v2604
      %v2629 = vunpack.c.l.b16 %v2605
      %v2630 = vunpack.c.l.b16 %v2606
      %v2631 = vunpack.c.h.b16 %v2604
      %v2632 = vunpack.c.h.b16 %v2605
      %v2633 = vunpack.c.h.b16 %v2606
      %v2634 = vunpack.c.l.b16 %v2607
      %v2635 = vunpack.c.l.b16 %v2608
      %v2636 = vunpack.c.l.b16 %v2609
      %v2637 = vunpack.c.h.b16 %v2607
      %v2638 = vunpack.c.h.b16 %v2608
      %v2639 = vunpack.c.h.b16 %v2609
      %v2640 = vunpack.c.l.b16 %v2610
      %v2641 = vunpack.c.l.b16 %v2611
      %v2642 = vunpack.c.l.b16 %v2612
      %v2643 = vunpack.c.h.b16 %v2610
      %v2644 = vunpack.c.h.b16 %v2611
      %v2645 = vunpack.c.h.b16 %v2612
      %v2646 = vunpack.c.l.b16 %v2613
      %v2647 = vunpack.c.l.b16 %v2614
      %v2648 = vunpack.c.l.b16 %v2615
      %v2649 = vunpack.c.h.b16 %v2613
      %v2650 = vunpack.c.h.b16 %v2614
      %v2651 = vunpack.c.h.b16 %v2615
      %v2652 = vpack.c.b16 %v2629, %v2628
      %v2653 = vpack.c.b16 %v2630, %v2630
      %v2654 = vpack.c.b16 %v2632, %v2631
      %v2655 = vpack.c.b16 %v2633, %v2633
      %v2656 = vpack.c.b16 %v2635, %v2634
      %v2657 = vpack.c.b16 %v2636, %v2636
      %v2658 = vpack.c.b16 %v2638, %v2637
      %v2659 = vpack.c.b16 %v2639, %v2639
      %v2660 = vpack.c.b16 %v2641, %v2640
      %v2661 = vpack.c.b16 %v2642, %v2642
      %v2662 = vpack.c.b16 %v2644, %v2643
      %v2663 = vpack.c.b16 %v2645, %v2645
      %v2664 = vpack.c.b16 %v2647, %v2646
      %v2665 = vpack.c.b16 %v2648, %v2648
      %v2666 = vpack.c.b16 %v2650, %v2649
      %v2667 = vpack.c.b16 %v2651, %v2651
      %2684 = vst [vmem:[%s278] sm:$0xff] %v2652
      %vm2685 = vcmask 388096
      %2686 = vst.msk [vmem:[%s278 + $0x8] sm:$0xf] %vm2685, %v2653
      %2687 = vst [vmem:[%s278 + $0xc] sm:$0xff] %v2654
      %2688 = vst.msk [vmem:[%s278 + $0x14] sm:$0xf] %vm2685, %v2655
      %2689 = vst [vmem:[%s278 + $0x18] sm:$0xff] %v2656
      %2690 = vst.msk [vmem:[%s278 + $0x20] sm:$0xf] %vm2685, %v2657
      %2691 = vst [vmem:[%s278 + $0x24] sm:$0xff] %v2658
      %2692 = vst.msk [vmem:[%s278 + $0x2c] sm:$0xf] %vm2685, %v2659
      %2693 = vst [vmem:[%s278 + $0x30] sm:$0xff] %v2660
      %2694 = vst.msk [vmem:[%s278 + $0x38] sm:$0xf] %vm2685, %v2661
      %2695 = vst [vmem:[%s278 + $0x3c] sm:$0xff] %v2662
      %2696 = vst.msk [vmem:[%s278 + $0x44] sm:$0xf] %vm2685, %v2663
      %2697 = vst [vmem:[%s278 + $0x48] sm:$0xff] %v2664
      %2698 = vst.msk [vmem:[%s278 + $0x50] sm:$0xf] %vm2685, %v2665
      %2699 = vst [vmem:[%s278 + $0x54] sm:$0xff] %v2666
      %2700 = vst.msk [vmem:[%s278 + $0x5c] sm:$0xf] %vm2685, %v2667
      %p2701 = scmp.lt.s32.totalorder %s18, 1
      %s2702 = scalar_select %p2701, %s18, 1
      %s2703 = smul.addr %s2702, 24
      %s2704 = smul.addr %s2703, 4
      %s2705 = scalar_lea.vmem %s7, %s2704
      // Predicated region
      $region49: #{forward.4} parent=47 // pred_check
        %p2706 = pneg %p188
      $region50: #{forward.4} parent=47 // pred_check_branch
        %2708 = sbr.rel (%p2706) target = $region52
      $region51: #{forward.4} parent=47 // pred_region
        _
      $region52: #{forward.4} parent=47 // pred_fallthru
        _
    $region48: #{forward.4} parent=5 // pred_fallthru
      _
    %p2709 = scmp.le.s32.totalorder 2, %s13
    // Predicated region
    $region53: #{forward.4} parent=5 // pred_check
      %p2710 = pneg %p2709
    $region54: #{forward.4} parent=5 // pred_check_branch
      %2712 = sbr.rel (%p2710) target = $region56
    $region55: #{forward.4} parent=5 // pred_region
      %s2713 = ssub.s32 %s13, 2
      // Predicated region
      $region57: #{forward.4} parent=55 // pred_check
        %p2714 = pneg %p194
      $region58: #{forward.4} parent=55 // pred_check_branch
        %2716 = sbr.rel (%p2714) target = $region60
      $region59: #{forward.4} parent=55 // pred_region
        %p2717 = scmp.lt.s32.totalorder %s19, 1
        %s2718 = scalar_select %p2717, %s19, 1
        %s2719 = smul.addr %s2718, 24
        %s2720 = smul.addr %s2719, 4
        %s2721 = scalar_lea.vmem %s7, %s2720
      $region60: #{forward.4} parent=55 // pred_fallthru
        _
    $region56: #{forward.4} parent=5 // pred_fallthru
      _
  $region6: #{forward.4} parent=0 // loop_footer
    %s17 = sadd.s32 1, %s13
  $region7: #{forward.4} parent=0 // loop_footer_branch
    %12 = sbr.rel target = $region3
  $region8: #{forward.4} parent=0 // loop_exit
    _

// kernel: forward.5
$region0: #{forward.5}
  #allocation0 [shape = 'u32[]', space=smem, size = 0x4, offset = 0x4, fixed_abs, tag = 'smem constant byte address 0x4 - core index']
  #allocation1 [shape = 'u32[144,128]{1,0:T(1,128)}', space=vmem, size = 0x12000, scoped, tag = 'internal scratch']
  #allocation2 [shape = 'f32[82,192]{1,0:T(8,128)}', space=vmem, size = 0x16000, scoped, tag = 'scratch operand']
  %s0 = inlined_call_operand.vmem [shape: bf16[2,64,304], index: 0, kind: input, shape index: {}]
  %s1 = inlined_call_operand.vmem [shape: bf16[304,192], index: 1, kind: input, shape index: {}]
  %s2 = inlined_call_operand.vmem [shape: f32[1,192], index: 2, kind: input, shape index: {}]
  %s3 = inlined_call_operand.vmem [shape: bf16[9,192,192], index: 3, kind: input, shape index: {}]
  %s4 = inlined_call_operand.vmem [shape: f32[1,192], index: 4, kind: input, shape index: {}]
  %s5 = inlined_call_operand.vmem [shape: bf16[192,544], index: 5, kind: input, shape index: {}]
  %s6 = inlined_call_operand.vmem [shape: f32[1,544], index: 6, kind: input, shape index: {}]
  %s7 = inlined_call_operand.vmem [shape: bf16[304,544], index: 7, kind: input, shape index: {}]
  %s8 = inlined_call_operand.vmem [shape: f32[1,544], index: 8, kind: input, shape index: {}]
  %s9 = inlined_call_operand.vmem [shape: bf16[2,64,576], index: 9, kind: output, shape index: {}]
  %s10 = sld [smem:[#allocation0]]
  $region69: #{forward.5} parent=0
    _
  %s12 = ssub.s32 1, %s10
  %s13 = scalar_select 0, %s12, %s10
  loop: start=0, step=1, limit=4
  $region2: #{forward.5} parent=0 // loop_pre_header
    _
  $region3: #{forward.5} parent=0 // loop_header
    %s15 = sphi 0, %s19
    %p16 = scmp.ge.s32.totalorder %s15, 4
    %s25 = sphi 0, %s27
    %s28 = sphi 0, %s25
    %s29 = sphi 0, %s28
    %s45 = sphi 0, %s29
    %s49 = sphi 0, %s49
    %s51 = sphi 0, %s49
    %s52 = sphi 0, %s51
    %s66 = sphi 0, %s52
    %s70 = sphi 0, %s70
    %s72 = sphi 0, %s70
    %s73 = sphi 0, %s72
    %s87 = sphi 0, %s73
    %s91 = sphi 0, %s91
    %s93 = sphi 0, %s91
    %s94 = sphi 0, %s93
    %s108 = sphi 0, %s94
    %s112 = sphi 0, %s112
    %s114 = sphi 0, %s112
    %s115 = sphi 0, %s114
    %s129 = sphi 0, %s115
    %s133 = sphi 0, %s133
    %s135 = sphi 0, %s133
    %s136 = sphi 0, %s135
    %s150 = sphi 0, %s136
    %s154 = sphi 0, %s154
    %s156 = sphi 0, %s154
    %s157 = sphi 0, %s156
    %s171 = sphi 0, %s157
    %s175 = sphi 0, %s175
    %s177 = sphi 0, %s175
    %s178 = sphi 0, %s177
    %s192 = sphi 0, %s178
    %s196 = sphi 0, %s196
    %s198 = sphi 0, %s196
    %s199 = sphi 0, %s198
    %s213 = sphi 0, %s199
    %s219 = sphi 0, %s221
    %s222 = sphi 0, %s219
    %s223 = sphi 0, %s222
    %s239 = sphi 0, %s223
  $region4: #{forward.5} parent=0 // loop_header_branch
    %18 = sbr.rel (%p16) target = $region8
  $region5: #{forward.5} parent=0 // loop_body
    %s20 = ssub.s32 %s15, 1
    %s21 = ssub.s32 %s15, 2
    %s22 = sadd.s32 %s15, 1
    %s23 = ssub.s32 %s15, %s22
    %p24 = scmp.eq.s32.totalorder %s23, 0
    %s26 = sadd.s32 %s25, 1
    %s27 = scalar_select %p24, %s25, %s26
    %p30 = pneg %p24
    %p31 = scmp.eq.s32.totalorder %s15, 1
    %p32 = por %p30, %p31
    %p33 = scmp.ne.s32.totalorder %s25, %s28
    %p34 = scmp.eq.s32.totalorder %s15, 0
    %p35 = por %p33, %p34
    %p36 = scmp.ne.s32.totalorder %s25, %s28
    %p37 = scmp.eq.s32.totalorder %s20, 1
    %p38 = por %p36, %p37
    %p39 = scmp.ne.s32.totalorder %s28, %s29
    %p40 = scmp.eq.s32.totalorder %s20, 0
    %p41 = por %p39, %p40
    %p42 = scmp.ne.s32.totalorder %s28, %s29
    %p43 = scmp.eq.s32.totalorder %s21, 1
    %p44 = por %p42, %p43
    %p46 = scmp.ne.s32.totalorder %s29, %s45
    %p47 = scmp.eq.s32.totalorder %s21, 0
    %p48 = por %p46, %p47
    %s50 = sadd.s32 %s49, 1
    %p53 = scmp.eq.s32.totalorder %s15, 1
    %p54 = scmp.ne.s32.totalorder %s49, %s51
    %p55 = scmp.eq.s32.totalorder %s15, 0
    %p56 = por %p54, %p55
    %p57 = scmp.ne.s32.totalorder %s49, %s51
    %p58 = scmp.eq.s32.totalorder %s20, 1
    %p59 = por %p57, %p58
    %p60 = scmp.ne.s32.totalorder %s51, %s52
    %p61 = scmp.eq.s32.totalorder %s20, 0
    %p62 = por %p60, %p61
    %p63 = scmp.ne.s32.totalorder %s51, %s52
    %p64 = scmp.eq.s32.totalorder %s21, 1
    %p65 = por %p63, %p64
    %p67 = scmp.ne.s32.totalorder %s52, %s66
    %p68 = scmp.eq.s32.totalorder %s21, 0
    %p69 = por %p67, %p68
    %s71 = sadd.s32 %s70, 1
    %p74 = scmp.eq.s32.totalorder %s15, 1
    %p75 = scmp.ne.s32.totalorder %s70, %s72
    %p76 = scmp.eq.s32.totalorder %s15, 0
    %p77 = por %p75, %p76
    %p78 = scmp.ne.s32.totalorder %s70, %s72
    %p79 = scmp.eq.s32.totalorder %s20, 1
    %p80 = por %p78, %p79
    %p81 = scmp.ne.s32.totalorder %s72, %s73
    %p82 = scmp.eq.s32.totalorder %s20, 0
    %p83 = por %p81, %p82
    %p84 = scmp.ne.s32.totalorder %s72, %s73
    %p85 = scmp.eq.s32.totalorder %s21, 1
    %p86 = por %p84, %p85
    %p88 = scmp.ne.s32.totalorder %s73, %s87
    %p89 = scmp.eq.s32.totalorder %s21, 0
    %p90 = por %p88, %p89
    %s92 = sadd.s32 %s91, 1
    %p95 = scmp.eq.s32.totalorder %s15, 1
    %p96 = scmp.ne.s32.totalorder %s91, %s93
    %p97 = scmp.eq.s32.totalorder %s15, 0
    %p98 = por %p96, %p97
    %p99 = scmp.ne.s32.totalorder %s91, %s93
    %p100 = scmp.eq.s32.totalorder %s20, 1
    %p101 = por %p99, %p100
    %p102 = scmp.ne.s32.totalorder %s93, %s94
    %p103 = scmp.eq.s32.totalorder %s20, 0
    %p104 = por %p102, %p103
    %p105 = scmp.ne.s32.totalorder %s93, %s94
    %p106 = scmp.eq.s32.totalorder %s21, 1
    %p107 = por %p105, %p106
    %p109 = scmp.ne.s32.totalorder %s94, %s108
    %p110 = scmp.eq.s32.totalorder %s21, 0
    %p111 = por %p109, %p110
    %s113 = sadd.s32 %s112, 1
    %p116 = scmp.eq.s32.totalorder %s15, 1
    %p117 = scmp.ne.s32.totalorder %s112, %s114
    %p118 = scmp.eq.s32.totalorder %s15, 0
    %p119 = por %p117, %p118
    %p120 = scmp.ne.s32.totalorder %s112, %s114
    %p121 = scmp.eq.s32.totalorder %s20, 1
    %p122 = por %p120, %p121
    %p123 = scmp.ne.s32.totalorder %s114, %s115
    %p124 = scmp.eq.s32.totalorder %s20, 0
    %p125 = por %p123, %p124
    %p126 = scmp.ne.s32.totalorder %s114, %s115
    %p127 = scmp.eq.s32.totalorder %s21, 1
    %p128 = por %p126, %p127
    %p130 = scmp.ne.s32.totalorder %s115, %s129
    %p131 = scmp.eq.s32.totalorder %s21, 0
    %p132 = por %p130, %p131
    %s134 = sadd.s32 %s133, 1
    %p137 = scmp.eq.s32.totalorder %s15, 1
    %p138 = scmp.ne.s32.totalorder %s133, %s135
    %p139 = scmp.eq.s32.totalorder %s15, 0
    %p140 = por %p138, %p139
    %p141 = scmp.ne.s32.totalorder %s133, %s135
    %p142 = scmp.eq.s32.totalorder %s20, 1
    %p143 = por %p141, %p142
    %p144 = scmp.ne.s32.totalorder %s135, %s136
    %p145 = scmp.eq.s32.totalorder %s20, 0
    %p146 = por %p144, %p145
    %p147 = scmp.ne.s32.totalorder %s135, %s136
    %p148 = scmp.eq.s32.totalorder %s21, 1
    %p149 = por %p147, %p148
    %p151 = scmp.ne.s32.totalorder %s136, %s150
    %p152 = scmp.eq.s32.totalorder %s21, 0
    %p153 = por %p151, %p152
    %s155 = sadd.s32 %s154, 1
    %p158 = scmp.eq.s32.totalorder %s15, 1
    %p159 = scmp.ne.s32.totalorder %s154, %s156
    %p160 = scmp.eq.s32.totalorder %s15, 0
    %p161 = por %p159, %p160
    %p162 = scmp.ne.s32.totalorder %s154, %s156
    %p163 = scmp.eq.s32.totalorder %s20, 1
    %p164 = por %p162, %p163
    %p165 = scmp.ne.s32.totalorder %s156, %s157
    %p166 = scmp.eq.s32.totalorder %s20, 0
    %p167 = por %p165, %p166
    %p168 = scmp.ne.s32.totalorder %s156, %s157
    %p169 = scmp.eq.s32.totalorder %s21, 1
    %p170 = por %p168, %p169
    %p172 = scmp.ne.s32.totalorder %s157, %s171
    %p173 = scmp.eq.s32.totalorder %s21, 0
    %p174 = por %p172, %p173
    %s176 = sadd.s32 %s175, 1
    %p179 = scmp.eq.s32.totalorder %s15, 1
    %p180 = scmp.ne.s32.totalorder %s175, %s177
    %p181 = scmp.eq.s32.totalorder %s15, 0
    %p182 = por %p180, %p181
    %p183 = scmp.ne.s32.totalorder %s175, %s177
    %p184 = scmp.eq.s32.totalorder %s20, 1
    %p185 = por %p183, %p184
    %p186 = scmp.ne.s32.totalorder %s177, %s178
    %p187 = scmp.eq.s32.totalorder %s20, 0
    %p188 = por %p186, %p187
    %p189 = scmp.ne.s32.totalorder %s177, %s178
    %p190 = scmp.eq.s32.totalorder %s21, 1
    %p191 = por %p189, %p190
    %p193 = scmp.ne.s32.totalorder %s178, %s192
    %p194 = scmp.eq.s32.totalorder %s21, 0
    %p195 = por %p193, %p194
    %s197 = sadd.s32 %s196, 1
    %p200 = scmp.eq.s32.totalorder %s15, 1
    %p201 = scmp.ne.s32.totalorder %s196, %s198
    %p202 = scmp.eq.s32.totalorder %s15, 0
    %p203 = por %p201, %p202
    %p204 = scmp.ne.s32.totalorder %s196, %s198
    %p205 = scmp.eq.s32.totalorder %s20, 1
    %p206 = por %p204, %p205
    %p207 = scmp.ne.s32.totalorder %s198, %s199
    %p208 = scmp.eq.s32.totalorder %s20, 0
    %p209 = por %p207, %p208
    %p210 = scmp.ne.s32.totalorder %s198, %s199
    %p211 = scmp.eq.s32.totalorder %s21, 1
    %p212 = por %p210, %p211
    %p214 = scmp.ne.s32.totalorder %s199, %s213
    %p215 = scmp.eq.s32.totalorder %s21, 0
    %p216 = por %p214, %p215
    %s217 = ssub.s32 %s15, %s22
    %p218 = scmp.eq.s32.totalorder %s217, 0
    %s220 = sadd.s32 %s219, 1
    %s221 = scalar_select %p218, %s219, %s220
    %p224 = pneg %p218
    %p225 = scmp.eq.s32.totalorder %s15, 1
    %p226 = por %p224, %p225
    %p227 = scmp.ne.s32.totalorder %s219, %s222
    %p228 = scmp.eq.s32.totalorder %s15, 0
    %p229 = por %p227, %p228
    %p230 = scmp.ne.s32.totalorder %s219, %s222
    %p231 = scmp.eq.s32.totalorder %s20, 1
    %p232 = por %p230, %p231
    %p233 = scmp.ne.s32.totalorder %s222, %s223
    %p234 = scmp.eq.s32.totalorder %s20, 0
    %p235 = por %p233, %p234
    %p236 = scmp.ne.s32.totalorder %s222, %s223
    %p237 = scmp.eq.s32.totalorder %s21, 1
    %p238 = por %p236, %p237
    %p240 = scmp.ne.s32.totalorder %s223, %s239
    %p241 = scmp.eq.s32.totalorder %s21, 0
    %p242 = por %p240, %p241
    %p243 = scmp.le.s32.totalorder 1, %s15
    %p244 = scmp.lt.s32.totalorder %s15, 3
    %p245 = pnand %p243, %p244
    %p246 = pneg %p245
    // Predicated region
    $region9: #{forward.5} parent=5 // pred_check
      _
    $region10: #{forward.5} parent=5 // pred_check_branch
      %248 = sbr.rel (%p245) target = $region12
    $region11: #{forward.5} parent=5 // pred_region
      %s249 = ssub.s32 %s15, 1
      // Predicated region
      $region13: #{forward.5} parent=11 // pred_check
        %p250 = pneg %p62
      $region14: #{forward.5} parent=11 // pred_check_branch
        %252 = sbr.rel (%p250) target = $region16
      $region15: #{forward.5} parent=11 // pred_region
        _
      $region16: #{forward.5} parent=11 // pred_fallthru
        _
      // Predicated region
      $region17: #{forward.5} parent=11 // pred_check
        %p253 = pneg %p83
      $region18: #{forward.5} parent=11 // pred_check_branch
        %255 = sbr.rel (%p253) target = $region20
      $region19: #{forward.5} parent=11 // pred_region
        _
      $region20: #{forward.5} parent=11 // pred_fallthru
        _
      // Predicated region
      $region21: #{forward.5} parent=11 // pred_check
        %p256 = pneg %p104
      $region22: #{forward.5} parent=11 // pred_check_branch
        %258 = sbr.rel (%p256) target = $region24
      $region23: #{forward.5} parent=11 // pred_region
        _
      $region24: #{forward.5} parent=11 // pred_fallthru
        _
      // Predicated region
      $region25: #{forward.5} parent=11 // pred_check
        %p259 = pneg %p125
      $region26: #{forward.5} parent=11 // pred_check_branch
        %261 = sbr.rel (%p259) target = $region28
      $region27: #{forward.5} parent=11 // pred_region
        _
      $region28: #{forward.5} parent=11 // pred_fallthru
        _
      // Predicated region
      $region29: #{forward.5} parent=11 // pred_check
        %p262 = pneg %p146
      $region30: #{forward.5} parent=11 // pred_check_branch
        %264 = sbr.rel (%p262) target = $region32
      $region31: #{forward.5} parent=11 // pred_region
        _
      $region32: #{forward.5} parent=11 // pred_fallthru
        _
      // Predicated region
      $region33: #{forward.5} parent=11 // pred_check
        %p265 = pneg %p167
      $region34: #{forward.5} parent=11 // pred_check_branch
        %267 = sbr.rel (%p265) target = $region36
      $region35: #{forward.5} parent=11 // pred_region
        _
      $region36: #{forward.5} parent=11 // pred_fallthru
        _
      // Predicated region
      $region37: #{forward.5} parent=11 // pred_check
        %p268 = pneg %p188
      $region38: #{forward.5} parent=11 // pred_check_branch
        %270 = sbr.rel (%p268) target = $region40
      $region39: #{forward.5} parent=11 // pred_region
        _
      $region40: #{forward.5} parent=11 // pred_fallthru
        _
      // Predicated region
      $region41: #{forward.5} parent=11 // pred_check
        %p271 = pneg %p209
      $region42: #{forward.5} parent=11 // pred_check_branch
        %273 = sbr.rel (%p271) target = $region44
      $region43: #{forward.5} parent=11 // pred_region
        _
      $region44: #{forward.5} parent=11 // pred_fallthru
        _
    $region12: #{forward.5} parent=5 // pred_fallthru
      _
    %p274 = scmp.lt.s32.totalorder %s15, 2
    // Predicated region
    $region45: #{forward.5} parent=5 // pred_check
      %p275 = pneg %p274
    $region46: #{forward.5} parent=5 // pred_check_branch
      %277 = sbr.rel (%p275) target = $region48
    $region47: #{forward.5} parent=5 // pred_region
      // Predicated region
      $region49: #{forward.5} parent=47 // pred_check
        %p278 = pneg %p35
      $region50: #{forward.5} parent=47 // pred_check_branch
        %280 = sbr.rel (%p278) target = $region52
      $region51: #{forward.5} parent=47 // pred_region
        %p281 = scmp.lt.s32.totalorder %s15, 1
        %s282 = scalar_select %p281, %s15, 1
        %s283 = smul.addr %s282, 24
        %s284 = smul.addr %s283, 4
        %s285 = scalar_lea.vmem %s0, %s284
      $region52: #{forward.5} parent=47 // pred_fallthru
        _
    $region48: #{forward.5} parent=5 // pred_fallthru
      _
    %p286 = scmp.le.s32.totalorder 1, %s15
    %p287 = scmp.lt.s32.totalorder %s15, 3
    %p288 = pnand %p286, %p287
    %p289 = pneg %p288
    // Predicated region
    $region53: #{forward.5} parent=5 // pred_check
      _
    $region54: #{forward.5} parent=5 // pred_check_branch
      %291 = sbr.rel (%p288) target = $region56
    $region55: #{forward.5} parent=5 // pred_region
      %s292 = ssub.s32 %s15, 1
      %p293 = scmp.lt.s32.totalorder %s20, 1
      %s294 = scalar_select %p293, %s20, 1
      %s295 = smul.addr %s294, 24
      %s296 = smul.addr %s295, 4
      %s297 = scalar_lea.vmem %s0, %s296
      %p298 = pneg %p41
      %p299 = pneg %p38
      %p300 = pneg %p62
      %p301 = pneg %p59
      %p302 = pneg %p83
      %p303 = pneg %p80
      %p304 = pneg %p104
      %p305 = pneg %p101
      %p306 = pneg %p125
      %p307 = pneg %p122
      %p308 = pneg %p146
      %p309 = pneg %p143
      %p310 = pneg %p167
      %p311 = pneg %p164
      %p312 = pneg %p188
      %p313 = pneg %p185
      %p314 = pneg %p209
      %p315 = pneg %p206
      %p316 = pneg %p235
      %p317 = pneg %p232
      %p318 = scmp.lt.s32.totalorder %s20, 1
      %s319 = scalar_select %p318, %s20, 1
      %s320 = smul.addr %s319, 40
      %s321 = smul.addr %s320, 4
      %s322 = scalar_lea.vmem %s9, %s321
      %p323 = scmp.lt.s32.totalorder %s20, 1
      %s324 = scalar_select %p323, %s20, 1
      %s325 = smul.addr %s324, 24
      %s326 = smul.addr %s325, 4
      %s327 = scalar_lea.vmem %s0, %s326
      %p328 = scmp.lt.s32.totalorder %s20, 1
      %s329 = scalar_select %p328, %s20, 1
      %s330 = smul.addr %s329, 40
      %s331 = smul.addr %s330, 4
      %s332 = scalar_lea.vmem %s9, %s331
      %v334 = vld [vmem:[%s327] sm:$0xff]
      %v335 = vld [vmem:[%s327 + $0x8] sm:$0xf]
      %v336 = vld [vmem:[%s327 + $0xc] sm:$0xff]
      %v337 = vld [vmem:[%s327 + $0x14] sm:$0xf]
      %v338 = vld [vmem:[%s327 + $0x18] sm:$0xff]
      %v339 = vld [vmem:[%s327 + $0x20] sm:$0xf]
      %v340 = vld [vmem:[%s327 + $0x24] sm:$0xff]
      %v341 = vld [vmem:[%s327 + $0x2c] sm:$0xf]
      %v342 = vld [vmem:[%s327 + $0x30] sm:$0xff]
      %v343 = vld [vmem:[%s327 + $0x38] sm:$0xf]
      %v344 = vld [vmem:[%s327 + $0x3c] sm:$0xff]
      %v345 = vld [vmem:[%s327 + $0x44] sm:$0xf]
      %v346 = vld [vmem:[%s327 + $0x48] sm:$0xff]
      %v347 = vld [vmem:[%s327 + $0x50] sm:$0xf]
      %v348 = vld [vmem:[%s327 + $0x54] sm:$0xff]
      %v349 = vld [vmem:[%s327 + $0x5c] sm:$0xf]
      %v350 = vld [vmem:[%s1] sm:$0xff]
      %v351 = vld [vmem:[%s1 + $0x8] sm:$0xff]
      %v352 = vld [vmem:[%s1 + $0x10] sm:$0xff]
      %v353 = vld [vmem:[%s1 + $0x18] sm:$0xff]
      %v354 = vld [vmem:[%s1 + $0x20] sm:$0xff]
      %v355 = vld [vmem:[%s1 + $0x28] sm:$0xff]
      %v356 = vld [vmem:[%s1 + $0x30] sm:$0xff]
      %v357 = vld [vmem:[%s1 + $0x38] sm:$0xff]
      %v358 = vld [vmem:[%s1 + $0x40] sm:$0xff]
      %v359 = vld [vmem:[%s1 + $0x48] sm:$0xff]
      %v360 = vld [vmem:[%s1 + $0x50] sm:$0xff]
      %v361 = vld [vmem:[%s1 + $0x58] sm:$0xff]
      %v362 = vld [vmem:[%s1 + $0x60] sm:$0xff]
      %v363 = vld [vmem:[%s1 + $0x68] sm:$0xff]
      %v364 = vld [vmem:[%s1 + $0x70] sm:$0xff]
      %v365 = vld [vmem:[%s1 + $0x78] sm:$0xff]
      %v366 = vld [vmem:[%s1 + $0x80] sm:$0xff]
      %v367 = vld [vmem:[%s1 + $0x88] sm:$0xff]
      %v368 = vld [vmem:[%s1 + $0x90] sm:$0xff]
      %v369 = vld [vmem:[%s1 + $0x98] sm:$0xff]
      %v370 = vld [vmem:[%s1 + $0xa0] sm:$0xff]
      %v371 = vld [vmem:[%s1 + $0xa8] sm:$0xff]
      %v372 = vld [vmem:[%s1 + $0xb0] sm:$0xff]
      %v373 = vld [vmem:[%s1 + $0xb8] sm:$0xff]
      %v374 = vld [vmem:[%s1 + $0xc0] sm:$0xff]
      %v375 = vld [vmem:[%s1 + $0xc8] sm:$0xff]
      %v376 = vld [vmem:[%s1 + $0xd0] sm:$0xff]
      %v377 = vld [vmem:[%s1 + $0xd8] sm:$0xff]
      %v378 = vld [vmem:[%s1 + $0xe0] sm:$0xff]
      %v379 = vld [vmem:[%s1 + $0xe8] sm:$0xff]
      %v380 = vld [vmem:[%s1 + $0xf0] sm:$0xff]
      %v381 = vld [vmem:[%s1 + $0xf8] sm:$0xff]
      %v382 = vld [vmem:[%s1 + $0x100] sm:$0xff]
      %v383 = vld [vmem:[%s1 + $0x108] sm:$0xff]
      %v384 = vld [vmem:[%s1 + $0x110] sm:$0xff]
      %v385 = vld [vmem:[%s1 + $0x118] sm:$0xff]
      %v386 = vld [vmem:[%s1 + $0x120] sm:$0xff]
      %v387 = vld [vmem:[%s1 + $0x128] sm:$0xff]
      %v388 = vld [vmem:[%s2] sm:$0x3]
      %v390 = vlaneseq
      %v391 = vshrl.u32 %v390, 7
      %v392 = vsub.s32 0, %v391
      %v393 = vrot.slane %v388, %v392
      %v394 = vlaneseq
      %v395 = vshrl.u32 %v394, 7
      %v396 = vsub.s32 1, %v395
      %v397 = vrot.slane %v388, %v396
      %v416 = vunpack.c.l.b16 %v334
      %v417 = vunpack.c.h.b16 %v334
      %v418 = vunpack.c.l.b16 %v335
      %v419 = vunpack.c.l.b16 %v336
      %v420 = vunpack.c.h.b16 %v336
      %v421 = vunpack.c.l.b16 %v337
      %v422 = vunpack.c.l.b16 %v338
      %v423 = vunpack.c.h.b16 %v338
      %v424 = vunpack.c.l.b16 %v339
      %v425 = vunpack.c.l.b16 %v340
      %v426 = vunpack.c.h.b16 %v340
      %v427 = vunpack.c.l.b16 %v341
      %v428 = vunpack.c.l.b16 %v342
      %v429 = vunpack.c.h.b16 %v342
      %v430 = vunpack.c.l.b16 %v343
      %v431 = vunpack.c.l.b16 %v344
      %v432 = vunpack.c.h.b16 %v344
      %v433 = vunpack.c.l.b16 %v345
      %v434 = vunpack.c.l.b16 %v346
      %v435 = vunpack.c.h.b16 %v346
      %v436 = vunpack.c.l.b16 %v347
      %v437 = vunpack.c.l.b16 %v348
      %v438 = vunpack.c.h.b16 %v348
      %v439 = vunpack.c.l.b16 %v349
      %v440 = vpack.c.b16 %v419, %v416
      %v441 = vpack.c.b16 %v420, %v417
      %v442 = vpack.c.b16 %v421, %v418
      %v443 = vpack.c.b16 %v425, %v422
      %v444 = vpack.c.b16 %v426, %v423
      %v445 = vpack.c.b16 %v427, %v424
      %v446 = vpack.c.b16 %v431, %v428
      %v447 = vpack.c.b16 %v432, %v429
      %v448 = vpack.c.b16 %v433, %v430
      %v449 = vpack.c.b16 %v437, %v434
      %v450 = vpack.c.b16 %v438, %v435
      %v451 = vpack.c.b16 %v439, %v436
      %v498 = vunpack.c.l.b16 %v350
      %v499 = vunpack.c.h.b16 %v350
      %v500 = vunpack.c.l.b16 %v351
      %v501 = vunpack.c.h.b16 %v351
      %v502 = vunpack.c.l.b16 %v352
      %v503 = vunpack.c.h.b16 %v352
      %v504 = vunpack.c.l.b16 %v353
      %v505 = vunpack.c.h.b16 %v353
      %v506 = vunpack.c.l.b16 %v354
      %v507 = vunpack.c.h.b16 %v354
      %v508 = vunpack.c.l.b16 %v355
      %v509 = vunpack.c.h.b16 %v355
      %v510 = vunpack.c.l.b16 %v356
      %v511 = vunpack.c.h.b16 %v356
      %v512 = vunpack.c.l.b16 %v357
      %v513 = vunpack.c.h.b16 %v357
      %v514 = vunpack.c.l.b16 %v358
      %v515 = vunpack.c.h.b16 %v358
      %v516 = vunpack.c.l.b16 %v359
      %v517 = vunpack.c.h.b16 %v359
      %v518 = vunpack.c.l.b16 %v360
      %v519 = vunpack.c.h.b16 %v360
      %v520 = vunpack.c.l.b16 %v361
      %v521 = vunpack.c.h.b16 %v361
      %v522 = vunpack.c.l.b16 %v362
      %v523 = vunpack.c.h.b16 %v362
      %v524 = vunpack.c.l.b16 %v363
      %v525 = vunpack.c.h.b16 %v363
      %v526 = vunpack.c.l.b16 %v364
      %v527 = vunpack.c.h.b16 %v364
      %v528 = vunpack.c.l.b16 %v365
      %v529 = vunpack.c.h.b16 %v365
      %v530 = vunpack.c.l.b16 %v366
      %v531 = vunpack.c.h.b16 %v366
      %v532 = vunpack.c.l.b16 %v367
      %v533 = vunpack.c.h.b16 %v367
      %v534 = vunpack.c.l.b16 %v368
      %v535 = vunpack.c.h.b16 %v368
      %v536 = vunpack.c.l.b16 %v369
      %v537 = vunpack.c.h.b16 %v369
      %v538 = vunpack.c.l.b16 %v370
      %v539 = vunpack.c.h.b16 %v370
      %v540 = vunpack.c.l.b16 %v371
      %v541 = vunpack.c.h.b16 %v371
      %v542 = vunpack.c.l.b16 %v372
      %v543 = vunpack.c.h.b16 %v372
      %v544 = vunpack.c.l.b16 %v373
      %v545 = vunpack.c.h.b16 %v373
      %v546 = vunpack.c.l.b16 %v374
      %v547 = vunpack.c.h.b16 %v374
      %v548 = vunpack.c.l.b16 %v375
      %v549 = vunpack.c.h.b16 %v375
      %v550 = vunpack.c.l.b16 %v376
      %v551 = vunpack.c.h.b16 %v376
      %v552 = vunpack.c.l.b16 %v377
      %v553 = vunpack.c.h.b16 %v377
      %v554 = vunpack.c.l.b16 %v378
      %v555 = vunpack.c.h.b16 %v378
      %v556 = vunpack.c.l.b16 %v379
      %v557 = vunpack.c.h.b16 %v379
      %v558 = vunpack.c.l.b16 %v380
      %v559 = vunpack.c.h.b16 %v380
      %v560 = vunpack.c.l.b16 %v381
      %v561 = vunpack.c.h.b16 %v381
      %v562 = vunpack.c.l.b16 %v382
      %v563 = vunpack.c.h.b16 %v382
      %v564 = vunpack.c.l.b16 %v383
      %v565 = vunpack.c.h.b16 %v383
      %v566 = vunpack.c.l.b16 %v384
      %v567 = vunpack.c.h.b16 %v384
      %v568 = vunpack.c.l.b16 %v385
      %v569 = vunpack.c.h.b16 %v385
      %v570 = vunpack.c.l.b16 %v386
      %v571 = vunpack.c.h.b16 %v386
      %v572 = vunpack.c.l.b16 %v387
      %v573 = vunpack.c.h.b16 %v387
      %v574 = vpack.c.b16 %v500, %v498
      %v575 = vpack.c.b16 %v501, %v499
      %v576 = vpack.c.b16 %v504, %v502
      %v577 = vpack.c.b16 %v505, %v503
      %v578 = vpack.c.b16 %v508, %v506
      %v579 = vpack.c.b16 %v509, %v507
      %v580 = vpack.c.b16 %v512, %v510
      %v581 = vpack.c.b16 %v513, %v511
      %v582 = vpack.c.b16 %v516, %v514
      %v583 = vpack.c.b16 %v517, %v515
      %v584 = vpack.c.b16 %v520, %v518
      %v585 = vpack.c.b16 %v521, %v519
      %v586 = vpack.c.b16 %v524, %v522
      %v587 = vpack.c.b16 %v525, %v523
      %v588 = vpack.c.b16 %v528, %v526
      %v589 = vpack.c.b16 %v529, %v527
      %v590 = vpack.c.b16 %v532, %v530
      %v591 = vpack.c.b16 %v533, %v531
      %v592 = vpack.c.b16 %v536, %v534
      %v593 = vpack.c.b16 %v537, %v535
      %v594 = vpack.c.b16 %v540, %v538
      %v595 = vpack.c.b16 %v541, %v539
      %v596 = vpack.c.b16 %v544, %v542
      %v597 = vpack.c.b16 %v545, %v543
      %v598 = vpack.c.b16 %v548, %v546
      %v599 = vpack.c.b16 %v549, %v547
      %v600 = vpack.c.b16 %v552, %v550
      %v601 = vpack.c.b16 %v553, %v551
      %v602 = vpack.c.b16 %v556, %v554
      %v603 = vpack.c.b16 %v557, %v555
      %v604 = vpack.c.b16 %v560, %v558
      %v605 = vpack.c.b16 %v561, %v559
      %v606 = vpack.c.b16 %v564, %v562
      %v607 = vpack.c.b16 %v565, %v563
      %v608 = vpack.c.b16 %v568, %v566
      %v609 = vpack.c.b16 %v569, %v567
      %v610 = vpack.c.b16 %v572, %v570
      %v611 = vpack.c.b16 %v573, %v571
      %vm650 = vcmask 392192
      %v652 = vsel %vm650, %v442, 0
      %v655 = vsel %vm650, %v445, 0
      %v658 = vsel %vm650, %v448, 0
      %v661 = vsel %vm650, %v451, 0
      %663 = vmatprep.subr.bf16.mxu0 %v575
      %664 = vmatpush1.bf16.msra.mxu0 %v574
      %665 = vmatprep.subr.bf16.mxu0 %v577
      %666 = vmatpush1.bf16.msra.mxu0 %v576
      %667 = vmatprep.subr.bf16.mxu0 %v579
      %668 = vmatpush1.bf16.msra.mxu0 %v578
      %669 = vmatprep.subr.bf16.mxu0 %v581
      %670 = vmatpush1.bf16.msra.mxu0 %v580
      %671 = vmatprep.subr.bf16.mxu0 %v583
      %672 = vmatpush1.bf16.msra.mxu0 %v582
      %673 = vmatprep.subr.bf16.mxu0 %v585
      %674 = vmatpush1.bf16.msra.mxu0 %v584
      %675 = vmatprep.subr.bf16.mxu0 %v587
      %676 = vmatpush1.bf16.msra.mxu0 %v586
      %677 = vmatprep.subr.bf16.mxu0 %v589
      %678 = vmatpush1.bf16.msra.mxu0 %v588
      %679 = vmatprep.subr.bf16.mxu0 %v591
      %680 = vmatpush1.bf16.msra.mxu0 %v590
      %681 = vmatprep.subr.bf16.mxu0 %v593
      %682 = vmatpush1.bf16.msra.mxu0 %v592
      %683 = vmatprep.subr.bf16.mxu0 %v595
      %684 = vmatpush1.bf16.msra.mxu0 %v594
      %685 = vmatprep.subr.bf16.mxu0 %v597
      %686 = vmatpush1.bf16.msra.mxu0 %v596
      %687 = vmatprep.subr.bf16.mxu0 %v599
      %688 = vmatpush1.bf16.msra.mxu0 %v598
      %689 = vmatprep.subr.bf16.mxu0 %v601
      %690 = vmatpush1.bf16.msra.mxu0 %v600
      %691 = vmatprep.subr.bf16.mxu0 %v603
      %692 = vmatpush1.bf16.msra.mxu0 %v602
      %693 = vmatprep.subr.bf16.mxu0 %v605
      %694 = vmatpush1.bf16.msra.mxu0 %v604
      %695 = vmatprep.mubr.bf16.mxu0 %v441
      %696 = vmatmul.mubr.bf16.gmra.mrb[0].mxu0 %v440
      %v697 = vpop.f32.mrb[0].mxu0
      %v698 = vadd.f32 %v393, %v697
      %v699 = vpop.f32.mrb[0].mxu0
      %v700 = vadd.f32 %v397, %v699
      %v701 = vpop.f32.mrb[0].mxu0
      %v702 = vadd.f32 %v393, %v701
      %v703 = vpop.f32.mrb[0].mxu0
      %v704 = vadd.f32 %v397, %v703
      %705 = vmatprep.mubr.bf16.mxu0 %v444
      %706 = vmatmul.mubr.bf16.gmra.mrb[0].mxu0 %v443
      %v707 = vpop.f32.mrb[0].mxu0
      %v708 = vadd.f32 %v393, %v707
      %v709 = vpop.f32.mrb[0].mxu0
      %v710 = vadd.f32 %v397, %v709
      %v711 = vpop.f32.mrb[0].mxu0
      %v712 = vadd.f32 %v393, %v711
      %v713 = vpop.f32.mrb[0].mxu0
      %v714 = vadd.f32 %v397, %v713
      %715 = vmatprep.mubr.bf16.mxu0 %v447
      %716 = vmatmul.mubr.bf16.gmra.mrb[0].mxu0 %v446
      %v717 = vpop.f32.mrb[0].mxu0
      %v718 = vadd.f32 %v393, %v717
      %v719 = vpop.f32.mrb[0].mxu0
      %v720 = vadd.f32 %v397, %v719
      %v721 = vpop.f32.mrb[0].mxu0
      %v722 = vadd.f32 %v393, %v721
      %v723 = vpop.f32.mrb[0].mxu0
      %v724 = vadd.f32 %v397, %v723
      %725 = vmatprep.mubr.bf16.mxu0 %v450
      %726 = vmatmul.mubr.bf16.gmra.mrb[0].mxu0 %v449
      %v727 = vpop.f32.mrb[0].mxu0
      %v728 = vadd.f32 %v393, %v727
      %v729 = vpop.f32.mrb[0].mxu0
      %v730 = vadd.f32 %v397, %v729
      %v731 = vpop.f32.mrb[0].mxu0
      %v732 = vadd.f32 %v393, %v731
      %v733 = vpop.f32.mrb[0].mxu0
      %v734 = vadd.f32 %v397, %v733
      %735 = vdwg.mxu0
      %736 = vmatprep.subr.bf16.mxu0 %v607
      %737 = vmatpush1.bf16.msra.mxu0 %v606
      %738 = vmatprep.subr.bf16.mxu0 %v609
      %739 = vmatpush1.bf16.msra.mxu0 %v608
      %740 = vmatprep.subr.bf16.mxu0 %v611
      %741 = vmatpush1.bf16.msra.mxu0 %v610
      %742 = vmatprep.subr.bf16.mxu0 0
      %743 = vmatpush1.bf16.msra.mxu0 0
      %744 = vmatprep.subr.bf16.mxu0 0
      %745 = vmatpush1.bf16.msra.mxu0 0
      %746 = vmatprep.subr.bf16.mxu0 0
      %747 = vmatpush1.bf16.msra.mxu0 0
      %748 = vmatprep.subr.bf16.mxu0 0
      %749 = vmatpush1.bf16.msra.mxu0 0
      %750 = vmatprep.subr.bf16.mxu0 0
      %751 = vmatpush1.bf16.msra.mxu0 0
      %752 = vmatprep.subr.bf16.mxu0 0
      %753 = vmatpush1.bf16.msra.mxu0 0
      %754 = vmatprep.subr.bf16.mxu0 0
      %755 = vmatpush1.bf16.msra.mxu0 0
      %756 = vmatprep.subr.bf16.mxu0 0
      %757 = vmatpush1.bf16.msra.mxu0 0
      %758 = vmatprep.subr.bf16.mxu0 0
      %759 = vmatpush1.bf16.msra.mxu0 0
      %760 = vmatprep.subr.bf16.mxu0 0
      %761 = vmatpush1.bf16.msra.mxu0 0
      %762 = vmatprep.subr.bf16.mxu0 0
      %763 = vmatpush1.bf16.msra.mxu0 0
      %764 = vmatprep.subr.bf16.mxu0 0
      %765 = vmatpush1.bf16.msra.mxu0 0
      %766 = vmatprep.subr.bf16.mxu0 0
      %767 = vmatpush1.bf16.msra.mxu0 0
      %768 = vmatprep.mubr.bf16.mxu0 0
      %769 = vmatmul.mubr.bf16.gmra.mrb[0].mxu0 %v652
      %v770 = vpop.f32.mrb[0].mxu0
      %v771 = vadd.f32 %v698, %v770
      %v772 = vpop.f32.mrb[0].mxu0
      %v773 = vadd.f32 %v700, %v772
      %v774 = vpop.f32.mrb[0].mxu0
      %v775 = vadd.f32 %v702, %v774
      %v776 = vpop.f32.mrb[0].mxu0
      %v777 = vadd.f32 %v704, %v776
      %778 = vmatprep.mubr.bf16.mxu0 0
      %779 = vmatmul.mubr.bf16.gmra.mrb[0].mxu0 %v655
      %v780 = vpop.f32.mrb[0].mxu0
      %v781 = vadd.f32 %v708, %v780
      %v782 = vpop.f32.mrb[0].mxu0
      %v783 = vadd.f32 %v710, %v782
      %v784 = vpop.f32.mrb[0].mxu0
      %v785 = vadd.f32 %v712, %v784
      %v786 = vpop.f32.mrb[0].mxu0
      %v787 = vadd.f32 %v714, %v786
      %788 = vmatprep.mubr.bf16.mxu0 0
      %789 = vmatmul.mubr.bf16.gmra.mrb[0].mxu0 %v658
      %v790 = vpop.f32.mrb[0].mxu0
      %v791 = vadd.f32 %v718, %v790
      %v792 = vpop.f32.mrb[0].mxu0
      %v793 = vadd.f32 %v720, %v792
      %v794 = vpop.f32.mrb[0].mxu0
      %v795 = vadd.f32 %v722, %v794
      %v796 = vpop.f32.mrb[0].mxu0
      %v797 = vadd.f32 %v724, %v796
      %798 = vmatprep.mubr.bf16.mxu0 0
      %799 = vmatmul.mubr.bf16.gmra.mrb[0].mxu0 %v661
      %v800 = vpop.f32.mrb[0].mxu0
      %v801 = vadd.f32 %v728, %v800
      %v802 = vpop.f32.mrb[0].mxu0
      %v803 = vadd.f32 %v730, %v802
      %v804 = vpop.f32.mrb[0].mxu0
      %v805 = vadd.f32 %v732, %v804
      %v806 = vpop.f32.mrb[0].mxu0
      %v807 = vadd.f32 %v734, %v806
      %808 = vdwg.mxu0
      %v809 = vmax.f32 %v771, 0.0
      %v810 = vmax.f32 %v773, 0.0
      %v811 = vmax.f32 %v775, 0.0
      %v812 = vmax.f32 %v777, 0.0
      %v813 = vmax.f32 %v781, 0.0
      %v814 = vmax.f32 %v783, 0.0
      %v815 = vmax.f32 %v785, 0.0
      %v816 = vmax.f32 %v787, 0.0
      %v817 = vmax.f32 %v791, 0.0
      %v818 = vmax.f32 %v793, 0.0
      %v819 = vmax.f32 %v795, 0.0
      %v820 = vmax.f32 %v797, 0.0
      %v821 = vmax.f32 %v801, 0.0
      %v822 = vmax.f32 %v803, 0.0
      %v823 = vmax.f32 %v805, 0.0
      %v824 = vmax.f32 %v807, 0.0
      %825 = vst [vmem:[#allocation2] sm:$0xff] 0.0
      %vm826 = vcmask 523264
      %827 = vst.msk [vmem:[#allocation2 + $0x8] sm:$0xff] %vm826, 0.0
      %828 = vst [vmem:[#allocation2 + $0x10] sm:$0xff] 0.0
      %829 = vst.msk [vmem:[#allocation2 + $0x18] sm:$0xff] %vm826, 0.0
      %830 = vst [vmem:[#allocation2 + $0x20] sm:$0xff] 0.0
      %831 = vst.msk [vmem:[#allocation2 + $0x28] sm:$0xff] %vm826, 0.0
      %832 = vst [vmem:[#allocation2 + $0x30] sm:$0xff] 0.0
      %833 = vst.msk [vmem:[#allocation2 + $0x38] sm:$0xff] %vm826, 0.0
      %834 = vst [vmem:[#allocation2 + $0x40] sm:$0xff] 0.0
      %835 = vst.msk [vmem:[#allocation2 + $0x48] sm:$0xff] %vm826, 0.0
      %836 = vst [vmem:[#allocation2 + $0x50] sm:$0xff] 0.0
      %837 = vst.msk [vmem:[#allocation2 + $0x58] sm:$0xff] %vm826, 0.0
      %838 = vst [vmem:[#allocation2 + $0x60] sm:$0xff] 0.0
      %839 = vst.msk [vmem:[#allocation2 + $0x68] sm:$0xff] %vm826, 0.0
      %840 = vst [vmem:[#allocation2 + $0x70] sm:$0xff] 0.0
      %841 = vst.msk [vmem:[#allocation2 + $0x78] sm:$0xff] %vm826, 0.0
      %842 = vst [vmem:[#allocation2 + $0x80] sm:$0xff] 0.0
      %843 = vst.msk [vmem:[#allocation2 + $0x88] sm:$0xff] %vm826, 0.0
      %844 = vst [vmem:[#allocation2 + $0x90] sm:$0xff] 0.0
      %845 = vst.msk [vmem:[#allocation2 + $0x98] sm:$0xff] %vm826, 0.0
      %846 = vst [vmem:[#allocation2 + $0xa0] sm:$0x3] 0.0
      %vm847 = vcmask 517120
      %848 = vst.msk [vmem:[#allocation2 + $0xa8] sm:$0x3] %vm847, 0.0
      %vm865 = vcmask 1040384
      %v866 = vrot.slane %v809, 7
      %v867 = vrot.slane %v810, 7
      %v868 = vrot.slane %v811, 7
      %v869 = vsel %vm865, %v866, %v868
      %v870 = vrot.slane %v812, 7
      %v871 = vsel %vm865, %v867, %v870
      %v872 = vrot.slane %v813, 7
      %v873 = vsel %vm865, %v868, %v872
      %v874 = vrot.slane %v814, 7
      %v875 = vsel %vm865, %v870, %v874
      %v876 = vrot.slane %v815, 7
      %v877 = vsel %vm865, %v872, %v876
      %v878 = vrot.slane %v816, 7
      %v879 = vsel %vm865, %v874, %v878
      %v880 = vrot.slane %v817, 7
      %v881 = vsel %vm865, %v876, %v880
      %v882 = vrot.slane %v818, 7
      %v883 = vsel %vm865, %v878, %v882
      %v884 = vrot.slane %v819, 7
      %v885 = vsel %vm865, %v880, %v884
      %v886 = vrot.slane %v820, 7
      %v887 = vsel %vm865, %v882, %v886
      %v888 = vrot.slane %v821, 7
      %v889 = vsel %vm865, %v884, %v888
      %v890 = vrot.slane %v822, 7
      %v891 = vsel %vm865, %v886, %v890
      %v892 = vrot.slane %v823, 7
      %v893 = vsel %vm865, %v888, %v892
      %v894 = vrot.slane %v824, 7
      %v895 = vsel %vm865, %v890, %v894
      %914 = vst [vmem:[#allocation2 + $0x10] sm:$0xfe] %v866
      %vm915 = vcmask 523265
      %916 = vst.msk [vmem:[#allocation2 + $0x18] sm:$0xfe] %vm915, %v867
      %917 = vst [vmem:[#allocation2 + $0x20] sm:$0xff] %v869
      %918 = vst.msk [vmem:[#allocation2 + $0x28] sm:$0xff] %vm826, %v871
      %919 = vst [vmem:[#allocation2 + $0x30] sm:$0xff] %v873
      %920 = vst.msk [vmem:[#allocation2 + $0x38] sm:$0xff] %vm826, %v875
      %921 = vst [vmem:[#allocation2 + $0x40] sm:$0xff] %v877
      %922 = vst.msk [vmem:[#allocation2 + $0x48] sm:$0xff] %vm826, %v879
      %923 = vst [vmem:[#allocation2 + $0x50] sm:$0xff] %v881
      %924 = vst.msk [vmem:[#allocation2 + $0x58] sm:$0xff] %vm826, %v883
      %925 = vst [vmem:[#allocation2 + $0x60] sm:$0xff] %v885
      %926 = vst.msk [vmem:[#allocation2 + $0x68] sm:$0xff] %vm826, %v887
      %927 = vst [vmem:[#allocation2 + $0x70] sm:$0xff] %v889
      %928 = vst.msk [vmem:[#allocation2 + $0x78] sm:$0xff] %vm826, %v891
      %929 = vst [vmem:[#allocation2 + $0x80] sm:$0xff] %v893
      %930 = vst.msk [vmem:[#allocation2 + $0x88] sm:$0xff] %vm826, %v895
      %931 = vst [vmem:[#allocation2 + $0x90] sm:$0x1] %v892
      %vm932 = vcmask 516096
      %933 = vst.msk [vmem:[#allocation2 + $0x98] sm:$0x1] %vm932, %v894
      %v934 = vlaneseq
      %v935 = vshrl.u32 %v934, 7
      %v936 = vadd.s32 %v935, 8
      %v937 = vadd.s32 %v935, 16
      %v938 = vadd.s32 %v935, 24
      %v939 = vadd.s32 %v935, 32
      %v940 = vadd.s32 %v935, 40
      %v941 = vadd.s32 %v935, 48
      %v942 = vadd.s32 %v935, 56
      %vm943 = vcmp.lt.s32.totalorder %v935, 0
      %v944 = vsub.s32 0, %v935
      %v945 = vsel %vm943, %v944, %v935
      %v946 = vshrl.u32 %v945, 3
      %v947 = vand.u32 %v945, 7
      %v948 = vsub.s32 0, %v947
      %v949 = vsel %vm943, %v948, %v947
      %vm950 = vcmp.lt.s32.totalorder %v936, 0
      %v951 = vsub.s32 0, %v936
      %v952 = vsel %vm950, %v951, %v936
      %v953 = vshrl.u32 %v952, 3
      %v954 = vand.u32 %v952, 7
      %v955 = vsub.s32 0, %v954
      %v956 = vsel %vm950, %v955, %v954
      %vm957 = vcmp.lt.s32.totalorder %v937, 0
      %v958 = vsub.s32 0, %v937
      %v959 = vsel %vm957, %v958, %v937
      %v960 = vshrl.u32 %v959, 3
      %v961 = vand.u32 %v959, 7
      %v962 = vsub.s32 0, %v961
      %v963 = vsel %vm957, %v962, %v961
      %vm964 = vcmp.lt.s32.totalorder %v938, 0
      %v965 = vsub.s32 0, %v938
      %v966 = vsel %vm964, %v965, %v938
      %v967 = vshrl.u32 %v966, 3
      %v968 = vand.u32 %v966, 7
      %v969 = vsub.s32 0, %v968
      %v970 = vsel %vm964, %v969, %v968
      %vm971 = vcmp.lt.s32.totalorder %v939, 0
      %v972 = vsub.s32 0, %v939
      %v973 = vsel %vm971, %v972, %v939
      %v974 = vshrl.u32 %v973, 3
      %v975 = vand.u32 %v973, 7
      %v976 = vsub.s32 0, %v975
      %v977 = vsel %vm971, %v976, %v975
      %vm978 = vcmp.lt.s32.totalorder %v940, 0
      %v979 = vsub.s32 0, %v940
      %v980 = vsel %vm978, %v979, %v940
      %v981 = vshrl.u32 %v980, 3
      %v982 = vand.u32 %v980, 7
      %v983 = vsub.s32 0, %v982
      %v984 = vsel %vm978, %v983, %v982
      %vm985 = vcmp.lt.s32.totalorder %v941, 0
      %v986 = vsub.s32 0, %v941
      %v987 = vsel %vm985, %v986, %v941
      %v988 = vshrl.u32 %v987, 3
      %v989 = vand.u32 %v987, 7
      %v990 = vsub.s32 0, %v989
      %v991 = vsel %vm985, %v990, %v989
      %vm992 = vcmp.lt.s32.totalorder %v942, 0
      %v993 = vsub.s32 0, %v942
      %v994 = vsel %vm992, %v993, %v942
      %v995 = vshrl.u32 %v994, 3
      %v996 = vand.u32 %v994, 7
      %v997 = vsub.s32 0, %v996
      %v998 = vsel %vm992, %v997, %v996
      %vm999 = vcmp.ne.s32.totalorder %v949, 0
      %vm1000 = vcmp.ne.s32.totalorder %v956, 0
      %vm1001 = vcmp.ne.s32.totalorder %v963, 0
      %vm1002 = vcmp.ne.s32.totalorder %v970, 0
      %vm1003 = vcmp.ne.s32.totalorder %v977, 0
      %vm1004 = vcmp.ne.s32.totalorder %v984, 0
      %vm1005 = vcmp.ne.s32.totalorder %v991, 0
      %vm1006 = vcmp.ne.s32.totalorder %v998, 0
      %vm1007 = vcmp.lt.s32.totalorder %v949, 0
      %vm1008 = vcmp.lt.s32.totalorder %v956, 0
      %vm1009 = vcmp.lt.s32.totalorder %v963, 0
      %vm1010 = vcmp.lt.s32.totalorder %v970, 0
      %vm1011 = vcmp.lt.s32.totalorder %v977, 0
      %vm1012 = vcmp.lt.s32.totalorder %v984, 0
      %vm1013 = vcmp.lt.s32.totalorder %v991, 0
      %vm1014 = vcmp.lt.s32.totalorder %v998, 0
      %vm1015 = vmand %vm1007, %vm999
      %vm1016 = vmand %vm1008, %vm1000
      %vm1017 = vmand %vm1009, %vm1001
      %vm1018 = vmand %vm1010, %vm1002
      %vm1019 = vmand %vm1011, %vm1003
      %vm1020 = vmand %vm1012, %vm1004
      %vm1021 = vmand %vm1013, %vm1005
      %vm1022 = vmand %vm1014, %vm1006
      %v1023 = vadd.s32 %v949, 8
      %v1024 = vadd.s32 %v956, 8
      %v1025 = vadd.s32 %v963, 8
      %v1026 = vadd.s32 %v970, 8
      %v1027 = vadd.s32 %v977, 8
      %v1028 = vadd.s32 %v984, 8
      %v1029 = vadd.s32 %v991, 8
      %v1030 = vadd.s32 %v998, 8
      %v1031 = vsel %vm1015, %v1023, %v949
      %v1032 = vsel %vm1016, %v1024, %v956
      %v1033 = vsel %vm1017, %v1025, %v963
      %v1034 = vsel %vm1018, %v1026, %v970
      %v1035 = vsel %vm1019, %v1027, %v977
      %v1036 = vsel %vm1020, %v1028, %v984
      %v1037 = vsel %vm1021, %v1029, %v991
      %v1038 = vsel %vm1022, %v1030, %v998
      %v1039 = vld [vmem:[%s4] sm:$0x3]
      %v1041 = vlaneseq
      %v1042 = vshrl.u32 %v1041, 7
      %v1043 = vsub.s32 0, %v1042
      %v1044 = vrot.slane %v1039, %v1043
      %v1045 = vlaneseq
      %v1046 = vshrl.u32 %v1045, 7
      %v1047 = vsub.s32 1, %v1046
      %v1048 = vrot.slane %v1039, %v1047
      %v1051 = vadd.f32 %v1044, 0.0
      %v1052 = vadd.f32 %v1048, 0.0
      %v1053 = vld [vmem:[#allocation2] sm:$0xff]
      %v1054 = vld [vmem:[#allocation2 + $0x8] sm:$0xff]
      %v1055 = vld [vmem:[#allocation2 + $0x10] sm:$0xff]
      %v1056 = vld [vmem:[#allocation2 + $0x18] sm:$0xff]
      %v1057 = vld [vmem:[#allocation2 + $0x20] sm:$0xff]
      %v1058 = vld [vmem:[#allocation2 + $0x28] sm:$0xff]
      %v1059 = vld [vmem:[#allocation2 + $0x30] sm:$0xff]
      %v1060 = vld [vmem:[#allocation2 + $0x38] sm:$0xff]
      %v1061 = vld [vmem:[#allocation2 + $0x40] sm:$0xff]
      %v1062 = vld [vmem:[#allocation2 + $0x48] sm:$0xff]
      %v1063 = vld [vmem:[#allocation2 + $0x50] sm:$0xff]
      %v1064 = vld [vmem:[#allocation2 + $0x58] sm:$0xff]
      %v1065 = vld [vmem:[#allocation2 + $0x60] sm:$0xff]
      %v1066 = vld [vmem:[#allocation2 + $0x68] sm:$0xff]
      %v1067 = vld [vmem:[#allocation2 + $0x70] sm:$0xff]
      %v1068 = vld [vmem:[#allocation2 + $0x78] sm:$0xff]
      %vm1069 = vcmp.ne.s32.totalorder %v1031, 0
      %vm1070 = vcmp.ne.s32.totalorder %v1032, 0
      %vm1071 = vcmp.ne.s32.totalorder %v1033, 0
      %vm1072 = vcmp.ne.s32.totalorder %v1034, 0
      %vm1073 = vcmp.ne.s32.totalorder %v1035, 0
      %vm1074 = vcmp.ne.s32.totalorder %v1036, 0
      %vm1075 = vcmp.ne.s32.totalorder %v1037, 0
      %vm1076 = vcmp.ne.s32.totalorder %v1038, 0
      %v1077 = vsel %vm1069, 1, 0
      %v1078 = vsel %vm1070, 1, 0
      %v1079 = vsel %vm1071, 1, 0
      %v1080 = vsel %vm1072, 1, 0
      %v1081 = vsel %vm1073, 1, 0
      %v1082 = vsel %vm1074, 1, 0
      %v1083 = vsel %vm1075, 1, 0
      %v1084 = vsel %vm1076, 1, 0
      %vm1085 = vcmp.eq.s32.totalorder %v1077, 1
      %vm1086 = vcmp.eq.s32.totalorder %v1078, 1
      %vm1087 = vcmp.eq.s32.totalorder %v1079, 1
      %vm1088 = vcmp.eq.s32.totalorder %v1080, 1
      %vm1089 = vcmp.eq.s32.totalorder %v1081, 1
      %vm1090 = vcmp.eq.s32.totalorder %v1082, 1
      %vm1091 = vcmp.eq.s32.totalorder %v1083, 1
      %vm1092 = vcmp.eq.s32.totalorder %v1084, 1
      %v1093 = vsel %vm1085, %v1053, 0.0
      %v1094 = vsel %vm1085, %v1054, 0.0
      %v1095 = vsel %vm1086, %v1055, 0.0
      %v1096 = vsel %vm1086, %v1056, 0.0
      %v1097 = vsel %vm1087, %v1057, 0.0
      %v1098 = vsel %vm1087, %v1058, 0.0
      %v1099 = vsel %vm1088, %v1059, 0.0
      %v1100 = vsel %vm1088, %v1060, 0.0
      %v1101 = vsel %vm1089, %v1061, 0.0
      %v1102 = vsel %vm1089, %v1062, 0.0
      %v1103 = vsel %vm1090, %v1063, 0.0
      %v1104 = vsel %vm1090, %v1064, 0.0
      %v1105 = vsel %vm1091, %v1065, 0.0
      %v1106 = vsel %vm1091, %v1066, 0.0
      %v1107 = vsel %vm1092, %v1067, 0.0
      %v1108 = vsel %vm1092, %v1068, 0.0
      %v1109 = vpack.c.bf16 %v1095, %v1093
      %v1110 = vpack.c.bf16 %v1096, %v1094
      %v1111 = vpack.c.bf16 %v1099, %v1097
      %v1112 = vpack.c.bf16 %v1100, %v1098
      %v1113 = vpack.c.bf16 %v1103, %v1101
      %v1114 = vpack.c.bf16 %v1104, %v1102
      %v1115 = vpack.c.bf16 %v1107, %v1105
      %v1116 = vpack.c.bf16 %v1108, %v1106
      %v1117 = vld [vmem:[%s3] sm:$0xff]
      %v1118 = vld [vmem:[%s3 + $0x8] sm:$0xff]
      %v1119 = vld [vmem:[%s3 + $0x10] sm:$0xff]
      %v1120 = vld [vmem:[%s3 + $0x18] sm:$0xff]
      %v1121 = vld [vmem:[%s3 + $0x20] sm:$0xff]
      %v1122 = vld [vmem:[%s3 + $0x28] sm:$0xff]
      %v1123 = vld [vmem:[%s3 + $0x30] sm:$0xff]
      %v1124 = vld [vmem:[%s3 + $0x38] sm:$0xff]
      %v1125 = vld [vmem:[%s3 + $0x40] sm:$0xff]
      %v1126 = vld [vmem:[%s3 + $0x48] sm:$0xff]
      %v1127 = vld [vmem:[%s3 + $0x50] sm:$0xff]
      %v1128 = vld [vmem:[%s3 + $0x58] sm:$0xff]
      %v1129 = vld [vmem:[%s3 + $0x60] sm:$0xff]
      %v1130 = vld [vmem:[%s3 + $0x68] sm:$0xff]
      %v1131 = vld [vmem:[%s3 + $0x70] sm:$0xff]
      %v1132 = vld [vmem:[%s3 + $0x78] sm:$0xff]
      %v1133 = vld [vmem:[%s3 + $0x80] sm:$0xff]
      %v1134 = vld [vmem:[%s3 + $0x88] sm:$0xff]
      %v1135 = vld [vmem:[%s3 + $0x90] sm:$0xff]
      %v1136 = vld [vmem:[%s3 + $0x98] sm:$0xff]
      %v1137 = vld [vmem:[%s3 + $0xa0] sm:$0xff]
      %v1138 = vld [vmem:[%s3 + $0xa8] sm:$0xff]
      %v1139 = vld [vmem:[%s3 + $0xb0] sm:$0xff]
      %v1140 = vld [vmem:[%s3 + $0xb8] sm:$0xff]
      %v1165 = vunpack.c.l.b16 %v1117
      %v1166 = vunpack.c.h.b16 %v1117
      %v1167 = vunpack.c.l.b16 %v1118
      %v1168 = vunpack.c.h.b16 %v1118
      %v1169 = vunpack.c.l.b16 %v1119
      %v1170 = vunpack.c.h.b16 %v1119
      %v1171 = vunpack.c.l.b16 %v1120
      %v1172 = vunpack.c.h.b16 %v1120
      %v1173 = vunpack.c.l.b16 %v1121
      %v1174 = vunpack.c.h.b16 %v1121
      %v1175 = vunpack.c.l.b16 %v1122
      %v1176 = vunpack.c.h.b16 %v1122
      %v1177 = vunpack.c.l.b16 %v1123
      %v1178 = vunpack.c.h.b16 %v1123
      %v1179 = vunpack.c.l.b16 %v1124
      %v1180 = vunpack.c.h.b16 %v1124
      %v1181 = vunpack.c.l.b16 %v1125
      %v1182 = vunpack.c.h.b16 %v1125
      %v1183 = vunpack.c.l.b16 %v1126
      %v1184 = vunpack.c.h.b16 %v1126
      %v1185 = vunpack.c.l.b16 %v1127
      %v1186 = vunpack.c.h.b16 %v1127
      %v1187 = vunpack.c.l.b16 %v1128
      %v1188 = vunpack.c.h.b16 %v1128
      %v1189 = vunpack.c.l.b16 %v1129
      %v1190 = vunpack.c.h.b16 %v1129
      %v1191 = vunpack.c.l.b16 %v1130
      %v1192 = vunpack.c.h.b16 %v1130
      %v1193 = vunpack.c.l.b16 %v1131
      %v1194 = vunpack.c.h.b16 %v1131
      %v1195 = vunpack.c.l.b16 %v1132
      %v1196 = vunpack.c.h.b16 %v1132
      %v1197 = vunpack.c.l.b16 %v1133
      %v1198 = vunpack.c.h.b16 %v1133
      %v1199 = vunpack.c.l.b16 %v1134
      %v1200 = vunpack.c.h.b16 %v1134
      %v1201 = vunpack.c.l.b16 %v1135
      %v1202 = vunpack.c.h.b16 %v1135
      %v1203 = vunpack.c.l.b16 %v1136
      %v1204 = vunpack.c.h.b16 %v1136
      %v1205 = vunpack.c.l.b16 %v1137
      %v1206 = vunpack.c.h.b16 %v1137
      %v1207 = vunpack.c.l.b16 %v1138
      %v1208 = vunpack.c.h.b16 %v1138
      %v1209 = vunpack.c.l.b16 %v1139
      %v1210 = vunpack.c.h.b16 %v1139
      %v1211 = vunpack.c.l.b16 %v1140
      %v1212 = vunpack.c.h.b16 %v1140
      %v1213 = vpack.c.b16 %v1167, %v1165
      %v1214 = vpack.c.b16 %v1168, %v1166
      %v1215 = vpack.c.b16 %v1171, %v1169
      %v1216 = vpack.c.b16 %v1172, %v1170
      %v1217 = vpack.c.b16 %v1175, %v1173
      %v1218 = vpack.c.b16 %v1176, %v1174
      %v1219 = vpack.c.b16 %v1179, %v1177
      %v1220 = vpack.c.b16 %v1180, %v1178
      %v1221 = vpack.c.b16 %v1183, %v1181
      %v1222 = vpack.c.b16 %v1184, %v1182
      %v1223 = vpack.c.b16 %v1187, %v1185
      %v1224 = vpack.c.b16 %v1188, %v1186
      %v1225 = vpack.c.b16 %v1191, %v1189
      %v1226 = vpack.c.b16 %v1192, %v1190
      %v1227 = vpack.c.b16 %v1195, %v1193
      %v1228 = vpack.c.b16 %v1196, %v1194
      %v1229 = vpack.c.b16 %v1199, %v1197
      %v1230 = vpack.c.b16 %v1200, %v1198
      %v1231 = vpack.c.b16 %v1203, %v1201
      %v1232 = vpack.c.b16 %v1204, %v1202
      %v1233 = vpack.c.b16 %v1207, %v1205
      %v1234 = vpack.c.b16 %v1208, %v1206
      %v1235 = vpack.c.b16 %v1211, %v1209
      %v1236 = vpack.c.b16 %v1212, %v1210
      %v1262 = vsel %vm826, %v1110, 0
      %v1265 = vsel %vm826, %v1112, 0
      %v1268 = vsel %vm826, %v1114, 0
      %v1271 = vsel %vm826, %v1116, 0
      %1273 = vmatprep.subr.bf16.mxu0 %v1214
      %1274 = vmatpush1.bf16.msra.mxu0 %v1213
      %1275 = vmatprep.subr.bf16.mxu0 %v1216
      %1276 = vmatpush1.bf16.msra.mxu0 %v1215
      %1277 = vmatprep.subr.bf16.mxu0 %v1218
      %1278 = vmatpush1.bf16.msra.mxu0 %v1217
      %1279 = vmatprep.subr.bf16.mxu0 %v1220
      %1280 = vmatpush1.bf16.msra.mxu0 %v1219
      %1281 = vmatprep.subr.bf16.mxu0 %v1222
      %1282 = vmatpush1.bf16.msra.mxu0 %v1221
      %1283 = vmatprep.subr.bf16.mxu0 %v1224
      %1284 = vmatpush1.bf16.msra.mxu0 %v1223
      %1285 = vmatprep.subr.bf16.mxu0 %v1226
      %1286 = vmatpush1.bf16.msra.mxu0 %v1225
      %1287 = vmatprep.subr.bf16.mxu0 %v1228
      %1288 = vmatpush1.bf16.msra.mxu0 %v1227
      %1289 = vmatprep.subr.bf16.mxu0 %v1230
      %1290 = vmatpush1.bf16.msra.mxu0 %v1229
      %1291 = vmatprep.subr.bf16.mxu0 %v1232
      %1292 = vmatpush1.bf16.msra.mxu0 %v1231
      %1293 = vmatprep.subr.bf16.mxu0 %v1234
      %1294 = vmatpush1.bf16.msra.mxu0 %v1233
      %1295 = vmatprep.subr.bf16.mxu0 %v1236
      %1296 = vmatpush1.bf16.msra.mxu0 %v1235
      %1297 = vmatprep.subr.bf16.mxu0 0
      %1298 = vmatpush1.bf16.msra.mxu0 0
      %1299 = vmatprep.subr.bf16.mxu0 0
      %1300 = vmatpush1.bf16.msra.mxu0 0
      %1301 = vmatprep.subr.bf16.mxu0 0
      %1302 = vmatpush1.bf16.msra.mxu0 0
      %1303 = vmatprep.subr.bf16.mxu0 0
      %1304 = vmatpush1.bf16.msra.mxu0 0
      %1305 = vmatprep.mubr.bf16.mxu0 %v1262
      %1306 = vmatmul.mubr.bf16.gmra.mrb[0].mxu0 %v1109
      %v1307 = vpop.f32.mrb[0].mxu0
      %v1308 = vadd.f32 0.0, %v1307
      %v1309 = vpop.f32.mrb[0].mxu0
      %v1310 = vadd.f32 0.0, %v1309
      %v1311 = vpop.f32.mrb[0].mxu0
      %v1312 = vadd.f32 0.0, %v1311
      %v1313 = vpop.f32.mrb[0].mxu0
      %v1314 = vadd.f32 0.0, %v1313
      %1315 = vmatprep.mubr.bf16.mxu0 %v1265
      %1316 = vmatmul.mubr.bf16.gmra.mrb[0].mxu0 %v1111
      %v1317 = vpop.f32.mrb[0].mxu0
      %v1318 = vadd.f32 0.0, %v1317
      %v1319 = vpop.f32.mrb[0].mxu0
      %v1320 = vadd.f32 0.0, %v1319
      %v1321 = vpop.f32.mrb[0].mxu0
      %v1322 = vadd.f32 0.0, %v1321
      %v1323 = vpop.f32.mrb[0].mxu0
      %v1324 = vadd.f32 0.0, %v1323
      %1325 = vmatprep.mubr.bf16.mxu0 %v1268
      %1326 = vmatmul.mubr.bf16.gmra.mrb[0].mxu0 %v1113
      %v1327 = vpop.f32.mrb[0].mxu0
      %v1328 = vadd.f32 0.0, %v1327
      %v1329 = vpop.f32.mrb[0].mxu0
      %v1330 = vadd.f32 0.0, %v1329
      %v1331 = vpop.f32.mrb[0].mxu0
      %v1332 = vadd.f32 0.0, %v1331
      %v1333 = vpop.f32.mrb[0].mxu0
      %v1334 = vadd.f32 0.0, %v1333
      %1335 = vmatprep.mubr.bf16.mxu0 %v1271
      %1336 = vmatmul.mubr.bf16.gmra.mrb[0].mxu0 %v1115
      %v1337 = vpop.f32.mrb[0].mxu0
      %v1338 = vadd.f32 0.0, %v1337
      %v1339 = vpop.f32.mrb[0].mxu0
      %v1340 = vadd.f32 0.0, %v1339
      %v1341 = vpop.f32.mrb[0].mxu0
      %v1342 = vadd.f32 0.0, %v1341
      %v1343 = vpop.f32.mrb[0].mxu0
      %v1344 = vadd.f32 0.0, %v1343
      %1345 = vdwg.mxu0
      %v1346 = vadd.f32 %v1051, %v1308
      %v1347 = vadd.f32 %v1052, %v1310
      %v1348 = vadd.f32 %v1051, %v1312
      %v1349 = vadd.f32 %v1052, %v1314
      %v1350 = vadd.f32 %v1051, %v1318
      %v1351 = vadd.f32 %v1052, %v1320
      %v1352 = vadd.f32 %v1051, %v1322
      %v1353 = vadd.f32 %v1052, %v1324
      %v1354 = vadd.f32 %v1051, %v1328
      %v1355 = vadd.f32 %v1052, %v1330
      %v1356 = vadd.f32 %v1051, %v1332
      %v1357 = vadd.f32 %v1052, %v1334
      %v1358 = vadd.f32 %v1051, %v1338
      %v1359 = vadd.f32 %v1052, %v1340
      %v1360 = vadd.f32 %v1051, %v1342
      %v1361 = vadd.f32 %v1052, %v1344
      %v1362 = vld [vmem:[#allocation2] sm:$0xfe]
      %v1363 = vld [vmem:[#allocation2 + $0x8] sm:$0xfe]
      %v1364 = vld [vmem:[#allocation2 + $0x10] sm:$0xff]
      %v1365 = vld [vmem:[#allocation2 + $0x18] sm:$0xff]
      %v1366 = vld [vmem:[#allocation2 + $0x20] sm:$0xff]
      %v1367 = vld [vmem:[#allocation2 + $0x28] sm:$0xff]
      %v1368 = vld [vmem:[#allocation2 + $0x30] sm:$0xff]
      %v1369 = vld [vmem:[#allocation2 + $0x38] sm:$0xff]
      %v1370 = vld [vmem:[#allocation2 + $0x40] sm:$0xff]
      %v1371 = vld [vmem:[#allocation2 + $0x48] sm:$0xff]
      %v1372 = vld [vmem:[#allocation2 + $0x50] sm:$0xff]
      %v1373 = vld [vmem:[#allocation2 + $0x58] sm:$0xff]
      %v1374 = vld [vmem:[#allocation2 + $0x60] sm:$0xff]
      %v1375 = vld [vmem:[#allocation2 + $0x68] sm:$0xff]
      %v1376 = vld [vmem:[#allocation2 + $0x70] sm:$0xff]
      %v1377 = vld [vmem:[#allocation2 + $0x78] sm:$0xff]
      %v1378 = vld [vmem:[#allocation2 + $0x80] sm:$0x1]
      %v1379 = vld [vmem:[#allocation2 + $0x88] sm:$0x1]
      %v1380 = vpack.c.bf16 %v1364, %v1362
      %v1381 = vpack.c.bf16 %v1365, %v1363
      %v1382 = vpack.c.bf16 %v1368, %v1366
      %v1383 = vpack.c.bf16 %v1369, %v1367
      %v1384 = vpack.c.bf16 %v1372, %v1370
      %v1385 = vpack.c.bf16 %v1373, %v1371
      %v1386 = vpack.c.bf16 %v1376, %v1374
      %v1387 = vpack.c.bf16 %v1377, %v1375
      %v1388 = vpack.c.bf16 %v1378, %v1378
      %v1389 = vpack.c.bf16 %v1379, %v1379
      %s1390 = scalar_lea.vmem %s3, 192
      %v1391 = vld [vmem:[%s1390] sm:$0xff]
      %v1392 = vld [vmem:[%s1390 + $0x8] sm:$0xff]
      %v1393 = vld [vmem:[%s1390 + $0x10] sm:$0xff]
      %v1394 = vld [vmem:[%s1390 + $0x18] sm:$0xff]
      %v1395 = vld [vmem:[%s1390 + $0x20] sm:$0xff]
      %v1396 = vld [vmem:[%s1390 + $0x28] sm:$0xff]
      %v1397 = vld [vmem:[%s1390 + $0x30] sm:$0xff]
      %v1398 = vld [vmem:[%s1390 + $0x38] sm:$0xff]
      %v1399 = vld [vmem:[%s1390 + $0x40] sm:$0xff]
      %v1400 = vld [vmem:[%s1390 + $0x48] sm:$0xff]
      %v1401 = vld [vmem:[%s1390 + $0x50] sm:$0xff]
      %v1402 = vld [vmem:[%s1390 + $0x58] sm:$0xff]
      %v1403 = vld [vmem:[%s1390 + $0x60] sm:$0xff]
      %v1404 = vld [vmem:[%s1390 + $0x68] sm:$0xff]
      %v1405 = vld [vmem:[%s1390 + $0x70] sm:$0xff]
      %v1406 = vld [vmem:[%s1390 + $0x78] sm:$0xff]
      %v1407 = vld [vmem:[%s1390 + $0x80] sm:$0xff]
      %v1408 = vld [vmem:[%s1390 + $0x88] sm:$0xff]
      %v1409 = vld [vmem:[%s1390 + $0x90] sm:$0xff]
      %v1410 = vld [vmem:[%s1390 + $0x98] sm:$0xff]
      %v1411 = vld [vmem:[%s1390 + $0xa0] sm:$0xff]
      %v1412 = vld [vmem:[%s1390 + $0xa8] sm:$0xff]
      %v1413 = vld [vmem:[%s1390 + $0xb0] sm:$0xff]
      %v1414 = vld [vmem:[%s1390 + $0xb8] sm:$0xff]
      %vm1415 = vsmask.f32 7424
      %v1417 = vshrl.u32 %v1380, 16
      %v1419 = vshll.u32 %v1380, 16
      %v1421 = vrot.slane %v1419, 1
      %v1422 = vor.u32 %v1417, %v1421
      %v1424 = vshll.u32 %v1382, 16
      %v1426 = vrot.slane %v1424, 1
      %v1427 = vsel %vm1415, %v1422, %v1426
      %v1429 = vshrl.u32 %v1381, 16
      %v1431 = vshll.u32 %v1381, 16
      %v1433 = vrot.slane %v1431, 1
      %v1434 = vor.u32 %v1429, %v1433
      %v1436 = vshll.u32 %v1383, 16
      %v1438 = vrot.slane %v1436, 1
      %v1439 = vsel %vm1415, %v1434, %v1438
      %v1440 = vshrl.u32 %v1382, 16
      %v1442 = vor.u32 %v1440, %v1426
      %v1444 = vshll.u32 %v1384, 16
      %v1446 = vrot.slane %v1444, 1
      %v1447 = vsel %vm1415, %v1442, %v1446
      %v1448 = vshrl.u32 %v1383, 16
      %v1450 = vor.u32 %v1448, %v1438
      %v1452 = vshll.u32 %v1385, 16
      %v1454 = vrot.slane %v1452, 1
      %v1455 = vsel %vm1415, %v1450, %v1454
      %v1456 = vshrl.u32 %v1384, 16
      %v1458 = vor.u32 %v1456, %v1446
      %v1460 = vshll.u32 %v1386, 16
      %v1462 = vrot.slane %v1460, 1
      %v1463 = vsel %vm1415, %v1458, %v1462
      %v1464 = vshrl.u32 %v1385, 16
      %v1466 = vor.u32 %v1464, %v1454
      %v1468 = vshll.u32 %v1387, 16
      %v1470 = vrot.slane %v1468, 1
      %v1471 = vsel %vm1415, %v1466, %v1470
      %v1472 = vshrl.u32 %v1386, 16
      %v1474 = vor.u32 %v1472, %v1462
      %v1476 = vshll.u32 %v1388, 16
      %v1478 = vrot.slane %v1476, 1
      %v1479 = vsel %vm1415, %v1474, %v1478
      %v1480 = vshrl.u32 %v1387, 16
      %v1482 = vor.u32 %v1480, %v1470
      %v1484 = vshll.u32 %v1389, 16
      %v1486 = vrot.slane %v1484, 1
      %v1487 = vsel %vm1415, %v1482, %v1486
      %v1516 = vunpack.c.l.b16 %v1391
      %v1517 = vunpack.c.h.b16 %v1391
      %v1518 = vunpack.c.l.b16 %v1392
      %v1519 = vunpack.c.h.b16 %v1392
      %v1520 = vunpack.c.l.b16 %v1393
      %v1521 = vunpack.c.h.b16 %v1393
      %v1522 = vunpack.c.l.b16 %v1394
      %v1523 = vunpack.c.h.b16 %v1394
      %v1524 = vunpack.c.l.b16 %v1395
      %v1525 = vunpack.c.h.b16 %v1395
      %v1526 = vunpack.c.l.b16 %v1396
      %v1527 = vunpack.c.h.b16 %v1396
      %v1528 = vunpack.c.l.b16 %v1397
      %v1529 = vunpack.c.h.b16 %v1397
      %v1530 = vunpack.c.l.b16 %v1398
      %v1531 = vunpack.c.h.b16 %v1398
      %v1532 = vunpack.c.l.b16 %v1399
      %v1533 = vunpack.c.h.b16 %v1399
      %v1534 = vunpack.c.l.b16 %v1400
      %v1535 = vunpack.c.h.b16 %v1400
      %v1536 = vunpack.c.l.b16 %v1401
      %v1537 = vunpack.c.h.b16 %v1401
      %v1538 = vunpack.c.l.b16 %v1402
      %v1539 = vunpack.c.h.b16 %v1402
      %v1540 = vunpack.c.l.b16 %v1403
      %v1541 = vunpack.c.h.b16 %v1403
      %v1542 = vunpack.c.l.b16 %v1404
      %v1543 = vunpack.c.h.b16 %v1404
      %v1544 = vunpack.c.l.b16 %v1405
      %v1545 = vunpack.c.h.b16 %v1405
      %v1546 = vunpack.c.l.b16 %v1406
      %v1547 = vunpack.c.h.b16 %v1406
      %v1548 = vunpack.c.l.b16 %v1407
      %v1549 = vunpack.c.h.b16 %v1407
      %v1550 = vunpack.c.l.b16 %v1408
      %v1551 = vunpack.c.h.b16 %v1408
      %v1552 = vunpack.c.l.b16 %v1409
      %v1553 = vunpack.c.h.b16 %v1409
      %v1554 = vunpack.c.l.b16 %v1410
      %v1555 = vunpack.c.h.b16 %v1410
      %v1556 = vunpack.c.l.b16 %v1411
      %v1557 = vunpack.c.h.b16 %v1411
      %v1558 = vunpack.c.l.b16 %v1412
      %v1559 = vunpack.c.h.b16 %v1412
      %v1560 = vunpack.c.l.b16 %v1413
      %v1561 = vunpack.c.h.b16 %v1413
      %v1562 = vunpack.c.l.b16 %v1414
      %v1563 = vunpack.c.h.b16 %v1414
      %v1564 = vpack.c.b16 %v1518, %v1516
      %v1565 = vpack.c.b16 %v1519, %v1517
      %v1566 = vpack.c.b16 %v1522, %v1520
      %v1567 = vpack.c.b16 %v1523, %v1521
      %v1568 = vpack.c.b16 %v1526, %v1524
      %v1569 = vpack.c.b16 %v1527, %v1525
      %v1570 = vpack.c.b16 %v1530, %v1528
      %v1571 = vpack.c.b16 %v1531, %v1529
      %v1572 = vpack.c.b16 %v1534, %v1532
      %v1573 = vpack.c.b16 %v1535, %v1533
      %v1574 = vpack.c.b16 %v1538, %v1536
      %v1575 = vpack.c.b16 %v1539, %v1537
      %v1576 = vpack.c.b16 %v1542, %v1540
      %v1577 = vpack.c.b16 %v1543, %v1541
      %v1578 = vpack.c.b16 %v1546, %v1544
      %v1579 = vpack.c.b16 %v1547, %v1545
      %v1580 = vpack.c.b16 %v1550, %v1548
      %v1581 = vpack.c.b16 %v1551, %v1549
      %v1582 = vpack.c.b16 %v1554, %v1552
      %v1583 = vpack.c.b16 %v1555, %v1553
      %v1584 = vpack.c.b16 %v1558, %v1556
      %v1585 = vpack.c.b16 %v1559, %v1557
      %v1586 = vpack.c.b16 %v1562, %v1560
      %v1587 = vpack.c.b16 %v1563, %v1561
      %v1613 = vsel %vm826, %v1439, 0
      %v1616 = vsel %vm826, %v1455, 0
      %v1619 = vsel %vm826, %v1471, 0
      %v1622 = vsel %vm826, %v1487, 0
      %1624 = vmatprep.subr.bf16.mxu0 %v1565
      %1625 = vmatpush1.bf16.msra.mxu0 %v1564
      %1626 = vmatprep.subr.bf16.mxu0 %v1567
      %1627 = vmatpush1.bf16.msra.mxu0 %v1566
      %1628 = vmatprep.subr.bf16.mxu0 %v1569
      %1629 = vmatpush1.bf16.msra.mxu0 %v1568
      %1630 = vmatprep.subr.bf16.mxu0 %v1571
      %1631 = vmatpush1.bf16.msra.mxu0 %v1570
      %1632 = vmatprep.subr.bf16.mxu0 %v1573
      %1633 = vmatpush1.bf16.msra.mxu0 %v1572
      %1634 = vmatprep.subr.bf16.mxu0 %v1575
      %1635 = vmatpush1.bf16.msra.mxu0 %v1574
      %1636 = vmatprep.subr.bf16.mxu0 %v1577
      %1637 = vmatpush1.bf16.msra.mxu0 %v1576
      %1638 = vmatprep.subr.bf16.mxu0 %v1579
      %1639 = vmatpush1.bf16.msra.mxu0 %v1578
      %1640 = vmatprep.subr.bf16.mxu0 %v1581
      %1641 = vmatpush1.bf16.msra.mxu0 %v1580
      %1642 = vmatprep.subr.bf16.mxu0 %v1583
      %1643 = vmatpush1.bf16.msra.mxu0 %v1582
      %1644 = vmatprep.subr.bf16.mxu0 %v1585
      %1645 = vmatpush1.bf16.msra.mxu0 %v1584
      %1646 = vmatprep.subr.bf16.mxu0 %v1587
      %1647 = vmatpush1.bf16.msra.mxu0 %v1586
      %1648 = vmatprep.subr.bf16.mxu0 0
      %1649 = vmatpush1.bf16.msra.mxu0 0
      %1650 = vmatprep.subr.bf16.mxu0 0
      %1651 = vmatpush1.bf16.msra.mxu0 0
      %1652 = vmatprep.subr.bf16.mxu0 0
      %1653 = vmatpush1.bf16.msra.mxu0 0
      %1654 = vmatprep.subr.bf16.mxu0 0
      %1655 = vmatpush1.bf16.msra.mxu0 0
      %1656 = vmatprep.mubr.bf16.mxu0 %v1613
      %1657 = vmatmul.mubr.bf16.gmra.mrb[0].mxu0 %v1427
      %v1658 = vpop.f32.mrb[0].mxu0
      %v1659 = vadd.f32 0.0, %v1658
      %v1660 = vpop.f32.mrb[0].mxu0
      %v1661 = vadd.f32 0.0, %v1660
      %v1662 = vpop.f32.mrb[0].mxu0
      %v1663 = vadd.f32 0.0, %v1662
      %v1664 = vpop.f32.mrb[0].mxu0
      %v1665 = vadd.f32 0.0, %v1664
      %1666 = vmatprep.mubr.bf16.mxu0 %v1616
      %1667 = vmatmul.mubr.bf16.gmra.mrb[0].mxu0 %v1447
      %v1668 = vpop.f32.mrb[0].mxu0
      %v1669 = vadd.f32 0.0, %v1668
      %v1670 = vpop.f32.mrb[0].mxu0
      %v1671 = vadd.f32 0.0, %v1670
      %v1672 = vpop.f32.mrb[0].mxu0
      %v1673 = vadd.f32 0.0, %v1672
      %v1674 = vpop.f32.mrb[0].mxu0
      %v1675 = vadd.f32 0.0, %v1674
      %1676 = vmatprep.mubr.bf16.mxu0 %v1619
      %1677 = vmatmul.mubr.bf16.gmra.mrb[0].mxu0 %v1463
      %v1678 = vpop.f32.mrb[0].mxu0
      %v1679 = vadd.f32 0.0, %v1678
      %v1680 = vpop.f32.mrb[0].mxu0
      %v1681 = vadd.f32 0.0, %v1680
      %v1682 = vpop.f32.mrb[0].mxu0
      %v1683 = vadd.f32 0.0, %v1682
      %v1684 = vpop.f32.mrb[0].mxu0
      %v1685 = vadd.f32 0.0, %v1684
      %1686 = vmatprep.mubr.bf16.mxu0 %v1622
      %1687 = vmatmul.mubr.bf16.gmra.mrb[0].mxu0 %v1479
      %v1688 = vpop.f32.mrb[0].mxu0
      %v1689 = vadd.f32 0.0, %v1688
      %v1690 = vpop.f32.mrb[0].mxu0
      %v1691 = vadd.f32 0.0, %v1690
      %v1692 = vpop.f32.mrb[0].mxu0
      %v1693 = vadd.f32 0.0, %v1692
      %v1694 = vpop.f32.mrb[0].mxu0
      %v1695 = vadd.f32 0.0, %v1694
      %1696 = vdwg.mxu0
      %v1697 = vadd.f32 %v1346, %v1659
      %v1698 = vadd.f32 %v1347, %v1661
      %v1699 = vadd.f32 %v1348, %v1663
      %v1700 = vadd.f32 %v1349, %v1665
      %v1701 = vadd.f32 %v1350, %v1669
      %v1702 = vadd.f32 %v1351, %v1671
      %v1703 = vadd.f32 %v1352, %v1673
      %v1704 = vadd.f32 %v1353, %v1675
      %v1705 = vadd.f32 %v1354, %v1679
      %v1706 = vadd.f32 %v1355, %v1681
      %v1707 = vadd.f32 %v1356, %v1683
      %v1708 = vadd.f32 %v1357, %v1685
      %v1709 = vadd.f32 %v1358, %v1689
      %v1710 = vadd.f32 %v1359, %v1691
      %v1711 = vadd.f32 %v1360, %v1693
      %v1712 = vadd.f32 %v1361, %v1695
      %v1713 = vld [vmem:[#allocation2] sm:$0xfc]
      %v1714 = vld [vmem:[#allocation2 + $0x8] sm:$0xfc]
      %v1715 = vld [vmem:[#allocation2 + $0x80] sm:$0x3]
      %v1716 = vld [vmem:[#allocation2 + $0x88] sm:$0x3]
      %vm1717 = vcmp.ne.s32.totalorder %v1031, 7
      %vm1718 = vcmp.ne.s32.totalorder %v1032, 7
      %vm1719 = vcmp.ne.s32.totalorder %v1033, 7
      %vm1720 = vcmp.ne.s32.totalorder %v1034, 7
      %vm1721 = vcmp.ne.s32.totalorder %v1035, 7
      %vm1722 = vcmp.ne.s32.totalorder %v1036, 7
      %vm1723 = vcmp.ne.s32.totalorder %v1037, 7
      %vm1724 = vcmp.ne.s32.totalorder %v1038, 7
      %v1725 = vsel %vm1717, 1, 0
      %v1726 = vsel %vm1718, 1, 0
      %v1727 = vsel %vm1719, 1, 0
      %v1728 = vsel %vm1720, 1, 0
      %v1729 = vsel %vm1721, 1, 0
      %v1730 = vsel %vm1722, 1, 0
      %v1731 = vsel %vm1723, 1, 0
      %v1732 = vsel %vm1724, 1, 0
      %vm1733 = vcmp.eq.s32.totalorder %v1725, 1
      %vm1734 = vcmp.eq.s32.totalorder %v1726, 1
      %vm1735 = vcmp.eq.s32.totalorder %v1727, 1
      %vm1736 = vcmp.eq.s32.totalorder %v1728, 1
      %vm1737 = vcmp.eq.s32.totalorder %v1729, 1
      %vm1738 = vcmp.eq.s32.totalorder %v1730, 1
      %vm1739 = vcmp.eq.s32.totalorder %v1731, 1
      %vm1740 = vcmp.eq.s32.totalorder %v1732, 1
      %vm1759 = vcmask 1045504
      %v1760 = vrot.slane %v1713, 2
      %v1761 = vrot.slane %v1364, 2
      %v1762 = vsel %vm1759, %v1760, %v1761
      %v1763 = vrot.slane %v1714, 2
      %v1764 = vrot.slane %v1365, 2
      %v1765 = vsel %vm1759, %v1763, %v1764
      %v1766 = vrot.slane %v1366, 2
      %v1767 = vsel %vm1759, %v1761, %v1766
      %v1768 = vrot.slane %v1367, 2
      %v1769 = vsel %vm1759, %v1764, %v1768
      %v1770 = vrot.slane %v1368, 2
      %v1771 = vsel %vm1759, %v1766, %v1770
      %v1772 = vrot.slane %v1369, 2
      %v1773 = vsel %vm1759, %v1768, %v1772
      %v1774 = vrot.slane %v1370, 2
      %v1775 = vsel %vm1759, %v1770, %v1774
      %v1776 = vrot.slane %v1371, 2
      %v1777 = vsel %vm1759, %v1772, %v1776
      %v1778 = vrot.slane %v1372, 2
      %v1779 = vsel %vm1759, %v1774, %v1778
      %v1780 = vrot.slane %v1373, 2
      %v1781 = vsel %vm1759, %v1776, %v1780
      %v1782 = vrot.slane %v1374, 2
      %v1783 = vsel %vm1759, %v1778, %v1782
      %v1784 = vrot.slane %v1375, 2
      %v1785 = vsel %vm1759, %v1780, %v1784
      %v1786 = vrot.slane %v1376, 2
      %v1787 = vsel %vm1759, %v1782, %v1786
      %v1788 = vrot.slane %v1377, 2
      %v1789 = vsel %vm1759, %v1784, %v1788
      %v1790 = vrot.slane %v1715, 2
      %v1791 = vsel %vm1759, %v1786, %v1790
      %v1792 = vrot.slane %v1716, 2
      %v1793 = vsel %vm1759, %v1788, %v1792
      %v1810 = vsel %vm1733, %v1762, 0.0
      %v1811 = vsel %vm1733, %v1765, 0.0
      %v1812 = vsel %vm1734, %v1767, 0.0
      %v1813 = vsel %vm1734, %v1769, 0.0
      %v1814 = vsel %vm1735, %v1771, 0.0
      %v1815 = vsel %vm1735, %v1773, 0.0
      %v1816 = vsel %vm1736, %v1775, 0.0
      %v1817 = vsel %vm1736, %v1777, 0.0
      %v1818 = vsel %vm1737, %v1779, 0.0
      %v1819 = vsel %vm1737, %v1781, 0.0
      %v1820 = vsel %vm1738, %v1783, 0.0
      %v1821 = vsel %vm1738, %v1785, 0.0
      %v1822 = vsel %vm1739, %v1787, 0.0
      %v1823 = vsel %vm1739, %v1789, 0.0
      %v1824 = vsel %vm1740, %v1791, 0.0
      %v1825 = vsel %vm1740, %v1793, 0.0
      %v1826 = vpack.c.bf16 %v1812, %v1810
      %v1827 = vpack.c.bf16 %v1813, %v1811
      %v1828 = vpack.c.bf16 %v1816, %v1814
      %v1829 = vpack.c.bf16 %v1817, %v1815
      %v1830 = vpack.c.bf16 %v1820, %v1818
      %v1831 = vpack.c.bf16 %v1821, %v1819
      %v1832 = vpack.c.bf16 %v1824, %v1822
      %v1833 = vpack.c.bf16 %v1825, %v1823
      %s1834 = scalar_lea.vmem %s3, 384
      %v1835 = vld [vmem:[%s1834] sm:$0xff]
      %v1836 = vld [vmem:[%s1834 + $0x8] sm:$0xff]
      %v1837 = vld [vmem:[%s1834 + $0x10] sm:$0xff]
      %v1838 = vld [vmem:[%s1834 + $0x18] sm:$0xff]
      %v1839 = vld [vmem:[%s1834 + $0x20] sm:$0xff]
      %v1840 = vld [vmem:[%s1834 + $0x28] sm:$0xff]
      %v1841 = vld [vmem:[%s1834 + $0x30] sm:$0xff]
      %v1842 = vld [vmem:[%s1834 + $0x38] sm:$0xff]
      %v1843 = vld [vmem:[%s1834 + $0x40] sm:$0xff]
      %v1844 = vld [vmem:[%s1834 + $0x48] sm:$0xff]
      %v1845 = vld [vmem:[%s1834 + $0x50] sm:$0xff]
      %v1846 = vld [vmem:[%s1834 + $0x58] sm:$0xff]
      %v1847 = vld [vmem:[%s1834 + $0x60] sm:$0xff]
      %v1848 = vld [vmem:[%s1834 + $0x68] sm:$0xff]
      %v1849 = vld [vmem:[%s1834 + $0x70] sm:$0xff]
      %v1850 = vld [vmem:[%s1834 + $0x78] sm:$0xff]
      %v1851 = vld [vmem:[%s1834 + $0x80] sm:$0xff]
      %v1852 = vld [vmem:[%s1834 + $0x88] sm:$0xff]
      %v1853 = vld [vmem:[%s1834 + $0x90] sm:$0xff]
      %v1854 = vld [vmem:[%s1834 + $0x98] sm:$0xff]
      %v1855 = vld [vmem:[%s1834 + $0xa0] sm:$0xff]
      %v1856 = vld [vmem:[%s1834 + $0xa8] sm:$0xff]
      %v1857 = vld [vmem:[%s1834 + $0xb0] sm:$0xff]
      %v1858 = vld [vmem:[%s1834 + $0xb8] sm:$0xff]
      %v1883 = vunpack.c.l.b16 %v1835
      %v1884 = vunpack.c.h.b16 %v1835
      %v1885 = vunpack.c.l.b16 %v1836
      %v1886 = vunpack.c.h.b16 %v1836
      %v1887 = vunpack.c.l.b16 %v1837
      %v1888 = vunpack.c.h.b16 %v1837
      %v1889 = vunpack.c.l.b16 %v1838
      %v1890 = vunpack.c.h.b16 %v1838
      %v1891 = vunpack.c.l.b16 %v1839
      %v1892 = vunpack.c.h.b16 %v1839
      %v1893 = vunpack.c.l.b16 %v1840
      %v1894 = vunpack.c.h.b16 %v1840
      %v1895 = vunpack.c.l.b16 %v1841
      %v1896 = vunpack.c.h.b16 %v1841
      %v1897 = vunpack.c.l.b16 %v1842
      %v1898 = vunpack.c.h.b16 %v1842
      %v1899 = vunpack.c.l.b16 %v1843
      %v1900 = vunpack.c.h.b16 %v1843
      %v1901 = vunpack.c.l.b16 %v1844
      %v1902 = vunpack.c.h.b16 %v1844
      %v1903 = vunpack.c.l.b16 %v1845
      %v1904 = vunpack.c.h.b16 %v1845
      %v1905 = vunpack.c.l.b16 %v1846
      %v1906 = vunpack.c.h.b16 %v1846
      %v1907 = vunpack.c.l.b16 %v1847
      %v1908 = vunpack.c.h.b16 %v1847
      %v1909 = vunpack.c.l.b16 %v1848
      %v1910 = vunpack.c.h.b16 %v1848
      %v1911 = vunpack.c.l.b16 %v1849
      %v1912 = vunpack.c.h.b16 %v1849
      %v1913 = vunpack.c.l.b16 %v1850
      %v1914 = vunpack.c.h.b16 %v1850
      %v1915 = vunpack.c.l.b16 %v1851
      %v1916 = vunpack.c.h.b16 %v1851
      %v1917 = vunpack.c.l.b16 %v1852
      %v1918 = vunpack.c.h.b16 %v1852
      %v1919 = vunpack.c.l.b16 %v1853
      %v1920 = vunpack.c.h.b16 %v1853
      %v1921 = vunpack.c.l.b16 %v1854
      %v1922 = vunpack.c.h.b16 %v1854
      %v1923 = vunpack.c.l.b16 %v1855
      %v1924 = vunpack.c.h.b16 %v1855
      %v1925 = vunpack.c.l.b16 %v1856
      %v1926 = vunpack.c.h.b16 %v1856
      %v1927 = vunpack.c.l.b16 %v1857
      %v1928 = vunpack.c.h.b16 %v1857
      %v1929 = vunpack.c.l.b16 %v1858
      %v1930 = vunpack.c.h.b16 %v1858
      %v1931 = vpack.c.b16 %v1885, %v1883
      %v1932 = vpack.c.b16 %v1886, %v1884
      %v1933 = vpack.c.b16 %v1889, %v1887
      %v1934 = vpack.c.b16 %v1890, %v1888
      %v1935 = vpack.c.b16 %v1893, %v1891
      %v1936 = vpack.c.b16 %v1894, %v1892
      %v1937 = vpack.c.b16 %v1897, %v1895
      %v1938 = vpack.c.b16 %v1898, %v1896
      %v1939 = vpack.c.b16 %v1901, %v1899
      %v1940 = vpack.c.b16 %v1902, %v1900
      %v1941 = vpack.c.b16 %v1905, %v1903
      %v1942 = vpack.c.b16 %v1906, %v1904
      %v1943 = vpack.c.b16 %v1909, %v1907
      %v1944 = vpack.c.b16 %v1910, %v1908
      %v1945 = vpack.c.b16 %v1913, %v1911
      %v1946 = vpack.c.b16 %v1914, %v1912
      %v1947 = vpack.c.b16 %v1917, %v1915
      %v1948 = vpack.c.b16 %v1918, %v1916
      %v1949 = vpack.c.b16 %v1921, %v1919
      %v1950 = vpack.c.b16 %v1922, %v1920
      %v1951 = vpack.c.b16 %v1925, %v1923
      %v1952 = vpack.c.b16 %v1926, %v1924
      %v1953 = vpack.c.b16 %v1929, %v1927
      %v1954 = vpack.c.b16 %v1930, %v1928
      %v1980 = vsel %vm826, %v1827, 0
      %v1983 = vsel %vm826, %v1829, 0
      %v1986 = vsel %vm826, %v1831, 0
      %v1989 = vsel %vm826, %v1833, 0
      %1991 = vmatprep.subr.bf16.mxu0 %v1932
      %1992 = vmatpush1.bf16.msra.mxu0 %v1931
      %1993 = vmatprep.subr.bf16.mxu0 %v1934
      %1994 = vmatpush1.bf16.msra.mxu0 %v1933
      %1995 = vmatprep.subr.bf16.mxu0 %v1936
      %1996 = vmatpush1.bf16.msra.mxu0 %v1935
      %1997 = vmatprep.subr.bf16.mxu0 %v1938
      %1998 = vmatpush1.bf16.msra.mxu0 %v1937
      %1999 = vmatprep.subr.bf16.mxu0 %v1940
      %2000 = vmatpush1.bf16.msra.mxu0 %v1939
      %2001 = vmatprep.subr.bf16.mxu0 %v1942
      %2002 = vmatpush1.bf16.msra.mxu0 %v1941
      %2003 = vmatprep.subr.bf16.mxu0 %v1944
      %2004 = vmatpush1.bf16.msra.mxu0 %v1943
      %2005 = vmatprep.subr.bf16.mxu0 %v1946
      %2006 = vmatpush1.bf16.msra.mxu0 %v1945
      %2007 = vmatprep.subr.bf16.mxu0 %v1948
      %2008 = vmatpush1.bf16.msra.mxu0 %v1947
      %2009 = vmatprep.subr.bf16.mxu0 %v1950
      %2010 = vmatpush1.bf16.msra.mxu0 %v1949
      %2011 = vmatprep.subr.bf16.mxu0 %v1952
      %2012 = vmatpush1.bf16.msra.mxu0 %v1951
      %2013 = vmatprep.subr.bf16.mxu0 %v1954
      %2014 = vmatpush1.bf16.msra.mxu0 %v1953
      %2015 = vmatprep.subr.bf16.mxu0 0
      %2016 = vmatpush1.bf16.msra.mxu0 0
      %2017 = vmatprep.subr.bf16.mxu0 0
      %2018 = vmatpush1.bf16.msra.mxu0 0
      %2019 = vmatprep.subr.bf16.mxu0 0
      %2020 = vmatpush1.bf16.msra.mxu0 0
      %2021 = vmatprep.subr.bf16.mxu0 0
      %2022 = vmatpush1.bf16.msra.mxu0 0
      %2023 = vmatprep.mubr.bf16.mxu0 %v1980
      %2024 = vmatmul.mubr.bf16.gmra.mrb[0].mxu0 %v1826
      %v2025 = vpop.f32.mrb[0].mxu0
      %v2026 = vadd.f32 0.0, %v2025
      %v2027 = vpop.f32.mrb[0].mxu0
      %v2028 = vadd.f32 0.0, %v2027
      %v2029 = vpop.f32.mrb[0].mxu0
      %v2030 = vadd.f32 0.0, %v2029
      %v2031 = vpop.f32.mrb[0].mxu0
      %v2032 = vadd.f32 0.0, %v2031
      %2033 = vmatprep.mubr.bf16.mxu0 %v1983
      %2034 = vmatmul.mubr.bf16.gmra.mrb[0].mxu0 %v1828
      %v2035 = vpop.f32.mrb[0].mxu0
      %v2036 = vadd.f32 0.0, %v2035
      %v2037 = vpop.f32.mrb[0].mxu0
      %v2038 = vadd.f32 0.0, %v2037
      %v2039 = vpop.f32.mrb[0].mxu0
      %v2040 = vadd.f32 0.0, %v2039
      %v2041 = vpop.f32.mrb[0].mxu0
      %v2042 = vadd.f32 0.0, %v2041
      %2043 = vmatprep.mubr.bf16.mxu0 %v1986
      %2044 = vmatmul.mubr.bf16.gmra.mrb[0].mxu0 %v1830
      %v2045 = vpop.f32.mrb[0].mxu0
      %v2046 = vadd.f32 0.0, %v2045
      %v2047 = vpop.f32.mrb[0].mxu0
      %v2048 = vadd.f32 0.0, %v2047
      %v2049 = vpop.f32.mrb[0].mxu0
      %v2050 = vadd.f32 0.0, %v2049
      %v2051 = vpop.f32.mrb[0].mxu0
      %v2052 = vadd.f32 0.0, %v2051
      %2053 = vmatprep.mubr.bf16.mxu0 %v1989
      %2054 = vmatmul.mubr.bf16.gmra.mrb[0].mxu0 %v1832
      %v2055 = vpop.f32.mrb[0].mxu0
      %v2056 = vadd.f32 0.0, %v2055
      %v2057 = vpop.f32.mrb[0].mxu0
      %v2058 = vadd.f32 0.0, %v2057
      %v2059 = vpop.f32.mrb[0].mxu0
      %v2060 = vadd.f32 0.0, %v2059
      %v2061 = vpop.f32.mrb[0].mxu0
      %v2062 = vadd.f32 0.0, %v2061
      %2063 = vdwg.mxu0
      %v2064 = vadd.f32 %v1697, %v2026
      %v2065 = vadd.f32 %v1698, %v2028
      %v2066 = vadd.f32 %v1699, %v2030
      %v2067 = vadd.f32 %v1700, %v2032
      %v2068 = vadd.f32 %v1701, %v2036
      %v2069 = vadd.f32 %v1702, %v2038
      %v2070 = vadd.f32 %v1703, %v2040
      %v2071 = vadd.f32 %v1704, %v2042
      %v2072 = vadd.f32 %v1705, %v2046
      %v2073 = vadd.f32 %v1706, %v2048
      %v2074 = vadd.f32 %v1707, %v2050
      %v2075 = vadd.f32 %v1708, %v2052
      %v2076 = vadd.f32 %v1709, %v2056
      %v2077 = vadd.f32 %v1710, %v2058
      %v2078 = vadd.f32 %v1711, %v2060
      %v2079 = vadd.f32 %v1712, %v2062
      %v2080 = vld [vmem:[#allocation2 + $0x80] sm:$0xff]
      %v2081 = vld [vmem:[#allocation2 + $0x88] sm:$0xff]
      %v2082 = vsel %vm1085, %v1364, 0.0
      %v2083 = vsel %vm1085, %v1365, 0.0
      %v2084 = vsel %vm1086, %v1366, 0.0
      %v2085 = vsel %vm1086, %v1367, 0.0
      %v2086 = vsel %vm1087, %v1368, 0.0
      %v2087 = vsel %vm1087, %v1369, 0.0
      %v2088 = vsel %vm1088, %v1370, 0.0
      %v2089 = vsel %vm1088, %v1371, 0.0
      %v2090 = vsel %vm1089, %v1372, 0.0
      %v2091 = vsel %vm1089, %v1373, 0.0
      %v2092 = vsel %vm1090, %v1374, 0.0
      %v2093 = vsel %vm1090, %v1375, 0.0
      %v2094 = vsel %vm1091, %v1376, 0.0
      %v2095 = vsel %vm1091, %v1377, 0.0
      %v2096 = vsel %vm1092, %v2080, 0.0
      %v2097 = vsel %vm1092, %v2081, 0.0
      %v2098 = vpack.c.bf16 %v2084, %v2082
      %v2099 = vpack.c.bf16 %v2085, %v2083
      %v2100 = vpack.c.bf16 %v2088, %v2086
      %v2101 = vpack.c.bf16 %v2089, %v2087
      %v2102 = vpack.c.bf16 %v2092, %v2090
      %v2103 = vpack.c.bf16 %v2093, %v2091
      %v2104 = vpack.c.bf16 %v2096, %v2094
      %v2105 = vpack.c.bf16 %v2097, %v2095
      %s2106 = scalar_lea.vmem %s3, 576
      %v2107 = vld [vmem:[%s2106] sm:$0xff]
      %v2108 = vld [vmem:[%s2106 + $0x8] sm:$0xff]
      %v2109 = vld [vmem:[%s2106 + $0x10] sm:$0xff]
      %v2110 = vld [vmem:[%s2106 + $0x18] sm:$0xff]
      %v2111 = vld [vmem:[%s2106 + $0x20] sm:$0xff]
      %v2112 = vld [vmem:[%s2106 + $0x28] sm:$0xff]
      %v2113 = vld [vmem:[%s2106 + $0x30] sm:$0xff]
      %v2114 = vld [vmem:[%s2106 + $0x38] sm:$0xff]
      %v2115 = vld [vmem:[%s2106 + $0x40] sm:$0xff]
      %v2116 = vld [vmem:[%s2106 + $0x48] sm:$0xff]
      %v2117 = vld [vmem:[%s2106 + $0x50] sm:$0xff]
      %v2118 = vld [vmem:[%s2106 + $0x58] sm:$0xff]
      %v2119 = vld [vmem:[%s2106 + $0x60] sm:$0xff]
      %v2120 = vld [vmem:[%s2106 + $0x68] sm:$0xff]
      %v2121 = vld [vmem:[%s2106 + $0x70] sm:$0xff]
      %v2122 = vld [vmem:[%s2106 + $0x78] sm:$0xff]
      %v2123 = vld [vmem:[%s2106 + $0x80] sm:$0xff]
      %v2124 = vld [vmem:[%s2106 + $0x88] sm:$0xff]
      %v2125 = vld [vmem:[%s2106 + $0x90] sm:$0xff]
      %v2126 = vld [vmem:[%s2106 + $0x98] sm:$0xff]
      %v2127 = vld [vmem:[%s2106 + $0xa0] sm:$0xff]
      %v2128 = vld [vmem:[%s2106 + $0xa8] sm:$0xff]
      %v2129 = vld [vmem:[%s2106 + $0xb0] sm:$0xff]
      %v2130 = vld [vmem:[%s2106 + $0xb8] sm:$0xff]
      %v2155 = vunpack.c.l.b16 %v2107
      %v2156 = vunpack.c.h.b16 %v2107
      %v2157 = vunpack.c.l.b16 %v2108
      %v2158 = vunpack.c.h.b16 %v2108
      %v2159 = vunpack.c.l.b16 %v2109
      %v2160 = vunpack.c.h.b16 %v2109
      %v2161 = vunpack.c.l.b16 %v2110
      %v2162 = vunpack.c.h.b16 %v2110
      %v2163 = vunpack.c.l.b16 %v2111
      %v2164 = vunpack.c.h.b16 %v2111
      %v2165 = vunpack.c.l.b16 %v2112
      %v2166 = vunpack.c.h.b16 %v2112
      %v2167 = vunpack.c.l.b16 %v2113
      %v2168 = vunpack.c.h.b16 %v2113
      %v2169 = vunpack.c.l.b16 %v2114
      %v2170 = vunpack.c.h.b16 %v2114
      %v2171 = vunpack.c.l.b16 %v2115
      %v2172 = vunpack.c.h.b16 %v2115
      %v2173 = vunpack.c.l.b16 %v2116
      %v2174 = vunpack.c.h.b16 %v2116
      %v2175 = vunpack.c.l.b16 %v2117
      %v2176 = vunpack.c.h.b16 %v2117
      %v2177 = vunpack.c.l.b16 %v2118
      %v2178 = vunpack.c.h.b16 %v2118
      %v2179 = vunpack.c.l.b16 %v2119
      %v2180 = vunpack.c.h.b16 %v2119
      %v2181 = vunpack.c.l.b16 %v2120
      %v2182 = vunpack.c.h.b16 %v2120
      %v2183 = vunpack.c.l.b16 %v2121
      %v2184 = vunpack.c.h.b16 %v2121
      %v2185 = vunpack.c.l.b16 %v2122
      %v2186 = vunpack.c.h.b16 %v2122
      %v2187 = vunpack.c.l.b16 %v2123
      %v2188 = vunpack.c.h.b16 %v2123
      %v2189 = vunpack.c.l.b16 %v2124
      %v2190 = vunpack.c.h.b16 %v2124
      %v2191 = vunpack.c.l.b16 %v2125
      %v2192 = vunpack.c.h.b16 %v2125
      %v2193 = vunpack.c.l.b16 %v2126
      %v2194 = vunpack.c.h.b16 %v2126
      %v2195 = vunpack.c.l.b16 %v2127
      %v2196 = vunpack.c.h.b16 %v2127
      %v2197 = vunpack.c.l.b16 %v2128
      %v2198 = vunpack.c.h.b16 %v2128
      %v2199 = vunpack.c.l.b16 %v2129
      %v2200 = vunpack.c.h.b16 %v2129
      %v2201 = vunpack.c.l.b16 %v2130
      %v2202 = vunpack.c.h.b16 %v2130
      %v2203 = vpack.c.b16 %v2157, %v2155
      %v2204 = vpack.c.b16 %v2158, %v2156
      %v2205 = vpack.c.b16 %v2161, %v2159
      %v2206 = vpack.c.b16 %v2162, %v2160
      %v2207 = vpack.c.b16 %v2165, %v2163
      %v2208 = vpack.c.b16 %v2166, %v2164
      %v2209 = vpack.c.b16 %v2169, %v2167
      %v2210 = vpack.c.b16 %v2170, %v2168
      %v2211 = vpack.c.b16 %v2173, %v2171
      %v2212 = vpack.c.b16 %v2174, %v2172
      %v2213 = vpack.c.b16 %v2177, %v2175
      %v2214 = vpack.c.b16 %v2178, %v2176
      %v2215 = vpack.c.b16 %v2181, %v2179
      %v2216 = vpack.c.b16 %v2182, %v2180
      %v2217 = vpack.c.b16 %v2185, %v2183
      %v2218 = vpack.c.b16 %v2186, %v2184
      %v2219 = vpack.c.b16 %v2189, %v2187
      %v2220 = vpack.c.b16 %v2190, %v2188
      %v2221 = vpack.c.b16 %v2193, %v2191
      %v2222 = vpack.c.b16 %v2194, %v2192
      %v2223 = vpack.c.b16 %v2197, %v2195
      %v2224 = vpack.c.b16 %v2198, %v2196
      %v2225 = vpack.c.b16 %v2201, %v2199
      %v2226 = vpack.c.b16 %v2202, %v2200
      %v2252 = vsel %vm826, %v2099, 0
      %v2255 = vsel %vm826, %v2101, 0
      %v2258 = vsel %vm826, %v2103, 0
      %v2261 = vsel %vm826, %v2105, 0
      %2263 = vmatprep.subr.bf16.mxu0 %v2204
      %2264 = vmatpush1.bf16.msra.mxu0 %v2203
      %2265 = vmatprep.subr.bf16.mxu0 %v2206
      %2266 = vmatpush1.bf16.msra.mxu0 %v2205
      %2267 = vmatprep.subr.bf16.mxu0 %v2208
      %2268 = vmatpush1.bf16.msra.mxu0 %v2207
      %2269 = vmatprep.subr.bf16.mxu0 %v2210
      %2270 = vmatpush1.bf16.msra.mxu0 %v2209
      %2271 = vmatprep.subr.bf16.mxu0 %v2212
      %2272 = vmatpush1.bf16.msra.mxu0 %v2211
      %2273 = vmatprep.subr.bf16.mxu0 %v2214
      %2274 = vmatpush1.bf16.msra.mxu0 %v2213
      %2275 = vmatprep.subr.bf16.mxu0 %v2216
      %2276 = vmatpush1.bf16.msra.mxu0 %v2215
      %2277 = vmatprep.subr.bf16.mxu0 %v2218
      %2278 = vmatpush1.bf16.msra.mxu0 %v2217
      %2279 = vmatprep.subr.bf16.mxu0 %v2220
      %2280 = vmatpush1.bf16.msra.mxu0 %v2219
      %2281 = vmatprep.subr.bf16.mxu0 %v2222
      %2282 = vmatpush1.bf16.msra.mxu0 %v2221
      %2283 = vmatprep.subr.bf16.mxu0 %v2224
      %2284 = vmatpush1.bf16.msra.mxu0 %v2223
      %2285 = vmatprep.subr.bf16.mxu0 %v2226
      %2286 = vmatpush1.bf16.msra.mxu0 %v2225
      %2287 = vmatprep.subr.bf16.mxu0 0
      %2288 = vmatpush1.bf16.msra.mxu0 0
      %2289 = vmatprep.subr.bf16.mxu0 0
      %2290 = vmatpush1.bf16.msra.mxu0 0
      %2291 = vmatprep.subr.bf16.mxu0 0
      %2292 = vmatpush1.bf16.msra.mxu0 0
      %2293 = vmatprep.subr.bf16.mxu0 0
      %2294 = vmatpush1.bf16.msra.mxu0 0
      %2295 = vmatprep.mubr.bf16.mxu0 %v2252
      %2296 = vmatmul.mubr.bf16.gmra.mrb[0].mxu0 %v2098
      %v2297 = vpop.f32.mrb[0].mxu0
      %v2298 = vadd.f32 0.0, %v2297
      %v2299 = vpop.f32.mrb[0].mxu0
      %v2300 = vadd.f32 0.0, %v2299
      %v2301 = vpop.f32.mrb[0].mxu0
      %v2302 = vadd.f32 0.0, %v2301
      %v2303 = vpop.f32.mrb[0].mxu0
      %v2304 = vadd.f32 0.0, %v2303
      %2305 = vmatprep.mubr.bf16.mxu0 %v2255
      %2306 = vmatmul.mubr.bf16.gmra.mrb[0].mxu0 %v2100
      %v2307 = vpop.f32.mrb[0].mxu0
      %v2308 = vadd.f32 0.0, %v2307
      %v2309 = vpop.f32.mrb[0].mxu0
      %v2310 = vadd.f32 0.0, %v2309
      %v2311 = vpop.f32.mrb[0].mxu0
      %v2312 = vadd.f32 0.0, %v2311
      %v2313 = vpop.f32.mrb[0].mxu0
      %v2314 = vadd.f32 0.0, %v2313
      %2315 = vmatprep.mubr.bf16.mxu0 %v2258
      %2316 = vmatmul.mubr.bf16.gmra.mrb[0].mxu0 %v2102
      %v2317 = vpop.f32.mrb[0].mxu0
      %v2318 = vadd.f32 0.0, %v2317
      %v2319 = vpop.f32.mrb[0].mxu0
      %v2320 = vadd.f32 0.0, %v2319
      %v2321 = vpop.f32.mrb[0].mxu0
      %v2322 = vadd.f32 0.0, %v2321
      %v2323 = vpop.f32.mrb[0].mxu0
      %v2324 = vadd.f32 0.0, %v2323
      %2325 = vmatprep.mubr.bf16.mxu0 %v2261
      %2326 = vmatmul.mubr.bf16.gmra.mrb[0].mxu0 %v2104
      %v2327 = vpop.f32.mrb[0].mxu0
      %v2328 = vadd.f32 0.0, %v2327
      %v2329 = vpop.f32.mrb[0].mxu0
      %v2330 = vadd.f32 0.0, %v2329
      %v2331 = vpop.f32.mrb[0].mxu0
      %v2332 = vadd.f32 0.0, %v2331
      %v2333 = vpop.f32.mrb[0].mxu0
      %v2334 = vadd.f32 0.0, %v2333
      %2335 = vdwg.mxu0
      %v2336 = vadd.f32 %v2064, %v2298
      %v2337 = vadd.f32 %v2065, %v2300
      %v2338 = vadd.f32 %v2066, %v2302
      %v2339 = vadd.f32 %v2067, %v2304
      %v2340 = vadd.f32 %v2068, %v2308
      %v2341 = vadd.f32 %v2069, %v2310
      %v2342 = vadd.f32 %v2070, %v2312
      %v2343 = vadd.f32 %v2071, %v2314
      %v2344 = vadd.f32 %v2072, %v2318
      %v2345 = vadd.f32 %v2073, %v2320
      %v2346 = vadd.f32 %v2074, %v2322
      %v2347 = vadd.f32 %v2075, %v2324
      %v2348 = vadd.f32 %v2076, %v2328
      %v2349 = vadd.f32 %v2077, %v2330
      %v2350 = vadd.f32 %v2078, %v2332
      %v2351 = vadd.f32 %v2079, %v2334
      %v2352 = vld [vmem:[#allocation2 + $0x10] sm:$0xfe]
      %v2353 = vld [vmem:[#allocation2 + $0x18] sm:$0xfe]
      %v2354 = vld [vmem:[#allocation2 + $0x20] sm:$0xff]
      %v2355 = vld [vmem:[#allocation2 + $0x28] sm:$0xff]
      %v2356 = vld [vmem:[#allocation2 + $0x30] sm:$0xff]
      %v2357 = vld [vmem:[#allocation2 + $0x38] sm:$0xff]
      %v2358 = vld [vmem:[#allocation2 + $0x40] sm:$0xff]
      %v2359 = vld [vmem:[#allocation2 + $0x48] sm:$0xff]
      %v2360 = vld [vmem:[#allocation2 + $0x50] sm:$0xff]
      %v2361 = vld [vmem:[#allocation2 + $0x58] sm:$0xff]
      %v2362 = vld [vmem:[#allocation2 + $0x60] sm:$0xff]
      %v2363 = vld [vmem:[#allocation2 + $0x68] sm:$0xff]
      %v2364 = vld [vmem:[#allocation2 + $0x70] sm:$0xff]
      %v2365 = vld [vmem:[#allocation2 + $0x78] sm:$0xff]
      %v2366 = vld [vmem:[#allocation2 + $0x80] sm:$0xff]
      %v2367 = vld [vmem:[#allocation2 + $0x88] sm:$0xff]
      %v2368 = vld [vmem:[#allocation2 + $0x90] sm:$0x1]
      %v2369 = vld [vmem:[#allocation2 + $0x98] sm:$0x1]
      %v2370 = vpack.c.bf16 %v2354, %v2352
      %v2371 = vpack.c.bf16 %v2355, %v2353
      %v2372 = vpack.c.bf16 %v2358, %v2356
      %v2373 = vpack.c.bf16 %v2359, %v2357
      %v2374 = vpack.c.bf16 %v2362, %v2360
      %v2375 = vpack.c.bf16 %v2363, %v2361
      %v2376 = vpack.c.bf16 %v2366, %v2364
      %v2377 = vpack.c.bf16 %v2367, %v2365
      %v2378 = vpack.c.bf16 %v2368, %v2368
      %v2379 = vpack.c.bf16 %v2369, %v2369
      %s2380 = scalar_lea.vmem %s3, 768
      %v2381 = vld [vmem:[%s2380] sm:$0xff]
      %v2382 = vld [vmem:[%s2380 + $0x8] sm:$0xff]
      %v2383 = vld [vmem:[%s2380 + $0x10] sm:$0xff]
      %v2384 = vld [vmem:[%s2380 + $0x18] sm:$0xff]
      %v2385 = vld [vmem:[%s2380 + $0x20] sm:$0xff]
      %v2386 = vld [vmem:[%s2380 + $0x28] sm:$0xff]
      %v2387 = vld [vmem:[%s2380 + $0x30] sm:$0xff]
      %v2388 = vld [vmem:[%s2380 + $0x38] sm:$0xff]
      %v2389 = vld [vmem:[%s2380 + $0x40] sm:$0xff]
      %v2390 = vld [vmem:[%s2380 + $0x48] sm:$0xff]
      %v2391 = vld [vmem:[%s2380 + $0x50] sm:$0xff]
      %v2392 = vld [vmem:[%s2380 + $0x58] sm:$0xff]
      %v2393 = vld [vmem:[%s2380 + $0x60] sm:$0xff]
      %v2394 = vld [vmem:[%s2380 + $0x68] sm:$0xff]
      %v2395 = vld [vmem:[%s2380 + $0x70] sm:$0xff]
      %v2396 = vld [vmem:[%s2380 + $0x78] sm:$0xff]
      %v2397 = vld [vmem:[%s2380 + $0x80] sm:$0xff]
      %v2398 = vld [vmem:[%s2380 + $0x88] sm:$0xff]
      %v2399 = vld [vmem:[%s2380 + $0x90] sm:$0xff]
      %v2400 = vld [vmem:[%s2380 + $0x98] sm:$0xff]
      %v2401 = vld [vmem:[%s2380 + $0xa0] sm:$0xff]
      %v2402 = vld [vmem:[%s2380 + $0xa8] sm:$0xff]
      %v2403 = vld [vmem:[%s2380 + $0xb0] sm:$0xff]
      %v2404 = vld [vmem:[%s2380 + $0xb8] sm:$0xff]
      %v2406 = vshrl.u32 %v2370, 16
      %v2408 = vshll.u32 %v2370, 16
      %v2410 = vrot.slane %v2408, 1
      %v2411 = vor.u32 %v2406, %v2410
      %v2413 = vshll.u32 %v2372, 16
      %v2415 = vrot.slane %v2413, 1
      %v2416 = vsel %vm1415, %v2411, %v2415
      %v2418 = vshrl.u32 %v2371, 16
      %v2420 = vshll.u32 %v2371, 16
      %v2422 = vrot.slane %v2420, 1
      %v2423 = vor.u32 %v2418, %v2422
      %v2425 = vshll.u32 %v2373, 16
      %v2427 = vrot.slane %v2425, 1
      %v2428 = vsel %vm1415, %v2423, %v2427
      %v2429 = vshrl.u32 %v2372, 16
      %v2431 = vor.u32 %v2429, %v2415
      %v2433 = vshll.u32 %v2374, 16
      %v2435 = vrot.slane %v2433, 1
      %v2436 = vsel %vm1415, %v2431, %v2435
      %v2437 = vshrl.u32 %v2373, 16
      %v2439 = vor.u32 %v2437, %v2427
      %v2441 = vshll.u32 %v2375, 16
      %v2443 = vrot.slane %v2441, 1
      %v2444 = vsel %vm1415, %v2439, %v2443
      %v2445 = vshrl.u32 %v2374, 16
      %v2447 = vor.u32 %v2445, %v2435
      %v2449 = vshll.u32 %v2376, 16
      %v2451 = vrot.slane %v2449, 1
      %v2452 = vsel %vm1415, %v2447, %v2451
      %v2453 = vshrl.u32 %v2375, 16
      %v2455 = vor.u32 %v2453, %v2443
      %v2457 = vshll.u32 %v2377, 16
      %v2459 = vrot.slane %v2457, 1
      %v2460 = vsel %vm1415, %v2455, %v2459
      %v2461 = vshrl.u32 %v2376, 16
      %v2463 = vor.u32 %v2461, %v2451
      %v2465 = vshll.u32 %v2378, 16
      %v2467 = vrot.slane %v2465, 1
      %v2468 = vsel %vm1415, %v2463, %v2467
      %v2469 = vshrl.u32 %v2377, 16
      %v2471 = vor.u32 %v2469, %v2459
      %v2473 = vshll.u32 %v2379, 16
      %v2475 = vrot.slane %v2473, 1
      %v2476 = vsel %vm1415, %v2471, %v2475
      %v2505 = vunpack.c.l.b16 %v2381
      %v2506 = vunpack.c.h.b16 %v2381
      %v2507 = vunpack.c.l.b16 %v2382
      %v2508 = vunpack.c.h.b16 %v2382
      %v2509 = vunpack.c.l.b16 %v2383
      %v2510 = vunpack.c.h.b16 %v2383
      %v2511 = vunpack.c.l.b16 %v2384
      %v2512 = vunpack.c.h.b16 %v2384
      %v2513 = vunpack.c.l.b16 %v2385
      %v2514 = vunpack.c.h.b16 %v2385
      %v2515 = vunpack.c.l.b16 %v2386
      %v2516 = vunpack.c.h.b16 %v2386
      %v2517 = vunpack.c.l.b16 %v2387
      %v2518 = vunpack.c.h.b16 %v2387
      %v2519 = vunpack.c.l.b16 %v2388
      %v2520 = vunpack.c.h.b16 %v2388
      %v2521 = vunpack.c.l.b16 %v2389
      %v2522 = vunpack.c.h.b16 %v2389
      %v2523 = vunpack.c.l.b16 %v2390
      %v2524 = vunpack.c.h.b16 %v2390
      %v2525 = vunpack.c.l.b16 %v2391
      %v2526 = vunpack.c.h.b16 %v2391
      %v2527 = vunpack.c.l.b16 %v2392
      %v2528 = vunpack.c.h.b16 %v2392
      %v2529 = vunpack.c.l.b16 %v2393
      %v2530 = vunpack.c.h.b16 %v2393
      %v2531 = vunpack.c.l.b16 %v2394
      %v2532 = vunpack.c.h.b16 %v2394
      %v2533 = vunpack.c.l.b16 %v2395
      %v2534 = vunpack.c.h.b16 %v2395
      %v2535 = vunpack.c.l.b16 %v2396
      %v2536 = vunpack.c.h.b16 %v2396
      %v2537 = vunpack.c.l.b16 %v2397
      %v2538 = vunpack.c.h.b16 %v2397
      %v2539 = vunpack.c.l.b16 %v2398
      %v2540 = vunpack.c.h.b16 %v2398
      %v2541 = vunpack.c.l.b16 %v2399
      %v2542 = vunpack.c.h.b16 %v2399
      %v2543 = vunpack.c.l.b16 %v2400
      %v2544 = vunpack.c.h.b16 %v2400
      %v2545 = vunpack.c.l.b16 %v2401
      %v2546 = vunpack.c.h.b16 %v2401
      %v2547 = vunpack.c.l.b16 %v2402
      %v2548 = vunpack.c.h.b16 %v2402
      %v2549 = vunpack.c.l.b16 %v2403
      %v2550 = vunpack.c.h.b16 %v2403
      %v2551 = vunpack.c.l.b16 %v2404
      %v2552 = vunpack.c.h.b16 %v2404
      %v2553 = vpack.c.b16 %v2507, %v2505
      %v2554 = vpack.c.b16 %v2508, %v2506
      %v2555 = vpack.c.b16 %v2511, %v2509
      %v2556 = vpack.c.b16 %v2512, %v2510
      %v2557 = vpack.c.b16 %v2515, %v2513
      %v2558 = vpack.c.b16 %v2516, %v2514
      %v2559 = vpack.c.b16 %v2519, %v2517
      %v2560 = vpack.c.b16 %v2520, %v2518
      %v2561 = vpack.c.b16 %v2523, %v2521
      %v2562 = vpack.c.b16 %v2524, %v2522
      %v2563 = vpack.c.b16 %v2527, %v2525
      %v2564 = vpack.c.b16 %v2528, %v2526
      %v2565 = vpack.c.b16 %v2531, %v2529
      %v2566 = vpack.c.b16 %v2532, %v2530
      %v2567 = vpack.c.b16 %v2535, %v2533
      %v2568 = vpack.c.b16 %v2536, %v2534
      %v2569 = vpack.c.b16 %v2539, %v2537
      %v2570 = vpack.c.b16 %v2540, %v2538
      %v2571 = vpack.c.b16 %v2543, %v2541
      %v2572 = vpack.c.b16 %v2544, %v2542
      %v2573 = vpack.c.b16 %v2547, %v2545
      %v2574 = vpack.c.b16 %v2548, %v2546
      %v2575 = vpack.c.b16 %v2551, %v2549
      %v2576 = vpack.c.b16 %v2552, %v2550
      %v2602 = vsel %vm826, %v2428, 0
      %v2605 = vsel %vm826, %v2444, 0
      %v2608 = vsel %vm826, %v2460, 0
      %v2611 = vsel %vm826, %v2476, 0
      %2613 = vmatprep.subr.bf16.mxu0 %v2554
      %2614 = vmatpush1.bf16.msra.mxu0 %v2553
      %2615 = vmatprep.subr.bf16.mxu0 %v2556
      %2616 = vmatpush1.bf16.msra.mxu0 %v2555
      %2617 = vmatprep.subr.bf16.mxu0 %v2558
      %2618 = vmatpush1.bf16.msra.mxu0 %v2557
      %2619 = vmatprep.subr.bf16.mxu0 %v2560
      %2620 = vmatpush1.bf16.msra.mxu0 %v2559
      %2621 = vmatprep.subr.bf16.mxu0 %v2562
      %2622 = vmatpush1.bf16.msra.mxu0 %v2561
      %2623 = vmatprep.subr.bf16.mxu0 %v2564
      %2624 = vmatpush1.bf16.msra.mxu0 %v2563
      %2625 = vmatprep.subr.bf16.mxu0 %v2566
      %2626 = vmatpush1.bf16.msra.mxu0 %v2565
      %2627 = vmatprep.subr.bf16.mxu0 %v2568
      %2628 = vmatpush1.bf16.msra.mxu0 %v2567
      %2629 = vmatprep.subr.bf16.mxu0 %v2570
      %2630 = vmatpush1.bf16.msra.mxu0 %v2569
      %2631 = vmatprep.subr.bf16.mxu0 %v2572
      %2632 = vmatpush1.bf16.msra.mxu0 %v2571
      %2633 = vmatprep.subr.bf16.mxu0 %v2574
      %2634 = vmatpush1.bf16.msra.mxu0 %v2573
      %2635 = vmatprep.subr.bf16.mxu0 %v2576
      %2636 = vmatpush1.bf16.msra.mxu0 %v2575
      %2637 = vmatprep.subr.bf16.mxu0 0
      %2638 = vmatpush1.bf16.msra.mxu0 0
      %2639 = vmatprep.subr.bf16.mxu0 0
      %2640 = vmatpush1.bf16.msra.mxu0 0
      %2641 = vmatprep.subr.bf16.mxu0 0
      %2642 = vmatpush1.bf16.msra.mxu0 0
      %2643 = vmatprep.subr.bf16.mxu0 0
      %2644 = vmatpush1.bf16.msra.mxu0 0
      %2645 = vmatprep.mubr.bf16.mxu0 %v2602
      %2646 = vmatmul.mubr.bf16.gmra.mrb[0].mxu0 %v2416
      %v2647 = vpop.f32.mrb[0].mxu0
      %v2648 = vadd.f32 0.0, %v2647
      %v2649 = vpop.f32.mrb[0].mxu0
      %v2650 = vadd.f32 0.0, %v2649
      %v2651 = vpop.f32.mrb[0].mxu0
      %v2652 = vadd.f32 0.0, %v2651
      %v2653 = vpop.f32.mrb[0].mxu0
      %v2654 = vadd.f32 0.0, %v2653
      %2655 = vmatprep.mubr.bf16.mxu0 %v2605
      %2656 = vmatmul.mubr.bf16.gmra.mrb[0].mxu0 %v2436
      %v2657 = vpop.f32.mrb[0].mxu0
      %v2658 = vadd.f32 0.0, %v2657
      %v2659 = vpop.f32.mrb[0].mxu0
      %v2660 = vadd.f32 0.0, %v2659
      %v2661 = vpop.f32.mrb[0].mxu0
      %v2662 = vadd.f32 0.0, %v2661
      %v2663 = vpop.f32.mrb[0].mxu0
      %v2664 = vadd.f32 0.0, %v2663
      %2665 = vmatprep.mubr.bf16.mxu0 %v2608
      %2666 = vmatmul.mubr.bf16.gmra.mrb[0].mxu0 %v2452
      %v2667 = vpop.f32.mrb[0].mxu0
      %v2668 = vadd.f32 0.0, %v2667
      %v2669 = vpop.f32.mrb[0].mxu0
      %v2670 = vadd.f32 0.0, %v2669
      %v2671 = vpop.f32.mrb[0].mxu0
      %v2672 = vadd.f32 0.0, %v2671
      %v2673 = vpop.f32.mrb[0].mxu0
      %v2674 = vadd.f32 0.0, %v2673
      %2675 = vmatprep.mubr.bf16.mxu0 %v2611
      %2676 = vmatmul.mubr.bf16.gmra.mrb[0].mxu0 %v2468
      %v2677 = vpop.f32.mrb[0].mxu0
      %v2678 = vadd.f32 0.0, %v2677
      %v2679 = vpop.f32.mrb[0].mxu0
      %v2680 = vadd.f32 0.0, %v2679
      %v2681 = vpop.f32.mrb[0].mxu0
      %v2682 = vadd.f32 0.0, %v2681
      %v2683 = vpop.f32.mrb[0].mxu0
      %v2684 = vadd.f32 0.0, %v2683
      %2685 = vdwg.mxu0
      %v2686 = vadd.f32 %v2336, %v2648
      %v2687 = vadd.f32 %v2337, %v2650
      %v2688 = vadd.f32 %v2338, %v2652
      %v2689 = vadd.f32 %v2339, %v2654
      %v2690 = vadd.f32 %v2340, %v2658
      %v2691 = vadd.f32 %v2341, %v2660
      %v2692 = vadd.f32 %v2342, %v2662
      %v2693 = vadd.f32 %v2343, %v2664
      %v2694 = vadd.f32 %v2344, %v2668
      %v2695 = vadd.f32 %v2345, %v2670
      %v2696 = vadd.f32 %v2346, %v2672
      %v2697 = vadd.f32 %v2347, %v2674
      %v2698 = vadd.f32 %v2348, %v2678
      %v2699 = vadd.f32 %v2349, %v2680
      %v2700 = vadd.f32 %v2350, %v2682
      %v2701 = vadd.f32 %v2351, %v2684
      %v2702 = vld [vmem:[#allocation2 + $0x10] sm:$0xfc]
      %v2703 = vld [vmem:[#allocation2 + $0x18] sm:$0xfc]
      %v2704 = vld [vmem:[#allocation2 + $0x90] sm:$0x3]
      %v2705 = vld [vmem:[#allocation2 + $0x98] sm:$0x3]
      %v2724 = vrot.slane %v2702, 2
      %v2725 = vrot.slane %v2354, 2
      %v2726 = vsel %vm1759, %v2724, %v2725
      %v2727 = vrot.slane %v2703, 2
      %v2728 = vrot.slane %v2355, 2
      %v2729 = vsel %vm1759, %v2727, %v2728
      %v2730 = vrot.slane %v2356, 2
      %v2731 = vsel %vm1759, %v2725, %v2730
      %v2732 = vrot.slane %v2357, 2
      %v2733 = vsel %vm1759, %v2728, %v2732
      %v2734 = vrot.slane %v2358, 2
      %v2735 = vsel %vm1759, %v2730, %v2734
      %v2736 = vrot.slane %v2359, 2
      %v2737 = vsel %vm1759, %v2732, %v2736
      %v2738 = vrot.slane %v2360, 2
      %v2739 = vsel %vm1759, %v2734, %v2738
      %v2740 = vrot.slane %v2361, 2
      %v2741 = vsel %vm1759, %v2736, %v2740
      %v2742 = vrot.slane %v2362, 2
      %v2743 = vsel %vm1759, %v2738, %v2742
      %v2744 = vrot.slane %v2363, 2
      %v2745 = vsel %vm1759, %v2740, %v2744
      %v2746 = vrot.slane %v2364, 2
      %v2747 = vsel %vm1759, %v2742, %v2746
      %v2748 = vrot.slane %v2365, 2
      %v2749 = vsel %vm1759, %v2744, %v2748
      %v2750 = vrot.slane %v2366, 2
      %v2751 = vsel %vm1759, %v2746, %v2750
      %v2752 = vrot.slane %v2367, 2
      %v2753 = vsel %vm1759, %v2748, %v2752
      %v2754 = vrot.slane %v2704, 2
      %v2755 = vsel %vm1759, %v2750, %v2754
      %v2756 = vrot.slane %v2705, 2
      %v2757 = vsel %vm1759, %v2752, %v2756
      %v2774 = vsel %vm1733, %v2726, 0.0
      %v2775 = vsel %vm1733, %v2729, 0.0
      %v2776 = vsel %vm1734, %v2731, 0.0
      %v2777 = vsel %vm1734, %v2733, 0.0
      %v2778 = vsel %vm1735, %v2735, 0.0
      %v2779 = vsel %vm1735, %v2737, 0.0
      %v2780 = vsel %vm1736, %v2739, 0.0
      %v2781 = vsel %vm1736, %v2741, 0.0
      %v2782 = vsel %vm1737, %v2743, 0.0
      %v2783 = vsel %vm1737, %v2745, 0.0
      %v2784 = vsel %vm1738, %v2747, 0.0
      %v2785 = vsel %vm1738, %v2749, 0.0
      %v2786 = vsel %vm1739, %v2751, 0.0
      %v2787 = vsel %vm1739, %v2753, 0.0
      %v2788 = vsel %vm1740, %v2755, 0.0
      %v2789 = vsel %vm1740, %v2757, 0.0
      %v2790 = vpack.c.bf16 %v2776, %v2774
      %v2791 = vpack.c.bf16 %v2777, %v2775
      %v2792 = vpack.c.bf16 %v2780, %v2778
      %v2793 = vpack.c.bf16 %v2781, %v2779
      %v2794 = vpack.c.bf16 %v2784, %v2782
      %v2795 = vpack.c.bf16 %v2785, %v2783
      %v2796 = vpack.c.bf16 %v2788, %v2786
      %v2797 = vpack.c.bf16 %v2789, %v2787
      %s2798 = scalar_lea.vmem %s3, 960
      %v2799 = vld [vmem:[%s2798] sm:$0xff]
      %v2800 = vld [vmem:[%s2798 + $0x8] sm:$0xff]
      %v2801 = vld [vmem:[%s2798 + $0x10] sm:$0xff]
      %v2802 = vld [vmem:[%s2798 + $0x18] sm:$0xff]
      %v2803 = vld [vmem:[%s2798 + $0x20] sm:$0xff]
      %v2804 = vld [vmem:[%s2798 + $0x28] sm:$0xff]
      %v2805 = vld [vmem:[%s2798 + $0x30] sm:$0xff]
      %v2806 = vld [vmem:[%s2798 + $0x38] sm:$0xff]
      %v2807 = vld [vmem:[%s2798 + $0x40] sm:$0xff]
      %v2808 = vld [vmem:[%s2798 + $0x48] sm:$0xff]
      %v2809 = vld [vmem:[%s2798 + $0x50] sm:$0xff]
      %v2810 = vld [vmem:[%s2798 + $0x58] sm:$0xff]
      %v2811 = vld [vmem:[%s2798 + $0x60] sm:$0xff]
      %v2812 = vld [vmem:[%s2798 + $0x68] sm:$0xff]
      %v2813 = vld [vmem:[%s2798 + $0x70] sm:$0xff]
      %v2814 = vld [vmem:[%s2798 + $0x78] sm:$0xff]
      %v2815 = vld [vmem:[%s2798 + $0x80] sm:$0xff]
      %v2816 = vld [vmem:[%s2798 + $0x88] sm:$0xff]
      %v2817 = vld [vmem:[%s2798 + $0x90] sm:$0xff]
      %v2818 = vld [vmem:[%s2798 + $0x98] sm:$0xff]
      %v2819 = vld [vmem:[%s2798 + $0xa0] sm:$0xff]
      %v2820 = vld [vmem:[%s2798 + $0xa8] sm:$0xff]
      %v2821 = vld [vmem:[%s2798 + $0xb0] sm:$0xff]
      %v2822 = vld [vmem:[%s2798 + $0xb8] sm:$0xff]
      %v2847 = vunpack.c.l.b16 %v2799
      %v2848 = vunpack.c.h.b16 %v2799
      %v2849 = vunpack.c.l.b16 %v2800
      %v2850 = vunpack.c.h.b16 %v2800
      %v2851 = vunpack.c.l.b16 %v2801
      %v2852 = vunpack.c.h.b16 %v2801
      %v2853 = vunpack.c.l.b16 %v2802
      %v2854 = vunpack.c.h.b16 %v2802
      %v2855 = vunpack.c.l.b16 %v2803
      %v2856 = vunpack.c.h.b16 %v2803
      %v2857 = vunpack.c.l.b16 %v2804
      %v2858 = vunpack.c.h.b16 %v2804
      %v2859 = vunpack.c.l.b16 %v2805
      %v2860 = vunpack.c.h.b16 %v2805
      %v2861 = vunpack.c.l.b16 %v2806
      %v2862 = vunpack.c.h.b16 %v2806
      %v2863 = vunpack.c.l.b16 %v2807
      %v2864 = vunpack.c.h.b16 %v2807
      %v2865 = vunpack.c.l.b16 %v2808
      %v2866 = vunpack.c.h.b16 %v2808
      %v2867 = vunpack.c.l.b16 %v2809
      %v2868 = vunpack.c.h.b16 %v2809
      %v2869 = vunpack.c.l.b16 %v2810
      %v2870 = vunpack.c.h.b16 %v2810
      %v2871 = vunpack.c.l.b16 %v2811
      %v2872 = vunpack.c.h.b16 %v2811
      %v2873 = vunpack.c.l.b16 %v2812
      %v2874 = vunpack.c.h.b16 %v2812
      %v2875 = vunpack.c.l.b16 %v2813
      %v2876 = vunpack.c.h.b16 %v2813
      %v2877 = vunpack.c.l.b16 %v2814
      %v2878 = vunpack.c.h.b16 %v2814
      %v2879 = vunpack.c.l.b16 %v2815
      %v2880 = vunpack.c.h.b16 %v2815
      %v2881 = vunpack.c.l.b16 %v2816
      %v2882 = vunpack.c.h.b16 %v2816
      %v2883 = vunpack.c.l.b16 %v2817
      %v2884 = vunpack.c.h.b16 %v2817
      %v2885 = vunpack.c.l.b16 %v2818
      %v2886 = vunpack.c.h.b16 %v2818
      %v2887 = vunpack.c.l.b16 %v2819
      %v2888 = vunpack.c.h.b16 %v2819
      %v2889 = vunpack.c.l.b16 %v2820
      %v2890 = vunpack.c.h.b16 %v2820
      %v2891 = vunpack.c.l.b16 %v2821
      %v2892 = vunpack.c.h.b16 %v2821
      %v2893 = vunpack.c.l.b16 %v2822
      %v2894 = vunpack.c.h.b16 %v2822
      %v2895 = vpack.c.b16 %v2849, %v2847
      %v2896 = vpack.c.b16 %v2850, %v2848
      %v2897 = vpack.c.b16 %v2853, %v2851
      %v2898 = vpack.c.b16 %v2854, %v2852
      %v2899 = vpack.c.b16 %v2857, %v2855
      %v2900 = vpack.c.b16 %v2858, %v2856
      %v2901 = vpack.c.b16 %v2861, %v2859
      %v2902 = vpack.c.b16 %v2862, %v2860
      %v2903 = vpack.c.b16 %v2865, %v2863
      %v2904 = vpack.c.b16 %v2866, %v2864
      %v2905 = vpack.c.b16 %v2869, %v2867
      %v2906 = vpack.c.b16 %v2870, %v2868
      %v2907 = vpack.c.b16 %v2873, %v2871
      %v2908 = vpack.c.b16 %v2874, %v2872
      %v2909 = vpack.c.b16 %v2877, %v2875
      %v2910 = vpack.c.b16 %v2878, %v2876
      %v2911 = vpack.c.b16 %v2881, %v2879
      %v2912 = vpack.c.b16 %v2882, %v2880
      %v2913 = vpack.c.b16 %v2885, %v2883
      %v2914 = vpack.c.b16 %v2886, %v2884
      %v2915 = vpack.c.b16 %v2889, %v2887
      %v2916 = vpack.c.b16 %v2890, %v2888
      %v2917 = vpack.c.b16 %v2893, %v2891
      %v2918 = vpack.c.b16 %v2894, %v2892
      %v2944 = vsel %vm826, %v2791, 0
      %v2947 = vsel %vm826, %v2793, 0
      %v2950 = vsel %vm826, %v2795, 0
      %v2953 = vsel %vm826, %v2797, 0
      %2955 = vmatprep.subr.bf16.mxu0 %v2896
      %2956 = vmatpush1.bf16.msra.mxu0 %v2895
      %2957 = vmatprep.subr.bf16.mxu0 %v2898
      %2958 = vmatpush1.bf16.msra.mxu0 %v2897
      %2959 = vmatprep.subr.bf16.mxu0 %v2900
      %2960 = vmatpush1.bf16.msra.mxu0 %v2899
      %2961 = vmatprep.subr.bf16.mxu0 %v2902
      %2962 = vmatpush1.bf16.msra.mxu0 %v2901
      %2963 = vmatprep.subr.bf16.mxu0 %v2904
      %2964 = vmatpush1.bf16.msra.mxu0 %v2903
      %2965 = vmatprep.subr.bf16.mxu0 %v2906
      %2966 = vmatpush1.bf16.msra.mxu0 %v2905
      %2967 = vmatprep.subr.bf16.mxu0 %v2908
      %2968 = vmatpush1.bf16.msra.mxu0 %v2907
      %2969 = vmatprep.subr.bf16.mxu0 %v2910
      %2970 = vmatpush1.bf16.msra.mxu0 %v2909
      %2971 = vmatprep.subr.bf16.mxu0 %v2912
      %2972 = vmatpush1.bf16.msra.mxu0 %v2911
      %2973 = vmatprep.subr.bf16.mxu0 %v2914
      %2974 = vmatpush1.bf16.msra.mxu0 %v2913
      %2975 = vmatprep.subr.bf16.mxu0 %v2916
      %2976 = vmatpush1.bf16.msra.mxu0 %v2915
      %2977 = vmatprep.subr.bf16.mxu0 %v2918
      %2978 = vmatpush1.bf16.msra.mxu0 %v2917
      %2979 = vmatprep.subr.bf16.mxu0 0
      %2980 = vmatpush1.bf16.msra.mxu0 0
      %2981 = vmatprep.subr.bf16.mxu0 0
      %2982 = vmatpush1.bf16.msra.mxu0 0
      %2983 = vmatprep.subr.bf16.mxu0 0
      %2984 = vmatpush1.bf16.msra.mxu0 0
      %2985 = vmatprep.subr.bf16.mxu0 0
      %2986 = vmatpush1.bf16.msra.mxu0 0
      %2987 = vmatprep.mubr.bf16.mxu0 %v2944
      %2988 = vmatmul.mubr.bf16.gmra.mrb[0].mxu0 %v2790
      %v2989 = vpop.f32.mrb[0].mxu0
      %v2990 = vadd.f32 0.0, %v2989
      %v2991 = vpop.f32.mrb[0].mxu0
      %v2992 = vadd.f32 0.0, %v2991
      %v2993 = vpop.f32.mrb[0].mxu0
      %v2994 = vadd.f32 0.0, %v2993
      %v2995 = vpop.f32.mrb[0].mxu0
      %v2996 = vadd.f32 0.0, %v2995
      %2997 = vmatprep.mubr.bf16.mxu0 %v2947
      %2998 = vmatmul.mubr.bf16.gmra.mrb[0].mxu0 %v2792
      %v2999 = vpop.f32.mrb[0].mxu0
      %v3000 = vadd.f32 0.0, %v2999
      %v3001 = vpop.f32.mrb[0].mxu0
      %v3002 = vadd.f32 0.0, %v3001
      %v3003 = vpop.f32.mrb[0].mxu0
      %v3004 = vadd.f32 0.0, %v3003
      %v3005 = vpop.f32.mrb[0].mxu0
      %v3006 = vadd.f32 0.0, %v3005
      %3007 = vmatprep.mubr.bf16.mxu0 %v2950
      %3008 = vmatmul.mubr.bf16.gmra.mrb[0].mxu0 %v2794
      %v3009 = vpop.f32.mrb[0].mxu0
      %v3010 = vadd.f32 0.0, %v3009
      %v3011 = vpop.f32.mrb[0].mxu0
      %v3012 = vadd.f32 0.0, %v3011
      %v3013 = vpop.f32.mrb[0].mxu0
      %v3014 = vadd.f32 0.0, %v3013
      %v3015 = vpop.f32.mrb[0].mxu0
      %v3016 = vadd.f32 0.0, %v3015
      %3017 = vmatprep.mubr.bf16.mxu0 %v2953
      %3018 = vmatmul.mubr.bf16.gmra.mrb[0].mxu0 %v2796
      %v3019 = vpop.f32.mrb[0].mxu0
      %v3020 = vadd.f32 0.0, %v3019
      %v3021 = vpop.f32.mrb[0].mxu0
      %v3022 = vadd.f32 0.0, %v3021
      %v3023 = vpop.f32.mrb[0].mxu0
      %v3024 = vadd.f32 0.0, %v3023
      %v3025 = vpop.f32.mrb[0].mxu0
      %v3026 = vadd.f32 0.0, %v3025
      %3027 = vdwg.mxu0
      %v3028 = vadd.f32 %v2686, %v2990
      %v3029 = vadd.f32 %v2687, %v2992
      %v3030 = vadd.f32 %v2688, %v2994
      %v3031 = vadd.f32 %v2689, %v2996
      %v3032 = vadd.f32 %v2690, %v3000
      %v3033 = vadd.f32 %v2691, %v3002
      %v3034 = vadd.f32 %v2692, %v3004
      %v3035 = vadd.f32 %v2693, %v3006
      %v3036 = vadd.f32 %v2694, %v3010
      %v3037 = vadd.f32 %v2695, %v3012
      %v3038 = vadd.f32 %v2696, %v3014
      %v3039 = vadd.f32 %v2697, %v3016
      %v3040 = vadd.f32 %v2698, %v3020
      %v3041 = vadd.f32 %v2699, %v3022
      %v3042 = vadd.f32 %v2700, %v3024
      %v3043 = vadd.f32 %v2701, %v3026
      %v3044 = vld [vmem:[#allocation2 + $0x90] sm:$0xff]
      %v3045 = vld [vmem:[#allocation2 + $0x98] sm:$0xff]
      %v3046 = vsel %vm1085, %v2354, 0.0
      %v3047 = vsel %vm1085, %v2355, 0.0
      %v3048 = vsel %vm1086, %v2356, 0.0
      %v3049 = vsel %vm1086, %v2357, 0.0
      %v3050 = vsel %vm1087, %v2358, 0.0
      %v3051 = vsel %vm1087, %v2359, 0.0
      %v3052 = vsel %vm1088, %v2360, 0.0
      %v3053 = vsel %vm1088, %v2361, 0.0
      %v3054 = vsel %vm1089, %v2362, 0.0
      %v3055 = vsel %vm1089, %v2363, 0.0
      %v3056 = vsel %vm1090, %v2364, 0.0
      %v3057 = vsel %vm1090, %v2365, 0.0
      %v3058 = vsel %vm1091, %v2366, 0.0
      %v3059 = vsel %vm1091, %v2367, 0.0
      %v3060 = vsel %vm1092, %v3044, 0.0
      %v3061 = vsel %vm1092, %v3045, 0.0
      %v3062 = vpack.c.bf16 %v3048, %v3046
      %v3063 = vpack.c.bf16 %v3049, %v3047
      %v3064 = vpack.c.bf16 %v3052, %v3050
      %v3065 = vpack.c.bf16 %v3053, %v3051
      %v3066 = vpack.c.bf16 %v3056, %v3054
      %v3067 = vpack.c.bf16 %v3057, %v3055
      %v3068 = vpack.c.bf16 %v3060, %v3058
      %v3069 = vpack.c.bf16 %v3061, %v3059
      %s3070 = scalar_lea.vmem %s3, 1152
      %v3071 = vld [vmem:[%s3070] sm:$0xff]
      %v3072 = vld [vmem:[%s3070 + $0x8] sm:$0xff]
      %v3073 = vld [vmem:[%s3070 + $0x10] sm:$0xff]
      %v3074 = vld [vmem:[%s3070 + $0x18] sm:$0xff]
      %v3075 = vld [vmem:[%s3070 + $0x20] sm:$0xff]
      %v3076 = vld [vmem:[%s3070 + $0x28] sm:$0xff]
      %v3077 = vld [vmem:[%s3070 + $0x30] sm:$0xff]
      %v3078 = vld [vmem:[%s3070 + $0x38] sm:$0xff]
      %v3079 = vld [vmem:[%s3070 + $0x40] sm:$0xff]
      %v3080 = vld [vmem:[%s3070 + $0x48] sm:$0xff]
      %v3081 = vld [vmem:[%s3070 + $0x50] sm:$0xff]
      %v3082 = vld [vmem:[%s3070 + $0x58] sm:$0xff]
      %v3083 = vld [vmem:[%s3070 + $0x60] sm:$0xff]
      %v3084 = vld [vmem:[%s3070 + $0x68] sm:$0xff]
      %v3085 = vld [vmem:[%s3070 + $0x70] sm:$0xff]
      %v3086 = vld [vmem:[%s3070 + $0x78] sm:$0xff]
      %v3087 = vld [vmem:[%s3070 + $0x80] sm:$0xff]
      %v3088 = vld [vmem:[%s3070 + $0x88] sm:$0xff]
      %v3089 = vld [vmem:[%s3070 + $0x90] sm:$0xff]
      %v3090 = vld [vmem:[%s3070 + $0x98] sm:$0xff]
      %v3091 = vld [vmem:[%s3070 + $0xa0] sm:$0xff]
      %v3092 = vld [vmem:[%s3070 + $0xa8] sm:$0xff]
      %v3093 = vld [vmem:[%s3070 + $0xb0] sm:$0xff]
      %v3094 = vld [vmem:[%s3070 + $0xb8] sm:$0xff]
      %v3119 = vunpack.c.l.b16 %v3071
      %v3120 = vunpack.c.h.b16 %v3071
      %v3121 = vunpack.c.l.b16 %v3072
      %v3122 = vunpack.c.h.b16 %v3072
      %v3123 = vunpack.c.l.b16 %v3073
      %v3124 = vunpack.c.h.b16 %v3073
      %v3125 = vunpack.c.l.b16 %v3074
      %v3126 = vunpack.c.h.b16 %v3074
      %v3127 = vunpack.c.l.b16 %v3075
      %v3128 = vunpack.c.h.b16 %v3075
      %v3129 = vunpack.c.l.b16 %v3076
      %v3130 = vunpack.c.h.b16 %v3076
      %v3131 = vunpack.c.l.b16 %v3077
      %v3132 = vunpack.c.h.b16 %v3077
      %v3133 = vunpack.c.l.b16 %v3078
      %v3134 = vunpack.c.h.b16 %v3078
      %v3135 = vunpack.c.l.b16 %v3079
      %v3136 = vunpack.c.h.b16 %v3079
      %v3137 = vunpack.c.l.b16 %v3080
      %v3138 = vunpack.c.h.b16 %v3080
      %v3139 = vunpack.c.l.b16 %v3081
      %v3140 = vunpack.c.h.b16 %v3081
      %v3141 = vunpack.c.l.b16 %v3082
      %v3142 = vunpack.c.h.b16 %v3082
      %v3143 = vunpack.c.l.b16 %v3083
      %v3144 = vunpack.c.h.b16 %v3083
      %v3145 = vunpack.c.l.b16 %v3084
      %v3146 = vunpack.c.h.b16 %v3084
      %v3147 = vunpack.c.l.b16 %v3085
      %v3148 = vunpack.c.h.b16 %v3085
      %v3149 = vunpack.c.l.b16 %v3086
      %v3150 = vunpack.c.h.b16 %v3086
      %v3151 = vunpack.c.l.b16 %v3087
      %v3152 = vunpack.c.h.b16 %v3087
      %v3153 = vunpack.c.l.b16 %v3088
      %v3154 = vunpack.c.h.b16 %v3088
      %v3155 = vunpack.c.l.b16 %v3089
      %v3156 = vunpack.c.h.b16 %v3089
      %v3157 = vunpack.c.l.b16 %v3090
      %v3158 = vunpack.c.h.b16 %v3090
      %v3159 = vunpack.c.l.b16 %v3091
      %v3160 = vunpack.c.h.b16 %v3091
      %v3161 = vunpack.c.l.b16 %v3092
      %v3162 = vunpack.c.h.b16 %v3092
      %v3163 = vunpack.c.l.b16 %v3093
      %v3164 = vunpack.c.h.b16 %v3093
      %v3165 = vunpack.c.l.b16 %v3094
      %v3166 = vunpack.c.h.b16 %v3094
      %v3167 = vpack.c.b16 %v3121, %v3119
      %v3168 = vpack.c.b16 %v3122, %v3120
      %v3169 = vpack.c.b16 %v3125, %v3123
      %v3170 = vpack.c.b16 %v3126, %v3124
      %v3171 = vpack.c.b16 %v3129, %v3127
      %v3172 = vpack.c.b16 %v3130, %v3128
      %v3173 = vpack.c.b16 %v3133, %v3131
      %v3174 = vpack.c.b16 %v3134, %v3132
      %v3175 = vpack.c.b16 %v3137, %v3135
      %v3176 = vpack.c.b16 %v3138, %v3136
      %v3177 = vpack.c.b16 %v3141, %v3139
      %v3178 = vpack.c.b16 %v3142, %v3140
      %v3179 = vpack.c.b16 %v3145, %v3143
      %v3180 = vpack.c.b16 %v3146, %v3144
      %v3181 = vpack.c.b16 %v3149, %v3147
      %v3182 = vpack.c.b16 %v3150, %v3148
      %v3183 = vpack.c.b16 %v3153, %v3151
      %v3184 = vpack.c.b16 %v3154, %v3152
      %v3185 = vpack.c.b16 %v3157, %v3155
      %v3186 = vpack.c.b16 %v3158, %v3156
      %v3187 = vpack.c.b16 %v3161, %v3159
      %v3188 = vpack.c.b16 %v3162, %v3160
      %v3189 = vpack.c.b16 %v3165, %v3163
      %v3190 = vpack.c.b16 %v3166, %v3164
      %v3216 = vsel %vm826, %v3063, 0
      %v3219 = vsel %vm826, %v3065, 0
      %v3222 = vsel %vm826, %v3067, 0
      %v3225 = vsel %vm826, %v3069, 0
      %3227 = vmatprep.subr.bf16.mxu0 %v3168
      %3228 = vmatpush1.bf16.msra.mxu0 %v3167
      %3229 = vmatprep.subr.bf16.mxu0 %v3170
      %3230 = vmatpush1.bf16.msra.mxu0 %v3169
      %3231 = vmatprep.subr.bf16.mxu0 %v3172
      %3232 = vmatpush1.bf16.msra.mxu0 %v3171
      %3233 = vmatprep.subr.bf16.mxu0 %v3174
      %3234 = vmatpush1.bf16.msra.mxu0 %v3173
      %3235 = vmatprep.subr.bf16.mxu0 %v3176
      %3236 = vmatpush1.bf16.msra.mxu0 %v3175
      %3237 = vmatprep.subr.bf16.mxu0 %v3178
      %3238 = vmatpush1.bf16.msra.mxu0 %v3177
      %3239 = vmatprep.subr.bf16.mxu0 %v3180
      %3240 = vmatpush1.bf16.msra.mxu0 %v3179
      %3241 = vmatprep.subr.bf16.mxu0 %v3182
      %3242 = vmatpush1.bf16.msra.mxu0 %v3181
      %3243 = vmatprep.subr.bf16.mxu0 %v3184
      %3244 = vmatpush1.bf16.msra.mxu0 %v3183
      %3245 = vmatprep.subr.bf16.mxu0 %v3186
      %3246 = vmatpush1.bf16.msra.mxu0 %v3185
      %3247 = vmatprep.subr.bf16.mxu0 %v3188
      %3248 = vmatpush1.bf16.msra.mxu0 %v3187
      %3249 = vmatprep.subr.bf16.mxu0 %v3190
      %3250 = vmatpush1.bf16.msra.mxu0 %v3189
      %3251 = vmatprep.subr.bf16.mxu0 0
      %3252 = vmatpush1.bf16.msra.mxu0 0
      %3253 = vmatprep.subr.bf16.mxu0 0
      %3254 = vmatpush1.bf16.msra.mxu0 0
      %3255 = vmatprep.subr.bf16.mxu0 0
      %3256 = vmatpush1.bf16.msra.mxu0 0
      %3257 = vmatprep.subr.bf16.mxu0 0
      %3258 = vmatpush1.bf16.msra.mxu0 0
      %3259 = vmatprep.mubr.bf16.mxu0 %v3216
      %3260 = vmatmul.mubr.bf16.gmra.mrb[0].mxu0 %v3062
      %v3261 = vpop.f32.mrb[0].mxu0
      %v3262 = vadd.f32 0.0, %v3261
      %v3263 = vpop.f32.mrb[0].mxu0
      %v3264 = vadd.f32 0.0, %v3263
      %v3265 = vpop.f32.mrb[0].mxu0
      %v3266 = vadd.f32 0.0, %v3265
      %v3267 = vpop.f32.mrb[0].mxu0
      %v3268 = vadd.f32 0.0, %v3267
      %3269 = vmatprep.mubr.bf16.mxu0 %v3219
      %3270 = vmatmul.mubr.bf16.gmra.mrb[0].mxu0 %v3064
      %v3271 = vpop.f32.mrb[0].mxu0
      %v3272 = vadd.f32 0.0, %v3271
      %v3273 = vpop.f32.mrb[0].mxu0
      %v3274 = vadd.f32 0.0, %v3273
      %v3275 = vpop.f32.mrb[0].mxu0
      %v3276 = vadd.f32 0.0, %v3275
      %v3277 = vpop.f32.mrb[0].mxu0
      %v3278 = vadd.f32 0.0, %v3277
      %3279 = vmatprep.mubr.bf16.mxu0 %v3222
      %3280 = vmatmul.mubr.bf16.gmra.mrb[0].mxu0 %v3066
      %v3281 = vpop.f32.mrb[0].mxu0
      %v3282 = vadd.f32 0.0, %v3281
      %v3283 = vpop.f32.mrb[0].mxu0
      %v3284 = vadd.f32 0.0, %v3283
      %v3285 = vpop.f32.mrb[0].mxu0
      %v3286 = vadd.f32 0.0, %v3285
      %v3287 = vpop.f32.mrb[0].mxu0
      %v3288 = vadd.f32 0.0, %v3287
      %3289 = vmatprep.mubr.bf16.mxu0 %v3225
      %3290 = vmatmul.mubr.bf16.gmra.mrb[0].mxu0 %v3068
      %v3291 = vpop.f32.mrb[0].mxu0
      %v3292 = vadd.f32 0.0, %v3291
      %v3293 = vpop.f32.mrb[0].mxu0
      %v3294 = vadd.f32 0.0, %v3293
      %v3295 = vpop.f32.mrb[0].mxu0
      %v3296 = vadd.f32 0.0, %v3295
      %v3297 = vpop.f32.mrb[0].mxu0
      %v3298 = vadd.f32 0.0, %v3297
      %3299 = vdwg.mxu0
      %v3300 = vadd.f32 %v3028, %v3262
      %v3301 = vadd.f32 %v3029, %v3264
      %v3302 = vadd.f32 %v3030, %v3266
      %v3303 = vadd.f32 %v3031, %v3268
      %v3304 = vadd.f32 %v3032, %v3272
      %v3305 = vadd.f32 %v3033, %v3274
      %v3306 = vadd.f32 %v3034, %v3276
      %v3307 = vadd.f32 %v3035, %v3278
      %v3308 = vadd.f32 %v3036, %v3282
      %v3309 = vadd.f32 %v3037, %v3284
      %v3310 = vadd.f32 %v3038, %v3286
      %v3311 = vadd.f32 %v3039, %v3288
      %v3312 = vadd.f32 %v3040, %v3292
      %v3313 = vadd.f32 %v3041, %v3294
      %v3314 = vadd.f32 %v3042, %v3296
      %v3315 = vadd.f32 %v3043, %v3298
      %v3316 = vld [vmem:[#allocation2 + $0x20] sm:$0xfe]
      %v3317 = vld [vmem:[#allocation2 + $0x28] sm:$0xfe]
      %v3318 = vld [vmem:[#allocation2 + $0x30] sm:$0xff]
      %v3319 = vld [vmem:[#allocation2 + $0x38] sm:$0xff]
      %v3320 = vld [vmem:[#allocation2 + $0x40] sm:$0xff]
      %v3321 = vld [vmem:[#allocation2 + $0x48] sm:$0xff]
      %v3322 = vld [vmem:[#allocation2 + $0x50] sm:$0xff]
      %v3323 = vld [vmem:[#allocation2 + $0x58] sm:$0xff]
      %v3324 = vld [vmem:[#allocation2 + $0x60] sm:$0xff]
      %v3325 = vld [vmem:[#allocation2 + $0x68] sm:$0xff]
      %v3326 = vld [vmem:[#allocation2 + $0x70] sm:$0xff]
      %v3327 = vld [vmem:[#allocation2 + $0x78] sm:$0xff]
      %v3328 = vld [vmem:[#allocation2 + $0x80] sm:$0xff]
      %v3329 = vld [vmem:[#allocation2 + $0x88] sm:$0xff]
      %v3330 = vld [vmem:[#allocation2 + $0x90] sm:$0xff]
      %v3331 = vld [vmem:[#allocation2 + $0x98] sm:$0xff]
      %v3332 = vld [vmem:[#allocation2 + $0xa0] sm:$0x1]
      %v3333 = vld [vmem:[#allocation2 + $0xa8] sm:$0x1]
      %v3334 = vpack.c.bf16 %v3318, %v3316
      %v3335 = vpack.c.bf16 %v3319, %v3317
      %v3336 = vpack.c.bf16 %v3322, %v3320
      %v3337 = vpack.c.bf16 %v3323, %v3321
      %v3338 = vpack.c.bf16 %v3326, %v3324
      %v3339 = vpack.c.bf16 %v3327, %v3325
      %v3340 = vpack.c.bf16 %v3330, %v3328
      %v3341 = vpack.c.bf16 %v3331, %v3329
      %v3342 = vpack.c.bf16 %v3332, %v3332
      %v3343 = vpack.c.bf16 %v3333, %v3333
      %s3344 = scalar_lea.vmem %s3, 1344
      %v3345 = vld [vmem:[%s3344] sm:$0xff]
      %v3346 = vld [vmem:[%s3344 + $0x8] sm:$0xff]
      %v3347 = vld [vmem:[%s3344 + $0x10] sm:$0xff]
      %v3348 = vld [vmem:[%s3344 + $0x18] sm:$0xff]
      %v3349 = vld [vmem:[%s3344 + $0x20] sm:$0xff]
      %v3350 = vld [vmem:[%s3344 + $0x28] sm:$0xff]
      %v3351 = vld [vmem:[%s3344 + $0x30] sm:$0xff]
      %v3352 = vld [vmem:[%s3344 + $0x38] sm:$0xff]
      %v3353 = vld [vmem:[%s3344 + $0x40] sm:$0xff]
      %v3354 = vld [vmem:[%s3344 + $0x48] sm:$0xff]
      %v3355 = vld [vmem:[%s3344 + $0x50] sm:$0xff]
      %v3356 = vld [vmem:[%s3344 + $0x58] sm:$0xff]
      %v3357 = vld [vmem:[%s3344 + $0x60] sm:$0xff]
      %v3358 = vld [vmem:[%s3344 + $0x68] sm:$0xff]
      %v3359 = vld [vmem:[%s3344 + $0x70] sm:$0xff]
      %v3360 = vld [vmem:[%s3344 + $0x78] sm:$0xff]
      %v3361 = vld [vmem:[%s3344 + $0x80] sm:$0xff]
      %v3362 = vld [vmem:[%s3344 + $0x88] sm:$0xff]
      %v3363 = vld [vmem:[%s3344 + $0x90] sm:$0xff]
      %v3364 = vld [vmem:[%s3344 + $0x98] sm:$0xff]
      %v3365 = vld [vmem:[%s3344 + $0xa0] sm:$0xff]
      %v3366 = vld [vmem:[%s3344 + $0xa8] sm:$0xff]
      %v3367 = vld [vmem:[%s3344 + $0xb0] sm:$0xff]
      %v3368 = vld [vmem:[%s3344 + $0xb8] sm:$0xff]
      %v3370 = vshrl.u32 %v3334, 16
      %v3372 = vshll.u32 %v3334, 16
      %v3374 = vrot.slane %v3372, 1
      %v3375 = vor.u32 %v3370, %v3374
      %v3377 = vshll.u32 %v3336, 16
      %v3379 = vrot.slane %v3377, 1
      %v3380 = vsel %vm1415, %v3375, %v3379
      %v3382 = vshrl.u32 %v3335, 16
      %v3384 = vshll.u32 %v3335, 16
      %v3386 = vrot.slane %v3384, 1
      %v3387 = vor.u32 %v3382, %v3386
      %v3389 = vshll.u32 %v3337, 16
      %v3391 = vrot.slane %v3389, 1
      %v3392 = vsel %vm1415, %v3387, %v3391
      %v3393 = vshrl.u32 %v3336, 16
      %v3395 = vor.u32 %v3393, %v3379
      %v3397 = vshll.u32 %v3338, 16
      %v3399 = vrot.slane %v3397, 1
      %v3400 = vsel %vm1415, %v3395, %v3399
      %v3401 = vshrl.u32 %v3337, 16
      %v3403 = vor.u32 %v3401, %v3391
      %v3405 = vshll.u32 %v3339, 16
      %v3407 = vrot.slane %v3405, 1
      %v3408 = vsel %vm1415, %v3403, %v3407
      %v3409 = vshrl.u32 %v3338, 16
      %v3411 = vor.u32 %v3409, %v3399
      %v3413 = vshll.u32 %v3340, 16
      %v3415 = vrot.slane %v3413, 1
      %v3416 = vsel %vm1415, %v3411, %v3415
      %v3417 = vshrl.u32 %v3339, 16
      %v3419 = vor.u32 %v3417, %v3407
      %v3421 = vshll.u32 %v3341, 16
      %v3423 = vrot.slane %v3421, 1
      %v3424 = vsel %vm1415, %v3419, %v3423
      %v3425 = vshrl.u32 %v3340, 16
      %v3427 = vor.u32 %v3425, %v3415
      %v3429 = vshll.u32 %v3342, 16
      %v3431 = vrot.slane %v3429, 1
      %v3432 = vsel %vm1415, %v3427, %v3431
      %v3433 = vshrl.u32 %v3341, 16
      %v3435 = vor.u32 %v3433, %v3423
      %v3437 = vshll.u32 %v3343, 16
      %v3439 = vrot.slane %v3437, 1
      %v3440 = vsel %vm1415, %v3435, %v3439
      %v3469 = vunpack.c.l.b16 %v3345
      %v3470 = vunpack.c.h.b16 %v3345
      %v3471 = vunpack.c.l.b16 %v3346
      %v3472 = vunpack.c.h.b16 %v3346
      %v3473 = vunpack.c.l.b16 %v3347
      %v3474 = vunpack.c.h.b16 %v3347
      %v3475 = vunpack.c.l.b16 %v3348
      %v3476 = vunpack.c.h.b16 %v3348
      %v3477 = vunpack.c.l.b16 %v3349
      %v3478 = vunpack.c.h.b16 %v3349
      %v3479 = vunpack.c.l.b16 %v3350
      %v3480 = vunpack.c.h.b16 %v3350
      %v3481 = vunpack.c.l.b16 %v3351
      %v3482 = vunpack.c.h.b16 %v3351
      %v3483 = vunpack.c.l.b16 %v3352
      %v3484 = vunpack.c.h.b16 %v3352
      %v3485 = vunpack.c.l.b16 %v3353
      %v3486 = vunpack.c.h.b16 %v3353
      %v3487 = vunpack.c.l.b16 %v3354
      %v3488 = vunpack.c.h.b16 %v3354
      %v3489 = vunpack.c.l.b16 %v3355
      %v3490 = vunpack.c.h.b16 %v3355
      %v3491 = vunpack.c.l.b16 %v3356
      %v3492 = vunpack.c.h.b16 %v3356
      %v3493 = vunpack.c.l.b16 %v3357
      %v3494 = vunpack.c.h.b16 %v3357
      %v3495 = vunpack.c.l.b16 %v3358
      %v3496 = vunpack.c.h.b16 %v3358
      %v3497 = vunpack.c.l.b16 %v3359
      %v3498 = vunpack.c.h.b16 %v3359
      %v3499 = vunpack.c.l.b16 %v3360
      %v3500 = vunpack.c.h.b16 %v3360
      %v3501 = vunpack.c.l.b16 %v3361
      %v3502 = vunpack.c.h.b16 %v3361
      %v3503 = vunpack.c.l.b16 %v3362
      %v3504 = vunpack.c.h.b16 %v3362
      %v3505 = vunpack.c.l.b16 %v3363
      %v3506 = vunpack.c.h.b16 %v3363
      %v3507 = vunpack.c.l.b16 %v3364
      %v3508 = vunpack.c.h.b16 %v3364
      %v3509 = vunpack.c.l.b16 %v3365
      %v3510 = vunpack.c.h.b16 %v3365
      %v3511 = vunpack.c.l.b16 %v3366
      %v3512 = vunpack.c.h.b16 %v3366
      %v3513 = vunpack.c.l.b16 %v3367
      %v3514 = vunpack.c.h.b16 %v3367
      %v3515 = vunpack.c.l.b16 %v3368
      %v3516 = vunpack.c.h.b16 %v3368
      %v3517 = vpack.c.b16 %v3471, %v3469
      %v3518 = vpack.c.b16 %v3472, %v3470
      %v3519 = vpack.c.b16 %v3475, %v3473
      %v3520 = vpack.c.b16 %v3476, %v3474
      %v3521 = vpack.c.b16 %v3479, %v3477
      %v3522 = vpack.c.b16 %v3480, %v3478
      %v3523 = vpack.c.b16 %v3483, %v3481
      %v3524 = vpack.c.b16 %v3484, %v3482
      %v3525 = vpack.c.b16 %v3487, %v3485
      %v3526 = vpack.c.b16 %v3488, %v3486
      %v3527 = vpack.c.b16 %v3491, %v3489
      %v3528 = vpack.c.b16 %v3492, %v3490
      %v3529 = vpack.c.b16 %v3495, %v3493
      %v3530 = vpack.c.b16 %v3496, %v3494
      %v3531 = vpack.c.b16 %v3499, %v3497
      %v3532 = vpack.c.b16 %v3500, %v3498
      %v3533 = vpack.c.b16 %v3503, %v3501
      %v3534 = vpack.c.b16 %v3504, %v3502
      %v3535 = vpack.c.b16 %v3507, %v3505
      %v3536 = vpack.c.b16 %v3508, %v3506
      %v3537 = vpack.c.b16 %v3511, %v3509
      %v3538 = vpack.c.b16 %v3512, %v3510
      %v3539 = vpack.c.b16 %v3515, %v3513
      %v3540 = vpack.c.b16 %v3516, %v3514
      %v3566 = vsel %vm826, %v3392, 0
      %v3569 = vsel %vm826, %v3408, 0
      %v3572 = vsel %vm826, %v3424, 0
      %v3575 = vsel %vm826, %v3440, 0
      %3577 = vmatprep.subr.bf16.mxu0 %v3518
      %3578 = vmatpush1.bf16.msra.mxu0 %v3517
      %3579 = vmatprep.subr.bf16.mxu0 %v3520
      %3580 = vmatpush1.bf16.msra.mxu0 %v3519
      %3581 = vmatprep.subr.bf16.mxu0 %v3522
      %3582 = vmatpush1.bf16.msra.mxu0 %v3521
      %3583 = vmatprep.subr.bf16.mxu0 %v3524
      %3584 = vmatpush1.bf16.msra.mxu0 %v3523
      %3585 = vmatprep.subr.bf16.mxu0 %v3526
      %3586 = vmatpush1.bf16.msra.mxu0 %v3525
      %3587 = vmatprep.subr.bf16.mxu0 %v3528
      %3588 = vmatpush1.bf16.msra.mxu0 %v3527
      %3589 = vmatprep.subr.bf16.mxu0 %v3530
      %3590 = vmatpush1.bf16.msra.mxu0 %v3529
      %3591 = vmatprep.subr.bf16.mxu0 %v3532
      %3592 = vmatpush1.bf16.msra.mxu0 %v3531
      %3593 = vmatprep.subr.bf16.mxu0 %v3534
      %3594 = vmatpush1.bf16.msra.mxu0 %v3533
      %3595 = vmatprep.subr.bf16.mxu0 %v3536
      %3596 = vmatpush1.bf16.msra.mxu0 %v3535
      %3597 = vmatprep.subr.bf16.mxu0 %v3538
      %3598 = vmatpush1.bf16.msra.mxu0 %v3537
      %3599 = vmatprep.subr.bf16.mxu0 %v3540
      %3600 = vmatpush1.bf16.msra.mxu0 %v3539
      %3601 = vmatprep.subr.bf16.mxu0 0
      %3602 = vmatpush1.bf16.msra.mxu0 0
      %3603 = vmatprep.subr.bf16.mxu0 0
      %3604 = vmatpush1.bf16.msra.mxu0 0
      %3605 = vmatprep.subr.bf16.mxu0 0
      %3606 = vmatpush1.bf16.msra.mxu0 0
      %3607 = vmatprep.subr.bf16.mxu0 0
      %3608 = vmatpush1.bf16.msra.mxu0 0
      %3609 = vmatprep.mubr.bf16.mxu0 %v3566
      %3610 = vmatmul.mubr.bf16.gmra.mrb[0].mxu0 %v3380
      %v3611 = vpop.f32.mrb[0].mxu0
      %v3612 = vadd.f32 0.0, %v3611
      %v3613 = vpop.f32.mrb[0].mxu0
      %v3614 = vadd.f32 0.0, %v3613
      %v3615 = vpop.f32.mrb[0].mxu0
      %v3616 = vadd.f32 0.0, %v3615
      %v3617 = vpop.f32.mrb[0].mxu0
      %v3618 = vadd.f32 0.0, %v3617
      %3619 = vmatprep.mubr.bf16.mxu0 %v3569
      %3620 = vmatmul.mubr.bf16.gmra.mrb[0].mxu0 %v3400
      %v3621 = vpop.f32.mrb[0].mxu0
      %v3622 = vadd.f32 0.0, %v3621
      %v3623 = vpop.f32.mrb[0].mxu0
      %v3624 = vadd.f32 0.0, %v3623
      %v3625 = vpop.f32.mrb[0].mxu0
      %v3626 = vadd.f32 0.0, %v3625
      %v3627 = vpop.f32.mrb[0].mxu0
      %v3628 = vadd.f32 0.0, %v3627
      %3629 = vmatprep.mubr.bf16.mxu0 %v3572
      %3630 = vmatmul.mubr.bf16.gmra.mrb[0].mxu0 %v3416
      %v3631 = vpop.f32.mrb[0].mxu0
      %v3632 = vadd.f32 0.0, %v3631
      %v3633 = vpop.f32.mrb[0].mxu0
      %v3634 = vadd.f32 0.0, %v3633
      %v3635 = vpop.f32.mrb[0].mxu0
      %v3636 = vadd.f32 0.0, %v3635
      %v3637 = vpop.f32.mrb[0].mxu0
      %v3638 = vadd.f32 0.0, %v3637
      %3639 = vmatprep.mubr.bf16.mxu0 %v3575
      %3640 = vmatmul.mubr.bf16.gmra.mrb[0].mxu0 %v3432
      %v3641 = vpop.f32.mrb[0].mxu0
      %v3642 = vadd.f32 0.0, %v3641
      %v3643 = vpop.f32.mrb[0].mxu0
      %v3644 = vadd.f32 0.0, %v3643
      %v3645 = vpop.f32.mrb[0].mxu0
      %v3646 = vadd.f32 0.0, %v3645
      %v3647 = vpop.f32.mrb[0].mxu0
      %v3648 = vadd.f32 0.0, %v3647
      %3649 = vdwg.mxu0
      %v3650 = vadd.f32 %v3300, %v3612
      %v3651 = vadd.f32 %v3301, %v3614
      %v3652 = vadd.f32 %v3302, %v3616
      %v3653 = vadd.f32 %v3303, %v3618
      %v3654 = vadd.f32 %v3304, %v3622
      %v3655 = vadd.f32 %v3305, %v3624
      %v3656 = vadd.f32 %v3306, %v3626
      %v3657 = vadd.f32 %v3307, %v3628
      %v3658 = vadd.f32 %v3308, %v3632
      %v3659 = vadd.f32 %v3309, %v3634
      %v3660 = vadd.f32 %v3310, %v3636
      %v3661 = vadd.f32 %v3311, %v3638
      %v3662 = vadd.f32 %v3312, %v3642
      %v3663 = vadd.f32 %v3313, %v3644
      %v3664 = vadd.f32 %v3314, %v3646
      %v3665 = vadd.f32 %v3315, %v3648
      %v3666 = vld [vmem:[#allocation2 + $0x20] sm:$0xfc]
      %v3667 = vld [vmem:[#allocation2 + $0x28] sm:$0xfc]
      %v3668 = vld [vmem:[#allocation2 + $0xa0] sm:$0x3]
      %v3669 = vld [vmem:[#allocation2 + $0xa8] sm:$0x3]
      %v3688 = vrot.slane %v3666, 2
      %v3689 = vrot.slane %v3318, 2
      %v3690 = vsel %vm1759, %v3688, %v3689
      %v3691 = vrot.slane %v3667, 2
      %v3692 = vrot.slane %v3319, 2
      %v3693 = vsel %vm1759, %v3691, %v3692
      %v3694 = vrot.slane %v3320, 2
      %v3695 = vsel %vm1759, %v3689, %v3694
      %v3696 = vrot.slane %v3321, 2
      %v3697 = vsel %vm1759, %v3692, %v3696
      %v3698 = vrot.slane %v3322, 2
      %v3699 = vsel %vm1759, %v3694, %v3698
      %v3700 = vrot.slane %v3323, 2
      %v3701 = vsel %vm1759, %v3696, %v3700
      %v3702 = vrot.slane %v3324, 2
      %v3703 = vsel %vm1759, %v3698, %v3702
      %v3704 = vrot.slane %v3325, 2
      %v3705 = vsel %vm1759, %v3700, %v3704
      %v3706 = vrot.slane %v3326, 2
      %v3707 = vsel %vm1759, %v3702, %v3706
      %v3708 = vrot.slane %v3327, 2
      %v3709 = vsel %vm1759, %v3704, %v3708
      %v3710 = vrot.slane %v3328, 2
      %v3711 = vsel %vm1759, %v3706, %v3710
      %v3712 = vrot.slane %v3329, 2
      %v3713 = vsel %vm1759, %v3708, %v3712
      %v3714 = vrot.slane %v3330, 2
      %v3715 = vsel %vm1759, %v3710, %v3714
      %v3716 = vrot.slane %v3331, 2
      %v3717 = vsel %vm1759, %v3712, %v3716
      %v3718 = vrot.slane %v3668, 2
      %v3719 = vsel %vm1759, %v3714, %v3718
      %v3720 = vrot.slane %v3669, 2
      %v3721 = vsel %vm1759, %v3716, %v3720
      %v3738 = vsel %vm1733, %v3690, 0.0
      %v3739 = vsel %vm1733, %v3693, 0.0
      %v3740 = vsel %vm1734, %v3695, 0.0
      %v3741 = vsel %vm1734, %v3697, 0.0
      %v3742 = vsel %vm1735, %v3699, 0.0
      %v3743 = vsel %vm1735, %v3701, 0.0
      %v3744 = vsel %vm1736, %v3703, 0.0
      %v3745 = vsel %vm1736, %v3705, 0.0
      %v3746 = vsel %vm1737, %v3707, 0.0
      %v3747 = vsel %vm1737, %v3709, 0.0
      %v3748 = vsel %vm1738, %v3711, 0.0
      %v3749 = vsel %vm1738, %v3713, 0.0
      %v3750 = vsel %vm1739, %v3715, 0.0
      %v3751 = vsel %vm1739, %v3717, 0.0
      %v3752 = vsel %vm1740, %v3719, 0.0
      %v3753 = vsel %vm1740, %v3721, 0.0
      %v3754 = vpack.c.bf16 %v3740, %v3738
      %v3755 = vpack.c.bf16 %v3741, %v3739
      %v3756 = vpack.c.bf16 %v3744, %v3742
      %v3757 = vpack.c.bf16 %v3745, %v3743
      %v3758 = vpack.c.bf16 %v3748, %v3746
      %v3759 = vpack.c.bf16 %v3749, %v3747
      %v3760 = vpack.c.bf16 %v3752, %v3750
      %v3761 = vpack.c.bf16 %v3753, %v3751
      %s3762 = scalar_lea.vmem %s3, 1536
      %v3763 = vld [vmem:[%s3762] sm:$0xff]
      %v3764 = vld [vmem:[%s3762 + $0x8] sm:$0xff]
      %v3765 = vld [vmem:[%s3762 + $0x10] sm:$0xff]
      %v3766 = vld [vmem:[%s3762 + $0x18] sm:$0xff]
      %v3767 = vld [vmem:[%s3762 + $0x20] sm:$0xff]
      %v3768 = vld [vmem:[%s3762 + $0x28] sm:$0xff]
      %v3769 = vld [vmem:[%s3762 + $0x30] sm:$0xff]
      %v3770 = vld [vmem:[%s3762 + $0x38] sm:$0xff]
      %v3771 = vld [vmem:[%s3762 + $0x40] sm:$0xff]
      %v3772 = vld [vmem:[%s3762 + $0x48] sm:$0xff]
      %v3773 = vld [vmem:[%s3762 + $0x50] sm:$0xff]
      %v3774 = vld [vmem:[%s3762 + $0x58] sm:$0xff]
      %v3775 = vld [vmem:[%s3762 + $0x60] sm:$0xff]
      %v3776 = vld [vmem:[%s3762 + $0x68] sm:$0xff]
      %v3777 = vld [vmem:[%s3762 + $0x70] sm:$0xff]
      %v3778 = vld [vmem:[%s3762 + $0x78] sm:$0xff]
      %v3779 = vld [vmem:[%s3762 + $0x80] sm:$0xff]
      %v3780 = vld [vmem:[%s3762 + $0x88] sm:$0xff]
      %v3781 = vld [vmem:[%s3762 + $0x90] sm:$0xff]
      %v3782 = vld [vmem:[%s3762 + $0x98] sm:$0xff]
      %v3783 = vld [vmem:[%s3762 + $0xa0] sm:$0xff]
      %v3784 = vld [vmem:[%s3762 + $0xa8] sm:$0xff]
      %v3785 = vld [vmem:[%s3762 + $0xb0] sm:$0xff]
      %v3786 = vld [vmem:[%s3762 + $0xb8] sm:$0xff]
      %v3811 = vunpack.c.l.b16 %v3763
      %v3812 = vunpack.c.h.b16 %v3763
      %v3813 = vunpack.c.l.b16 %v3764
      %v3814 = vunpack.c.h.b16 %v3764
      %v3815 = vunpack.c.l.b16 %v3765
      %v3816 = vunpack.c.h.b16 %v3765
      %v3817 = vunpack.c.l.b16 %v3766
      %v3818 = vunpack.c.h.b16 %v3766
      %v3819 = vunpack.c.l.b16 %v3767
      %v3820 = vunpack.c.h.b16 %v3767
      %v3821 = vunpack.c.l.b16 %v3768
      %v3822 = vunpack.c.h.b16 %v3768
      %v3823 = vunpack.c.l.b16 %v3769
      %v3824 = vunpack.c.h.b16 %v3769
      %v3825 = vunpack.c.l.b16 %v3770
      %v3826 = vunpack.c.h.b16 %v3770
      %v3827 = vunpack.c.l.b16 %v3771
      %v3828 = vunpack.c.h.b16 %v3771
      %v3829 = vunpack.c.l.b16 %v3772
      %v3830 = vunpack.c.h.b16 %v3772
      %v3831 = vunpack.c.l.b16 %v3773
      %v3832 = vunpack.c.h.b16 %v3773
      %v3833 = vunpack.c.l.b16 %v3774
      %v3834 = vunpack.c.h.b16 %v3774
      %v3835 = vunpack.c.l.b16 %v3775
      %v3836 = vunpack.c.h.b16 %v3775
      %v3837 = vunpack.c.l.b16 %v3776
      %v3838 = vunpack.c.h.b16 %v3776
      %v3839 = vunpack.c.l.b16 %v3777
      %v3840 = vunpack.c.h.b16 %v3777
      %v3841 = vunpack.c.l.b16 %v3778
      %v3842 = vunpack.c.h.b16 %v3778
      %v3843 = vunpack.c.l.b16 %v3779
      %v3844 = vunpack.c.h.b16 %v3779
      %v3845 = vunpack.c.l.b16 %v3780
      %v3846 = vunpack.c.h.b16 %v3780
      %v3847 = vunpack.c.l.b16 %v3781
      %v3848 = vunpack.c.h.b16 %v3781
      %v3849 = vunpack.c.l.b16 %v3782
      %v3850 = vunpack.c.h.b16 %v3782
      %v3851 = vunpack.c.l.b16 %v3783
      %v3852 = vunpack.c.h.b16 %v3783
      %v3853 = vunpack.c.l.b16 %v3784
      %v3854 = vunpack.c.h.b16 %v3784
      %v3855 = vunpack.c.l.b16 %v3785
      %v3856 = vunpack.c.h.b16 %v3785
      %v3857 = vunpack.c.l.b16 %v3786
      %v3858 = vunpack.c.h.b16 %v3786
      %v3859 = vpack.c.b16 %v3813, %v3811
      %v3860 = vpack.c.b16 %v3814, %v3812
      %v3861 = vpack.c.b16 %v3817, %v3815
      %v3862 = vpack.c.b16 %v3818, %v3816
      %v3863 = vpack.c.b16 %v3821, %v3819
      %v3864 = vpack.c.b16 %v3822, %v3820
      %v3865 = vpack.c.b16 %v3825, %v3823
      %v3866 = vpack.c.b16 %v3826, %v3824
      %v3867 = vpack.c.b16 %v3829, %v3827
      %v3868 = vpack.c.b16 %v3830, %v3828
      %v3869 = vpack.c.b16 %v3833, %v3831
      %v3870 = vpack.c.b16 %v3834, %v3832
      %v3871 = vpack.c.b16 %v3837, %v3835
      %v3872 = vpack.c.b16 %v3838, %v3836
      %v3873 = vpack.c.b16 %v3841, %v3839
      %v3874 = vpack.c.b16 %v3842, %v3840
      %v3875 = vpack.c.b16 %v3845, %v3843
      %v3876 = vpack.c.b16 %v3846, %v3844
      %v3877 = vpack.c.b16 %v3849, %v3847
      %v3878 = vpack.c.b16 %v3850, %v3848
      %v3879 = vpack.c.b16 %v3853, %v3851
      %v3880 = vpack.c.b16 %v3854, %v3852
      %v3881 = vpack.c.b16 %v3857, %v3855
      %v3882 = vpack.c.b16 %v3858, %v3856
      %v3908 = vsel %vm826, %v3755, 0
      %v3911 = vsel %vm826, %v3757, 0
      %v3914 = vsel %vm826, %v3759, 0
      %v3917 = vsel %vm826, %v3761, 0
      %3919 = vmatprep.subr.bf16.mxu0 %v3860
      %3920 = vmatpush1.bf16.msra.mxu0 %v3859
      %3921 = vmatprep.subr.bf16.mxu0 %v3862
      %3922 = vmatpush1.bf16.msra.mxu0 %v3861
      %3923 = vmatprep.subr.bf16.mxu0 %v3864
      %3924 = vmatpush1.bf16.msra.mxu0 %v3863
      %3925 = vmatprep.subr.bf16.mxu0 %v3866
      %3926 = vmatpush1.bf16.msra.mxu0 %v3865
      %3927 = vmatprep.subr.bf16.mxu0 %v3868
      %3928 = vmatpush1.bf16.msra.mxu0 %v3867
      %3929 = vmatprep.subr.bf16.mxu0 %v3870
      %3930 = vmatpush1.bf16.msra.mxu0 %v3869
      %3931 = vmatprep.subr.bf16.mxu0 %v3872
      %3932 = vmatpush1.bf16.msra.mxu0 %v3871
      %3933 = vmatprep.subr.bf16.mxu0 %v3874
      %3934 = vmatpush1.bf16.msra.mxu0 %v3873
      %3935 = vmatprep.subr.bf16.mxu0 %v3876
      %3936 = vmatpush1.bf16.msra.mxu0 %v3875
      %3937 = vmatprep.subr.bf16.mxu0 %v3878
      %3938 = vmatpush1.bf16.msra.mxu0 %v3877
      %3939 = vmatprep.subr.bf16.mxu0 %v3880
      %3940 = vmatpush1.bf16.msra.mxu0 %v3879
      %3941 = vmatprep.subr.bf16.mxu0 %v3882
      %3942 = vmatpush1.bf16.msra.mxu0 %v3881
      %3943 = vmatprep.subr.bf16.mxu0 0
      %3944 = vmatpush1.bf16.msra.mxu0 0
      %3945 = vmatprep.subr.bf16.mxu0 0
      %3946 = vmatpush1.bf16.msra.mxu0 0
      %3947 = vmatprep.subr.bf16.mxu0 0
      %3948 = vmatpush1.bf16.msra.mxu0 0
      %3949 = vmatprep.subr.bf16.mxu0 0
      %3950 = vmatpush1.bf16.msra.mxu0 0
      %3951 = vmatprep.mubr.bf16.mxu0 %v3908
      %3952 = vmatmul.mubr.bf16.gmra.mrb[0].mxu0 %v3754
      %v3953 = vpop.f32.mrb[0].mxu0
      %v3954 = vadd.f32 0.0, %v3953
      %v3955 = vpop.f32.mrb[0].mxu0
      %v3956 = vadd.f32 0.0, %v3955
      %v3957 = vpop.f32.mrb[0].mxu0
      %v3958 = vadd.f32 0.0, %v3957
      %v3959 = vpop.f32.mrb[0].mxu0
      %v3960 = vadd.f32 0.0, %v3959
      %3961 = vmatprep.mubr.bf16.mxu0 %v3911
      %3962 = vmatmul.mubr.bf16.gmra.mrb[0].mxu0 %v3756
      %v3963 = vpop.f32.mrb[0].mxu0
      %v3964 = vadd.f32 0.0, %v3963
      %v3965 = vpop.f32.mrb[0].mxu0
      %v3966 = vadd.f32 0.0, %v3965
      %v3967 = vpop.f32.mrb[0].mxu0
      %v3968 = vadd.f32 0.0, %v3967
      %v3969 = vpop.f32.mrb[0].mxu0
      %v3970 = vadd.f32 0.0, %v3969
      %3971 = vmatprep.mubr.bf16.mxu0 %v3914
      %3972 = vmatmul.mubr.bf16.gmra.mrb[0].mxu0 %v3758
      %v3973 = vpop.f32.mrb[0].mxu0
      %v3974 = vadd.f32 0.0, %v3973
      %v3975 = vpop.f32.mrb[0].mxu0
      %v3976 = vadd.f32 0.0, %v3975
      %v3977 = vpop.f32.mrb[0].mxu0
      %v3978 = vadd.f32 0.0, %v3977
      %v3979 = vpop.f32.mrb[0].mxu0
      %v3980 = vadd.f32 0.0, %v3979
      %3981 = vmatprep.mubr.bf16.mxu0 %v3917
      %3982 = vmatmul.mubr.bf16.gmra.mrb[0].mxu0 %v3760
      %v3983 = vpop.f32.mrb[0].mxu0
      %v3984 = vadd.f32 0.0, %v3983
      %v3985 = vpop.f32.mrb[0].mxu0
      %v3986 = vadd.f32 0.0, %v3985
      %v3987 = vpop.f32.mrb[0].mxu0
      %v3988 = vadd.f32 0.0, %v3987
      %v3989 = vpop.f32.mrb[0].mxu0
      %v3990 = vadd.f32 0.0, %v3989
      %3991 = vdwg.mxu0
      %v3992 = vadd.f32 %v3650, %v3954
      %v3993 = vadd.f32 %v3651, %v3956
      %v3994 = vadd.f32 %v3652, %v3958
      %v3995 = vadd.f32 %v3653, %v3960
      %v3996 = vadd.f32 %v3654, %v3964
      %v3997 = vadd.f32 %v3655, %v3966
      %v3998 = vadd.f32 %v3656, %v3968
      %v3999 = vadd.f32 %v3657, %v3970
      %v4000 = vadd.f32 %v3658, %v3974
      %v4001 = vadd.f32 %v3659, %v3976
      %v4002 = vadd.f32 %v3660, %v3978
      %v4003 = vadd.f32 %v3661, %v3980
      %v4004 = vadd.f32 %v3662, %v3984
      %v4005 = vadd.f32 %v3663, %v3986
      %v4006 = vadd.f32 %v3664, %v3988
      %v4007 = vadd.f32 %v3665, %v3990
      %v4008 = vmax.f32 %v3992, 0.0
      %v4009 = vmax.f32 %v3993, 0.0
      %v4010 = vmax.f32 %v3994, 0.0
      %v4011 = vmax.f32 %v3995, 0.0
      %v4012 = vmax.f32 %v3996, 0.0
      %v4013 = vmax.f32 %v3997, 0.0
      %v4014 = vmax.f32 %v3998, 0.0
      %v4015 = vmax.f32 %v3999, 0.0
      %v4016 = vmax.f32 %v4000, 0.0
      %v4017 = vmax.f32 %v4001, 0.0
      %v4018 = vmax.f32 %v4002, 0.0
      %v4019 = vmax.f32 %v4003, 0.0
      %v4020 = vmax.f32 %v4004, 0.0
      %v4021 = vmax.f32 %v4005, 0.0
      %v4022 = vmax.f32 %v4006, 0.0
      %v4023 = vmax.f32 %v4007, 0.0
      %v4024 = vpack.c.bf16 %v4010, %v4008
      %v4025 = vpack.c.bf16 %v4011, %v4009
      %v4026 = vpack.c.bf16 %v4014, %v4012
      %v4027 = vpack.c.bf16 %v4015, %v4013
      %v4028 = vpack.c.bf16 %v4018, %v4016
      %v4029 = vpack.c.bf16 %v4019, %v4017
      %v4030 = vpack.c.bf16 %v4022, %v4020
      %v4031 = vpack.c.bf16 %v4023, %v4021
      %v4032 = vld [vmem:[%s5] sm:$0xff]
      %v4033 = vld [vmem:[%s5 + $0x8] sm:$0xff]
      %v4034 = vld [vmem:[%s5 + $0x10] sm:$0xf]
      %v4035 = vld [vmem:[%s5 + $0x14] sm:$0xff]
      %v4036 = vld [vmem:[%s5 + $0x1c] sm:$0xff]
      %v4037 = vld [vmem:[%s5 + $0x24] sm:$0xf]
      %v4038 = vld [vmem:[%s5 + $0x28] sm:$0xff]
      %v4039 = vld [vmem:[%s5 + $0x30] sm:$0xff]
      %v4040 = vld [vmem:[%s5 + $0x38] sm:$0xf]
      %v4041 = vld [vmem:[%s5 + $0x3c] sm:$0xff]
      %v4042 = vld [vmem:[%s5 + $0x44] sm:$0xff]
      %v4043 = vld [vmem:[%s5 + $0x4c] sm:$0xf]
      %v4044 = vld [vmem:[%s5 + $0x50] sm:$0xff]
      %v4045 = vld [vmem:[%s5 + $0x58] sm:$0xff]
      %v4046 = vld [vmem:[%s5 + $0x60] sm:$0xf]
      %v4047 = vld [vmem:[%s5 + $0x64] sm:$0xff]
      %v4048 = vld [vmem:[%s5 + $0x6c] sm:$0xff]
      %v4049 = vld [vmem:[%s5 + $0x74] sm:$0xf]
      %v4050 = vld [vmem:[%s5 + $0x78] sm:$0xff]
      %v4051 = vld [vmem:[%s5 + $0x80] sm:$0xff]
      %v4052 = vld [vmem:[%s5 + $0x88] sm:$0xf]
      %v4053 = vld [vmem:[%s5 + $0x8c] sm:$0xff]
      %v4054 = vld [vmem:[%s5 + $0x94] sm:$0xff]
      %v4055 = vld [vmem:[%s5 + $0x9c] sm:$0xf]
      %v4056 = vld [vmem:[%s5 + $0xa0] sm:$0xff]
      %v4057 = vld [vmem:[%s5 + $0xa8] sm:$0xff]
      %v4058 = vld [vmem:[%s5 + $0xb0] sm:$0xf]
      %v4059 = vld [vmem:[%s5 + $0xb4] sm:$0xff]
      %v4060 = vld [vmem:[%s5 + $0xbc] sm:$0xff]
      %v4061 = vld [vmem:[%s5 + $0xc4] sm:$0xf]
      %v4062 = vld [vmem:[%s5 + $0xc8] sm:$0xff]
      %v4063 = vld [vmem:[%s5 + $0xd0] sm:$0xff]
      %v4064 = vld [vmem:[%s5 + $0xd8] sm:$0xf]
      %v4065 = vld [vmem:[%s5 + $0xdc] sm:$0xff]
      %v4066 = vld [vmem:[%s5 + $0xe4] sm:$0xff]
      %v4067 = vld [vmem:[%s5 + $0xec] sm:$0xf]
      %v4068 = vld [vmem:[%s5 + $0xf0] sm:$0xff]
      %v4069 = vld [vmem:[%s5 + $0xf8] sm:$0xff]
      %v4070 = vld [vmem:[%s5 + $0x100] sm:$0xf]
      %v4071 = vld [vmem:[%s5 + $0x104] sm:$0xff]
      %v4072 = vld [vmem:[%s5 + $0x10c] sm:$0xff]
      %v4073 = vld [vmem:[%s5 + $0x114] sm:$0xf]
      %v4074 = vld [vmem:[%s5 + $0x118] sm:$0xff]
      %v4075 = vld [vmem:[%s5 + $0x120] sm:$0xff]
      %v4076 = vld [vmem:[%s5 + $0x128] sm:$0xf]
      %v4077 = vld [vmem:[%s5 + $0x12c] sm:$0xff]
      %v4078 = vld [vmem:[%s5 + $0x134] sm:$0xff]
      %v4079 = vld [vmem:[%s5 + $0x13c] sm:$0xf]
      %v4080 = vld [vmem:[%s5 + $0x140] sm:$0xff]
      %v4081 = vld [vmem:[%s5 + $0x148] sm:$0xff]
      %v4082 = vld [vmem:[%s5 + $0x150] sm:$0xf]
      %v4083 = vld [vmem:[%s5 + $0x154] sm:$0xff]
      %v4084 = vld [vmem:[%s5 + $0x15c] sm:$0xff]
      %v4085 = vld [vmem:[%s5 + $0x164] sm:$0xf]
      %v4086 = vld [vmem:[%s5 + $0x168] sm:$0xff]
      %v4087 = vld [vmem:[%s5 + $0x170] sm:$0xff]
      %v4088 = vld [vmem:[%s5 + $0x178] sm:$0xf]
      %v4089 = vld [vmem:[%s5 + $0x17c] sm:$0xff]
      %v4090 = vld [vmem:[%s5 + $0x184] sm:$0xff]
      %v4091 = vld [vmem:[%s5 + $0x18c] sm:$0xf]
      %v4092 = vld [vmem:[%s5 + $0x190] sm:$0xff]
      %v4093 = vld [vmem:[%s5 + $0x198] sm:$0xff]
      %v4094 = vld [vmem:[%s5 + $0x1a0] sm:$0xf]
      %v4095 = vld [vmem:[%s5 + $0x1a4] sm:$0xff]
      %v4096 = vld [vmem:[%s5 + $0x1ac] sm:$0xff]
      %v4097 = vld [vmem:[%s5 + $0x1b4] sm:$0xf]
      %v4098 = vld [vmem:[%s5 + $0x1b8] sm:$0xff]
      %v4099 = vld [vmem:[%s5 + $0x1c0] sm:$0xff]
      %v4100 = vld [vmem:[%s5 + $0x1c8] sm:$0xf]
      %v4101 = vld [vmem:[%s5 + $0x1cc] sm:$0xff]
      %v4102 = vld [vmem:[%s5 + $0x1d4] sm:$0xff]
      %v4103 = vld [vmem:[%s5 + $0x1dc] sm:$0xf]
      %v4104 = vld [vmem:[%s6] sm:$0x1f]
      %v4106 = vlaneseq
      %v4107 = vshrl.u32 %v4106, 7
      %v4108 = vsub.s32 0, %v4107
      %v4109 = vrot.slane %v4104, %v4108
      %v4110 = vlaneseq
      %v4111 = vshrl.u32 %v4110, 7
      %v4112 = vsub.s32 1, %v4111
      %v4113 = vrot.slane %v4104, %v4112
      %v4114 = vlaneseq
      %v4115 = vshrl.u32 %v4114, 7
      %v4116 = vsub.s32 2, %v4115
      %v4117 = vrot.slane %v4104, %v4116
      %v4118 = vlaneseq
      %v4119 = vshrl.u32 %v4118, 7
      %v4120 = vsub.s32 3, %v4119
      %v4121 = vrot.slane %v4104, %v4120
      %v4122 = vlaneseq
      %v4123 = vshrl.u32 %v4122, 7
      %v4124 = vsub.s32 4, %v4123
      %v4125 = vrot.slane %v4104, %v4124
      %v4203 = vunpack.c.l.b16 %v4032
      %v4204 = vunpack.c.h.b16 %v4032
      %v4205 = vunpack.c.l.b16 %v4033
      %v4206 = vunpack.c.h.b16 %v4033
      %v4207 = vunpack.c.l.b16 %v4034
      %v4208 = vunpack.c.l.b16 %v4035
      %v4209 = vunpack.c.h.b16 %v4035
      %v4210 = vunpack.c.l.b16 %v4036
      %v4211 = vunpack.c.h.b16 %v4036
      %v4212 = vunpack.c.l.b16 %v4037
      %v4213 = vunpack.c.l.b16 %v4038
      %v4214 = vunpack.c.h.b16 %v4038
      %v4215 = vunpack.c.l.b16 %v4039
      %v4216 = vunpack.c.h.b16 %v4039
      %v4217 = vunpack.c.l.b16 %v4040
      %v4218 = vunpack.c.l.b16 %v4041
      %v4219 = vunpack.c.h.b16 %v4041
      %v4220 = vunpack.c.l.b16 %v4042
      %v4221 = vunpack.c.h.b16 %v4042
      %v4222 = vunpack.c.l.b16 %v4043
      %v4223 = vunpack.c.l.b16 %v4044
      %v4224 = vunpack.c.h.b16 %v4044
      %v4225 = vunpack.c.l.b16 %v4045
      %v4226 = vunpack.c.h.b16 %v4045
      %v4227 = vunpack.c.l.b16 %v4046
      %v4228 = vunpack.c.l.b16 %v4047
      %v4229 = vunpack.c.h.b16 %v4047
      %v4230 = vunpack.c.l.b16 %v4048
      %v4231 = vunpack.c.h.b16 %v4048
      %v4232 = vunpack.c.l.b16 %v4049
      %v4233 = vunpack.c.l.b16 %v4050
      %v4234 = vunpack.c.h.b16 %v4050
      %v4235 = vunpack.c.l.b16 %v4051
      %v4236 = vunpack.c.h.b16 %v4051
      %v4237 = vunpack.c.l.b16 %v4052
      %v4238 = vunpack.c.l.b16 %v4053
      %v4239 = vunpack.c.h.b16 %v4053
      %v4240 = vunpack.c.l.b16 %v4054
      %v4241 = vunpack.c.h.b16 %v4054
      %v4242 = vunpack.c.l.b16 %v4055
      %v4243 = vunpack.c.l.b16 %v4056
      %v4244 = vunpack.c.h.b16 %v4056
      %v4245 = vunpack.c.l.b16 %v4057
      %v4246 = vunpack.c.h.b16 %v4057
      %v4247 = vunpack.c.l.b16 %v4058
      %v4248 = vunpack.c.l.b16 %v4059
      %v4249 = vunpack.c.h.b16 %v4059
      %v4250 = vunpack.c.l.b16 %v4060
      %v4251 = vunpack.c.h.b16 %v4060
      %v4252 = vunpack.c.l.b16 %v4061
      %v4253 = vunpack.c.l.b16 %v4062
      %v4254 = vunpack.c.h.b16 %v4062
      %v4255 = vunpack.c.l.b16 %v4063
      %v4256 = vunpack.c.h.b16 %v4063
      %v4257 = vunpack.c.l.b16 %v4064
      %v4258 = vunpack.c.l.b16 %v4065
      %v4259 = vunpack.c.h.b16 %v4065
      %v4260 = vunpack.c.l.b16 %v4066
      %v4261 = vunpack.c.h.b16 %v4066
      %v4262 = vunpack.c.l.b16 %v4067
      %v4263 = vunpack.c.l.b16 %v4068
      %v4264 = vunpack.c.h.b16 %v4068
      %v4265 = vunpack.c.l.b16 %v4069
      %v4266 = vunpack.c.h.b16 %v4069
      %v4267 = vunpack.c.l.b16 %v4070
      %v4268 = vunpack.c.l.b16 %v4071
      %v4269 = vunpack.c.h.b16 %v4071
      %v4270 = vunpack.c.l.b16 %v4072
      %v4271 = vunpack.c.h.b16 %v4072
      %v4272 = vunpack.c.l.b16 %v4073
      %v4273 = vunpack.c.l.b16 %v4074
      %v4274 = vunpack.c.h.b16 %v4074
      %v4275 = vunpack.c.l.b16 %v4075
      %v4276 = vunpack.c.h.b16 %v4075
      %v4277 = vunpack.c.l.b16 %v4076
      %v4278 = vunpack.c.l.b16 %v4077
      %v4279 = vunpack.c.h.b16 %v4077
      %v4280 = vunpack.c.l.b16 %v4078
      %v4281 = vunpack.c.h.b16 %v4078
      %v4282 = vunpack.c.l.b16 %v4079
      %v4283 = vunpack.c.l.b16 %v4080
      %v4284 = vunpack.c.h.b16 %v4080
      %v4285 = vunpack.c.l.b16 %v4081
      %v4286 = vunpack.c.h.b16 %v4081
      %v4287 = vunpack.c.l.b16 %v4082
      %v4288 = vunpack.c.l.b16 %v4083
      %v4289 = vunpack.c.h.b16 %v4083
      %v4290 = vunpack.c.l.b16 %v4084
      %v4291 = vunpack.c.h.b16 %v4084
      %v4292 = vunpack.c.l.b16 %v4085
      %v4293 = vunpack.c.l.b16 %v4086
      %v4294 = vunpack.c.h.b16 %v4086
      %v4295 = vunpack.c.l.b16 %v4087
      %v4296 = vunpack.c.h.b16 %v4087
      %v4297 = vunpack.c.l.b16 %v4088
      %v4298 = vunpack.c.l.b16 %v4089
      %v4299 = vunpack.c.h.b16 %v4089
      %v4300 = vunpack.c.l.b16 %v4090
      %v4301 = vunpack.c.h.b16 %v4090
      %v4302 = vunpack.c.l.b16 %v4091
      %v4303 = vunpack.c.l.b16 %v4092
      %v4304 = vunpack.c.h.b16 %v4092
      %v4305 = vunpack.c.l.b16 %v4093
      %v4306 = vunpack.c.h.b16 %v4093
      %v4307 = vunpack.c.l.b16 %v4094
      %v4308 = vunpack.c.l.b16 %v4095
      %v4309 = vunpack.c.h.b16 %v4095
      %v4310 = vunpack.c.l.b16 %v4096
      %v4311 = vunpack.c.h.b16 %v4096
      %v4312 = vunpack.c.l.b16 %v4097
      %v4313 = vunpack.c.l.b16 %v4098
      %v4314 = vunpack.c.h.b16 %v4098
      %v4315 = vunpack.c.l.b16 %v4099
      %v4316 = vunpack.c.h.b16 %v4099
      %v4317 = vunpack.c.l.b16 %v4100
      %v4318 = vunpack.c.l.b16 %v4101
      %v4319 = vunpack.c.h.b16 %v4101
      %v4320 = vunpack.c.l.b16 %v4102
      %v4321 = vunpack.c.h.b16 %v4102
      %v4322 = vunpack.c.l.b16 %v4103
      %v4323 = vpack.c.b16 %v4208, %v4203
      %v4324 = vpack.c.b16 %v4209, %v4204
      %v4325 = vpack.c.b16 %v4210, %v4205
      %v4326 = vpack.c.b16 %v4211, %v4206
      %v4327 = vpack.c.b16 %v4212, %v4207
      %v4328 = vpack.c.b16 %v4218, %v4213
      %v4329 = vpack.c.b16 %v4219, %v4214
      %v4330 = vpack.c.b16 %v4220, %v4215
      %v4331 = vpack.c.b16 %v4221, %v4216
      %v4332 = vpack.c.b16 %v4222, %v4217
      %v4333 = vpack.c.b16 %v4228, %v4223
      %v4334 = vpack.c.b16 %v4229, %v4224
      %v4335 = vpack.c.b16 %v4230, %v4225
      %v4336 = vpack.c.b16 %v4231, %v4226
      %v4337 = vpack.c.b16 %v4232, %v4227
      %v4338 = vpack.c.b16 %v4238, %v4233
      %v4339 = vpack.c.b16 %v4239, %v4234
      %v4340 = vpack.c.b16 %v4240, %v4235
      %v4341 = vpack.c.b16 %v4241, %v4236
      %v4342 = vpack.c.b16 %v4242, %v4237
      %v4343 = vpack.c.b16 %v4248, %v4243
      %v4344 = vpack.c.b16 %v4249, %v4244
      %v4345 = vpack.c.b16 %v4250, %v4245
      %v4346 = vpack.c.b16 %v4251, %v4246
      %v4347 = vpack.c.b16 %v4252, %v4247
      %v4348 = vpack.c.b16 %v4258, %v4253
      %v4349 = vpack.c.b16 %v4259, %v4254
      %v4350 = vpack.c.b16 %v4260, %v4255
      %v4351 = vpack.c.b16 %v4261, %v4256
      %v4352 = vpack.c.b16 %v4262, %v4257
      %v4353 = vpack.c.b16 %v4268, %v4263
      %v4354 = vpack.c.b16 %v4269, %v4264
      %v4355 = vpack.c.b16 %v4270, %v4265
      %v4356 = vpack.c.b16 %v4271, %v4266
      %v4357 = vpack.c.b16 %v4272, %v4267
      %v4358 = vpack.c.b16 %v4278, %v4273
      %v4359 = vpack.c.b16 %v4279, %v4274
      %v4360 = vpack.c.b16 %v4280, %v4275
      %v4361 = vpack.c.b16 %v4281, %v4276
      %v4362 = vpack.c.b16 %v4282, %v4277
      %v4363 = vpack.c.b16 %v4288, %v4283
      %v4364 = vpack.c.b16 %v4289, %v4284
      %v4365 = vpack.c.b16 %v4290, %v4285
      %v4366 = vpack.c.b16 %v4291, %v4286
      %v4367 = vpack.c.b16 %v4292, %v4287
      %v4368 = vpack.c.b16 %v4298, %v4293
      %v4369 = vpack.c.b16 %v4299, %v4294
      %v4370 = vpack.c.b16 %v4300, %v4295
      %v4371 = vpack.c.b16 %v4301, %v4296
      %v4372 = vpack.c.b16 %v4302, %v4297
      %v4373 = vpack.c.b16 %v4308, %v4303
      %v4374 = vpack.c.b16 %v4309, %v4304
      %v4375 = vpack.c.b16 %v4310, %v4305
      %v4376 = vpack.c.b16 %v4311, %v4306
      %v4377 = vpack.c.b16 %v4312, %v4307
      %v4378 = vpack.c.b16 %v4318, %v4313
      %v4379 = vpack.c.b16 %v4319, %v4314
      %v4380 = vpack.c.b16 %v4320, %v4315
      %v4381 = vpack.c.b16 %v4321, %v4316
      %v4382 = vpack.c.b16 %v4322, %v4317
      %v4444 = vsel %vm826, %v4025, 0
      %v4447 = vsel %vm826, %v4027, 0
      %v4450 = vsel %vm826, %v4029, 0
      %v4453 = vsel %vm826, %v4031, 0
      %4455 = vmatprep.subr.bf16.mxu0 %v4324
      %4456 = vmatpush1.bf16.msra.mxu0 %v4323
      %4457 = vmatprep.subr.bf16.mxu0 %v4329
      %4458 = vmatpush1.bf16.msra.mxu0 %v4328
      %4459 = vmatprep.subr.bf16.mxu0 %v4334
      %4460 = vmatpush1.bf16.msra.mxu0 %v4333
      %4461 = vmatprep.subr.bf16.mxu0 %v4339
      %4462 = vmatpush1.bf16.msra.mxu0 %v4338
      %4463 = vmatprep.subr.bf16.mxu0 %v4344
      %4464 = vmatpush1.bf16.msra.mxu0 %v4343
      %4465 = vmatprep.subr.bf16.mxu0 %v4349
      %4466 = vmatpush1.bf16.msra.mxu0 %v4348
      %4467 = vmatprep.subr.bf16.mxu0 %v4354
      %4468 = vmatpush1.bf16.msra.mxu0 %v4353
      %4469 = vmatprep.subr.bf16.mxu0 %v4359
      %4470 = vmatpush1.bf16.msra.mxu0 %v4358
      %4471 = vmatprep.subr.bf16.mxu0 %v4364
      %4472 = vmatpush1.bf16.msra.mxu0 %v4363
      %4473 = vmatprep.subr.bf16.mxu0 %v4369
      %4474 = vmatpush1.bf16.msra.mxu0 %v4368
      %4475 = vmatprep.subr.bf16.mxu0 %v4374
      %4476 = vmatpush1.bf16.msra.mxu0 %v4373
      %4477 = vmatprep.subr.bf16.mxu0 %v4379
      %4478 = vmatpush1.bf16.msra.mxu0 %v4378
      %4479 = vmatprep.subr.bf16.mxu0 0
      %4480 = vmatpush1.bf16.msra.mxu0 0
      %4481 = vmatprep.subr.bf16.mxu0 0
      %4482 = vmatpush1.bf16.msra.mxu0 0
      %4483 = vmatprep.subr.bf16.mxu0 0
      %4484 = vmatpush1.bf16.msra.mxu0 0
      %4485 = vmatprep.subr.bf16.mxu0 0
      %4486 = vmatpush1.bf16.msra.mxu0 0
      %4487 = vmatprep.mubr.bf16.mxu0 %v4444
      %4488 = vmatmul.mubr.bf16.gmra.mrb[0].mxu0 %v4024
      %v4489 = vpop.f32.mrb[0].mxu0
      %v4490 = vadd.f32 %v4109, %v4489
      %v4491 = vpop.f32.mrb[0].mxu0
      %v4492 = vadd.f32 %v4113, %v4491
      %v4493 = vpop.f32.mrb[0].mxu0
      %v4494 = vadd.f32 %v4109, %v4493
      %v4495 = vpop.f32.mrb[0].mxu0
      %v4496 = vadd.f32 %v4113, %v4495
      %4497 = vmatprep.mubr.bf16.mxu0 %v4447
      %4498 = vmatmul.mubr.bf16.gmra.mrb[0].mxu0 %v4026
      %v4499 = vpop.f32.mrb[0].mxu0
      %v4500 = vadd.f32 %v4109, %v4499
      %v4501 = vpop.f32.mrb[0].mxu0
      %v4502 = vadd.f32 %v4113, %v4501
      %v4503 = vpop.f32.mrb[0].mxu0
      %v4504 = vadd.f32 %v4109, %v4503
      %v4505 = vpop.f32.mrb[0].mxu0
      %v4506 = vadd.f32 %v4113, %v4505
      %4507 = vmatprep.mubr.bf16.mxu0 %v4450
      %4508 = vmatmul.mubr.bf16.gmra.mrb[0].mxu0 %v4028
      %v4509 = vpop.f32.mrb[0].mxu0
      %v4510 = vadd.f32 %v4109, %v4509
      %v4511 = vpop.f32.mrb[0].mxu0
      %v4512 = vadd.f32 %v4113, %v4511
      %v4513 = vpop.f32.mrb[0].mxu0
      %v4514 = vadd.f32 %v4109, %v4513
      %v4515 = vpop.f32.mrb[0].mxu0
      %v4516 = vadd.f32 %v4113, %v4515
      %4517 = vmatprep.mubr.bf16.mxu0 %v4453
      %4518 = vmatmul.mubr.bf16.gmra.mrb[0].mxu0 %v4030
      %v4519 = vpop.f32.mrb[0].mxu0
      %v4520 = vadd.f32 %v4109, %v4519
      %v4521 = vpop.f32.mrb[0].mxu0
      %v4522 = vadd.f32 %v4113, %v4521
      %v4523 = vpop.f32.mrb[0].mxu0
      %v4524 = vadd.f32 %v4109, %v4523
      %v4525 = vpop.f32.mrb[0].mxu0
      %v4526 = vadd.f32 %v4113, %v4525
      %4527 = vdwg.mxu0
      %4528 = vmatprep.subr.bf16.mxu0 %v4326
      %4529 = vmatpush1.bf16.msra.mxu0 %v4325
      %4530 = vmatprep.subr.bf16.mxu0 %v4331
      %4531 = vmatpush1.bf16.msra.mxu0 %v4330
      %4532 = vmatprep.subr.bf16.mxu0 %v4336
      %4533 = vmatpush1.bf16.msra.mxu0 %v4335
      %4534 = vmatprep.subr.bf16.mxu0 %v4341
      %4535 = vmatpush1.bf16.msra.mxu0 %v4340
      %4536 = vmatprep.subr.bf16.mxu0 %v4346
      %4537 = vmatpush1.bf16.msra.mxu0 %v4345
      %4538 = vmatprep.subr.bf16.mxu0 %v4351
      %4539 = vmatpush1.bf16.msra.mxu0 %v4350
      %4540 = vmatprep.subr.bf16.mxu0 %v4356
      %4541 = vmatpush1.bf16.msra.mxu0 %v4355
      %4542 = vmatprep.subr.bf16.mxu0 %v4361
      %4543 = vmatpush1.bf16.msra.mxu0 %v4360
      %4544 = vmatprep.subr.bf16.mxu0 %v4366
      %4545 = vmatpush1.bf16.msra.mxu0 %v4365
      %4546 = vmatprep.subr.bf16.mxu0 %v4371
      %4547 = vmatpush1.bf16.msra.mxu0 %v4370
      %4548 = vmatprep.subr.bf16.mxu0 %v4376
      %4549 = vmatpush1.bf16.msra.mxu0 %v4375
      %4550 = vmatprep.subr.bf16.mxu0 %v4381
      %4551 = vmatpush1.bf16.msra.mxu0 %v4380
      %4552 = vmatprep.subr.bf16.mxu0 0
      %4553 = vmatpush1.bf16.msra.mxu0 0
      %4554 = vmatprep.subr.bf16.mxu0 0
      %4555 = vmatpush1.bf16.msra.mxu0 0
      %4556 = vmatprep.subr.bf16.mxu0 0
      %4557 = vmatpush1.bf16.msra.mxu0 0
      %4558 = vmatprep.subr.bf16.mxu0 0
      %4559 = vmatpush1.bf16.msra.mxu0 0
      %4560 = vmatprep.mubr.bf16.mxu0 %v4444
      %4561 = vmatmul.mubr.bf16.gmra.mrb[0].mxu0 %v4024
      %v4562 = vpop.f32.mrb[0].mxu0
      %v4563 = vadd.f32 %v4117, %v4562
      %v4564 = vpop.f32.mrb[0].mxu0
      %v4565 = vadd.f32 %v4121, %v4564
      %v4566 = vpop.f32.mrb[0].mxu0
      %v4567 = vadd.f32 %v4117, %v4566
      %v4568 = vpop.f32.mrb[0].mxu0
      %v4569 = vadd.f32 %v4121, %v4568
      %4570 = vmatprep.mubr.bf16.mxu0 %v4447
      %4571 = vmatmul.mubr.bf16.gmra.mrb[0].mxu0 %v4026
      %v4572 = vpop.f32.mrb[0].mxu0
      %v4573 = vadd.f32 %v4117, %v4572
      %v4574 = vpop.f32.mrb[0].mxu0
      %v4575 = vadd.f32 %v4121, %v4574
      %v4576 = vpop.f32.mrb[0].mxu0
      %v4577 = vadd.f32 %v4117, %v4576
      %v4578 = vpop.f32.mrb[0].mxu0
      %v4579 = vadd.f32 %v4121, %v4578
      %4580 = vmatprep.mubr.bf16.mxu0 %v4450
      %4581 = vmatmul.mubr.bf16.gmra.mrb[0].mxu0 %v4028
      %v4582 = vpop.f32.mrb[0].mxu0
      %v4583 = vadd.f32 %v4117, %v4582
      %v4584 = vpop.f32.mrb[0].mxu0
      %v4585 = vadd.f32 %v4121, %v4584
      %v4586 = vpop.f32.mrb[0].mxu0
      %v4587 = vadd.f32 %v4117, %v4586
      %v4588 = vpop.f32.mrb[0].mxu0
      %v4589 = vadd.f32 %v4121, %v4588
      %4590 = vmatprep.mubr.bf16.mxu0 %v4453
      %4591 = vmatmul.mubr.bf16.gmra.mrb[0].mxu0 %v4030
      %v4592 = vpop.f32.mrb[0].mxu0
      %v4593 = vadd.f32 %v4117, %v4592
      %v4594 = vpop.f32.mrb[0].mxu0
      %v4595 = vadd.f32 %v4121, %v4594
      %v4596 = vpop.f32.mrb[0].mxu0
      %v4597 = vadd.f32 %v4117, %v4596
      %v4598 = vpop.f32.mrb[0].mxu0
      %v4599 = vadd.f32 %v4121, %v4598
      %4600 = vdwg.mxu0
      %4601 = vmatprep.subr.bf16.mxu0 0
      %4602 = vmatpush1.bf16.msra.mxu0 %v4327
      %4603 = vmatprep.subr.bf16.mxu0 0
      %4604 = vmatpush1.bf16.msra.mxu0 %v4332
      %4605 = vmatprep.subr.bf16.mxu0 0
      %4606 = vmatpush1.bf16.msra.mxu0 %v4337
      %4607 = vmatprep.subr.bf16.mxu0 0
      %4608 = vmatpush1.bf16.msra.mxu0 %v4342
      %4609 = vmatprep.subr.bf16.mxu0 0
      %4610 = vmatpush1.bf16.msra.mxu0 %v4347
      %4611 = vmatprep.subr.bf16.mxu0 0
      %4612 = vmatpush1.bf16.msra.mxu0 %v4352
      %4613 = vmatprep.subr.bf16.mxu0 0
      %4614 = vmatpush1.bf16.msra.mxu0 %v4357
      %4615 = vmatprep.subr.bf16.mxu0 0
      %4616 = vmatpush1.bf16.msra.mxu0 %v4362
      %4617 = vmatprep.subr.bf16.mxu0 0
      %4618 = vmatpush1.bf16.msra.mxu0 %v4367
      %4619 = vmatprep.subr.bf16.mxu0 0
      %4620 = vmatpush1.bf16.msra.mxu0 %v4372
      %4621 = vmatprep.subr.bf16.mxu0 0
      %4622 = vmatpush1.bf16.msra.mxu0 %v4377
      %4623 = vmatprep.subr.bf16.mxu0 0
      %4624 = vmatpush1.bf16.msra.mxu0 %v4382
      %4625 = vmatprep.subr.bf16.mxu0 0
      %4626 = vmatpush1.bf16.msra.mxu0 0
      %4627 = vmatprep.subr.bf16.mxu0 0
      %4628 = vmatpush1.bf16.msra.mxu0 0
      %4629 = vmatprep.subr.bf16.mxu0 0
      %4630 = vmatpush1.bf16.msra.mxu0 0
      %4631 = vmatprep.subr.bf16.mxu0 0
      %4632 = vmatpush1.bf16.msra.mxu0 0
      %4633 = vmatprep.mubr.bf16.mxu0 %v4444
      %4634 = vmatmul.mubr.bf16.gmra.mrb[0].mxu0 %v4024
      %v4635 = vpop.f32.mrb[0].mxu0
      %v4636 = vadd.f32 %v4125, %v4635
      %v4637 = vpop.f32.mrb[0].mxu0
      %v4638 = vpop.f32.mrb[0].mxu0
      %v4639 = vadd.f32 %v4125, %v4638
      %v4640 = vpop.f32.mrb[0].mxu0
      %4641 = vmatprep.mubr.bf16.mxu0 %v4447
      %4642 = vmatmul.mubr.bf16.gmra.mrb[0].mxu0 %v4026
      %v4643 = vpop.f32.mrb[0].mxu0
      %v4644 = vadd.f32 %v4125, %v4643
      %v4645 = vpop.f32.mrb[0].mxu0
      %v4646 = vpop.f32.mrb[0].mxu0
      %v4647 = vadd.f32 %v4125, %v4646
      %v4648 = vpop.f32.mrb[0].mxu0
      %4649 = vmatprep.mubr.bf16.mxu0 %v4450
      %4650 = vmatmul.mubr.bf16.gmra.mrb[0].mxu0 %v4028
      %v4651 = vpop.f32.mrb[0].mxu0
      %v4652 = vadd.f32 %v4125, %v4651
      %v4653 = vpop.f32.mrb[0].mxu0
      %v4654 = vpop.f32.mrb[0].mxu0
      %v4655 = vadd.f32 %v4125, %v4654
      %v4656 = vpop.f32.mrb[0].mxu0
      %4657 = vmatprep.mubr.bf16.mxu0 %v4453
      %4658 = vmatmul.mubr.bf16.gmra.mrb[0].mxu0 %v4030
      %v4659 = vpop.f32.mrb[0].mxu0
      %v4660 = vadd.f32 %v4125, %v4659
      %v4661 = vpop.f32.mrb[0].mxu0
      %v4662 = vpop.f32.mrb[0].mxu0
      %v4663 = vadd.f32 %v4125, %v4662
      %v4664 = vpop.f32.mrb[0].mxu0
      %4665 = vdwg.mxu0
      %v4666 = vld [vmem:[%s7] sm:$0xff]
      %v4667 = vld [vmem:[%s7 + $0x8] sm:$0xff]
      %v4668 = vld [vmem:[%s7 + $0x10] sm:$0xf]
      %v4669 = vld [vmem:[%s7 + $0x14] sm:$0xff]
      %v4670 = vld [vmem:[%s7 + $0x1c] sm:$0xff]
      %v4671 = vld [vmem:[%s7 + $0x24] sm:$0xf]
      %v4672 = vld [vmem:[%s7 + $0x28] sm:$0xff]
      %v4673 = vld [vmem:[%s7 + $0x30] sm:$0xff]
      %v4674 = vld [vmem:[%s7 + $0x38] sm:$0xf]
      %v4675 = vld [vmem:[%s7 + $0x3c] sm:$0xff]
      %v4676 = vld [vmem:[%s7 + $0x44] sm:$0xff]
      %v4677 = vld [vmem:[%s7 + $0x4c] sm:$0xf]
      %v4678 = vld [vmem:[%s7 + $0x50] sm:$0xff]
      %v4679 = vld [vmem:[%s7 + $0x58] sm:$0xff]
      %v4680 = vld [vmem:[%s7 + $0x60] sm:$0xf]
      %v4681 = vld [vmem:[%s7 + $0x64] sm:$0xff]
      %v4682 = vld [vmem:[%s7 + $0x6c] sm:$0xff]
      %v4683 = vld [vmem:[%s7 + $0x74] sm:$0xf]
      %v4684 = vld [vmem:[%s7 + $0x78] sm:$0xff]
      %v4685 = vld [vmem:[%s7 + $0x80] sm:$0xff]
      %v4686 = vld [vmem:[%s7 + $0x88] sm:$0xf]
      %v4687 = vld [vmem:[%s7 + $0x8c] sm:$0xff]
      %v4688 = vld [vmem:[%s7 + $0x94] sm:$0xff]
      %v4689 = vld [vmem:[%s7 + $0x9c] sm:$0xf]
      %v4690 = vld [vmem:[%s7 + $0xa0] sm:$0xff]
      %v4691 = vld [vmem:[%s7 + $0xa8] sm:$0xff]
      %v4692 = vld [vmem:[%s7 + $0xb0] sm:$0xf]
      %v4693 = vld [vmem:[%s7 + $0xb4] sm:$0xff]
      %v4694 = vld [vmem:[%s7 + $0xbc] sm:$0xff]
      %v4695 = vld [vmem:[%s7 + $0xc4] sm:$0xf]
      %v4696 = vld [vmem:[%s7 + $0xc8] sm:$0xff]
      %v4697 = vld [vmem:[%s7 + $0xd0] sm:$0xff]
      %v4698 = vld [vmem:[%s7 + $0xd8] sm:$0xf]
      %v4699 = vld [vmem:[%s7 + $0xdc] sm:$0xff]
      %v4700 = vld [vmem:[%s7 + $0xe4] sm:$0xff]
      %v4701 = vld [vmem:[%s7 + $0xec] sm:$0xf]
      %v4702 = vld [vmem:[%s7 + $0xf0] sm:$0xff]
      %v4703 = vld [vmem:[%s7 + $0xf8] sm:$0xff]
      %v4704 = vld [vmem:[%s7 + $0x100] sm:$0xf]
      %v4705 = vld [vmem:[%s7 + $0x104] sm:$0xff]
      %v4706 = vld [vmem:[%s7 + $0x10c] sm:$0xff]
      %v4707 = vld [vmem:[%s7 + $0x114] sm:$0xf]
      %v4708 = vld [vmem:[%s7 + $0x118] sm:$0xff]
      %v4709 = vld [vmem:[%s7 + $0x120] sm:$0xff]
      %v4710 = vld [vmem:[%s7 + $0x128] sm:$0xf]
      %v4711 = vld [vmem:[%s7 + $0x12c] sm:$0xff]
      %v4712 = vld [vmem:[%s7 + $0x134] sm:$0xff]
      %v4713 = vld [vmem:[%s7 + $0x13c] sm:$0xf]
      %v4714 = vld [vmem:[%s7 + $0x140] sm:$0xff]
      %v4715 = vld [vmem:[%s7 + $0x148] sm:$0xff]
      %v4716 = vld [vmem:[%s7 + $0x150] sm:$0xf]
      %v4717 = vld [vmem:[%s7 + $0x154] sm:$0xff]
      %v4718 = vld [vmem:[%s7 + $0x15c] sm:$0xff]
      %v4719 = vld [vmem:[%s7 + $0x164] sm:$0xf]
      %v4720 = vld [vmem:[%s7 + $0x168] sm:$0xff]
      %v4721 = vld [vmem:[%s7 + $0x170] sm:$0xff]
      %v4722 = vld [vmem:[%s7 + $0x178] sm:$0xf]
      %v4723 = vld [vmem:[%s7 + $0x17c] sm:$0xff]
      %v4724 = vld [vmem:[%s7 + $0x184] sm:$0xff]
      %v4725 = vld [vmem:[%s7 + $0x18c] sm:$0xf]
      %v4726 = vld [vmem:[%s7 + $0x190] sm:$0xff]
      %v4727 = vld [vmem:[%s7 + $0x198] sm:$0xff]
      %v4728 = vld [vmem:[%s7 + $0x1a0] sm:$0xf]
      %v4729 = vld [vmem:[%s7 + $0x1a4] sm:$0xff]
      %v4730 = vld [vmem:[%s7 + $0x1ac] sm:$0xff]
      %v4731 = vld [vmem:[%s7 + $0x1b4] sm:$0xf]
      %v4732 = vld [vmem:[%s7 + $0x1b8] sm:$0xff]
      %v4733 = vld [vmem:[%s7 + $0x1c0] sm:$0xff]
      %v4734 = vld [vmem:[%s7 + $0x1c8] sm:$0xf]
      %v4735 = vld [vmem:[%s7 + $0x1cc] sm:$0xff]
      %v4736 = vld [vmem:[%s7 + $0x1d4] sm:$0xff]
      %v4737 = vld [vmem:[%s7 + $0x1dc] sm:$0xf]
      %v4738 = vld [vmem:[%s7 + $0x1e0] sm:$0xff]
      %v4739 = vld [vmem:[%s7 + $0x1e8] sm:$0xff]
      %v4740 = vld [vmem:[%s7 + $0x1f0] sm:$0xf]
      %v4741 = vld [vmem:[%s7 + $0x1f4] sm:$0xff]
      %v4742 = vld [vmem:[%s7 + $0x1fc] sm:$0xff]
      %v4743 = vld [vmem:[%s7 + $0x204] sm:$0xf]
      %v4744 = vld [vmem:[%s7 + $0x208] sm:$0xff]
      %v4745 = vld [vmem:[%s7 + $0x210] sm:$0xff]
      %v4746 = vld [vmem:[%s7 + $0x218] sm:$0xf]
      %v4747 = vld [vmem:[%s7 + $0x21c] sm:$0xff]
      %v4748 = vld [vmem:[%s7 + $0x224] sm:$0xff]
      %v4749 = vld [vmem:[%s7 + $0x22c] sm:$0xf]
      %v4750 = vld [vmem:[%s7 + $0x230] sm:$0xff]
      %v4751 = vld [vmem:[%s7 + $0x238] sm:$0xff]
      %v4752 = vld [vmem:[%s7 + $0x240] sm:$0xf]
      %v4753 = vld [vmem:[%s7 + $0x244] sm:$0xff]
      %v4754 = vld [vmem:[%s7 + $0x24c] sm:$0xff]
      %v4755 = vld [vmem:[%s7 + $0x254] sm:$0xf]
      %v4756 = vld [vmem:[%s7 + $0x258] sm:$0xff]
      %v4757 = vld [vmem:[%s7 + $0x260] sm:$0xff]
      %v4758 = vld [vmem:[%s7 + $0x268] sm:$0xf]
      %v4759 = vld [vmem:[%s7 + $0x26c] sm:$0xff]
      %v4760 = vld [vmem:[%s7 + $0x274] sm:$0xff]
      %v4761 = vld [vmem:[%s7 + $0x27c] sm:$0xf]
      %v4762 = vld [vmem:[%s7 + $0x280] sm:$0xff]
      %v4763 = vld [vmem:[%s7 + $0x288] sm:$0xff]
      %v4764 = vld [vmem:[%s7 + $0x290] sm:$0xf]
      %v4765 = vld [vmem:[%s7 + $0x294] sm:$0xff]
      %v4766 = vld [vmem:[%s7 + $0x29c] sm:$0xff]
      %v4767 = vld [vmem:[%s7 + $0x2a4] sm:$0xf]
      %v4768 = vld [vmem:[%s7 + $0x2a8] sm:$0xff]
      %v4769 = vld [vmem:[%s7 + $0x2b0] sm:$0xff]
      %v4770 = vld [vmem:[%s7 + $0x2b8] sm:$0xf]
      %v4771 = vld [vmem:[%s7 + $0x2bc] sm:$0xff]
      %v4772 = vld [vmem:[%s7 + $0x2c4] sm:$0xff]
      %v4773 = vld [vmem:[%s7 + $0x2cc] sm:$0xf]
      %v4774 = vld [vmem:[%s7 + $0x2d0] sm:$0xff]
      %v4775 = vld [vmem:[%s7 + $0x2d8] sm:$0xff]
      %v4776 = vld [vmem:[%s7 + $0x2e0] sm:$0xf]
      %v4777 = vld [vmem:[%s7 + $0x2e4] sm:$0xff]
      %v4778 = vld [vmem:[%s7 + $0x2ec] sm:$0xff]
      %v4779 = vld [vmem:[%s7 + $0x2f4] sm:$0xf]
      %v4780 = vld [vmem:[%s8] sm:$0x1f]
      %v4782 = vlaneseq
      %v4783 = vshrl.u32 %v4782, 7
      %v4784 = vsub.s32 0, %v4783
      %v4785 = vrot.slane %v4780, %v4784
      %v4786 = vlaneseq
      %v4787 = vshrl.u32 %v4786, 7
      %v4788 = vsub.s32 1, %v4787
      %v4789 = vrot.slane %v4780, %v4788
      %v4790 = vlaneseq
      %v4791 = vshrl.u32 %v4790, 7
      %v4792 = vsub.s32 2, %v4791
      %v4793 = vrot.slane %v4780, %v4792
      %v4794 = vlaneseq
      %v4795 = vshrl.u32 %v4794, 7
      %v4796 = vsub.s32 3, %v4795
      %v4797 = vrot.slane %v4780, %v4796
      %v4798 = vlaneseq
      %v4799 = vshrl.u32 %v4798, 7
      %v4800 = vsub.s32 4, %v4799
      %v4801 = vrot.slane %v4780, %v4800
      %v4921 = vunpack.c.l.b16 %v4666
      %v4922 = vunpack.c.h.b16 %v4666
      %v4923 = vunpack.c.l.b16 %v4667
      %v4924 = vunpack.c.h.b16 %v4667
      %v4925 = vunpack.c.l.b16 %v4668
      %v4926 = vunpack.c.l.b16 %v4669
      %v4927 = vunpack.c.h.b16 %v4669
      %v4928 = vunpack.c.l.b16 %v4670
      %v4929 = vunpack.c.h.b16 %v4670
      %v4930 = vunpack.c.l.b16 %v4671
      %v4931 = vunpack.c.l.b16 %v4672
      %v4932 = vunpack.c.h.b16 %v4672
      %v4933 = vunpack.c.l.b16 %v4673
      %v4934 = vunpack.c.h.b16 %v4673
      %v4935 = vunpack.c.l.b16 %v4674
      %v4936 = vunpack.c.l.b16 %v4675
      %v4937 = vunpack.c.h.b16 %v4675
      %v4938 = vunpack.c.l.b16 %v4676
      %v4939 = vunpack.c.h.b16 %v4676
      %v4940 = vunpack.c.l.b16 %v4677
      %v4941 = vunpack.c.l.b16 %v4678
      %v4942 = vunpack.c.h.b16 %v4678
      %v4943 = vunpack.c.l.b16 %v4679
      %v4944 = vunpack.c.h.b16 %v4679
      %v4945 = vunpack.c.l.b16 %v4680
      %v4946 = vunpack.c.l.b16 %v4681
      %v4947 = vunpack.c.h.b16 %v4681
      %v4948 = vunpack.c.l.b16 %v4682
      %v4949 = vunpack.c.h.b16 %v4682
      %v4950 = vunpack.c.l.b16 %v4683
      %v4951 = vunpack.c.l.b16 %v4684
      %v4952 = vunpack.c.h.b16 %v4684
      %v4953 = vunpack.c.l.b16 %v4685
      %v4954 = vunpack.c.h.b16 %v4685
      %v4955 = vunpack.c.l.b16 %v4686
      %v4956 = vunpack.c.l.b16 %v4687
      %v4957 = vunpack.c.h.b16 %v4687
      %v4958 = vunpack.c.l.b16 %v4688
      %v4959 = vunpack.c.h.b16 %v4688
      %v4960 = vunpack.c.l.b16 %v4689
      %v4961 = vunpack.c.l.b16 %v4690
      %v4962 = vunpack.c.h.b16 %v4690
      %v4963 = vunpack.c.l.b16 %v4691
      %v4964 = vunpack.c.h.b16 %v4691
      %v4965 = vunpack.c.l.b16 %v4692
      %v4966 = vunpack.c.l.b16 %v4693
      %v4967 = vunpack.c.h.b16 %v4693
      %v4968 = vunpack.c.l.b16 %v4694
      %v4969 = vunpack.c.h.b16 %v4694
      %v4970 = vunpack.c.l.b16 %v4695
      %v4971 = vunpack.c.l.b16 %v4696
      %v4972 = vunpack.c.h.b16 %v4696
      %v4973 = vunpack.c.l.b16 %v4697
      %v4974 = vunpack.c.h.b16 %v4697
      %v4975 = vunpack.c.l.b16 %v4698
      %v4976 = vunpack.c.l.b16 %v4699
      %v4977 = vunpack.c.h.b16 %v4699
      %v4978 = vunpack.c.l.b16 %v4700
      %v4979 = vunpack.c.h.b16 %v4700
      %v4980 = vunpack.c.l.b16 %v4701
      %v4981 = vunpack.c.l.b16 %v4702
      %v4982 = vunpack.c.h.b16 %v4702
      %v4983 = vunpack.c.l.b16 %v4703
      %v4984 = vunpack.c.h.b16 %v4703
      %v4985 = vunpack.c.l.b16 %v4704
      %v4986 = vunpack.c.l.b16 %v4705
      %v4987 = vunpack.c.h.b16 %v4705
      %v4988 = vunpack.c.l.b16 %v4706
      %v4989 = vunpack.c.h.b16 %v4706
      %v4990 = vunpack.c.l.b16 %v4707
      %v4991 = vunpack.c.l.b16 %v4708
      %v4992 = vunpack.c.h.b16 %v4708
      %v4993 = vunpack.c.l.b16 %v4709
      %v4994 = vunpack.c.h.b16 %v4709
      %v4995 = vunpack.c.l.b16 %v4710
      %v4996 = vunpack.c.l.b16 %v4711
      %v4997 = vunpack.c.h.b16 %v4711
      %v4998 = vunpack.c.l.b16 %v4712
      %v4999 = vunpack.c.h.b16 %v4712
      %v5000 = vunpack.c.l.b16 %v4713
      %v5001 = vunpack.c.l.b16 %v4714
      %v5002 = vunpack.c.h.b16 %v4714
      %v5003 = vunpack.c.l.b16 %v4715
      %v5004 = vunpack.c.h.b16 %v4715
      %v5005 = vunpack.c.l.b16 %v4716
      %v5006 = vunpack.c.l.b16 %v4717
      %v5007 = vunpack.c.h.b16 %v4717
      %v5008 = vunpack.c.l.b16 %v4718
      %v5009 = vunpack.c.h.b16 %v4718
      %v5010 = vunpack.c.l.b16 %v4719
      %v5011 = vunpack.c.l.b16 %v4720
      %v5012 = vunpack.c.h.b16 %v4720
      %v5013 = vunpack.c.l.b16 %v4721
      %v5014 = vunpack.c.h.b16 %v4721
      %v5015 = vunpack.c.l.b16 %v4722
      %v5016 = vunpack.c.l.b16 %v4723
      %v5017 = vunpack.c.h.b16 %v4723
      %v5018 = vunpack.c.l.b16 %v4724
      %v5019 = vunpack.c.h.b16 %v4724
      %v5020 = vunpack.c.l.b16 %v4725
      %v5021 = vunpack.c.l.b16 %v4726
      %v5022 = vunpack.c.h.b16 %v4726
      %v5023 = vunpack.c.l.b16 %v4727
      %v5024 = vunpack.c.h.b16 %v4727
      %v5025 = vunpack.c.l.b16 %v4728
      %v5026 = vunpack.c.l.b16 %v4729
      %v5027 = vunpack.c.h.b16 %v4729
      %v5028 = vunpack.c.l.b16 %v4730
      %v5029 = vunpack.c.h.b16 %v4730
      %v5030 = vunpack.c.l.b16 %v4731
      %v5031 = vunpack.c.l.b16 %v4732
      %v5032 = vunpack.c.h.b16 %v4732
      %v5033 = vunpack.c.l.b16 %v4733
      %v5034 = vunpack.c.h.b16 %v4733
      %v5035 = vunpack.c.l.b16 %v4734
      %v5036 = vunpack.c.l.b16 %v4735
      %v5037 = vunpack.c.h.b16 %v4735
      %v5038 = vunpack.c.l.b16 %v4736
      %v5039 = vunpack.c.h.b16 %v4736
      %v5040 = vunpack.c.l.b16 %v4737
      %v5041 = vunpack.c.l.b16 %v4738
      %v5042 = vunpack.c.h.b16 %v4738
      %v5043 = vunpack.c.l.b16 %v4739
      %v5044 = vunpack.c.h.b16 %v4739
      %v5045 = vunpack.c.l.b16 %v4740
      %v5046 = vunpack.c.l.b16 %v4741
      %v5047 = vunpack.c.h.b16 %v4741
      %v5048 = vunpack.c.l.b16 %v4742
      %v5049 = vunpack.c.h.b16 %v4742
      %v5050 = vunpack.c.l.b16 %v4743
      %v5051 = vunpack.c.l.b16 %v4744
      %v5052 = vunpack.c.h.b16 %v4744
      %v5053 = vunpack.c.l.b16 %v4745
      %v5054 = vunpack.c.h.b16 %v4745
      %v5055 = vunpack.c.l.b16 %v4746
      %v5056 = vunpack.c.l.b16 %v4747
      %v5057 = vunpack.c.h.b16 %v4747
      %v5058 = vunpack.c.l.b16 %v4748
      %v5059 = vunpack.c.h.b16 %v4748
      %v5060 = vunpack.c.l.b16 %v4749
      %v5061 = vunpack.c.l.b16 %v4750
      %v5062 = vunpack.c.h.b16 %v4750
      %v5063 = vunpack.c.l.b16 %v4751
      %v5064 = vunpack.c.h.b16 %v4751
      %v5065 = vunpack.c.l.b16 %v4752
      %v5066 = vunpack.c.l.b16 %v4753
      %v5067 = vunpack.c.h.b16 %v4753
      %v5068 = vunpack.c.l.b16 %v4754
      %v5069 = vunpack.c.h.b16 %v4754
      %v5070 = vunpack.c.l.b16 %v4755
      %v5071 = vunpack.c.l.b16 %v4756
      %v5072 = vunpack.c.h.b16 %v4756
      %v5073 = vunpack.c.l.b16 %v4757
      %v5074 = vunpack.c.h.b16 %v4757
      %v5075 = vunpack.c.l.b16 %v4758
      %v5076 = vunpack.c.l.b16 %v4759
      %v5077 = vunpack.c.h.b16 %v4759
      %v5078 = vunpack.c.l.b16 %v4760
      %v5079 = vunpack.c.h.b16 %v4760
      %v5080 = vunpack.c.l.b16 %v4761
      %v5081 = vunpack.c.l.b16 %v4762
      %v5082 = vunpack.c.h.b16 %v4762
      %v5083 = vunpack.c.l.b16 %v4763
      %v5084 = vunpack.c.h.b16 %v4763
      %v5085 = vunpack.c.l.b16 %v4764
      %v5086 = vunpack.c.l.b16 %v4765
      %v5087 = vunpack.c.h.b16 %v4765
      %v5088 = vunpack.c.l.b16 %v4766
      %v5089 = vunpack.c.h.b16 %v4766
      %v5090 = vunpack.c.l.b16 %v4767
      %v5091 = vunpack.c.l.b16 %v4768
      %v5092 = vunpack.c.h.b16 %v4768
      %v5093 = vunpack.c.l.b16 %v4769
      %v5094 = vunpack.c.h.b16 %v4769
      %v5095 = vunpack.c.l.b16 %v4770
      %v5096 = vunpack.c.l.b16 %v4771
      %v5097 = vunpack.c.h.b16 %v4771
      %v5098 = vunpack.c.l.b16 %v4772
      %v5099 = vunpack.c.h.b16 %v4772
      %v5100 = vunpack.c.l.b16 %v4773
      %v5101 = vunpack.c.l.b16 %v4774
      %v5102 = vunpack.c.h.b16 %v4774
      %v5103 = vunpack.c.l.b16 %v4775
      %v5104 = vunpack.c.h.b16 %v4775
      %v5105 = vunpack.c.l.b16 %v4776
      %v5106 = vunpack.c.l.b16 %v4777
      %v5107 = vunpack.c.h.b16 %v4777
      %v5108 = vunpack.c.l.b16 %v4778
      %v5109 = vunpack.c.h.b16 %v4778
      %v5110 = vunpack.c.l.b16 %v4779
      %v5111 = vpack.c.b16 %v4926, %v4921
      %v5112 = vpack.c.b16 %v4927, %v4922
      %v5113 = vpack.c.b16 %v4928, %v4923
      %v5114 = vpack.c.b16 %v4929, %v4924
      %v5115 = vpack.c.b16 %v4930, %v4925
      %v5116 = vpack.c.b16 %v4936, %v4931
      %v5117 = vpack.c.b16 %v4937, %v4932
      %v5118 = vpack.c.b16 %v4938, %v4933
      %v5119 = vpack.c.b16 %v4939, %v4934
      %v5120 = vpack.c.b16 %v4940, %v4935
      %v5121 = vpack.c.b16 %v4946, %v4941
      %v5122 = vpack.c.b16 %v4947, %v4942
      %v5123 = vpack.c.b16 %v4948, %v4943
      %v5124 = vpack.c.b16 %v4949, %v4944
      %v5125 = vpack.c.b16 %v4950, %v4945
      %v5126 = vpack.c.b16 %v4956, %v4951
      %v5127 = vpack.c.b16 %v4957, %v4952
      %v5128 = vpack.c.b16 %v4958, %v4953
      %v5129 = vpack.c.b16 %v4959, %v4954
      %v5130 = vpack.c.b16 %v4960, %v4955
      %v5131 = vpack.c.b16 %v4966, %v4961
      %v5132 = vpack.c.b16 %v4967, %v4962
      %v5133 = vpack.c.b16 %v4968, %v4963
      %v5134 = vpack.c.b16 %v4969, %v4964
      %v5135 = vpack.c.b16 %v4970, %v4965
      %v5136 = vpack.c.b16 %v4976, %v4971
      %v5137 = vpack.c.b16 %v4977, %v4972
      %v5138 = vpack.c.b16 %v4978, %v4973
      %v5139 = vpack.c.b16 %v4979, %v4974
      %v5140 = vpack.c.b16 %v4980, %v4975
      %v5141 = vpack.c.b16 %v4986, %v4981
      %v5142 = vpack.c.b16 %v4987, %v4982
      %v5143 = vpack.c.b16 %v4988, %v4983
      %v5144 = vpack.c.b16 %v4989, %v4984
      %v5145 = vpack.c.b16 %v4990, %v4985
      %v5146 = vpack.c.b16 %v4996, %v4991
      %v5147 = vpack.c.b16 %v4997, %v4992
      %v5148 = vpack.c.b16 %v4998, %v4993
      %v5149 = vpack.c.b16 %v4999, %v4994
      %v5150 = vpack.c.b16 %v5000, %v4995
      %v5151 = vpack.c.b16 %v5006, %v5001
      %v5152 = vpack.c.b16 %v5007, %v5002
      %v5153 = vpack.c.b16 %v5008, %v5003
      %v5154 = vpack.c.b16 %v5009, %v5004
      %v5155 = vpack.c.b16 %v5010, %v5005
      %v5156 = vpack.c.b16 %v5016, %v5011
      %v5157 = vpack.c.b16 %v5017, %v5012
      %v5158 = vpack.c.b16 %v5018, %v5013
      %v5159 = vpack.c.b16 %v5019, %v5014
      %v5160 = vpack.c.b16 %v5020, %v5015
      %v5161 = vpack.c.b16 %v5026, %v5021
      %v5162 = vpack.c.b16 %v5027, %v5022
      %v5163 = vpack.c.b16 %v5028, %v5023
      %v5164 = vpack.c.b16 %v5029, %v5024
      %v5165 = vpack.c.b16 %v5030, %v5025
      %v5166 = vpack.c.b16 %v5036, %v5031
      %v5167 = vpack.c.b16 %v5037, %v5032
      %v5168 = vpack.c.b16 %v5038, %v5033
      %v5169 = vpack.c.b16 %v5039, %v5034
      %v5170 = vpack.c.b16 %v5040, %v5035
      %v5171 = vpack.c.b16 %v5046, %v5041
      %v5172 = vpack.c.b16 %v5047, %v5042
      %v5173 = vpack.c.b16 %v5048, %v5043
      %v5174 = vpack.c.b16 %v5049, %v5044
      %v5175 = vpack.c.b16 %v5050, %v5045
      %v5176 = vpack.c.b16 %v5056, %v5051
      %v5177 = vpack.c.b16 %v5057, %v5052
      %v5178 = vpack.c.b16 %v5058, %v5053
      %v5179 = vpack.c.b16 %v5059, %v5054
      %v5180 = vpack.c.b16 %v5060, %v5055
      %v5181 = vpack.c.b16 %v5066, %v5061
      %v5182 = vpack.c.b16 %v5067, %v5062
      %v5183 = vpack.c.b16 %v5068, %v5063
      %v5184 = vpack.c.b16 %v5069, %v5064
      %v5185 = vpack.c.b16 %v5070, %v5065
      %v5186 = vpack.c.b16 %v5076, %v5071
      %v5187 = vpack.c.b16 %v5077, %v5072
      %v5188 = vpack.c.b16 %v5078, %v5073
      %v5189 = vpack.c.b16 %v5079, %v5074
      %v5190 = vpack.c.b16 %v5080, %v5075
      %v5191 = vpack.c.b16 %v5086, %v5081
      %v5192 = vpack.c.b16 %v5087, %v5082
      %v5193 = vpack.c.b16 %v5088, %v5083
      %v5194 = vpack.c.b16 %v5089, %v5084
      %v5195 = vpack.c.b16 %v5090, %v5085
      %v5196 = vpack.c.b16 %v5096, %v5091
      %v5197 = vpack.c.b16 %v5097, %v5092
      %v5198 = vpack.c.b16 %v5098, %v5093
      %v5199 = vpack.c.b16 %v5099, %v5094
      %v5200 = vpack.c.b16 %v5100, %v5095
      %v5201 = vpack.c.b16 %v5106, %v5101
      %v5202 = vpack.c.b16 %v5107, %v5102
      %v5203 = vpack.c.b16 %v5108, %v5103
      %v5204 = vpack.c.b16 %v5109, %v5104
      %v5205 = vpack.c.b16 %v5110, %v5105
      %5301 = vmatprep.subr.bf16.mxu0 %v5112
      %5302 = vmatpush1.bf16.msra.mxu0 %v5111
      %5303 = vmatprep.subr.bf16.mxu0 %v5117
      %5304 = vmatpush1.bf16.msra.mxu0 %v5116
      %5305 = vmatprep.subr.bf16.mxu0 %v5122
      %5306 = vmatpush1.bf16.msra.mxu0 %v5121
      %5307 = vmatprep.subr.bf16.mxu0 %v5127
      %5308 = vmatpush1.bf16.msra.mxu0 %v5126
      %5309 = vmatprep.subr.bf16.mxu0 %v5132
      %5310 = vmatpush1.bf16.msra.mxu0 %v5131
      %5311 = vmatprep.subr.bf16.mxu0 %v5137
      %5312 = vmatpush1.bf16.msra.mxu0 %v5136
      %5313 = vmatprep.subr.bf16.mxu0 %v5142
      %5314 = vmatpush1.bf16.msra.mxu0 %v5141
      %5315 = vmatprep.subr.bf16.mxu0 %v5147
      %5316 = vmatpush1.bf16.msra.mxu0 %v5146
      %5317 = vmatprep.subr.bf16.mxu0 %v5152
      %5318 = vmatpush1.bf16.msra.mxu0 %v5151
      %5319 = vmatprep.subr.bf16.mxu0 %v5157
      %5320 = vmatpush1.bf16.msra.mxu0 %v5156
      %5321 = vmatprep.subr.bf16.mxu0 %v5162
      %5322 = vmatpush1.bf16.msra.mxu0 %v5161
      %5323 = vmatprep.subr.bf16.mxu0 %v5167
      %5324 = vmatpush1.bf16.msra.mxu0 %v5166
      %5325 = vmatprep.subr.bf16.mxu0 %v5172
      %5326 = vmatpush1.bf16.msra.mxu0 %v5171
      %5327 = vmatprep.subr.bf16.mxu0 %v5177
      %5328 = vmatpush1.bf16.msra.mxu0 %v5176
      %5329 = vmatprep.subr.bf16.mxu0 %v5182
      %5330 = vmatpush1.bf16.msra.mxu0 %v5181
      %5331 = vmatprep.subr.bf16.mxu0 %v5187
      %5332 = vmatpush1.bf16.msra.mxu0 %v5186
      %5333 = vmatprep.mubr.bf16.mxu0 %v441
      %5334 = vmatmul.mubr.bf16.gmra.mrb[0].mxu0 %v440
      %v5335 = vpop.f32.mrb[0].mxu0
      %v5336 = vadd.f32 %v4785, %v5335
      %v5337 = vpop.f32.mrb[0].mxu0
      %v5338 = vadd.f32 %v4789, %v5337
      %v5339 = vpop.f32.mrb[0].mxu0
      %v5340 = vadd.f32 %v4785, %v5339
      %v5341 = vpop.f32.mrb[0].mxu0
      %v5342 = vadd.f32 %v4789, %v5341
      %5343 = vmatprep.mubr.bf16.mxu0 %v444
      %5344 = vmatmul.mubr.bf16.gmra.mrb[0].mxu0 %v443
      %v5345 = vpop.f32.mrb[0].mxu0
      %v5346 = vadd.f32 %v4785, %v5345
      %v5347 = vpop.f32.mrb[0].mxu0
      %v5348 = vadd.f32 %v4789, %v5347
      %v5349 = vpop.f32.mrb[0].mxu0
      %v5350 = vadd.f32 %v4785, %v5349
      %v5351 = vpop.f32.mrb[0].mxu0
      %v5352 = vadd.f32 %v4789, %v5351
      %5353 = vmatprep.mubr.bf16.mxu0 %v447
      %5354 = vmatmul.mubr.bf16.gmra.mrb[0].mxu0 %v446
      %v5355 = vpop.f32.mrb[0].mxu0
      %v5356 = vadd.f32 %v4785, %v5355
      %v5357 = vpop.f32.mrb[0].mxu0
      %v5358 = vadd.f32 %v4789, %v5357
      %v5359 = vpop.f32.mrb[0].mxu0
      %v5360 = vadd.f32 %v4785, %v5359
      %v5361 = vpop.f32.mrb[0].mxu0
      %v5362 = vadd.f32 %v4789, %v5361
      %5363 = vmatprep.mubr.bf16.mxu0 %v450
      %5364 = vmatmul.mubr.bf16.gmra.mrb[0].mxu0 %v449
      %v5365 = vpop.f32.mrb[0].mxu0
      %v5366 = vadd.f32 %v4785, %v5365
      %v5367 = vpop.f32.mrb[0].mxu0
      %v5368 = vadd.f32 %v4789, %v5367
      %v5369 = vpop.f32.mrb[0].mxu0
      %v5370 = vadd.f32 %v4785, %v5369
      %v5371 = vpop.f32.mrb[0].mxu0
      %v5372 = vadd.f32 %v4789, %v5371
      %5373 = vdwg.mxu0
      %5374 = vmatprep.subr.bf16.mxu0 %v5192
      %5375 = vmatpush1.bf16.msra.mxu0 %v5191
      %5376 = vmatprep.subr.bf16.mxu0 %v5197
      %5377 = vmatpush1.bf16.msra.mxu0 %v5196
      %5378 = vmatprep.subr.bf16.mxu0 %v5202
      %5379 = vmatpush1.bf16.msra.mxu0 %v5201
      %5380 = vmatprep.subr.bf16.mxu0 0
      %5381 = vmatpush1.bf16.msra.mxu0 0
      %5382 = vmatprep.subr.bf16.mxu0 0
      %5383 = vmatpush1.bf16.msra.mxu0 0
      %5384 = vmatprep.subr.bf16.mxu0 0
      %5385 = vmatpush1.bf16.msra.mxu0 0
      %5386 = vmatprep.subr.bf16.mxu0 0
      %5387 = vmatpush1.bf16.msra.mxu0 0
      %5388 = vmatprep.subr.bf16.mxu0 0
      %5389 = vmatpush1.bf16.msra.mxu0 0
      %5390 = vmatprep.subr.bf16.mxu0 0
      %5391 = vmatpush1.bf16.msra.mxu0 0
      %5392 = vmatprep.subr.bf16.mxu0 0
      %5393 = vmatpush1.bf16.msra.mxu0 0
      %5394 = vmatprep.subr.bf16.mxu0 0
      %5395 = vmatpush1.bf16.msra.mxu0 0
      %5396 = vmatprep.subr.bf16.mxu0 0
      %5397 = vmatpush1.bf16.msra.mxu0 0
      %5398 = vmatprep.subr.bf16.mxu0 0
      %5399 = vmatpush1.bf16.msra.mxu0 0
      %5400 = vmatprep.subr.bf16.mxu0 0
      %5401 = vmatpush1.bf16.msra.mxu0 0
      %5402 = vmatprep.subr.bf16.mxu0 0
      %5403 = vmatpush1.bf16.msra.mxu0 0
      %5404 = vmatprep.subr.bf16.mxu0 0
      %5405 = vmatpush1.bf16.msra.mxu0 0
      %5406 = vmatprep.mubr.bf16.mxu0 0
      %5407 = vmatmul.mubr.bf16.gmra.mrb[0].mxu0 %v652
      %v5408 = vpop.f32.mrb[0].mxu0
      %v5409 = vadd.f32 %v5336, %v5408
      %v5410 = vpop.f32.mrb[0].mxu0
      %v5411 = vadd.f32 %v5338, %v5410
      %v5412 = vpop.f32.mrb[0].mxu0
      %v5413 = vadd.f32 %v5340, %v5412
      %v5414 = vpop.f32.mrb[0].mxu0
      %v5415 = vadd.f32 %v5342, %v5414
      %5416 = vmatprep.mubr.bf16.mxu0 0
      %5417 = vmatmul.mubr.bf16.gmra.mrb[0].mxu0 %v655
      %v5418 = vpop.f32.mrb[0].mxu0
      %v5419 = vadd.f32 %v5346, %v5418
      %v5420 = vpop.f32.mrb[0].mxu0
      %v5421 = vadd.f32 %v5348, %v5420
      %v5422 = vpop.f32.mrb[0].mxu0
      %v5423 = vadd.f32 %v5350, %v5422
      %v5424 = vpop.f32.mrb[0].mxu0
      %v5425 = vadd.f32 %v5352, %v5424
      %5426 = vmatprep.mubr.bf16.mxu0 0
      %5427 = vmatmul.mubr.bf16.gmra.mrb[0].mxu0 %v658
      %v5428 = vpop.f32.mrb[0].mxu0
      %v5429 = vadd.f32 %v5356, %v5428
      %v5430 = vpop.f32.mrb[0].mxu0
      %v5431 = vadd.f32 %v5358, %v5430
      %v5432 = vpop.f32.mrb[0].mxu0
      %v5433 = vadd.f32 %v5360, %v5432
      %v5434 = vpop.f32.mrb[0].mxu0
      %v5435 = vadd.f32 %v5362, %v5434
      %5436 = vmatprep.mubr.bf16.mxu0 0
      %5437 = vmatmul.mubr.bf16.gmra.mrb[0].mxu0 %v661
      %v5438 = vpop.f32.mrb[0].mxu0
      %v5439 = vadd.f32 %v5366, %v5438
      %v5440 = vpop.f32.mrb[0].mxu0
      %v5441 = vadd.f32 %v5368, %v5440
      %v5442 = vpop.f32.mrb[0].mxu0
      %v5443 = vadd.f32 %v5370, %v5442
      %v5444 = vpop.f32.mrb[0].mxu0
      %v5445 = vadd.f32 %v5372, %v5444
      %5446 = vdwg.mxu0
      %5447 = vmatprep.subr.bf16.mxu0 %v5114
      %5448 = vmatpush1.bf16.msra.mxu0 %v5113
      %5449 = vmatprep.subr.bf16.mxu0 %v5119
      %5450 = vmatpush1.bf16.msra.mxu0 %v5118
      %5451 = vmatprep.subr.bf16.mxu0 %v5124
      %5452 = vmatpush1.bf16.msra.mxu0 %v5123
      %5453 = vmatprep.subr.bf16.mxu0 %v5129
      %5454 = vmatpush1.bf16.msra.mxu0 %v5128
      %5455 = vmatprep.subr.bf16.mxu0 %v5134
      %5456 = vmatpush1.bf16.msra.mxu0 %v5133
      %5457 = vmatprep.subr.bf16.mxu0 %v5139
      %5458 = vmatpush1.bf16.msra.mxu0 %v5138
      %5459 = vmatprep.subr.bf16.mxu0 %v5144
      %5460 = vmatpush1.bf16.msra.mxu0 %v5143
      %5461 = vmatprep.subr.bf16.mxu0 %v5149
      %5462 = vmatpush1.bf16.msra.mxu0 %v5148
      %5463 = vmatprep.subr.bf16.mxu0 %v5154
      %5464 = vmatpush1.bf16.msra.mxu0 %v5153
      %5465 = vmatprep.subr.bf16.mxu0 %v5159
      %5466 = vmatpush1.bf16.msra.mxu0 %v5158
      %5467 = vmatprep.subr.bf16.mxu0 %v5164
      %5468 = vmatpush1.bf16.msra.mxu0 %v5163
      %5469 = vmatprep.subr.bf16.mxu0 %v5169
      %5470 = vmatpush1.bf16.msra.mxu0 %v5168
      %5471 = vmatprep.subr.bf16.mxu0 %v5174
      %5472 = vmatpush1.bf16.msra.mxu0 %v5173
      %5473 = vmatprep.subr.bf16.mxu0 %v5179
      %5474 = vmatpush1.bf16.msra.mxu0 %v5178
      %5475 = vmatprep.subr.bf16.mxu0 %v5184
      %5476 = vmatpush1.bf16.msra.mxu0 %v5183
      %5477 = vmatprep.subr.bf16.mxu0 %v5189
      %5478 = vmatpush1.bf16.msra.mxu0 %v5188
      %5479 = vmatprep.mubr.bf16.mxu0 %v441
      %5480 = vmatmul.mubr.bf16.gmra.mrb[0].mxu0 %v440
      %v5481 = vpop.f32.mrb[0].mxu0
      %v5482 = vadd.f32 %v4793, %v5481
      %v5483 = vpop.f32.mrb[0].mxu0
      %v5484 = vadd.f32 %v4797, %v5483
      %v5485 = vpop.f32.mrb[0].mxu0
      %v5486 = vadd.f32 %v4793, %v5485
      %v5487 = vpop.f32.mrb[0].mxu0
      %v5488 = vadd.f32 %v4797, %v5487
      %5489 = vmatprep.mubr.bf16.mxu0 %v444
      %5490 = vmatmul.mubr.bf16.gmra.mrb[0].mxu0 %v443
      %v5491 = vpop.f32.mrb[0].mxu0
      %v5492 = vadd.f32 %v4793, %v5491
      %v5493 = vpop.f32.mrb[0].mxu0
      %v5494 = vadd.f32 %v4797, %v5493
      %v5495 = vpop.f32.mrb[0].mxu0
      %v5496 = vadd.f32 %v4793, %v5495
      %v5497 = vpop.f32.mrb[0].mxu0
      %v5498 = vadd.f32 %v4797, %v5497
      %5499 = vmatprep.mubr.bf16.mxu0 %v447
      %5500 = vmatmul.mubr.bf16.gmra.mrb[0].mxu0 %v446
      %v5501 = vpop.f32.mrb[0].mxu0
      %v5502 = vadd.f32 %v4793, %v5501
      %v5503 = vpop.f32.mrb[0].mxu0
      %v5504 = vadd.f32 %v4797, %v5503
      %v5505 = vpop.f32.mrb[0].mxu0
      %v5506 = vadd.f32 %v4793, %v5505
      %v5507 = vpop.f32.mrb[0].mxu0
      %v5508 = vadd.f32 %v4797, %v5507
      %5509 = vmatprep.mubr.bf16.mxu0 %v450
      %5510 = vmatmul.mubr.bf16.gmra.mrb[0].mxu0 %v449
      %v5511 = vpop.f32.mrb[0].mxu0
      %v5512 = vadd.f32 %v4793, %v5511
      %v5513 = vpop.f32.mrb[0].mxu0
      %v5514 = vadd.f32 %v4797, %v5513
      %v5515 = vpop.f32.mrb[0].mxu0
      %v5516 = vadd.f32 %v4793, %v5515
      %v5517 = vpop.f32.mrb[0].mxu0
      %v5518 = vadd.f32 %v4797, %v5517
      %5519 = vdwg.mxu0
      %5520 = vmatprep.subr.bf16.mxu0 %v5194
      %5521 = vmatpush1.bf16.msra.mxu0 %v5193
      %5522 = vmatprep.subr.bf16.mxu0 %v5199
      %5523 = vmatpush1.bf16.msra.mxu0 %v5198
      %5524 = vmatprep.subr.bf16.mxu0 %v5204
      %5525 = vmatpush1.bf16.msra.mxu0 %v5203
      %5526 = vmatprep.subr.bf16.mxu0 0
      %5527 = vmatpush1.bf16.msra.mxu0 0
      %5528 = vmatprep.subr.bf16.mxu0 0
      %5529 = vmatpush1.bf16.msra.mxu0 0
      %5530 = vmatprep.subr.bf16.mxu0 0
      %5531 = vmatpush1.bf16.msra.mxu0 0
      %5532 = vmatprep.subr.bf16.mxu0 0
      %5533 = vmatpush1.bf16.msra.mxu0 0
      %5534 = vmatprep.subr.bf16.mxu0 0
      %5535 = vmatpush1.bf16.msra.mxu0 0
      %5536 = vmatprep.subr.bf16.mxu0 0
      %5537 = vmatpush1.bf16.msra.mxu0 0
      %5538 = vmatprep.subr.bf16.mxu0 0
      %5539 = vmatpush1.bf16.msra.mxu0 0
      %5540 = vmatprep.subr.bf16.mxu0 0
      %5541 = vmatpush1.bf16.msra.mxu0 0
      %5542 = vmatprep.subr.bf16.mxu0 0
      %5543 = vmatpush1.bf16.msra.mxu0 0
      %5544 = vmatprep.subr.bf16.mxu0 0
      %5545 = vmatpush1.bf16.msra.mxu0 0
      %5546 = vmatprep.subr.bf16.mxu0 0
      %5547 = vmatpush1.bf16.msra.mxu0 0
      %5548 = vmatprep.subr.bf16.mxu0 0
      %5549 = vmatpush1.bf16.msra.mxu0 0
      %5550 = vmatprep.subr.bf16.mxu0 0
      %5551 = vmatpush1.bf16.msra.mxu0 0
      %5552 = vmatprep.mubr.bf16.mxu0 0
      %5553 = vmatmul.mubr.bf16.gmra.mrb[0].mxu0 %v652
      %v5554 = vpop.f32.mrb[0].mxu0
      %v5555 = vadd.f32 %v5482, %v5554
      %v5556 = vpop.f32.mrb[0].mxu0
      %v5557 = vadd.f32 %v5484, %v5556
      %v5558 = vpop.f32.mrb[0].mxu0
      %v5559 = vadd.f32 %v5486, %v5558
      %v5560 = vpop.f32.mrb[0].mxu0
      %v5561 = vadd.f32 %v5488, %v5560
      %5562 = vmatprep.mubr.bf16.mxu0 0
      %5563 = vmatmul.mubr.bf16.gmra.mrb[0].mxu0 %v655
      %v5564 = vpop.f32.mrb[0].mxu0
      %v5565 = vadd.f32 %v5492, %v5564
      %v5566 = vpop.f32.mrb[0].mxu0
      %v5567 = vadd.f32 %v5494, %v5566
      %v5568 = vpop.f32.mrb[0].mxu0
      %v5569 = vadd.f32 %v5496, %v5568
      %v5570 = vpop.f32.mrb[0].mxu0
      %v5571 = vadd.f32 %v5498, %v5570
      %5572 = vmatprep.mubr.bf16.mxu0 0
      %5573 = vmatmul.mubr.bf16.gmra.mrb[0].mxu0 %v658
      %v5574 = vpop.f32.mrb[0].mxu0
      %v5575 = vadd.f32 %v5502, %v5574
      %v5576 = vpop.f32.mrb[0].mxu0
      %v5577 = vadd.f32 %v5504, %v5576
      %v5578 = vpop.f32.mrb[0].mxu0
      %v5579 = vadd.f32 %v5506, %v5578
      %v5580 = vpop.f32.mrb[0].mxu0
      %v5581 = vadd.f32 %v5508, %v5580
      %5582 = vmatprep.mubr.bf16.mxu0 0
      %5583 = vmatmul.mubr.bf16.gmra.mrb[0].mxu0 %v661
      %v5584 = vpop.f32.mrb[0].mxu0
      %v5585 = vadd.f32 %v5512, %v5584
      %v5586 = vpop.f32.mrb[0].mxu0
      %v5587 = vadd.f32 %v5514, %v5586
      %v5588 = vpop.f32.mrb[0].mxu0
      %v5589 = vadd.f32 %v5516, %v5588
      %v5590 = vpop.f32.mrb[0].mxu0
      %v5591 = vadd.f32 %v5518, %v5590
      %5592 = vdwg.mxu0
      %5593 = vmatprep.subr.bf16.mxu0 0
      %5594 = vmatpush1.bf16.msra.mxu0 %v5115
      %5595 = vmatprep.subr.bf16.mxu0 0
      %5596 = vmatpush1.bf16.msra.mxu0 %v5120
      %5597 = vmatprep.subr.bf16.mxu0 0
      %5598 = vmatpush1.bf16.msra.mxu0 %v5125
      %5599 = vmatprep.subr.bf16.mxu0 0
      %5600 = vmatpush1.bf16.msra.mxu0 %v5130
      %5601 = vmatprep.subr.bf16.mxu0 0
      %5602 = vmatpush1.bf16.msra.mxu0 %v5135
      %5603 = vmatprep.subr.bf16.mxu0 0
      %5604 = vmatpush1.bf16.msra.mxu0 %v5140
      %5605 = vmatprep.subr.bf16.mxu0 0
      %5606 = vmatpush1.bf16.msra.mxu0 %v5145
      %5607 = vmatprep.subr.bf16.mxu0 0
      %5608 = vmatpush1.bf16.msra.mxu0 %v5150
      %5609 = vmatprep.subr.bf16.mxu0 0
      %5610 = vmatpush1.bf16.msra.mxu0 %v5155
      %5611 = vmatprep.subr.bf16.mxu0 0
      %5612 = vmatpush1.bf16.msra.mxu0 %v5160
      %5613 = vmatprep.subr.bf16.mxu0 0
      %5614 = vmatpush1.bf16.msra.mxu0 %v5165
      %5615 = vmatprep.subr.bf16.mxu0 0
      %5616 = vmatpush1.bf16.msra.mxu0 %v5170
      %5617 = vmatprep.subr.bf16.mxu0 0
      %5618 = vmatpush1.bf16.msra.mxu0 %v5175
      %5619 = vmatprep.subr.bf16.mxu0 0
      %5620 = vmatpush1.bf16.msra.mxu0 %v5180
      %5621 = vmatprep.subr.bf16.mxu0 0
      %5622 = vmatpush1.bf16.msra.mxu0 %v5185
      %5623 = vmatprep.subr.bf16.mxu0 0
      %5624 = vmatpush1.bf16.msra.mxu0 %v5190
      %5625 = vmatprep.mubr.bf16.mxu0 %v441
      %5626 = vmatmul.mubr.bf16.gmra.mrb[0].mxu0 %v440
      %v5627 = vpop.f32.mrb[0].mxu0
      %v5628 = vadd.f32 %v4801, %v5627
      %v5629 = vpop.f32.mrb[0].mxu0
      %v5630 = vpop.f32.mrb[0].mxu0
      %v5631 = vadd.f32 %v4801, %v5630
      %v5632 = vpop.f32.mrb[0].mxu0
      %5633 = vmatprep.mubr.bf16.mxu0 %v444
      %5634 = vmatmul.mubr.bf16.gmra.mrb[0].mxu0 %v443
      %v5635 = vpop.f32.mrb[0].mxu0
      %v5636 = vadd.f32 %v4801, %v5635
      %v5637 = vpop.f32.mrb[0].mxu0
      %v5638 = vpop.f32.mrb[0].mxu0
      %v5639 = vadd.f32 %v4801, %v5638
      %v5640 = vpop.f32.mrb[0].mxu0
      %5641 = vmatprep.mubr.bf16.mxu0 %v447
      %5642 = vmatmul.mubr.bf16.gmra.mrb[0].mxu0 %v446
      %v5643 = vpop.f32.mrb[0].mxu0
      %v5644 = vadd.f32 %v4801, %v5643
      %v5645 = vpop.f32.mrb[0].mxu0
      %v5646 = vpop.f32.mrb[0].mxu0
      %v5647 = vadd.f32 %v4801, %v5646
      %v5648 = vpop.f32.mrb[0].mxu0
      %5649 = vmatprep.mubr.bf16.mxu0 %v450
      %5650 = vmatmul.mubr.bf16.gmra.mrb[0].mxu0 %v449
      %v5651 = vpop.f32.mrb[0].mxu0
      %v5652 = vadd.f32 %v4801, %v5651
      %v5653 = vpop.f32.mrb[0].mxu0
      %v5654 = vpop.f32.mrb[0].mxu0
      %v5655 = vadd.f32 %v4801, %v5654
      %v5656 = vpop.f32.mrb[0].mxu0
      %5657 = vdwg.mxu0
      %5658 = vmatprep.subr.bf16.mxu0 0
      %5659 = vmatpush1.bf16.msra.mxu0 %v5195
      %5660 = vmatprep.subr.bf16.mxu0 0
      %5661 = vmatpush1.bf16.msra.mxu0 %v5200
      %5662 = vmatprep.subr.bf16.mxu0 0
      %5663 = vmatpush1.bf16.msra.mxu0 %v5205
      %5664 = vmatprep.subr.bf16.mxu0 0
      %5665 = vmatpush1.bf16.msra.mxu0 0
      %5666 = vmatprep.subr.bf16.mxu0 0
      %5667 = vmatpush1.bf16.msra.mxu0 0
      %5668 = vmatprep.subr.bf16.mxu0 0
      %5669 = vmatpush1.bf16.msra.mxu0 0
      %5670 = vmatprep.subr.bf16.mxu0 0
      %5671 = vmatpush1.bf16.msra.mxu0 0
      %5672 = vmatprep.subr.bf16.mxu0 0
      %5673 = vmatpush1.bf16.msra.mxu0 0
      %5674 = vmatprep.subr.bf16.mxu0 0
      %5675 = vmatpush1.bf16.msra.mxu0 0
      %5676 = vmatprep.subr.bf16.mxu0 0
      %5677 = vmatpush1.bf16.msra.mxu0 0
      %5678 = vmatprep.subr.bf16.mxu0 0
      %5679 = vmatpush1.bf16.msra.mxu0 0
      %5680 = vmatprep.subr.bf16.mxu0 0
      %5681 = vmatpush1.bf16.msra.mxu0 0
      %5682 = vmatprep.subr.bf16.mxu0 0
      %5683 = vmatpush1.bf16.msra.mxu0 0
      %5684 = vmatprep.subr.bf16.mxu0 0
      %5685 = vmatpush1.bf16.msra.mxu0 0
      %5686 = vmatprep.subr.bf16.mxu0 0
      %5687 = vmatpush1.bf16.msra.mxu0 0
      %5688 = vmatprep.subr.bf16.mxu0 0
      %5689 = vmatpush1.bf16.msra.mxu0 0
      %5690 = vmatprep.mubr.bf16.mxu0 0
      %5691 = vmatmul.mubr.bf16.gmra.mrb[0].mxu0 %v652
      %v5692 = vpop.f32.mrb[0].mxu0
      %v5693 = vadd.f32 %v5628, %v5692
      %v5694 = vpop.f32.mrb[0].mxu0
      %v5695 = vpop.f32.mrb[0].mxu0
      %v5696 = vadd.f32 %v5631, %v5695
      %v5697 = vpop.f32.mrb[0].mxu0
      %5698 = vmatprep.mubr.bf16.mxu0 0
      %5699 = vmatmul.mubr.bf16.gmra.mrb[0].mxu0 %v655
      %v5700 = vpop.f32.mrb[0].mxu0
      %v5701 = vadd.f32 %v5636, %v5700
      %v5702 = vpop.f32.mrb[0].mxu0
      %v5703 = vpop.f32.mrb[0].mxu0
      %v5704 = vadd.f32 %v5639, %v5703
      %v5705 = vpop.f32.mrb[0].mxu0
      %5706 = vmatprep.mubr.bf16.mxu0 0
      %5707 = vmatmul.mubr.bf16.gmra.mrb[0].mxu0 %v658
      %v5708 = vpop.f32.mrb[0].mxu0
      %v5709 = vadd.f32 %v5644, %v5708
      %v5710 = vpop.f32.mrb[0].mxu0
      %v5711 = vpop.f32.mrb[0].mxu0
      %v5712 = vadd.f32 %v5647, %v5711
      %v5713 = vpop.f32.mrb[0].mxu0
      %5714 = vmatprep.mubr.bf16.mxu0 0
      %5715 = vmatmul.mubr.bf16.gmra.mrb[0].mxu0 %v661
      %v5716 = vpop.f32.mrb[0].mxu0
      %v5717 = vadd.f32 %v5652, %v5716
      %v5718 = vpop.f32.mrb[0].mxu0
      %v5719 = vpop.f32.mrb[0].mxu0
      %v5720 = vadd.f32 %v5655, %v5719
      %v5721 = vpop.f32.mrb[0].mxu0
      %5722 = vdwg.mxu0
      %v5723 = vadd.f32 %v5409, %v4490
      %v5724 = vadd.f32 %v5411, %v4492
      %v5725 = vadd.f32 %v5555, %v4563
      %v5726 = vadd.f32 %v5557, %v4565
      %v5727 = vadd.f32 %v5413, %v4494
      %v5728 = vadd.f32 %v5415, %v4496
      %v5729 = vadd.f32 %v5559, %v4567
      %v5730 = vadd.f32 %v5561, %v4569
      %v5731 = vadd.f32 %v5419, %v4500
      %v5732 = vadd.f32 %v5421, %v4502
      %v5733 = vadd.f32 %v5565, %v4573
      %v5734 = vadd.f32 %v5567, %v4575
      %v5735 = vadd.f32 %v5423, %v4504
      %v5736 = vadd.f32 %v5425, %v4506
      %v5737 = vadd.f32 %v5569, %v4577
      %v5738 = vadd.f32 %v5571, %v4579
      %v5739 = vadd.f32 %v5429, %v4510
      %v5740 = vadd.f32 %v5431, %v4512
      %v5741 = vadd.f32 %v5575, %v4583
      %v5742 = vadd.f32 %v5577, %v4585
      %v5743 = vadd.f32 %v5433, %v4514
      %v5744 = vadd.f32 %v5435, %v4516
      %v5745 = vadd.f32 %v5579, %v4587
      %v5746 = vadd.f32 %v5581, %v4589
      %v5747 = vadd.f32 %v5439, %v4520
      %v5748 = vadd.f32 %v5441, %v4522
      %v5749 = vadd.f32 %v5585, %v4593
      %v5750 = vadd.f32 %v5587, %v4595
      %v5751 = vadd.f32 %v5443, %v4524
      %v5752 = vadd.f32 %v5445, %v4526
      %v5753 = vadd.f32 %v5589, %v4597
      %v5754 = vadd.f32 %v5591, %v4599
      %5763 = vrot.lane.b32.xlu0 %v4636, 32
      %v5764 = vpop.permute.xlu0 %5763
      %5765 = vrot.lane.b32.xlu0 %v4639, 32
      %v5766 = vpop.permute.xlu0 %5765
      %5767 = vrot.lane.b32.xlu0 %v4644, 32
      %v5768 = vpop.permute.xlu0 %5767
      %5769 = vrot.lane.b32.xlu0 %v4647, 32
      %v5770 = vpop.permute.xlu0 %5769
      %5771 = vrot.lane.b32.xlu0 %v4652, 32
      %v5772 = vpop.permute.xlu0 %5771
      %5773 = vrot.lane.b32.xlu0 %v4655, 32
      %v5774 = vpop.permute.xlu0 %5773
      %5775 = vrot.lane.b32.xlu0 %v4660, 32
      %v5776 = vpop.permute.xlu0 %5775
      %5777 = vrot.lane.b32.xlu0 %v4663, 32
      %v5778 = vpop.permute.xlu0 %5777
      %vm5787 = vcmask 261120
      %v5788 = vsel %vm5787, %v5693, %v5764
      %v5789 = vsel %vm5787, %v5696, %v5766
      %v5790 = vsel %vm5787, %v5701, %v5768
      %v5791 = vsel %vm5787, %v5704, %v5770
      %v5792 = vsel %vm5787, %v5709, %v5772
      %v5793 = vsel %vm5787, %v5712, %v5774
      %v5794 = vsel %vm5787, %v5717, %v5776
      %v5795 = vsel %vm5787, %v5720, %v5778
      %v5796 = vmax.f32 %v5723, 0.0
      %v5797 = vmax.f32 %v5724, 0.0
      %v5798 = vmax.f32 %v5725, 0.0
      %v5799 = vmax.f32 %v5726, 0.0
      %v5800 = vmax.f32 %v5788, 0.0
      %v5801 = vmax.f32 %v5727, 0.0
      %v5802 = vmax.f32 %v5728, 0.0
      %v5803 = vmax.f32 %v5729, 0.0
      %v5804 = vmax.f32 %v5730, 0.0
      %v5805 = vmax.f32 %v5789, 0.0
      %v5806 = vmax.f32 %v5731, 0.0
      %v5807 = vmax.f32 %v5732, 0.0
      %v5808 = vmax.f32 %v5733, 0.0
      %v5809 = vmax.f32 %v5734, 0.0
      %v5810 = vmax.f32 %v5790, 0.0
      %v5811 = vmax.f32 %v5735, 0.0
      %v5812 = vmax.f32 %v5736, 0.0
      %v5813 = vmax.f32 %v5737, 0.0
      %v5814 = vmax.f32 %v5738, 0.0
      %v5815 = vmax.f32 %v5791, 0.0
      %v5816 = vmax.f32 %v5739, 0.0
      %v5817 = vmax.f32 %v5740, 0.0
      %v5818 = vmax.f32 %v5741, 0.0
      %v5819 = vmax.f32 %v5742, 0.0
      %v5820 = vmax.f32 %v5792, 0.0
      %v5821 = vmax.f32 %v5743, 0.0
      %v5822 = vmax.f32 %v5744, 0.0
      %v5823 = vmax.f32 %v5745, 0.0
      %v5824 = vmax.f32 %v5746, 0.0
      %v5825 = vmax.f32 %v5793, 0.0
      %v5826 = vmax.f32 %v5747, 0.0
      %v5827 = vmax.f32 %v5748, 0.0
      %v5828 = vmax.f32 %v5749, 0.0
      %v5829 = vmax.f32 %v5750, 0.0
      %v5830 = vmax.f32 %v5794, 0.0
      %v5831 = vmax.f32 %v5751, 0.0
      %v5832 = vmax.f32 %v5752, 0.0
      %v5833 = vmax.f32 %v5753, 0.0
      %v5834 = vmax.f32 %v5754, 0.0
      %v5835 = vmax.f32 %v5795, 0.0
      %v5836 = vpack.c.bf16 %v5801, %v5796
      %v5837 = vpack.c.bf16 %v5802, %v5797
      %v5838 = vpack.c.bf16 %v5803, %v5798
      %v5839 = vpack.c.bf16 %v5804, %v5799
      %v5840 = vpack.c.bf16 %v5805, %v5800
      %v5841 = vpack.c.bf16 %v5811, %v5806
      %v5842 = vpack.c.bf16 %v5812, %v5807
      %v5843 = vpack.c.bf16 %v5813, %v5808
      %v5844 = vpack.c.bf16 %v5814, %v5809
      %v5845 = vpack.c.bf16 %v5815, %v5810
      %v5846 = vpack.c.bf16 %v5821, %v5816
      %v5847 = vpack.c.bf16 %v5822, %v5817
      %v5848 = vpack.c.bf16 %v5823, %v5818
      %v5849 = vpack.c.bf16 %v5824, %v5819
      %v5850 = vpack.c.bf16 %v5825, %v5820
      %v5851 = vpack.c.bf16 %v5831, %v5826
      %v5852 = vpack.c.bf16 %v5832, %v5827
      %v5853 = vpack.c.bf16 %v5833, %v5828
      %v5854 = vpack.c.bf16 %v5834, %v5829
      %v5855 = vpack.c.bf16 %v5835, %v5830
      %v5876 = vunpack.c.l.b16 %v5836
      %v5877 = vunpack.c.l.b16 %v5837
      %v5878 = vunpack.c.l.b16 %v5838
      %v5879 = vunpack.c.l.b16 %v5839
      %v5880 = vunpack.c.l.b16 %v5840
      %v5881 = vunpack.c.h.b16 %v5836
      %v5882 = vunpack.c.h.b16 %v5837
      %v5883 = vunpack.c.h.b16 %v5838
      %v5884 = vunpack.c.h.b16 %v5839
      %v5885 = vunpack.c.h.b16 %v5840
      %v5886 = vunpack.c.l.b16 %v5841
      %v5887 = vunpack.c.l.b16 %v5842
      %v5888 = vunpack.c.l.b16 %v5843
      %v5889 = vunpack.c.l.b16 %v5844
      %v5890 = vunpack.c.l.b16 %v5845
      %v5891 = vunpack.c.h.b16 %v5841
      %v5892 = vunpack.c.h.b16 %v5842
      %v5893 = vunpack.c.h.b16 %v5843
      %v5894 = vunpack.c.h.b16 %v5844
      %v5895 = vunpack.c.h.b16 %v5845
      %v5896 = vunpack.c.l.b16 %v5846
      %v5897 = vunpack.c.l.b16 %v5847
      %v5898 = vunpack.c.l.b16 %v5848
      %v5899 = vunpack.c.l.b16 %v5849
      %v5900 = vunpack.c.l.b16 %v5850
      %v5901 = vunpack.c.h.b16 %v5846
      %v5902 = vunpack.c.h.b16 %v5847
      %v5903 = vunpack.c.h.b16 %v5848
      %v5904 = vunpack.c.h.b16 %v5849
      %v5905 = vunpack.c.h.b16 %v5850
      %v5906 = vunpack.c.l.b16 %v5851
      %v5907 = vunpack.c.l.b16 %v5852
      %v5908 = vunpack.c.l.b16 %v5853
      %v5909 = vunpack.c.l.b16 %v5854
      %v5910 = vunpack.c.l.b16 %v5855
      %v5911 = vunpack.c.h.b16 %v5851
      %v5912 = vunpack.c.h.b16 %v5852
      %v5913 = vunpack.c.h.b16 %v5853
      %v5914 = vunpack.c.h.b16 %v5854
      %v5915 = vunpack.c.h.b16 %v5855
      %v5916 = vpack.c.b16 %v5877, %v5876
      %v5917 = vpack.c.b16 %v5879, %v5878
      %v5918 = vpack.c.b16 %v5880, %v5880
      %v5919 = vpack.c.b16 %v5882, %v5881
      %v5920 = vpack.c.b16 %v5884, %v5883
      %v5921 = vpack.c.b16 %v5885, %v5885
      %v5922 = vpack.c.b16 %v5887, %v5886
      %v5923 = vpack.c.b16 %v5889, %v5888
      %v5924 = vpack.c.b16 %v5890, %v5890
      %v5925 = vpack.c.b16 %v5892, %v5891
      %v5926 = vpack.c.b16 %v5894, %v5893
      %v5927 = vpack.c.b16 %v5895, %v5895
      %v5928 = vpack.c.b16 %v5897, %v5896
      %v5929 = vpack.c.b16 %v5899, %v5898
      %v5930 = vpack.c.b16 %v5900, %v5900
      %v5931 = vpack.c.b16 %v5902, %v5901
      %v5932 = vpack.c.b16 %v5904, %v5903
      %v5933 = vpack.c.b16 %v5905, %v5905
      %v5934 = vpack.c.b16 %v5907, %v5906
      %v5935 = vpack.c.b16 %v5909, %v5908
      %v5936 = vpack.c.b16 %v5910, %v5910
      %v5937 = vpack.c.b16 %v5912, %v5911
      %v5938 = vpack.c.b16 %v5914, %v5913
      %v5939 = vpack.c.b16 %v5915, %v5915
      %5964 = vst [vmem:[%s332] sm:$0xff] %v5916
      %5965 = vst [vmem:[%s332 + $0x8] sm:$0xff] %v5917
      %vm5966 = vcmask 519168
      %5967 = vst.msk [vmem:[%s332 + $0x10] sm:$0xf] %vm5966, %v5918
      %5968 = vst [vmem:[%s332 + $0x14] sm:$0xff] %v5919
      %5969 = vst [vmem:[%s332 + $0x1c] sm:$0xff] %v5920
      %5970 = vst.msk [vmem:[%s332 + $0x24] sm:$0xf] %vm5966, %v5921
      %5971 = vst [vmem:[%s332 + $0x28] sm:$0xff] %v5922
      %5972 = vst [vmem:[%s332 + $0x30] sm:$0xff] %v5923
      %5973 = vst.msk [vmem:[%s332 + $0x38] sm:$0xf] %vm5966, %v5924
      %5974 = vst [vmem:[%s332 + $0x3c] sm:$0xff] %v5925
      %5975 = vst [vmem:[%s332 + $0x44] sm:$0xff] %v5926
      %5976 = vst.msk [vmem:[%s332 + $0x4c] sm:$0xf] %vm5966, %v5927
      %5977 = vst [vmem:[%s332 + $0x50] sm:$0xff] %v5928
      %5978 = vst [vmem:[%s332 + $0x58] sm:$0xff] %v5929
      %5979 = vst.msk [vmem:[%s332 + $0x60] sm:$0xf] %vm5966, %v5930
      %5980 = vst [vmem:[%s332 + $0x64] sm:$0xff] %v5931
      %5981 = vst [vmem:[%s332 + $0x6c] sm:$0xff] %v5932
      %5982 = vst.msk [vmem:[%s332 + $0x74] sm:$0xf] %vm5966, %v5933
      %5983 = vst [vmem:[%s332 + $0x78] sm:$0xff] %v5934
      %5984 = vst [vmem:[%s332 + $0x80] sm:$0xff] %v5935
      %5985 = vst.msk [vmem:[%s332 + $0x88] sm:$0xf] %vm5966, %v5936
      %5986 = vst [vmem:[%s332 + $0x8c] sm:$0xff] %v5937
      %5987 = vst [vmem:[%s332 + $0x94] sm:$0xff] %v5938
      %5988 = vst.msk [vmem:[%s332 + $0x9c] sm:$0xf] %vm5966, %v5939
      %p5989 = scmp.lt.s32.totalorder %s20, 1
      %s5990 = scalar_select %p5989, %s20, 1
      %s5991 = smul.addr %s5990, 40
      %s5992 = smul.addr %s5991, 4
      %s5993 = scalar_lea.vmem %s9, %s5992
      // Predicated region
      $region57: #{forward.5} parent=55 // pred_check
        %p5994 = pneg %p232
      $region58: #{forward.5} parent=55 // pred_check_branch
        %5996 = sbr.rel (%p5994) target = $region60
      $region59: #{forward.5} parent=55 // pred_region
        _
      $region60: #{forward.5} parent=55 // pred_fallthru
        _
    $region56: #{forward.5} parent=5 // pred_fallthru
      _
    %p5997 = scmp.le.s32.totalorder 2, %s15
    // Predicated region
    $region61: #{forward.5} parent=5 // pred_check
      %p5998 = pneg %p5997
    $region62: #{forward.5} parent=5 // pred_check_branch
      %6000 = sbr.rel (%p5998) target = $region64
    $region63: #{forward.5} parent=5 // pred_region
      %s6001 = ssub.s32 %s15, 2
      // Predicated region
      $region65: #{forward.5} parent=63 // pred_check
        %p6002 = pneg %p238
      $region66: #{forward.5} parent=63 // pred_check_branch
        %6004 = sbr.rel (%p6002) target = $region68
      $region67: #{forward.5} parent=63 // pred_region
        %p6005 = scmp.lt.s32.totalorder %s21, 1
        %s6006 = scalar_select %p6005, %s21, 1
        %s6007 = smul.addr %s6006, 40
        %s6008 = smul.addr %s6007, 4
        %s6009 = scalar_lea.vmem %s9, %s6008
      $region68: #{forward.5} parent=63 // pred_fallthru
        _
    $region64: #{forward.5} parent=5 // pred_fallthru
      _
  $region6: #{forward.5} parent=0 // loop_footer
    %s19 = sadd.s32 1, %s15
  $region7: #{forward.5} parent=0 // loop_footer_branch
    %14 = sbr.rel target = $region3
  $region8: #{forward.5} parent=0 // loop_exit
    _

</llo_original>
